<compile_context>
chip_gen: v5e
topology: v5e:2x2
jax: 0.10.0
libtpu: 0.0.40
codegen_flags: <defaults>
</compile_context>

<pallas_src>
import functools

import jax
import jax.numpy as jnp
from jax import lax
from jax.experimental import pallas as pl
from jax.experimental.pallas import tpu as pltpu

LEAKY_SLOPE = 0.01

# Geometry implied by the module (Linear(1024 = 64*4*4) forces 28x28 input):
#   stage 1: Conv2d(1 -> 32, 5) : 28x28 -> 24x24, pool -> 12x12
#   stage 2: Conv2d(32 -> 64, 5): 12x12 ->  8x8,  pool ->  4x4
# Per-image activations are flattened (h*W + w) on the lane axis:
#   Lin  : padded flattened input width handed to the kernel
#   Lc   : conv accumulator width (covers all valid outputs + tap shifts)
#   Lm   : width fed to the 4-shift pooling max (covers all selected windows)
#   Lout : pooled output width (>= (H/2)*(W/2), padded for the next stage)
CFG1 = dict(Ci=1,  Co=32, W=28, Lin=896, Lc=672, Lm=640, Lout=256, mxu=False)
CFG2 = dict(Ci=32, Co=64, W=12, Lin=256, Lc=96,  Lm=80,  Lout=16,  mxu=True)


def _round_up(v, m):
    return (v + m - 1) // m * m


# ------------------------------ Pallas kernels ------------------------------

def _conv_pool_kernel(x_ref, w_ref, b_ref, s_ref, o_ref, *, Co, W, Lc, Lm, mxu):
    """Fused Conv2d(5x5, VALID) + bias + LeakyReLU + MaxPool2d(2,2), one image.

    x_ref : (Ci, Lin)  flattened image rows (lane p = h*W + w), padded lanes
    w_ref : mxu  -> (25, Co, Ci) per-tap weight matrices (bf16)
            else -> (Co, 25)     per-tap scalars (f32, Ci == 1)
    b_ref : (Co, 1)  f32
    s_ref : (Lm, Lout) 0/1 selection matrix (stride-2 downsample + relayout)
    o_ref : (Co, Lout) pooled activations (lane c = i*(Wo/2) + j)
    """
    xf = x_ref[...]
    acc = jnp.zeros((Co, Lc), jnp.float32)
    if mxu:
        # Per-tap contraction over Ci on the MXU (bf16 in, f32 accumulate).
        for t in range(25):
            off = (t // 5) * W + (t % 5)
            acc = acc + jnp.dot(w_ref[t], xf[:, off:off + Lc],
                                preferred_element_type=jnp.float32)
    else:
        # Ci == 1: per-tap (Co,1)x(1,Lc) outer products on the VPU — avoids a
        # wasteful K=25 (mostly padding) MXU pass.
        w = w_ref[...].astype(jnp.float32)
        xf32 = xf.astype(jnp.float32)
        for t in range(25):
            off = (t // 5) * W + (t % 5)
            acc = acc + w[:, t:t + 1] * xf32[:, off:off + Lc]

    # Fused 2x2 max pool: max over the four window members (flat offsets
    # {0, 1, W, W+1}) ...
    m4 = jnp.maximum(jnp.maximum(acc[:, 0:Lm], acc[:, 1:Lm + 1]),
                     jnp.maximum(acc[:, W:W + Lm], acc[:, W + 1:W + 1 + Lm]))
    # ... then a 0/1 selection matmul picks lanes 2i*W + 2j and lays the pooled
    # map out exactly as the next stage consumes it (lane-dense output store).
    pooled = jnp.dot(m4, s_ref[...], preferred_element_type=jnp.float32)

    # bias + LeakyReLU commute with max, so apply them to the (4x smaller)
    # pooled tensor, in f32 on the accumulator (v5e-safe epilogue).
    y = pooled + b_ref[...]
    y = jnp.where(y >= 0, y, LEAKY_SLOPE * y)
    o_ref[...] = y.astype(o_ref.dtype)


def _fc_kernel(x_ref, w1_ref, b1_ref, w2_ref, b2_ref, o_ref):
    """Fused Linear(1024,1024) + LeakyReLU + Linear(1024, 1 padded to 128)."""
    h = jnp.dot(x_ref[...], w1_ref[...], preferred_element_type=jnp.float32)
    h = h + b1_ref[...]
    h = jnp.where(h >= 0, h, LEAKY_SLOPE * h)
    y = jnp.dot(h.astype(jnp.bfloat16), w2_ref[...],
                preferred_element_type=jnp.float32)
    o_ref[...] = y + b2_ref[...]


# ------------------------------ pallas_call wrappers ------------------------

def _conv_stage(x, w, b, s, *, cfg, out_dtype):
    N = x.shape[0]
    Ci, Co, Lin, Lout = cfg["Ci"], cfg["Co"], cfg["Lin"], cfg["Lout"]
    kern = functools.partial(_conv_pool_kernel, Co=Co, W=cfg["W"],
                             Lc=cfg["Lc"], Lm=cfg["Lm"], mxu=cfg["mxu"])
    w_idx = (0,) * w.ndim
    return pl.pallas_call(
        kern,
        out_shape=jax.ShapeDtypeStruct((N, Co, Lout), out_dtype),
        grid=(N,),
        in_specs=[
            pl.BlockSpec((None, Ci, Lin), lambda n: (n, 0, 0)),
            pl.BlockSpec(w.shape, lambda n: w_idx),       # resident weights
            pl.BlockSpec((Co, 1), lambda n: (0, 0)),      # resident bias
            pl.BlockSpec(s.shape, lambda n: (0, 0)),      # resident pool matrix
        ],
        out_specs=pl.BlockSpec((None, Co, Lout), lambda n: (n, 0, 0)),
        compiler_params=pltpu.CompilerParams(
            dimension_semantics=("parallel",),
            vmem_limit_bytes=32 * 1024 * 1024),
    )(x, w, b, s)


def _fc_fused(feat, wf1, bf1, wf2, bf2):
    N, K = feat.shape
    TM = 256                      # sized for v7x's 64 MiB VMEM with headroom
    if N <= TM:
        Np = _round_up(N, 8)
        tm = Np
    else:
        Np = _round_up(N, TM)
        tm = TM
    if Np != N:
        feat = jnp.pad(feat, ((0, Np - N), (0, 0)))
    out = pl.pallas_call(
        _fc_kernel,
        out_shape=jax.ShapeDtypeStruct((Np, 128), jnp.float32),
        grid=(Np // tm,),
        in_specs=[
            pl.BlockSpec((tm, K), lambda i: (i, 0)),
            pl.BlockSpec((K, 1024), lambda i: (0, 0)),
            pl.BlockSpec((1, 1024), lambda i: (0, 0)),
            pl.BlockSpec((K, 128), lambda i: (0, 0)),
            pl.BlockSpec((1, 128), lambda i: (0, 0)),
        ],
        out_specs=pl.BlockSpec((tm, 128), lambda i: (i, 0)),
        compiler_params=pltpu.CompilerParams(
            dimension_semantics=("parallel",),
            vmem_limit_bytes=32 * 1024 * 1024),
    )(feat, wf1, bf1, wf2, bf2)
    return out[:N, :1]


# ------------------------------- glue (JAX) ---------------------------------

def _pool_select_matrix(W, Ho, Wo, Lm, out_cols):
    """0/1 matrix (Lm, out_cols): column i*(Wo/2)+j selects lane 2i*W + 2j."""
    Hp, Wp = Ho // 2, Wo // 2
    c = jnp.arange(out_cols)
    i, j = c // Wp, c % Wp
    target = jnp.where(c < Hp * Wp, 2 * i * W + 2 * j, -1)
    q = jnp.arange(Lm)
    return (q[:, None] == target[None, :]).astype(jnp.float32)


def prepare_params(params):
    """One-time weight re-layout (no per-call .T / transposes in forward)."""
    return {
        # conv1: (Co, kh*kw) scalars for the Ci=1 VPU path.
        "w1": params["w1"].reshape(32, 25).astype(jnp.float32),
        "b1": params["b1"].reshape(32, 1).astype(jnp.float32),
        # conv2: (tap, Co, Ci) bf16 for per-tap MXU contraction.
        "w2": params["w2"].transpose(2, 3, 0, 1).reshape(25, 64, 32)
                          .astype(jnp.bfloat16),
        "b2": params["b2"].reshape(64, 1).astype(jnp.float32),
        # fc: K-major (pre-transposed) bf16 weights; fc2 padded to 128 lanes.
        "wf1": params["wf1"].T.astype(jnp.bfloat16),
        "bf1": params["bf1"].reshape(1, 1024).astype(jnp.float32),
        "wf2": jnp.zeros((1024, 128), jnp.bfloat16)
                  .at[:, 0].set(params["wf2"][0].astype(jnp.bfloat16)),
        "bf2": jnp.zeros((1, 128), jnp.float32).at[0, 0].set(params["bf2"][0]),
        # fused-pool selection matrices (constants derived from shapes).
        "S1": _pool_select_matrix(28, 24, 24, CFG1["Lm"], CFG1["Lout"]),
        "S2": _pool_select_matrix(12, 8, 8, CFG2["Lm"], CFG2["Lout"]),
    }


def _forward(prep, x):
    N = x.shape[0]
    assert x.shape[1:] == (1, 28, 28), x.shape
    # Flatten spatial (bitcast reshape) + zero-pad lanes 784 -> 896.
    x1 = jnp.pad(x.reshape(N, 1, 28 * 28), ((0, 0), (0, 0), (0, 896 - 784)))
    a1 = _conv_stage(x1, prep["w1"], prep["b1"], prep["S1"],
                     cfg=CFG1, out_dtype=jnp.bfloat16)          # (N, 32, 256)
    a2 = _conv_stage(a1, prep["w2"], prep["b2"], prep["S2"],
                     cfg=CFG2, out_dtype=jnp.bfloat16)          # (N, 64, 16)
    feat = a2.reshape(N, 64 * 16)   # free reshape; == torch x.view(N, -1) order
    return _fc_fused(feat, prep["wf1"], prep["bf1"], prep["wf2"], prep["bf2"])


forward = jax.jit(_forward)


# --------------------------- deterministic params ---------------------------

def init_params(key):
    ks = jax.random.split(key, 8)

    def u(k, shape, fan_in):
        bound = 1.0 / jnp.sqrt(fan_in)
        return jax.random.uniform(k, shape, jnp.float32, -bound, bound)

    return {
        "w1": u(ks[0], (32, 1, 5, 5), 1 * 5 * 5),     # nn.Conv2d(1, 32, 5, 1)
        "b1": u(ks[1], (32,), 1 * 5 * 5),
        "w2": u(ks[2], (64, 32, 5, 5), 32 * 5 * 5),   # nn.Conv2d(32, 64, 5, 1)
        "b2": u(ks[3], (64,), 32 * 5 * 5),
        "wf1": u(ks[4], (1024, 1024), 1024),          # nn.Linear(1024, 1024)
        "bf1": u(ks[5], (1024,), 1024),
        "wf2": u(ks[6], (1, 1024), 1024),             # nn.Linear(1024, 1)
        "bf2": u(ks[7], (1,), 1024),
    }


# ------------------------------ pure-JAX ref ---------------------------------

def _leaky(v):
    return jnp.where(v >= 0, v, LEAKY_SLOPE * v)


def reference(params, x):
    y = lax.conv_general_dilated(x, params["w1"], (1, 1), "VALID",
                                 dimension_numbers=("NCHW", "OIHW", "NCHW"))
    y = _leaky(y + params["b1"].reshape(1, -1, 1, 1))
    y = lax.reduce_window(y, -jnp.inf, lax.max, (1, 1, 2, 2), (1, 1, 2, 2), "VALID")
    y = lax.conv_general_dilated(y, params["w2"], (1, 1), "VALID",
                                 dimension_numbers=("NCHW", "OIHW", "NCHW"))
    y = _leaky(y + params["b2"].reshape(1, -1, 1, 1))
    y = lax.reduce_window(y, -jnp.inf, lax.max, (1, 1, 2, 2), (1, 1, 2, 2), "VALID")
    y = y.reshape(y.shape[0], -1)
    y = _leaky(y @ params["wf1"].T + params["bf1"])
    return y @ params["wf2"].T + params["bf2"]


if __name__ == "__main__":
    key = jax.random.PRNGKey(0)
    pkey, xkey = jax.random.split(key)
    params = init_params(pkey)
    prep = prepare_params(params)
    # The fc layer (1024 = 64*4*4) forces 28x28 spatial input (MNIST-sized).
    x = jax.random.normal(xkey, (2, 1, 28, 28), jnp.float32)

    out = jax.block_until_ready(forward(prep, x))
    ref = reference(params, x)

    assert out.shape == (2, 1), out.shape
    # Tolerance accounts for bf16 MXU inputs (f32 accumulation), per review.
    assert jnp.allclose(out, ref, atol=3e-2, rtol=3e-2), (out, ref)
    print("KERNEL_OK")
</pallas_src>

<mosaic_0001>
module attributes {stable_mosaic.version = 11 : i64} {
  func.func @_conv_pool_kernel(%arg0: i32, %arg1: memref<1x1x896xf32, #tpu.memory_space<vmem>>, %arg2: memref<32x25xf32, #tpu.memory_space<vmem>>, %arg3: memref<32x1xf32, #tpu.memory_space<vmem>>, %arg4: memref<640x256xf32, #tpu.memory_space<vmem>>, %arg5: memref<1x32x256xbf16, #tpu.memory_space<vmem>>) attributes {dimension_semantics = [#tpu.dimension_semantics<parallel>], iteration_bounds = array<i64: 2>, scalar_prefetch = 0 : i64, scratch_operands = 0 : i64, tpu.core_type = #tpu.core_type<tc>, window_params = [{transform_indices = @transform_0, window_bounds = array<i64: 1, 1, 896>}, {pipeline_mode = #tpu.pipeline_mode<synchronous>, transform_indices = @transform_1, window_bounds = array<i64: 32, 25>}, {pipeline_mode = #tpu.pipeline_mode<synchronous>, transform_indices = @transform_2, window_bounds = array<i64: 32, 1>}, {pipeline_mode = #tpu.pipeline_mode<synchronous>, transform_indices = @transform_3, window_bounds = array<i64: 640, 256>}, {transform_indices = @transform_4, window_bounds = array<i64: 1, 32, 256>}]} {
    %c0 = arith.constant 0 : index
    %c0_0 = arith.constant 0 : index
    %c0_1 = arith.constant 0 : index
    %0 = vector.load %arg1[%c0, %c0_0, %c0_1] : memref<1x1x896xf32, #tpu.memory_space<vmem>>, vector<1x1x896xf32>
    %1 = vector.shape_cast %0 : vector<1x1x896xf32> to vector<1x896xf32>
    %cst = arith.constant 0.000000e+00 : f32
    %2 = vector.broadcast %cst : f32 to vector<32x672xf32>
    %c0_2 = arith.constant 0 : index
    %c0_3 = arith.constant 0 : index
    %3 = vector.load %arg2[%c0_2, %c0_3] : memref<32x25xf32, #tpu.memory_space<vmem>>, vector<32x25xf32>
    %4 = vector.extract_strided_slice %3 {offsets = [0, 0], sizes = [32, 1], strides = [1, 1]} : vector<32x25xf32> to vector<32x1xf32>
    %5 = vector.extract_strided_slice %1 {offsets = [0, 0], sizes = [1, 672], strides = [1, 1]} : vector<1x896xf32> to vector<1x672xf32>
    %6 = vector.broadcast %4 : vector<32x1xf32> to vector<32x672xf32>
    %7 = vector.broadcast %5 : vector<1x672xf32> to vector<32x672xf32>
    %8 = arith.mulf %6, %7 : vector<32x672xf32>
    %9 = arith.addf %2, %8 : vector<32x672xf32>
    %10 = vector.extract_strided_slice %3 {offsets = [0, 1], sizes = [32, 1], strides = [1, 1]} : vector<32x25xf32> to vector<32x1xf32>
    %11 = vector.extract_strided_slice %1 {offsets = [0, 1], sizes = [1, 672], strides = [1, 1]} : vector<1x896xf32> to vector<1x672xf32>
    %12 = vector.broadcast %10 : vector<32x1xf32> to vector<32x672xf32>
    %13 = vector.broadcast %11 : vector<1x672xf32> to vector<32x672xf32>
    %14 = arith.mulf %12, %13 : vector<32x672xf32>
    %15 = arith.addf %9, %14 : vector<32x672xf32>
    %16 = vector.extract_strided_slice %3 {offsets = [0, 2], sizes = [32, 1], strides = [1, 1]} : vector<32x25xf32> to vector<32x1xf32>
    %17 = vector.extract_strided_slice %1 {offsets = [0, 2], sizes = [1, 672], strides = [1, 1]} : vector<1x896xf32> to vector<1x672xf32>
    %18 = vector.broadcast %16 : vector<32x1xf32> to vector<32x672xf32>
    %19 = vector.broadcast %17 : vector<1x672xf32> to vector<32x672xf32>
    %20 = arith.mulf %18, %19 : vector<32x672xf32>
    %21 = arith.addf %15, %20 : vector<32x672xf32>
    %22 = vector.extract_strided_slice %3 {offsets = [0, 3], sizes = [32, 1], strides = [1, 1]} : vector<32x25xf32> to vector<32x1xf32>
    %23 = vector.extract_strided_slice %1 {offsets = [0, 3], sizes = [1, 672], strides = [1, 1]} : vector<1x896xf32> to vector<1x672xf32>
    %24 = vector.broadcast %22 : vector<32x1xf32> to vector<32x672xf32>
    %25 = vector.broadcast %23 : vector<1x672xf32> to vector<32x672xf32>
    %26 = arith.mulf %24, %25 : vector<32x672xf32>
    %27 = arith.addf %21, %26 : vector<32x672xf32>
    %28 = vector.extract_strided_slice %3 {offsets = [0, 4], sizes = [32, 1], strides = [1, 1]} : vector<32x25xf32> to vector<32x1xf32>
    %29 = vector.extract_strided_slice %1 {offsets = [0, 4], sizes = [1, 672], strides = [1, 1]} : vector<1x896xf32> to vector<1x672xf32>
    %30 = vector.broadcast %28 : vector<32x1xf32> to vector<32x672xf32>
    %31 = vector.broadcast %29 : vector<1x672xf32> to vector<32x672xf32>
    %32 = arith.mulf %30, %31 : vector<32x672xf32>
    %33 = arith.addf %27, %32 : vector<32x672xf32>
    %34 = vector.extract_strided_slice %3 {offsets = [0, 5], sizes = [32, 1], strides = [1, 1]} : vector<32x25xf32> to vector<32x1xf32>
    %35 = vector.extract_strided_slice %1 {offsets = [0, 28], sizes = [1, 672], strides = [1, 1]} : vector<1x896xf32> to vector<1x672xf32>
    %36 = vector.broadcast %34 : vector<32x1xf32> to vector<32x672xf32>
    %37 = vector.broadcast %35 : vector<1x672xf32> to vector<32x672xf32>
    %38 = arith.mulf %36, %37 : vector<32x672xf32>
    %39 = arith.addf %33, %38 : vector<32x672xf32>
    %40 = vector.extract_strided_slice %3 {offsets = [0, 6], sizes = [32, 1], strides = [1, 1]} : vector<32x25xf32> to vector<32x1xf32>
    %41 = vector.extract_strided_slice %1 {offsets = [0, 29], sizes = [1, 672], strides = [1, 1]} : vector<1x896xf32> to vector<1x672xf32>
    %42 = vector.broadcast %40 : vector<32x1xf32> to vector<32x672xf32>
    %43 = vector.broadcast %41 : vector<1x672xf32> to vector<32x672xf32>
    %44 = arith.mulf %42, %43 : vector<32x672xf32>
    %45 = arith.addf %39, %44 : vector<32x672xf32>
    %46 = vector.extract_strided_slice %3 {offsets = [0, 7], sizes = [32, 1], strides = [1, 1]} : vector<32x25xf32> to vector<32x1xf32>
    %47 = vector.extract_strided_slice %1 {offsets = [0, 30], sizes = [1, 672], strides = [1, 1]} : vector<1x896xf32> to vector<1x672xf32>
    %48 = vector.broadcast %46 : vector<32x1xf32> to vector<32x672xf32>
    %49 = vector.broadcast %47 : vector<1x672xf32> to vector<32x672xf32>
    %50 = arith.mulf %48, %49 : vector<32x672xf32>
    %51 = arith.addf %45, %50 : vector<32x672xf32>
    %52 = vector.extract_strided_slice %3 {offsets = [0, 8], sizes = [32, 1], strides = [1, 1]} : vector<32x25xf32> to vector<32x1xf32>
    %53 = vector.extract_strided_slice %1 {offsets = [0, 31], sizes = [1, 672], strides = [1, 1]} : vector<1x896xf32> to vector<1x672xf32>
    %54 = vector.broadcast %52 : vector<32x1xf32> to vector<32x672xf32>
    %55 = vector.broadcast %53 : vector<1x672xf32> to vector<32x672xf32>
    %56 = arith.mulf %54, %55 : vector<32x672xf32>
    %57 = arith.addf %51, %56 : vector<32x672xf32>
    %58 = vector.extract_strided_slice %3 {offsets = [0, 9], sizes = [32, 1], strides = [1, 1]} : vector<32x25xf32> to vector<32x1xf32>
    %59 = vector.extract_strided_slice %1 {offsets = [0, 32], sizes = [1, 672], strides = [1, 1]} : vector<1x896xf32> to vector<1x672xf32>
    %60 = vector.broadcast %58 : vector<32x1xf32> to vector<32x672xf32>
    %61 = vector.broadcast %59 : vector<1x672xf32> to vector<32x672xf32>
    %62 = arith.mulf %60, %61 : vector<32x672xf32>
    %63 = arith.addf %57, %62 : vector<32x672xf32>
    %64 = vector.extract_strided_slice %3 {offsets = [0, 10], sizes = [32, 1], strides = [1, 1]} : vector<32x25xf32> to vector<32x1xf32>
    %65 = vector.extract_strided_slice %1 {offsets = [0, 56], sizes = [1, 672], strides = [1, 1]} : vector<1x896xf32> to vector<1x672xf32>
    %66 = vector.broadcast %64 : vector<32x1xf32> to vector<32x672xf32>
    %67 = vector.broadcast %65 : vector<1x672xf32> to vector<32x672xf32>
    %68 = arith.mulf %66, %67 : vector<32x672xf32>
    %69 = arith.addf %63, %68 : vector<32x672xf32>
    %70 = vector.extract_strided_slice %3 {offsets = [0, 11], sizes = [32, 1], strides = [1, 1]} : vector<32x25xf32> to vector<32x1xf32>
    %71 = vector.extract_strided_slice %1 {offsets = [0, 57], sizes = [1, 672], strides = [1, 1]} : vector<1x896xf32> to vector<1x672xf32>
    %72 = vector.broadcast %70 : vector<32x1xf32> to vector<32x672xf32>
    %73 = vector.broadcast %71 : vector<1x672xf32> to vector<32x672xf32>
    %74 = arith.mulf %72, %73 : vector<32x672xf32>
    %75 = arith.addf %69, %74 : vector<32x672xf32>
    %76 = vector.extract_strided_slice %3 {offsets = [0, 12], sizes = [32, 1], strides = [1, 1]} : vector<32x25xf32> to vector<32x1xf32>
    %77 = vector.extract_strided_slice %1 {offsets = [0, 58], sizes = [1, 672], strides = [1, 1]} : vector<1x896xf32> to vector<1x672xf32>
    %78 = vector.broadcast %76 : vector<32x1xf32> to vector<32x672xf32>
    %79 = vector.broadcast %77 : vector<1x672xf32> to vector<32x672xf32>
    %80 = arith.mulf %78, %79 : vector<32x672xf32>
    %81 = arith.addf %75, %80 : vector<32x672xf32>
    %82 = vector.extract_strided_slice %3 {offsets = [0, 13], sizes = [32, 1], strides = [1, 1]} : vector<32x25xf32> to vector<32x1xf32>
    %83 = vector.extract_strided_slice %1 {offsets = [0, 59], sizes = [1, 672], strides = [1, 1]} : vector<1x896xf32> to vector<1x672xf32>
    %84 = vector.broadcast %82 : vector<32x1xf32> to vector<32x672xf32>
    %85 = vector.broadcast %83 : vector<1x672xf32> to vector<32x672xf32>
    %86 = arith.mulf %84, %85 : vector<32x672xf32>
    %87 = arith.addf %81, %86 : vector<32x672xf32>
    %88 = vector.extract_strided_slice %3 {offsets = [0, 14], sizes = [32, 1], strides = [1, 1]} : vector<32x25xf32> to vector<32x1xf32>
    %89 = vector.extract_strided_slice %1 {offsets = [0, 60], sizes = [1, 672], strides = [1, 1]} : vector<1x896xf32> to vector<1x672xf32>
    %90 = vector.broadcast %88 : vector<32x1xf32> to vector<32x672xf32>
    %91 = vector.broadcast %89 : vector<1x672xf32> to vector<32x672xf32>
    %92 = arith.mulf %90, %91 : vector<32x672xf32>
    %93 = arith.addf %87, %92 : vector<32x672xf32>
    %94 = vector.extract_strided_slice %3 {offsets = [0, 15], sizes = [32, 1], strides = [1, 1]} : vector<32x25xf32> to vector<32x1xf32>
    %95 = vector.extract_strided_slice %1 {offsets = [0, 84], sizes = [1, 672], strides = [1, 1]} : vector<1x896xf32> to vector<1x672xf32>
    %96 = vector.broadcast %94 : vector<32x1xf32> to vector<32x672xf32>
    %97 = vector.broadcast %95 : vector<1x672xf32> to vector<32x672xf32>
    %98 = arith.mulf %96, %97 : vector<32x672xf32>
    %99 = arith.addf %93, %98 : vector<32x672xf32>
    %100 = vector.extract_strided_slice %3 {offsets = [0, 16], sizes = [32, 1], strides = [1, 1]} : vector<32x25xf32> to vector<32x1xf32>
    %101 = vector.extract_strided_slice %1 {offsets = [0, 85], sizes = [1, 672], strides = [1, 1]} : vector<1x896xf32> to vector<1x672xf32>
    %102 = vector.broadcast %100 : vector<32x1xf32> to vector<32x672xf32>
    %103 = vector.broadcast %101 : vector<1x672xf32> to vector<32x672xf32>
    %104 = arith.mulf %102, %103 : vector<32x672xf32>
    %105 = arith.addf %99, %104 : vector<32x672xf32>
    %106 = vector.extract_strided_slice %3 {offsets = [0, 17], sizes = [32, 1], strides = [1, 1]} : vector<32x25xf32> to vector<32x1xf32>
    %107 = vector.extract_strided_slice %1 {offsets = [0, 86], sizes = [1, 672], strides = [1, 1]} : vector<1x896xf32> to vector<1x672xf32>
    %108 = vector.broadcast %106 : vector<32x1xf32> to vector<32x672xf32>
    %109 = vector.broadcast %107 : vector<1x672xf32> to vector<32x672xf32>
    %110 = arith.mulf %108, %109 : vector<32x672xf32>
    %111 = arith.addf %105, %110 : vector<32x672xf32>
    %112 = vector.extract_strided_slice %3 {offsets = [0, 18], sizes = [32, 1], strides = [1, 1]} : vector<32x25xf32> to vector<32x1xf32>
    %113 = vector.extract_strided_slice %1 {offsets = [0, 87], sizes = [1, 672], strides = [1, 1]} : vector<1x896xf32> to vector<1x672xf32>
    %114 = vector.broadcast %112 : vector<32x1xf32> to vector<32x672xf32>
    %115 = vector.broadcast %113 : vector<1x672xf32> to vector<32x672xf32>
    %116 = arith.mulf %114, %115 : vector<32x672xf32>
    %117 = arith.addf %111, %116 : vector<32x672xf32>
    %118 = vector.extract_strided_slice %3 {offsets = [0, 19], sizes = [32, 1], strides = [1, 1]} : vector<32x25xf32> to vector<32x1xf32>
    %119 = vector.extract_strided_slice %1 {offsets = [0, 88], sizes = [1, 672], strides = [1, 1]} : vector<1x896xf32> to vector<1x672xf32>
    %120 = vector.broadcast %118 : vector<32x1xf32> to vector<32x672xf32>
    %121 = vector.broadcast %119 : vector<1x672xf32> to vector<32x672xf32>
    %122 = arith.mulf %120, %121 : vector<32x672xf32>
    %123 = arith.addf %117, %122 : vector<32x672xf32>
    %124 = vector.extract_strided_slice %3 {offsets = [0, 20], sizes = [32, 1], strides = [1, 1]} : vector<32x25xf32> to vector<32x1xf32>
    %125 = vector.extract_strided_slice %1 {offsets = [0, 112], sizes = [1, 672], strides = [1, 1]} : vector<1x896xf32> to vector<1x672xf32>
    %126 = vector.broadcast %124 : vector<32x1xf32> to vector<32x672xf32>
    %127 = vector.broadcast %125 : vector<1x672xf32> to vector<32x672xf32>
    %128 = arith.mulf %126, %127 : vector<32x672xf32>
    %129 = arith.addf %123, %128 : vector<32x672xf32>
    %130 = vector.extract_strided_slice %3 {offsets = [0, 21], sizes = [32, 1], strides = [1, 1]} : vector<32x25xf32> to vector<32x1xf32>
    %131 = vector.extract_strided_slice %1 {offsets = [0, 113], sizes = [1, 672], strides = [1, 1]} : vector<1x896xf32> to vector<1x672xf32>
    %132 = vector.broadcast %130 : vector<32x1xf32> to vector<32x672xf32>
    %133 = vector.broadcast %131 : vector<1x672xf32> to vector<32x672xf32>
    %134 = arith.mulf %132, %133 : vector<32x672xf32>
    %135 = arith.addf %129, %134 : vector<32x672xf32>
    %136 = vector.extract_strided_slice %3 {offsets = [0, 22], sizes = [32, 1], strides = [1, 1]} : vector<32x25xf32> to vector<32x1xf32>
    %137 = vector.extract_strided_slice %1 {offsets = [0, 114], sizes = [1, 672], strides = [1, 1]} : vector<1x896xf32> to vector<1x672xf32>
    %138 = vector.broadcast %136 : vector<32x1xf32> to vector<32x672xf32>
    %139 = vector.broadcast %137 : vector<1x672xf32> to vector<32x672xf32>
    %140 = arith.mulf %138, %139 : vector<32x672xf32>
    %141 = arith.addf %135, %140 : vector<32x672xf32>
    %142 = vector.extract_strided_slice %3 {offsets = [0, 23], sizes = [32, 1], strides = [1, 1]} : vector<32x25xf32> to vector<32x1xf32>
    %143 = vector.extract_strided_slice %1 {offsets = [0, 115], sizes = [1, 672], strides = [1, 1]} : vector<1x896xf32> to vector<1x672xf32>
    %144 = vector.broadcast %142 : vector<32x1xf32> to vector<32x672xf32>
    %145 = vector.broadcast %143 : vector<1x672xf32> to vector<32x672xf32>
    %146 = arith.mulf %144, %145 : vector<32x672xf32>
    %147 = arith.addf %141, %146 : vector<32x672xf32>
    %148 = vector.extract_strided_slice %3 {offsets = [0, 24], sizes = [32, 1], strides = [1, 1]} : vector<32x25xf32> to vector<32x1xf32>
    %149 = vector.extract_strided_slice %1 {offsets = [0, 116], sizes = [1, 672], strides = [1, 1]} : vector<1x896xf32> to vector<1x672xf32>
    %150 = vector.broadcast %148 : vector<32x1xf32> to vector<32x672xf32>
    %151 = vector.broadcast %149 : vector<1x672xf32> to vector<32x672xf32>
    %152 = arith.mulf %150, %151 : vector<32x672xf32>
    %153 = arith.addf %147, %152 : vector<32x672xf32>
    %154 = vector.extract_strided_slice %153 {offsets = [0, 0], sizes = [32, 640], strides = [1, 1]} : vector<32x672xf32> to vector<32x640xf32>
    %155 = vector.extract_strided_slice %153 {offsets = [0, 1], sizes = [32, 640], strides = [1, 1]} : vector<32x672xf32> to vector<32x640xf32>
    %156 = arith.maximumf %154, %155 : vector<32x640xf32>
    %157 = vector.extract_strided_slice %153 {offsets = [0, 28], sizes = [32, 640], strides = [1, 1]} : vector<32x672xf32> to vector<32x640xf32>
    %158 = vector.extract_strided_slice %153 {offsets = [0, 29], sizes = [32, 640], strides = [1, 1]} : vector<32x672xf32> to vector<32x640xf32>
    %159 = arith.maximumf %157, %158 : vector<32x640xf32>
    %160 = arith.maximumf %156, %159 : vector<32x640xf32>
    %c0_4 = arith.constant 0 : index
    %c0_5 = arith.constant 0 : index
    %161 = vector.load %arg4[%c0_4, %c0_5] : memref<640x256xf32, #tpu.memory_space<vmem>>, vector<640x256xf32>
    %cst_6 = arith.constant dense<0.000000e+00> : vector<32x256xf32>
    %162 = tpu.matmul %160, %161, %cst_6 {dimension_numbers = #tpu.dot_dimension_numbers<[1], [0], [0], [1], [0, 0, 1, 1], [], []>} : vector<32x640xf32>, vector<640x256xf32>, vector<32x256xf32> -> vector<32x256xf32>
    %c0_7 = arith.constant 0 : index
    %c0_8 = arith.constant 0 : index
    %163 = vector.load %arg3[%c0_7, %c0_8] : memref<32x1xf32, #tpu.memory_space<vmem>>, vector<32x1xf32>
    %164 = vector.broadcast %163 : vector<32x1xf32> to vector<32x256xf32>
    %165 = arith.addf %162, %164 : vector<32x256xf32>
    %cst_9 = arith.constant 0.000000e+00 : f32
    %166 = vector.broadcast %cst_9 : f32 to vector<32x256xf32>
    %167 = arith.cmpf oge, %165, %166 : vector<32x256xf32>
    %cst_10 = arith.constant 0.00999999977 : f32
    %168 = vector.broadcast %cst_10 : f32 to vector<32x256xf32>
    %169 = arith.mulf %168, %165 : vector<32x256xf32>
    %170 = arith.select %167, %165, %169 : vector<32x256xi1>, vector<32x256xf32>
    %171 = arith.truncf %170 : vector<32x256xf32> to vector<32x256xbf16>
    %c0_11 = arith.constant 0 : index
    %c0_12 = arith.constant 0 : index
    %c0_13 = arith.constant 0 : index
    %172 = vector.load %arg5[%c0_11, %c0_12, %c0_13] : memref<1x32x256xbf16, #tpu.memory_space<vmem>>, vector<1x32x256xbf16>
    %173 = vector.shape_cast %172 : vector<1x32x256xbf16> to vector<32x256xbf16>
    %174 = vector.shape_cast %171 : vector<32x256xbf16> to vector<1x32x256xbf16>
    tpu.vector_store %arg5[%c0_11, %c0_12, %c0_13], %174 {strides = array<i32>} : memref<1x32x256xbf16, #tpu.memory_space<vmem>>, vector<1x32x256xbf16>,
    return
  }
  func.func @transform_0(%arg0: i32) -> (i32, i32, i32) {
    %c0_i32 = arith.constant 0 : i32
    %c0_i32_0 = arith.constant 0 : i32
    %c0_i32_1 = arith.constant 0 : i32
    return %arg0, %c0_i32, %c0_i32_0 : i32, i32, i32
  }
  func.func @transform_1(%arg0: i32) -> (i32, i32) {
    %c0_i32 = arith.constant 0 : i32
    %c0_i32_0 = arith.constant 0 : i32
    %c0_i32_1 = arith.constant 0 : i32
    return %c0_i32, %c0_i32_0 : i32, i32
  }
  func.func @transform_2(%arg0: i32) -> (i32, i32) {
    %c0_i32 = arith.constant 0 : i32
    %c0_i32_0 = arith.constant 0 : i32
    %c0_i32_1 = arith.constant 0 : i32
    return %c0_i32, %c0_i32_0 : i32, i32
  }
  func.func @transform_3(%arg0: i32) -> (i32, i32) {
    %c0_i32 = arith.constant 0 : i32
    %c0_i32_0 = arith.constant 0 : i32
    %c0_i32_1 = arith.constant 0 : i32
    return %c0_i32, %c0_i32_0 : i32, i32
  }
  func.func @transform_4(%arg0: i32) -> (i32, i32, i32) {
    %c0_i32 = arith.constant 0 : i32
    %c0_i32_0 = arith.constant 0 : i32
    %c0_i32_1 = arith.constant 0 : i32
    return %arg0, %c0_i32, %c0_i32_0 : i32, i32, i32
  }
}

module attributes {stable_mosaic.version = 11 : i64} {
  func.func @_conv_pool_kernel(%arg0: i32, %arg1: memref<1x32x256xbf16, #tpu.memory_space<vmem>>, %arg2: memref<25x64x32xbf16, #tpu.memory_space<vmem>>, %arg3: memref<64x1xf32, #tpu.memory_space<vmem>>, %arg4: memref<80x16xf32, #tpu.memory_space<vmem>>, %arg5: memref<1x64x16xbf16, #tpu.memory_space<vmem>>) attributes {dimension_semantics = [#tpu.dimension_semantics<parallel>], iteration_bounds = array<i64: 2>, scalar_prefetch = 0 : i64, scratch_operands = 0 : i64, tpu.core_type = #tpu.core_type<tc>, window_params = [{transform_indices = @transform_0, window_bounds = array<i64: 1, 32, 256>}, {pipeline_mode = #tpu.pipeline_mode<synchronous>, transform_indices = @transform_1, window_bounds = array<i64: 25, 64, 32>}, {pipeline_mode = #tpu.pipeline_mode<synchronous>, transform_indices = @transform_2, window_bounds = array<i64: 64, 1>}, {pipeline_mode = #tpu.pipeline_mode<synchronous>, transform_indices = @transform_3, window_bounds = array<i64: 80, 16>}, {transform_indices = @transform_4, window_bounds = array<i64: 1, 64, 16>}]} {
    %c0 = arith.constant 0 : index
    %c0_0 = arith.constant 0 : index
    %c0_1 = arith.constant 0 : index
    %0 = vector.load %arg1[%c0, %c0_0, %c0_1] : memref<1x32x256xbf16, #tpu.memory_space<vmem>>, vector<1x32x256xbf16>
    %1 = vector.shape_cast %0 : vector<1x32x256xbf16> to vector<32x256xbf16>
    %cst = arith.constant 0.000000e+00 : f32
    %2 = vector.broadcast %cst : f32 to vector<64x96xf32>
    %c0_2 = arith.constant 0 : index
    %c0_3 = arith.constant 0 : index
    %c0_4 = arith.constant 0 : index
    %3 = vector.load %arg2[%c0_2, %c0_3, %c0_4] : memref<25x64x32xbf16, #tpu.memory_space<vmem>>, vector<1x64x32xbf16>
    %4 = vector.shape_cast %3 : vector<1x64x32xbf16> to vector<64x32xbf16>
    %5 = vector.extract_strided_slice %1 {offsets = [0, 0], sizes = [32, 96], strides = [1, 1]} : vector<32x256xbf16> to vector<32x96xbf16>
    %cst_5 = arith.constant dense<0.000000e+00> : vector<64x96xf32>
    %6 = tpu.matmul %4, %5, %cst_5 {dimension_numbers = #tpu.dot_dimension_numbers<[1], [0], [0], [1], [0, 0, 1, 1], [], []>} : vector<64x32xbf16>, vector<32x96xbf16>, vector<64x96xf32> -> vector<64x96xf32>
    %7 = arith.addf %2, %6 : vector<64x96xf32>
    %c1 = arith.constant 1 : index
    %c0_6 = arith.constant 0 : index
    %c0_7 = arith.constant 0 : index
    %8 = vector.load %arg2[%c1, %c0_6, %c0_7] : memref<25x64x32xbf16, #tpu.memory_space<vmem>>, vector<1x64x32xbf16>
    %9 = vector.shape_cast %8 : vector<1x64x32xbf16> to vector<64x32xbf16>
    %10 = vector.extract_strided_slice %1 {offsets = [0, 1], sizes = [32, 96], strides = [1, 1]} : vector<32x256xbf16> to vector<32x96xbf16>
    %cst_8 = arith.constant dense<0.000000e+00> : vector<64x96xf32>
    %11 = tpu.matmul %9, %10, %cst_8 {dimension_numbers = #tpu.dot_dimension_numbers<[1], [0], [0], [1], [0, 0, 1, 1], [], []>} : vector<64x32xbf16>, vector<32x96xbf16>, vector<64x96xf32> -> vector<64x96xf32>
    %12 = arith.addf %7, %11 : vector<64x96xf32>
    %c2 = arith.constant 2 : index
    %c0_9 = arith.constant 0 : index
    %c0_10 = arith.constant 0 : index
    %13 = vector.load %arg2[%c2, %c0_9, %c0_10] : memref<25x64x32xbf16, #tpu.memory_space<vmem>>, vector<1x64x32xbf16>
    %14 = vector.shape_cast %13 : vector<1x64x32xbf16> to vector<64x32xbf16>
    %15 = vector.extract_strided_slice %1 {offsets = [0, 2], sizes = [32, 96], strides = [1, 1]} : vector<32x256xbf16> to vector<32x96xbf16>
    %cst_11 = arith.constant dense<0.000000e+00> : vector<64x96xf32>
    %16 = tpu.matmul %14, %15, %cst_11 {dimension_numbers = #tpu.dot_dimension_numbers<[1], [0], [0], [1], [0, 0, 1, 1], [], []>} : vector<64x32xbf16>, vector<32x96xbf16>, vector<64x96xf32> -> vector<64x96xf32>
    %17 = arith.addf %12, %16 : vector<64x96xf32>
    %c3 = arith.constant 3 : index
    %c0_12 = arith.constant 0 : index
    %c0_13 = arith.constant 0 : index
    %18 = vector.load %arg2[%c3, %c0_12, %c0_13] : memref<25x64x32xbf16, #tpu.memory_space<vmem>>, vector<1x64x32xbf16>
    %19 = vector.shape_cast %18 : vector<1x64x32xbf16> to vector<64x32xbf16>
    %20 = vector.extract_strided_slice %1 {offsets = [0, 3], sizes = [32, 96], strides = [1, 1]} : vector<32x256xbf16> to vector<32x96xbf16>
    %cst_14 = arith.constant dense<0.000000e+00> : vector<64x96xf32>
    %21 = tpu.matmul %19, %20, %cst_14 {dimension_numbers = #tpu.dot_dimension_numbers<[1], [0], [0], [1], [0, 0, 1, 1], [], []>} : vector<64x32xbf16>, vector<32x96xbf16>, vector<64x96xf32> -> vector<64x96xf32>
    %22 = arith.addf %17, %21 : vector<64x96xf32>
    %c4 = arith.constant 4 : index
    %c0_15 = arith.constant 0 : index
    %c0_16 = arith.constant 0 : index
    %23 = vector.load %arg2[%c4, %c0_15, %c0_16] : memref<25x64x32xbf16, #tpu.memory_space<vmem>>, vector<1x64x32xbf16>
    %24 = vector.shape_cast %23 : vector<1x64x32xbf16> to vector<64x32xbf16>
    %25 = vector.extract_strided_slice %1 {offsets = [0, 4], sizes = [32, 96], strides = [1, 1]} : vector<32x256xbf16> to vector<32x96xbf16>
    %cst_17 = arith.constant dense<0.000000e+00> : vector<64x96xf32>
    %26 = tpu.matmul %24, %25, %cst_17 {dimension_numbers = #tpu.dot_dimension_numbers<[1], [0], [0], [1], [0, 0, 1, 1], [], []>} : vector<64x32xbf16>, vector<32x96xbf16>, vector<64x96xf32> -> vector<64x96xf32>
    %27 = arith.addf %22, %26 : vector<64x96xf32>
    %c5 = arith.constant 5 : index
    %c0_18 = arith.constant 0 : index
    %c0_19 = arith.constant 0 : index
    %28 = vector.load %arg2[%c5, %c0_18, %c0_19] : memref<25x64x32xbf16, #tpu.memory_space<vmem>>, vector<1x64x32xbf16>
    %29 = vector.shape_cast %28 : vector<1x64x32xbf16> to vector<64x32xbf16>
    %30 = vector.extract_strided_slice %1 {offsets = [0, 12], sizes = [32, 96], strides = [1, 1]} : vector<32x256xbf16> to vector<32x96xbf16>
    %cst_20 = arith.constant dense<0.000000e+00> : vector<64x96xf32>
    %31 = tpu.matmul %29, %30, %cst_20 {dimension_numbers = #tpu.dot_dimension_numbers<[1], [0], [0], [1], [0, 0, 1, 1], [], []>} : vector<64x32xbf16>, vector<32x96xbf16>, vector<64x96xf32> -> vector<64x96xf32>
    %32 = arith.addf %27, %31 : vector<64x96xf32>
    %c6 = arith.constant 6 : index
    %c0_21 = arith.constant 0 : index
    %c0_22 = arith.constant 0 : index
    %33 = vector.load %arg2[%c6, %c0_21, %c0_22] : memref<25x64x32xbf16, #tpu.memory_space<vmem>>, vector<1x64x32xbf16>
    %34 = vector.shape_cast %33 : vector<1x64x32xbf16> to vector<64x32xbf16>
    %35 = vector.extract_strided_slice %1 {offsets = [0, 13], sizes = [32, 96], strides = [1, 1]} : vector<32x256xbf16> to vector<32x96xbf16>
    %cst_23 = arith.constant dense<0.000000e+00> : vector<64x96xf32>
    %36 = tpu.matmul %34, %35, %cst_23 {dimension_numbers = #tpu.dot_dimension_numbers<[1], [0], [0], [1], [0, 0, 1, 1], [], []>} : vector<64x32xbf16>, vector<32x96xbf16>, vector<64x96xf32> -> vector<64x96xf32>
    %37 = arith.addf %32, %36 : vector<64x96xf32>
    %c7 = arith.constant 7 : index
    %c0_24 = arith.constant 0 : index
    %c0_25 = arith.constant 0 : index
    %38 = vector.load %arg2[%c7, %c0_24, %c0_25] : memref<25x64x32xbf16, #tpu.memory_space<vmem>>, vector<1x64x32xbf16>
    %39 = vector.shape_cast %38 : vector<1x64x32xbf16> to vector<64x32xbf16>
    %40 = vector.extract_strided_slice %1 {offsets = [0, 14], sizes = [32, 96], strides = [1, 1]} : vector<32x256xbf16> to vector<32x96xbf16>
    %cst_26 = arith.constant dense<0.000000e+00> : vector<64x96xf32>
    %41 = tpu.matmul %39, %40, %cst_26 {dimension_numbers = #tpu.dot_dimension_numbers<[1], [0], [0], [1], [0, 0, 1, 1], [], []>} : vector<64x32xbf16>, vector<32x96xbf16>, vector<64x96xf32> -> vector<64x96xf32>
    %42 = arith.addf %37, %41 : vector<64x96xf32>
    %c8 = arith.constant 8 : index
    %c0_27 = arith.constant 0 : index
    %c0_28 = arith.constant 0 : index
    %43 = vector.load %arg2[%c8, %c0_27, %c0_28] : memref<25x64x32xbf16, #tpu.memory_space<vmem>>, vector<1x64x32xbf16>
    %44 = vector.shape_cast %43 : vector<1x64x32xbf16> to vector<64x32xbf16>
    %45 = vector.extract_strided_slice %1 {offsets = [0, 15], sizes = [32, 96], strides = [1, 1]} : vector<32x256xbf16> to vector<32x96xbf16>
    %cst_29 = arith.constant dense<0.000000e+00> : vector<64x96xf32>
    %46 = tpu.matmul %44, %45, %cst_29 {dimension_numbers = #tpu.dot_dimension_numbers<[1], [0], [0], [1], [0, 0, 1, 1], [], []>} : vector<64x32xbf16>, vector<32x96xbf16>, vector<64x96xf32> -> vector<64x96xf32>
    %47 = arith.addf %42, %46 : vector<64x96xf32>
    %c9 = arith.constant 9 : index
    %c0_30 = arith.constant 0 : index
    %c0_31 = arith.constant 0 : index
    %48 = vector.load %arg2[%c9, %c0_30, %c0_31] : memref<25x64x32xbf16, #tpu.memory_space<vmem>>, vector<1x64x32xbf16>
    %49 = vector.shape_cast %48 : vector<1x64x32xbf16> to vector<64x32xbf16>
    %50 = vector.extract_strided_slice %1 {offsets = [0, 16], sizes = [32, 96], strides = [1, 1]} : vector<32x256xbf16> to vector<32x96xbf16>
    %cst_32 = arith.constant dense<0.000000e+00> : vector<64x96xf32>
    %51 = tpu.matmul %49, %50, %cst_32 {dimension_numbers = #tpu.dot_dimension_numbers<[1], [0], [0], [1], [0, 0, 1, 1], [], []>} : vector<64x32xbf16>, vector<32x96xbf16>, vector<64x96xf32> -> vector<64x96xf32>
    %52 = arith.addf %47, %51 : vector<64x96xf32>
    %c10 = arith.constant 10 : index
    %c0_33 = arith.constant 0 : index
    %c0_34 = arith.constant 0 : index
    %53 = vector.load %arg2[%c10, %c0_33, %c0_34] : memref<25x64x32xbf16, #tpu.memory_space<vmem>>, vector<1x64x32xbf16>
    %54 = vector.shape_cast %53 : vector<1x64x32xbf16> to vector<64x32xbf16>
    %55 = vector.extract_strided_slice %1 {offsets = [0, 24], sizes = [32, 96], strides = [1, 1]} : vector<32x256xbf16> to vector<32x96xbf16>
    %cst_35 = arith.constant dense<0.000000e+00> : vector<64x96xf32>
    %56 = tpu.matmul %54, %55, %cst_35 {dimension_numbers = #tpu.dot_dimension_numbers<[1], [0], [0], [1], [0, 0, 1, 1], [], []>} : vector<64x32xbf16>, vector<32x96xbf16>, vector<64x96xf32> -> vector<64x96xf32>
    %57 = arith.addf %52, %56 : vector<64x96xf32>
    %c11 = arith.constant 11 : index
    %c0_36 = arith.constant 0 : index
    %c0_37 = arith.constant 0 : index
    %58 = vector.load %arg2[%c11, %c0_36, %c0_37] : memref<25x64x32xbf16, #tpu.memory_space<vmem>>, vector<1x64x32xbf16>
    %59 = vector.shape_cast %58 : vector<1x64x32xbf16> to vector<64x32xbf16>
    %60 = vector.extract_strided_slice %1 {offsets = [0, 25], sizes = [32, 96], strides = [1, 1]} : vector<32x256xbf16> to vector<32x96xbf16>
    %cst_38 = arith.constant dense<0.000000e+00> : vector<64x96xf32>
    %61 = tpu.matmul %59, %60, %cst_38 {dimension_numbers = #tpu.dot_dimension_numbers<[1], [0], [0], [1], [0, 0, 1, 1], [], []>} : vector<64x32xbf16>, vector<32x96xbf16>, vector<64x96xf32> -> vector<64x96xf32>
    %62 = arith.addf %57, %61 : vector<64x96xf32>
    %c12 = arith.constant 12 : index
    %c0_39 = arith.constant 0 : index
    %c0_40 = arith.constant 0 : index
    %63 = vector.load %arg2[%c12, %c0_39, %c0_40] : memref<25x64x32xbf16, #tpu.memory_space<vmem>>, vector<1x64x32xbf16>
    %64 = vector.shape_cast %63 : vector<1x64x32xbf16> to vector<64x32xbf16>
    %65 = vector.extract_strided_slice %1 {offsets = [0, 26], sizes = [32, 96], strides = [1, 1]} : vector<32x256xbf16> to vector<32x96xbf16>
    %cst_41 = arith.constant dense<0.000000e+00> : vector<64x96xf32>
    %66 = tpu.matmul %64, %65, %cst_41 {dimension_numbers = #tpu.dot_dimension_numbers<[1], [0], [0], [1], [0, 0, 1, 1], [], []>} : vector<64x32xbf16>, vector<32x96xbf16>, vector<64x96xf32> -> vector<64x96xf32>
    %67 = arith.addf %62, %66 : vector<64x96xf32>
    %c13 = arith.constant 13 : index
    %c0_42 = arith.constant 0 : index
    %c0_43 = arith.constant 0 : index
    %68 = vector.load %arg2[%c13, %c0_42, %c0_43] : memref<25x64x32xbf16, #tpu.memory_space<vmem>>, vector<1x64x32xbf16>
    %69 = vector.shape_cast %68 : vector<1x64x32xbf16> to vector<64x32xbf16>
    %70 = vector.extract_strided_slice %1 {offsets = [0, 27], sizes = [32, 96], strides = [1, 1]} : vector<32x256xbf16> to vector<32x96xbf16>
    %cst_44 = arith.constant dense<0.000000e+00> : vector<64x96xf32>
    %71 = tpu.matmul %69, %70, %cst_44 {dimension_numbers = #tpu.dot_dimension_numbers<[1], [0], [0], [1], [0, 0, 1, 1], [], []>} : vector<64x32xbf16>, vector<32x96xbf16>, vector<64x96xf32> -> vector<64x96xf32>
    %72 = arith.addf %67, %71 : vector<64x96xf32>
    %c14 = arith.constant 14 : index
    %c0_45 = arith.constant 0 : index
    %c0_46 = arith.constant 0 : index
    %73 = vector.load %arg2[%c14, %c0_45, %c0_46] : memref<25x64x32xbf16, #tpu.memory_space<vmem>>, vector<1x64x32xbf16>
    %74 = vector.shape_cast %73 : vector<1x64x32xbf16> to vector<64x32xbf16>
    %75 = vector.extract_strided_slice %1 {offsets = [0, 28], sizes = [32, 96], strides = [1, 1]} : vector<32x256xbf16> to vector<32x96xbf16>
    %cst_47 = arith.constant dense<0.000000e+00> : vector<64x96xf32>
    %76 = tpu.matmul %74, %75, %cst_47 {dimension_numbers = #tpu.dot_dimension_numbers<[1], [0], [0], [1], [0, 0, 1, 1], [], []>} : vector<64x32xbf16>, vector<32x96xbf16>, vector<64x96xf32> -> vector<64x96xf32>
    %77 = arith.addf %72, %76 : vector<64x96xf32>
    %c15 = arith.constant 15 : index
    %c0_48 = arith.constant 0 : index
    %c0_49 = arith.constant 0 : index
    %78 = vector.load %arg2[%c15, %c0_48, %c0_49] : memref<25x64x32xbf16, #tpu.memory_space<vmem>>, vector<1x64x32xbf16>
    %79 = vector.shape_cast %78 : vector<1x64x32xbf16> to vector<64x32xbf16>
    %80 = vector.extract_strided_slice %1 {offsets = [0, 36], sizes = [32, 96], strides = [1, 1]} : vector<32x256xbf16> to vector<32x96xbf16>
    %cst_50 = arith.constant dense<0.000000e+00> : vector<64x96xf32>
    %81 = tpu.matmul %79, %80, %cst_50 {dimension_numbers = #tpu.dot_dimension_numbers<[1], [0], [0], [1], [0, 0, 1, 1], [], []>} : vector<64x32xbf16>, vector<32x96xbf16>, vector<64x96xf32> -> vector<64x96xf32>
    %82 = arith.addf %77, %81 : vector<64x96xf32>
    %c16 = arith.constant 16 : index
    %c0_51 = arith.constant 0 : index
    %c0_52 = arith.constant 0 : index
    %83 = vector.load %arg2[%c16, %c0_51, %c0_52] : memref<25x64x32xbf16, #tpu.memory_space<vmem>>, vector<1x64x32xbf16>
    %84 = vector.shape_cast %83 : vector<1x64x32xbf16> to vector<64x32xbf16>
    %85 = vector.extract_strided_slice %1 {offsets = [0, 37], sizes = [32, 96], strides = [1, 1]} : vector<32x256xbf16> to vector<32x96xbf16>
    %cst_53 = arith.constant dense<0.000000e+00> : vector<64x96xf32>
    %86 = tpu.matmul %84, %85, %cst_53 {dimension_numbers = #tpu.dot_dimension_numbers<[1], [0], [0], [1], [0, 0, 1, 1], [], []>} : vector<64x32xbf16>, vector<32x96xbf16>, vector<64x96xf32> -> vector<64x96xf32>
    %87 = arith.addf %82, %86 : vector<64x96xf32>
    %c17 = arith.constant 17 : index
    %c0_54 = arith.constant 0 : index
    %c0_55 = arith.constant 0 : index
    %88 = vector.load %arg2[%c17, %c0_54, %c0_55] : memref<25x64x32xbf16, #tpu.memory_space<vmem>>, vector<1x64x32xbf16>
    %89 = vector.shape_cast %88 : vector<1x64x32xbf16> to vector<64x32xbf16>
    %90 = vector.extract_strided_slice %1 {offsets = [0, 38], sizes = [32, 96], strides = [1, 1]} : vector<32x256xbf16> to vector<32x96xbf16>
    %cst_56 = arith.constant dense<0.000000e+00> : vector<64x96xf32>
    %91 = tpu.matmul %89, %90, %cst_56 {dimension_numbers = #tpu.dot_dimension_numbers<[1], [0], [0], [1], [0, 0, 1, 1], [], []>} : vector<64x32xbf16>, vector<32x96xbf16>, vector<64x96xf32> -> vector<64x96xf32>
    %92 = arith.addf %87, %91 : vector<64x96xf32>
    %c18 = arith.constant 18 : index
    %c0_57 = arith.constant 0 : index
    %c0_58 = arith.constant 0 : index
    %93 = vector.load %arg2[%c18, %c0_57, %c0_58] : memref<25x64x32xbf16, #tpu.memory_space<vmem>>, vector<1x64x32xbf16>
    %94 = vector.shape_cast %93 : vector<1x64x32xbf16> to vector<64x32xbf16>
    %95 = vector.extract_strided_slice %1 {offsets = [0, 39], sizes = [32, 96], strides = [1, 1]} : vector<32x256xbf16> to vector<32x96xbf16>
    %cst_59 = arith.constant dense<0.000000e+00> : vector<64x96xf32>
    %96 = tpu.matmul %94, %95, %cst_59 {dimension_numbers = #tpu.dot_dimension_numbers<[1], [0], [0], [1], [0, 0, 1, 1], [], []>} : vector<64x32xbf16>, vector<32x96xbf16>, vector<64x96xf32> -> vector<64x96xf32>
    %97 = arith.addf %92, %96 : vector<64x96xf32>
    %c19 = arith.constant 19 : index
    %c0_60 = arith.constant 0 : index
    %c0_61 = arith.constant 0 : index
    %98 = vector.load %arg2[%c19, %c0_60, %c0_61] : memref<25x64x32xbf16, #tpu.memory_space<vmem>>, vector<1x64x32xbf16>
    %99 = vector.shape_cast %98 : vector<1x64x32xbf16> to vector<64x32xbf16>
    %100 = vector.extract_strided_slice %1 {offsets = [0, 40], sizes = [32, 96], strides = [1, 1]} : vector<32x256xbf16> to vector<32x96xbf16>
    %cst_62 = arith.constant dense<0.000000e+00> : vector<64x96xf32>
    %101 = tpu.matmul %99, %100, %cst_62 {dimension_numbers = #tpu.dot_dimension_numbers<[1], [0], [0], [1], [0, 0, 1, 1], [], []>} : vector<64x32xbf16>, vector<32x96xbf16>, vector<64x96xf32> -> vector<64x96xf32>
    %102 = arith.addf %97, %101 : vector<64x96xf32>
    %c20 = arith.constant 20 : index
    %c0_63 = arith.constant 0 : index
    %c0_64 = arith.constant 0 : index
    %103 = vector.load %arg2[%c20, %c0_63, %c0_64] : memref<25x64x32xbf16, #tpu.memory_space<vmem>>, vector<1x64x32xbf16>
    %104 = vector.shape_cast %103 : vector<1x64x32xbf16> to vector<64x32xbf16>
    %105 = vector.extract_strided_slice %1 {offsets = [0, 48], sizes = [32, 96], strides = [1, 1]} : vector<32x256xbf16> to vector<32x96xbf16>
    %cst_65 = arith.constant dense<0.000000e+00> : vector<64x96xf32>
    %106 = tpu.matmul %104, %105, %cst_65 {dimension_numbers = #tpu.dot_dimension_numbers<[1], [0], [0], [1], [0, 0, 1, 1], [], []>} : vector<64x32xbf16>, vector<32x96xbf16>, vector<64x96xf32> -> vector<64x96xf32>
    %107 = arith.addf %102, %106 : vector<64x96xf32>
    %c21 = arith.constant 21 : index
    %c0_66 = arith.constant 0 : index
    %c0_67 = arith.constant 0 : index
    %108 = vector.load %arg2[%c21, %c0_66, %c0_67] : memref<25x64x32xbf16, #tpu.memory_space<vmem>>, vector<1x64x32xbf16>
    %109 = vector.shape_cast %108 : vector<1x64x32xbf16> to vector<64x32xbf16>
    %110 = vector.extract_strided_slice %1 {offsets = [0, 49], sizes = [32, 96], strides = [1, 1]} : vector<32x256xbf16> to vector<32x96xbf16>
    %cst_68 = arith.constant dense<0.000000e+00> : vector<64x96xf32>
    %111 = tpu.matmul %109, %110, %cst_68 {dimension_numbers = #tpu.dot_dimension_numbers<[1], [0], [0], [1], [0, 0, 1, 1], [], []>} : vector<64x32xbf16>, vector<32x96xbf16>, vector<64x96xf32> -> vector<64x96xf32>
    %112 = arith.addf %107, %111 : vector<64x96xf32>
    %c22 = arith.constant 22 : index
    %c0_69 = arith.constant 0 : index
    %c0_70 = arith.constant 0 : index
    %113 = vector.load %arg2[%c22, %c0_69, %c0_70] : memref<25x64x32xbf16, #tpu.memory_space<vmem>>, vector<1x64x32xbf16>
    %114 = vector.shape_cast %113 : vector<1x64x32xbf16> to vector<64x32xbf16>
    %115 = vector.extract_strided_slice %1 {offsets = [0, 50], sizes = [32, 96], strides = [1, 1]} : vector<32x256xbf16> to vector<32x96xbf16>
    %cst_71 = arith.constant dense<0.000000e+00> : vector<64x96xf32>
    %116 = tpu.matmul %114, %115, %cst_71 {dimension_numbers = #tpu.dot_dimension_numbers<[1], [0], [0], [1], [0, 0, 1, 1], [], []>} : vector<64x32xbf16>, vector<32x96xbf16>, vector<64x96xf32> -> vector<64x96xf32>
    %117 = arith.addf %112, %116 : vector<64x96xf32>
    %c23 = arith.constant 23 : index
    %c0_72 = arith.constant 0 : index
    %c0_73 = arith.constant 0 : index
    %118 = vector.load %arg2[%c23, %c0_72, %c0_73] : memref<25x64x32xbf16, #tpu.memory_space<vmem>>, vector<1x64x32xbf16>
    %119 = vector.shape_cast %118 : vector<1x64x32xbf16> to vector<64x32xbf16>
    %120 = vector.extract_strided_slice %1 {offsets = [0, 51], sizes = [32, 96], strides = [1, 1]} : vector<32x256xbf16> to vector<32x96xbf16>
    %cst_74 = arith.constant dense<0.000000e+00> : vector<64x96xf32>
    %121 = tpu.matmul %119, %120, %cst_74 {dimension_numbers = #tpu.dot_dimension_numbers<[1], [0], [0], [1], [0, 0, 1, 1], [], []>} : vector<64x32xbf16>, vector<32x96xbf16>, vector<64x96xf32> -> vector<64x96xf32>
    %122 = arith.addf %117, %121 : vector<64x96xf32>
    %c24 = arith.constant 24 : index
    %c0_75 = arith.constant 0 : index
    %c0_76 = arith.constant 0 : index
    %123 = vector.load %arg2[%c24, %c0_75, %c0_76] : memref<25x64x32xbf16, #tpu.memory_space<vmem>>, vector<1x64x32xbf16>
    %124 = vector.shape_cast %123 : vector<1x64x32xbf16> to vector<64x32xbf16>
    %125 = vector.extract_strided_slice %1 {offsets = [0, 52], sizes = [32, 96], strides = [1, 1]} : vector<32x256xbf16> to vector<32x96xbf16>
    %cst_77 = arith.constant dense<0.000000e+00> : vector<64x96xf32>
    %126 = tpu.matmul %124, %125, %cst_77 {dimension_numbers = #tpu.dot_dimension_numbers<[1], [0], [0], [1], [0, 0, 1, 1], [], []>} : vector<64x32xbf16>, vector<32x96xbf16>, vector<64x96xf32> -> vector<64x96xf32>
    %127 = arith.addf %122, %126 : vector<64x96xf32>
    %128 = vector.extract_strided_slice %127 {offsets = [0, 0], sizes = [64, 80], strides = [1, 1]} : vector<64x96xf32> to vector<64x80xf32>
    %129 = vector.extract_strided_slice %127 {offsets = [0, 1], sizes = [64, 80], strides = [1, 1]} : vector<64x96xf32> to vector<64x80xf32>
    %130 = arith.maximumf %128, %129 : vector<64x80xf32>
    %131 = vector.extract_strided_slice %127 {offsets = [0, 12], sizes = [64, 80], strides = [1, 1]} : vector<64x96xf32> to vector<64x80xf32>
    %132 = vector.extract_strided_slice %127 {offsets = [0, 13], sizes = [64, 80], strides = [1, 1]} : vector<64x96xf32> to vector<64x80xf32>
    %133 = arith.maximumf %131, %132 : vector<64x80xf32>
    %134 = arith.maximumf %130, %133 : vector<64x80xf32>
    %c0_78 = arith.constant 0 : index
    %c0_79 = arith.constant 0 : index
    %135 = vector.load %arg4[%c0_78, %c0_79] : memref<80x16xf32, #tpu.memory_space<vmem>>, vector<80x16xf32>
    %cst_80 = arith.constant dense<0.000000e+00> : vector<64x16xf32>
    %136 = tpu.matmul %134, %135, %cst_80 {dimension_numbers = #tpu.dot_dimension_numbers<[1], [0], [0], [1], [0, 0, 1, 1], [], []>} : vector<64x80xf32>, vector<80x16xf32>, vector<64x16xf32> -> vector<64x16xf32>
    %c0_81 = arith.constant 0 : index
    %c0_82 = arith.constant 0 : index
    %137 = vector.load %arg3[%c0_81, %c0_82] : memref<64x1xf32, #tpu.memory_space<vmem>>, vector<64x1xf32>
    %138 = vector.broadcast %137 : vector<64x1xf32> to vector<64x16xf32>
    %139 = arith.addf %136, %138 : vector<64x16xf32>
    %cst_83 = arith.constant 0.000000e+00 : f32
    %140 = vector.broadcast %cst_83 : f32 to vector<64x16xf32>
    %141 = arith.cmpf oge, %139, %140 : vector<64x16xf32>
    %cst_84 = arith.constant 0.00999999977 : f32
    %142 = vector.broadcast %cst_84 : f32 to vector<64x16xf32>
    %143 = arith.mulf %142, %139 : vector<64x16xf32>
    %144 = arith.select %141, %139, %143 : vector<64x16xi1>, vector<64x16xf32>
    %145 = arith.truncf %144 : vector<64x16xf32> to vector<64x16xbf16>
    %c0_85 = arith.constant 0 : index
    %c0_86 = arith.constant 0 : index
    %c0_87 = arith.constant 0 : index
    %146 = vector.load %arg5[%c0_85, %c0_86, %c0_87] : memref<1x64x16xbf16, #tpu.memory_space<vmem>>, vector<1x64x16xbf16>
    %147 = vector.shape_cast %146 : vector<1x64x16xbf16> to vector<64x16xbf16>
    %148 = vector.shape_cast %145 : vector<64x16xbf16> to vector<1x64x16xbf16>
    tpu.vector_store %arg5[%c0_85, %c0_86, %c0_87], %148 {strides = array<i32>} : memref<1x64x16xbf16, #tpu.memory_space<vmem>>, vector<1x64x16xbf16>,
    return
  }
  func.func @transform_0(%arg0: i32) -> (i32, i32, i32) {
    %c0_i32 = arith.constant 0 : i32
    %c0_i32_0 = arith.constant 0 : i32
    %c0_i32_1 = arith.constant 0 : i32
    return %arg0, %c0_i32, %c0_i32_0 : i32, i32, i32
  }
  func.func @transform_1(%arg0: i32) -> (i32, i32, i32) {
    %c0_i32 = arith.constant 0 : i32
    %c0_i32_0 = arith.constant 0 : i32
    %c0_i32_1 = arith.constant 0 : i32
    %c0_i32_2 = arith.constant 0 : i32
    return %c0_i32, %c0_i32_0, %c0_i32_1 : i32, i32, i32
  }
  func.func @transform_2(%arg0: i32) -> (i32, i32) {
    %c0_i32 = arith.constant 0 : i32
    %c0_i32_0 = arith.constant 0 : i32
    %c0_i32_1 = arith.constant 0 : i32
    return %c0_i32, %c0_i32_0 : i32, i32
  }
  func.func @transform_3(%arg0: i32) -> (i32, i32) {
    %c0_i32 = arith.constant 0 : i32
    %c0_i32_0 = arith.constant 0 : i32
    %c0_i32_1 = arith.constant 0 : i32
    return %c0_i32, %c0_i32_0 : i32, i32
  }
  func.func @transform_4(%arg0: i32) -> (i32, i32, i32) {
    %c0_i32 = arith.constant 0 : i32
    %c0_i32_0 = arith.constant 0 : i32
    %c0_i32_1 = arith.constant 0 : i32
    return %arg0, %c0_i32, %c0_i32_0 : i32, i32, i32
  }
}

module attributes {stable_mosaic.version = 11 : i64} {
  func.func @_fc_kernel(%arg0: i32, %arg1: memref<8x1024xbf16, #tpu.memory_space<vmem>>, %arg2: memref<1024x1024xbf16, #tpu.memory_space<vmem>>, %arg3: memref<1x1024xf32, #tpu.memory_space<vmem>>, %arg4: memref<1024x128xbf16, #tpu.memory_space<vmem>>, %arg5: memref<1x128xf32, #tpu.memory_space<vmem>>, %arg6: memref<8x128xf32, #tpu.memory_space<vmem>>) attributes {dimension_semantics = [#tpu.dimension_semantics<parallel>], iteration_bounds = array<i64: 1>, scalar_prefetch = 0 : i64, scratch_operands = 0 : i64, tpu.core_type = #tpu.core_type<tc>, window_params = [{transform_indices = @transform_0, window_bounds = array<i64: 8, 1024>}, {pipeline_mode = #tpu.pipeline_mode<synchronous>, transform_indices = @transform_1, window_bounds = array<i64: 1024, 1024>}, {pipeline_mode = #tpu.pipeline_mode<synchronous>, transform_indices = @transform_2, window_bounds = array<i64: 1, 1024>}, {pipeline_mode = #tpu.pipeline_mode<synchronous>, transform_indices = @transform_3, window_bounds = array<i64: 1024, 128>}, {pipeline_mode = #tpu.pipeline_mode<synchronous>, transform_indices = @transform_4, window_bounds = array<i64: 1, 128>}, {transform_indices = @transform_5, window_bounds = array<i64: 8, 128>}]} {
    %c0 = arith.constant 0 : index
    %c0_0 = arith.constant 0 : index
    %0 = vector.load %arg1[%c0, %c0_0] : memref<8x1024xbf16, #tpu.memory_space<vmem>>, vector<8x1024xbf16>
    %c0_1 = arith.constant 0 : index
    %c0_2 = arith.constant 0 : index
    %1 = vector.load %arg2[%c0_1, %c0_2] : memref<1024x1024xbf16, #tpu.memory_space<vmem>>, vector<1024x1024xbf16>
    %cst = arith.constant dense<0.000000e+00> : vector<8x1024xf32>
    %2 = tpu.matmul %0, %1, %cst {dimension_numbers = #tpu.dot_dimension_numbers<[1], [0], [0], [1], [0, 0, 1, 1], [], []>} : vector<8x1024xbf16>, vector<1024x1024xbf16>, vector<8x1024xf32> -> vector<8x1024xf32>
    %c0_3 = arith.constant 0 : index
    %c0_4 = arith.constant 0 : index
    %3 = vector.load %arg3[%c0_3, %c0_4] : memref<1x1024xf32, #tpu.memory_space<vmem>>, vector<1x1024xf32>
    %4 = vector.broadcast %3 : vector<1x1024xf32> to vector<8x1024xf32>
    %5 = arith.addf %2, %4 : vector<8x1024xf32>
    %cst_5 = arith.constant 0.000000e+00 : f32
    %6 = vector.broadcast %cst_5 : f32 to vector<8x1024xf32>
    %7 = arith.cmpf oge, %5, %6 : vector<8x1024xf32>
    %cst_6 = arith.constant 0.00999999977 : f32
    %8 = vector.broadcast %cst_6 : f32 to vector<8x1024xf32>
    %9 = arith.mulf %8, %5 : vector<8x1024xf32>
    %10 = arith.select %7, %5, %9 : vector<8x1024xi1>, vector<8x1024xf32>
    %11 = arith.truncf %10 : vector<8x1024xf32> to vector<8x1024xbf16>
    %c0_7 = arith.constant 0 : index
    %c0_8 = arith.constant 0 : index
    %12 = vector.load %arg4[%c0_7, %c0_8] : memref<1024x128xbf16, #tpu.memory_space<vmem>>, vector<1024x128xbf16>
    %cst_9 = arith.constant dense<0.000000e+00> : vector<8x128xf32>
    %13 = tpu.matmul %11, %12, %cst_9 {dimension_numbers = #tpu.dot_dimension_numbers<[1], [0], [0], [1], [0, 0, 1, 1], [], []>} : vector<8x1024xbf16>, vector<1024x128xbf16>, vector<8x128xf32> -> vector<8x128xf32>
    %c0_10 = arith.constant 0 : index
    %c0_11 = arith.constant 0 : index
    %14 = vector.load %arg5[%c0_10, %c0_11] : memref<1x128xf32, #tpu.memory_space<vmem>>, vector<1x128xf32>
    %15 = vector.broadcast %14 : vector<1x128xf32> to vector<8x128xf32>
    %16 = arith.addf %13, %15 : vector<8x128xf32>
    %c0_12 = arith.constant 0 : index
    %c0_13 = arith.constant 0 : index
    %17 = vector.load %arg6[%c0_12, %c0_13] : memref<8x128xf32, #tpu.memory_space<vmem>>, vector<8x128xf32>
    tpu.vector_store %arg6[%c0_12, %c0_13], %16 {strides = array<i32>} : memref<8x128xf32, #tpu.memory_space<vmem>>, vector<8x128xf32>,
    return
  }
  func.func @transform_0(%arg0: i32) -> (i32, i32) {
    %c0_i32 = arith.constant 0 : i32
    %c0_i32_0 = arith.constant 0 : i32
    return %arg0, %c0_i32 : i32, i32
  }
  func.func @transform_1(%arg0: i32) -> (i32, i32) {
    %c0_i32 = arith.constant 0 : i32
    %c0_i32_0 = arith.constant 0 : i32
    %c0_i32_1 = arith.constant 0 : i32
    return %c0_i32, %c0_i32_0 : i32, i32
  }
  func.func @transform_2(%arg0: i32) -> (i32, i32) {
    %c0_i32 = arith.constant 0 : i32
    %c0_i32_0 = arith.constant 0 : i32
    %c0_i32_1 = arith.constant 0 : i32
    return %c0_i32, %c0_i32_0 : i32, i32
  }
  func.func @transform_3(%arg0: i32) -> (i32, i32) {
    %c0_i32 = arith.constant 0 : i32
    %c0_i32_0 = arith.constant 0 : i32
    %c0_i32_1 = arith.constant 0 : i32
    return %c0_i32, %c0_i32_0 : i32, i32
  }
  func.func @transform_4(%arg0: i32) -> (i32, i32) {
    %c0_i32 = arith.constant 0 : i32
    %c0_i32_0 = arith.constant 0 : i32
    %c0_i32_1 = arith.constant 0 : i32
    return %c0_i32, %c0_i32_0 : i32, i32
  }
  func.func @transform_5(%arg0: i32) -> (i32, i32) {
    %c0_i32 = arith.constant 0 : i32
    %c0_i32_0 = arith.constant 0 : i32
    return %arg0, %c0_i32 : i32, i32
  }
}

</mosaic_0001>

<llo_original>
// kernel: _forward.4
$region0: #{_forward.4}
  #allocation0 [shape = 'u32[]', space=smem, size = 0x4, offset = 0x4, fixed_abs, tag = 'smem constant byte address 0x4 - core index']
  #allocation1 [shape = 'u32[72,128]{1,0:T(1,128)}', space=vmem, size = 0x9000, scoped, tag = 'internal scratch']
  %s0 = inlined_call_operand.vmem [shape: bf16[2,32,256], index: 0, kind: input, shape index: {}]
  %s1 = inlined_call_operand.vmem [shape: bf16[25,64,32], index: 1, kind: input, shape index: {}]
  %s2 = inlined_call_operand.vmem [shape: f32[64,1], index: 2, kind: input, shape index: {}]
  %s3 = inlined_call_operand.vmem [shape: f32[80,16], index: 3, kind: input, shape index: {}]
  %s4 = inlined_call_operand.vmem [shape: bf16[2,64,16], index: 4, kind: output, shape index: {}]
  %s5 = sld [smem:[#allocation0]]
  $region49: #{_forward.4} parent=0
    _
  %s7 = ssub.s32 1, %s5
  %s8 = scalar_select 0, %s7, %s5
  loop: start=0, step=1, limit=4
  $region2: #{_forward.4} parent=0 // loop_pre_header
    _
  $region3: #{_forward.4} parent=0 // loop_header
    %s10 = sphi 0, %s14
    %p11 = scmp.ge.s32.totalorder %s10, 4
    %s20 = sphi 0, %s22
    %s23 = sphi 0, %s20
    %s24 = sphi 0, %s23
    %s40 = sphi 0, %s24
    %s44 = sphi 0, %s44
    %s46 = sphi 0, %s44
    %s47 = sphi 0, %s46
    %s61 = sphi 0, %s47
    %s65 = sphi 0, %s65
    %s67 = sphi 0, %s65
    %s68 = sphi 0, %s67
    %s82 = sphi 0, %s68
    %s86 = sphi 0, %s86
    %s88 = sphi 0, %s86
    %s89 = sphi 0, %s88
    %s103 = sphi 0, %s89
    %s109 = sphi 0, %s111
    %s112 = sphi 0, %s109
    %s113 = sphi 0, %s112
    %s129 = sphi 0, %s113
  $region4: #{_forward.4} parent=0 // loop_header_branch
    %13 = sbr.rel (%p11) target = $region8
  $region5: #{_forward.4} parent=0 // loop_body
    %s15 = ssub.s32 %s10, 1
    %s16 = ssub.s32 %s10, 2
    %s17 = sadd.s32 %s10, 1
    %s18 = ssub.s32 %s10, %s17
    %p19 = scmp.eq.s32.totalorder %s18, 0
    %s21 = sadd.s32 %s20, 1
    %s22 = scalar_select %p19, %s20, %s21
    %p25 = pneg %p19
    %p26 = scmp.eq.s32.totalorder %s10, 1
    %p27 = por %p25, %p26
    %p28 = scmp.ne.s32.totalorder %s20, %s23
    %p29 = scmp.eq.s32.totalorder %s10, 0
    %p30 = por %p28, %p29
    %p31 = scmp.ne.s32.totalorder %s20, %s23
    %p32 = scmp.eq.s32.totalorder %s15, 1
    %p33 = por %p31, %p32
    %p34 = scmp.ne.s32.totalorder %s23, %s24
    %p35 = scmp.eq.s32.totalorder %s15, 0
    %p36 = por %p34, %p35
    %p37 = scmp.ne.s32.totalorder %s23, %s24
    %p38 = scmp.eq.s32.totalorder %s16, 1
    %p39 = por %p37, %p38
    %p41 = scmp.ne.s32.totalorder %s24, %s40
    %p42 = scmp.eq.s32.totalorder %s16, 0
    %p43 = por %p41, %p42
    %s45 = sadd.s32 %s44, 1
    %p48 = scmp.eq.s32.totalorder %s10, 1
    %p49 = scmp.ne.s32.totalorder %s44, %s46
    %p50 = scmp.eq.s32.totalorder %s10, 0
    %p51 = por %p49, %p50
    %p52 = scmp.ne.s32.totalorder %s44, %s46
    %p53 = scmp.eq.s32.totalorder %s15, 1
    %p54 = por %p52, %p53
    %p55 = scmp.ne.s32.totalorder %s46, %s47
    %p56 = scmp.eq.s32.totalorder %s15, 0
    %p57 = por %p55, %p56
    %p58 = scmp.ne.s32.totalorder %s46, %s47
    %p59 = scmp.eq.s32.totalorder %s16, 1
    %p60 = por %p58, %p59
    %p62 = scmp.ne.s32.totalorder %s47, %s61
    %p63 = scmp.eq.s32.totalorder %s16, 0
    %p64 = por %p62, %p63
    %s66 = sadd.s32 %s65, 1
    %p69 = scmp.eq.s32.totalorder %s10, 1
    %p70 = scmp.ne.s32.totalorder %s65, %s67
    %p71 = scmp.eq.s32.totalorder %s10, 0
    %p72 = por %p70, %p71
    %p73 = scmp.ne.s32.totalorder %s65, %s67
    %p74 = scmp.eq.s32.totalorder %s15, 1
    %p75 = por %p73, %p74
    %p76 = scmp.ne.s32.totalorder %s67, %s68
    %p77 = scmp.eq.s32.totalorder %s15, 0
    %p78 = por %p76, %p77
    %p79 = scmp.ne.s32.totalorder %s67, %s68
    %p80 = scmp.eq.s32.totalorder %s16, 1
    %p81 = por %p79, %p80
    %p83 = scmp.ne.s32.totalorder %s68, %s82
    %p84 = scmp.eq.s32.totalorder %s16, 0
    %p85 = por %p83, %p84
    %s87 = sadd.s32 %s86, 1
    %p90 = scmp.eq.s32.totalorder %s10, 1
    %p91 = scmp.ne.s32.totalorder %s86, %s88
    %p92 = scmp.eq.s32.totalorder %s10, 0
    %p93 = por %p91, %p92
    %p94 = scmp.ne.s32.totalorder %s86, %s88
    %p95 = scmp.eq.s32.totalorder %s15, 1
    %p96 = por %p94, %p95
    %p97 = scmp.ne.s32.totalorder %s88, %s89
    %p98 = scmp.eq.s32.totalorder %s15, 0
    %p99 = por %p97, %p98
    %p100 = scmp.ne.s32.totalorder %s88, %s89
    %p101 = scmp.eq.s32.totalorder %s16, 1
    %p102 = por %p100, %p101
    %p104 = scmp.ne.s32.totalorder %s89, %s103
    %p105 = scmp.eq.s32.totalorder %s16, 0
    %p106 = por %p104, %p105
    %s107 = ssub.s32 %s10, %s17
    %p108 = scmp.eq.s32.totalorder %s107, 0
    %s110 = sadd.s32 %s109, 1
    %s111 = scalar_select %p108, %s109, %s110
    %p114 = pneg %p108
    %p115 = scmp.eq.s32.totalorder %s10, 1
    %p116 = por %p114, %p115
    %p117 = scmp.ne.s32.totalorder %s109, %s112
    %p118 = scmp.eq.s32.totalorder %s10, 0
    %p119 = por %p117, %p118
    %p120 = scmp.ne.s32.totalorder %s109, %s112
    %p121 = scmp.eq.s32.totalorder %s15, 1
    %p122 = por %p120, %p121
    %p123 = scmp.ne.s32.totalorder %s112, %s113
    %p124 = scmp.eq.s32.totalorder %s15, 0
    %p125 = por %p123, %p124
    %p126 = scmp.ne.s32.totalorder %s112, %s113
    %p127 = scmp.eq.s32.totalorder %s16, 1
    %p128 = por %p126, %p127
    %p130 = scmp.ne.s32.totalorder %s113, %s129
    %p131 = scmp.eq.s32.totalorder %s16, 0
    %p132 = por %p130, %p131
    %p133 = scmp.le.s32.totalorder 1, %s10
    %p134 = scmp.lt.s32.totalorder %s10, 3
    %p135 = pnand %p133, %p134
    %p136 = pneg %p135
    // Predicated region
    $region9: #{_forward.4} parent=5 // pred_check
      _
    $region10: #{_forward.4} parent=5 // pred_check_branch
      %138 = sbr.rel (%p135) target = $region12
    $region11: #{_forward.4} parent=5 // pred_region
      %s139 = ssub.s32 %s10, 1
      // Predicated region
      $region13: #{_forward.4} parent=11 // pred_check
        %p140 = pneg %p57
      $region14: #{_forward.4} parent=11 // pred_check_branch
        %142 = sbr.rel (%p140) target = $region16
      $region15: #{_forward.4} parent=11 // pred_region
        _
      $region16: #{_forward.4} parent=11 // pred_fallthru
        _
      // Predicated region
      $region17: #{_forward.4} parent=11 // pred_check
        %p143 = pneg %p78
      $region18: #{_forward.4} parent=11 // pred_check_branch
        %145 = sbr.rel (%p143) target = $region20
      $region19: #{_forward.4} parent=11 // pred_region
        _
      $region20: #{_forward.4} parent=11 // pred_fallthru
        _
      // Predicated region
      $region21: #{_forward.4} parent=11 // pred_check
        %p146 = pneg %p99
      $region22: #{_forward.4} parent=11 // pred_check_branch
        %148 = sbr.rel (%p146) target = $region24
      $region23: #{_forward.4} parent=11 // pred_region
        _
      $region24: #{_forward.4} parent=11 // pred_fallthru
        _
    $region12: #{_forward.4} parent=5 // pred_fallthru
      _
    %p149 = scmp.lt.s32.totalorder %s10, 2
    // Predicated region
    $region25: #{_forward.4} parent=5 // pred_check
      %p150 = pneg %p149
    $region26: #{_forward.4} parent=5 // pred_check_branch
      %152 = sbr.rel (%p150) target = $region28
    $region27: #{_forward.4} parent=5 // pred_region
      // Predicated region
      $region29: #{_forward.4} parent=27 // pred_check
        %p153 = pneg %p30
      $region30: #{_forward.4} parent=27 // pred_check_branch
        %155 = sbr.rel (%p153) target = $region32
      $region31: #{_forward.4} parent=27 // pred_region
        %p156 = scmp.lt.s32.totalorder %s10, 1
        %s157 = scalar_select %p156, %s10, 1
        %s158 = smul.addr %s157, 8
        %s159 = smul.addr %s158, 4
        %s160 = scalar_lea.vmem %s0, %s159
      $region32: #{_forward.4} parent=27 // pred_fallthru
        _
    $region28: #{_forward.4} parent=5 // pred_fallthru
      _
    %p161 = scmp.le.s32.totalorder 1, %s10
    %p162 = scmp.lt.s32.totalorder %s10, 3
    %p163 = pnand %p161, %p162
    %p164 = pneg %p163
    // Predicated region
    $region33: #{_forward.4} parent=5 // pred_check
      _
    $region34: #{_forward.4} parent=5 // pred_check_branch
      %166 = sbr.rel (%p163) target = $region36
    $region35: #{_forward.4} parent=5 // pred_region
      %s167 = ssub.s32 %s10, 1
      %p168 = scmp.lt.s32.totalorder %s15, 1
      %s169 = scalar_select %p168, %s15, 1
      %s170 = smul.addr %s169, 8
      %s171 = smul.addr %s170, 4
      %s172 = scalar_lea.vmem %s0, %s171
      %p173 = pneg %p36
      %p174 = pneg %p33
      %p175 = pneg %p57
      %p176 = pneg %p54
      %p177 = pneg %p78
      %p178 = pneg %p75
      %p179 = pneg %p99
      %p180 = pneg %p96
      %p181 = pneg %p125
      %p182 = pneg %p122
      %p183 = scmp.lt.s32.totalorder %s15, 1
      %s184 = scalar_select %p183, %s15, 1
      %s185 = smul.addr %s184, 8
      %s186 = smul.addr %s185, 4
      %s187 = scalar_lea.vmem %s4, %s186
      %p188 = scmp.lt.s32.totalorder %s15, 1
      %s189 = scalar_select %p188, %s15, 1
      %s190 = smul.addr %s189, 8
      %s191 = smul.addr %s190, 4
      %s192 = scalar_lea.vmem %s0, %s191
      %p193 = scmp.lt.s32.totalorder %s15, 1
      %s194 = scalar_select %p193, %s15, 1
      %s195 = smul.addr %s194, 8
      %s196 = smul.addr %s195, 4
      %s197 = scalar_lea.vmem %s4, %s196
      %v199 = vld [vmem:[%s192] sm:$0xff]
      %v200 = vld [vmem:[%s192 + $0x8] sm:$0xff]
      %v201 = vld [vmem:[%s192 + $0x10] sm:$0xff]
      %v202 = vld [vmem:[%s192 + $0x18] sm:$0xff]
      %v203 = vld [vmem:[%s1] sm:$0xf]
      %v204 = vld [vmem:[%s1 + $0x4] sm:$0xf]
      %v205 = vld [vmem:[%s1 + $0x8] sm:$0xf]
      %v206 = vld [vmem:[%s1 + $0xc] sm:$0xf]
      %v207 = vld [vmem:[%s1 + $0x10] sm:$0xf]
      %v208 = vld [vmem:[%s1 + $0x14] sm:$0xf]
      %v209 = vld [vmem:[%s1 + $0x18] sm:$0xf]
      %v210 = vld [vmem:[%s1 + $0x1c] sm:$0xf]
      %s211 = scalar_lea.vmem %s1, 32
      %v212 = vld [vmem:[%s211] sm:$0xf]
      %v213 = vld [vmem:[%s211 + $0x4] sm:$0xf]
      %v214 = vld [vmem:[%s211 + $0x8] sm:$0xf]
      %v215 = vld [vmem:[%s211 + $0xc] sm:$0xf]
      %v216 = vld [vmem:[%s211 + $0x10] sm:$0xf]
      %v217 = vld [vmem:[%s211 + $0x14] sm:$0xf]
      %v218 = vld [vmem:[%s211 + $0x18] sm:$0xf]
      %v219 = vld [vmem:[%s211 + $0x1c] sm:$0xf]
      %v228 = vunpack.c.l.b16 %v212
      %v229 = vunpack.c.l.b16 %v213
      %v230 = vunpack.c.l.b16 %v214
      %v231 = vunpack.c.l.b16 %v215
      %v232 = vunpack.c.l.b16 %v216
      %v233 = vunpack.c.l.b16 %v217
      %v234 = vunpack.c.l.b16 %v218
      %v235 = vunpack.c.l.b16 %v219
      %v236 = vpack.c.b16 %v229, %v228
      %v237 = vpack.c.b16 %v231, %v230
      %v238 = vpack.c.b16 %v233, %v232
      %v239 = vpack.c.b16 %v235, %v234
      %v244 = vunpack.c.l.b16 %v199
      %v245 = vunpack.c.l.b16 %v200
      %v246 = vunpack.c.l.b16 %v201
      %v247 = vunpack.c.l.b16 %v202
      %v248 = vpack.c.b16 %v245, %v244
      %v249 = vpack.c.b16 %v247, %v246
      %250 = vrot.lane.b32.xlu0 %v248, 127
      %v251 = vpop.permute.xlu0 %250
      %252 = vrot.lane.b32.xlu0 %v249, 127
      %v253 = vpop.permute.xlu0 %252
      %vm256 = vcmask 261120
      %v258 = vsel %vm256, %v236, 0
      %v261 = vsel %vm256, %v237, 0
      %v264 = vsel %vm256, %v238, 0
      %v267 = vsel %vm256, %v239, 0
      %269 = vmatpush.bf16.msra.mxu0 0
      %270 = vmatpush.bf16.msra.mxu0 0
      %271 = vmatpush.bf16.msra.mxu0 0
      %272 = vmatpush.bf16.msra.mxu0 0
      %273 = vmatpush.bf16.msra.mxu0 0
      %274 = vmatpush.bf16.msra.mxu0 0
      %275 = vmatpush.bf16.msra.mxu0 %v253
      %276 = vmatpush.bf16.msra.mxu0 %v251
      %277 = vmatmul.bf16.gmra.mxu0 %v258
      %v278 = vpop.f32.mrf.mxu0
      %v279 = vadd.f32 0.0, %v278
      %v280 = vpop.f32.mrf.mxu0
      %v281 = vadd.f32 0.0, %v280
      %282 = vmatmul.bf16.gmra.mxu0 %v261
      %v283 = vpop.f32.mrf.mxu0
      %v284 = vadd.f32 0.0, %v283
      %v285 = vpop.f32.mrf.mxu0
      %v286 = vadd.f32 0.0, %v285
      %287 = vmatmul.bf16.gmra.mxu0 %v264
      %v288 = vpop.f32.mrf.mxu0
      %v289 = vadd.f32 0.0, %v288
      %v290 = vpop.f32.mrf.mxu0
      %v291 = vadd.f32 0.0, %v290
      %292 = vmatmul.bf16.gmra.mxu0 %v267
      %v293 = vpop.f32.mrf.mxu0
      %v294 = vadd.f32 0.0, %v293
      %v295 = vpop.f32.mrf.mxu0
      %v296 = vadd.f32 0.0, %v295
      %297 = vdwg.mxu0
      %v306 = vunpack.c.l.b16 %v203
      %v307 = vunpack.c.l.b16 %v204
      %v308 = vunpack.c.l.b16 %v205
      %v309 = vunpack.c.l.b16 %v206
      %v310 = vunpack.c.l.b16 %v207
      %v311 = vunpack.c.l.b16 %v208
      %v312 = vunpack.c.l.b16 %v209
      %v313 = vunpack.c.l.b16 %v210
      %v314 = vpack.c.b16 %v307, %v306
      %v315 = vpack.c.b16 %v309, %v308
      %v316 = vpack.c.b16 %v311, %v310
      %v317 = vpack.c.b16 %v313, %v312
      %v321 = vsel %vm256, %v314, 0
      %v324 = vsel %vm256, %v315, 0
      %v327 = vsel %vm256, %v316, 0
      %v330 = vsel %vm256, %v317, 0
      %332 = vmatpush.bf16.msra.mxu0 0
      %333 = vmatpush.bf16.msra.mxu0 0
      %334 = vmatpush.bf16.msra.mxu0 0
      %335 = vmatpush.bf16.msra.mxu0 0
      %336 = vmatpush.bf16.msra.mxu0 0
      %337 = vmatpush.bf16.msra.mxu0 0
      %338 = vmatpush.bf16.msra.mxu0 %v249
      %339 = vmatpush.bf16.msra.mxu0 %v248
      %340 = vmatmul.bf16.gmra.mxu0 %v321
      %v341 = vpop.f32.mrf.mxu0
      %v342 = vadd.f32 %v279, %v341
      %v343 = vpop.f32.mrf.mxu0
      %v344 = vadd.f32 %v281, %v343
      %345 = vmatmul.bf16.gmra.mxu0 %v324
      %v346 = vpop.f32.mrf.mxu0
      %v347 = vadd.f32 %v284, %v346
      %v348 = vpop.f32.mrf.mxu0
      %v349 = vadd.f32 %v286, %v348
      %350 = vmatmul.bf16.gmra.mxu0 %v327
      %v351 = vpop.f32.mrf.mxu0
      %v352 = vadd.f32 %v289, %v351
      %v353 = vpop.f32.mrf.mxu0
      %v354 = vadd.f32 %v291, %v353
      %355 = vmatmul.bf16.gmra.mxu0 %v330
      %v356 = vpop.f32.mrf.mxu0
      %v357 = vadd.f32 %v294, %v356
      %v358 = vpop.f32.mrf.mxu0
      %v359 = vadd.f32 %v296, %v358
      %360 = vdwg.mxu0
      %s361 = scalar_lea.vmem %s1, 64
      %v362 = vld [vmem:[%s361] sm:$0xf]
      %v363 = vld [vmem:[%s361 + $0x4] sm:$0xf]
      %v364 = vld [vmem:[%s361 + $0x8] sm:$0xf]
      %v365 = vld [vmem:[%s361 + $0xc] sm:$0xf]
      %v366 = vld [vmem:[%s361 + $0x10] sm:$0xf]
      %v367 = vld [vmem:[%s361 + $0x14] sm:$0xf]
      %v368 = vld [vmem:[%s361 + $0x18] sm:$0xf]
      %v369 = vld [vmem:[%s361 + $0x1c] sm:$0xf]
      %v378 = vunpack.c.l.b16 %v362
      %v379 = vunpack.c.l.b16 %v363
      %v380 = vunpack.c.l.b16 %v364
      %v381 = vunpack.c.l.b16 %v365
      %v382 = vunpack.c.l.b16 %v366
      %v383 = vunpack.c.l.b16 %v367
      %v384 = vunpack.c.l.b16 %v368
      %v385 = vunpack.c.l.b16 %v369
      %v386 = vpack.c.b16 %v379, %v378
      %v387 = vpack.c.b16 %v381, %v380
      %v388 = vpack.c.b16 %v383, %v382
      %v389 = vpack.c.b16 %v385, %v384
      %390 = vrot.lane.b32.xlu0 %v248, 126
      %v391 = vpop.permute.xlu0 %390
      %392 = vrot.lane.b32.xlu0 %v249, 126
      %v393 = vpop.permute.xlu0 %392
      %v397 = vsel %vm256, %v386, 0
      %v400 = vsel %vm256, %v387, 0
      %v403 = vsel %vm256, %v388, 0
      %v406 = vsel %vm256, %v389, 0
      %408 = vmatpush.bf16.msra.mxu0 0
      %409 = vmatpush.bf16.msra.mxu0 0
      %410 = vmatpush.bf16.msra.mxu0 0
      %411 = vmatpush.bf16.msra.mxu0 0
      %412 = vmatpush.bf16.msra.mxu0 0
      %413 = vmatpush.bf16.msra.mxu0 0
      %414 = vmatpush.bf16.msra.mxu0 %v393
      %415 = vmatpush.bf16.msra.mxu0 %v391
      %416 = vmatmul.bf16.gmra.mxu0 %v397
      %v417 = vpop.f32.mrf.mxu0
      %v418 = vadd.f32 0.0, %v417
      %v419 = vpop.f32.mrf.mxu0
      %v420 = vadd.f32 0.0, %v419
      %421 = vmatmul.bf16.gmra.mxu0 %v400
      %v422 = vpop.f32.mrf.mxu0
      %v423 = vadd.f32 0.0, %v422
      %v424 = vpop.f32.mrf.mxu0
      %v425 = vadd.f32 0.0, %v424
      %426 = vmatmul.bf16.gmra.mxu0 %v403
      %v427 = vpop.f32.mrf.mxu0
      %v428 = vadd.f32 0.0, %v427
      %v429 = vpop.f32.mrf.mxu0
      %v430 = vadd.f32 0.0, %v429
      %431 = vmatmul.bf16.gmra.mxu0 %v406
      %v432 = vpop.f32.mrf.mxu0
      %v433 = vadd.f32 0.0, %v432
      %v434 = vpop.f32.mrf.mxu0
      %v435 = vadd.f32 0.0, %v434
      %436 = vdwg.mxu0
      %v437 = vadd.f32 %v342, %v418
      %v438 = vadd.f32 %v344, %v420
      %v439 = vadd.f32 %v347, %v423
      %v440 = vadd.f32 %v349, %v425
      %v441 = vadd.f32 %v352, %v428
      %v442 = vadd.f32 %v354, %v430
      %v443 = vadd.f32 %v357, %v433
      %v444 = vadd.f32 %v359, %v435
      %s445 = scalar_lea.vmem %s1, 96
      %v446 = vld [vmem:[%s445] sm:$0xf]
      %v447 = vld [vmem:[%s445 + $0x4] sm:$0xf]
      %v448 = vld [vmem:[%s445 + $0x8] sm:$0xf]
      %v449 = vld [vmem:[%s445 + $0xc] sm:$0xf]
      %v450 = vld [vmem:[%s445 + $0x10] sm:$0xf]
      %v451 = vld [vmem:[%s445 + $0x14] sm:$0xf]
      %v452 = vld [vmem:[%s445 + $0x18] sm:$0xf]
      %v453 = vld [vmem:[%s445 + $0x1c] sm:$0xf]
      %v462 = vunpack.c.l.b16 %v446
      %v463 = vunpack.c.l.b16 %v447
      %v464 = vunpack.c.l.b16 %v448
      %v465 = vunpack.c.l.b16 %v449
      %v466 = vunpack.c.l.b16 %v450
      %v467 = vunpack.c.l.b16 %v451
      %v468 = vunpack.c.l.b16 %v452
      %v469 = vunpack.c.l.b16 %v453
      %v470 = vpack.c.b16 %v463, %v462
      %v471 = vpack.c.b16 %v465, %v464
      %v472 = vpack.c.b16 %v467, %v466
      %v473 = vpack.c.b16 %v469, %v468
      %474 = vrot.lane.b32.xlu0 %v248, 125
      %v475 = vpop.permute.xlu0 %474
      %476 = vrot.lane.b32.xlu0 %v249, 125
      %v477 = vpop.permute.xlu0 %476
      %v481 = vsel %vm256, %v470, 0
      %v484 = vsel %vm256, %v471, 0
      %v487 = vsel %vm256, %v472, 0
      %v490 = vsel %vm256, %v473, 0
      %492 = vmatpush.bf16.msra.mxu0 0
      %493 = vmatpush.bf16.msra.mxu0 0
      %494 = vmatpush.bf16.msra.mxu0 0
      %495 = vmatpush.bf16.msra.mxu0 0
      %496 = vmatpush.bf16.msra.mxu0 0
      %497 = vmatpush.bf16.msra.mxu0 0
      %498 = vmatpush.bf16.msra.mxu0 %v477
      %499 = vmatpush.bf16.msra.mxu0 %v475
      %500 = vmatmul.bf16.gmra.mxu0 %v481
      %v501 = vpop.f32.mrf.mxu0
      %v502 = vadd.f32 0.0, %v501
      %v503 = vpop.f32.mrf.mxu0
      %v504 = vadd.f32 0.0, %v503
      %505 = vmatmul.bf16.gmra.mxu0 %v484
      %v506 = vpop.f32.mrf.mxu0
      %v507 = vadd.f32 0.0, %v506
      %v508 = vpop.f32.mrf.mxu0
      %v509 = vadd.f32 0.0, %v508
      %510 = vmatmul.bf16.gmra.mxu0 %v487
      %v511 = vpop.f32.mrf.mxu0
      %v512 = vadd.f32 0.0, %v511
      %v513 = vpop.f32.mrf.mxu0
      %v514 = vadd.f32 0.0, %v513
      %515 = vmatmul.bf16.gmra.mxu0 %v490
      %v516 = vpop.f32.mrf.mxu0
      %v517 = vadd.f32 0.0, %v516
      %v518 = vpop.f32.mrf.mxu0
      %v519 = vadd.f32 0.0, %v518
      %520 = vdwg.mxu0
      %v521 = vadd.f32 %v437, %v502
      %v522 = vadd.f32 %v438, %v504
      %v523 = vadd.f32 %v439, %v507
      %v524 = vadd.f32 %v440, %v509
      %v525 = vadd.f32 %v441, %v512
      %v526 = vadd.f32 %v442, %v514
      %v527 = vadd.f32 %v443, %v517
      %v528 = vadd.f32 %v444, %v519
      %s529 = scalar_lea.vmem %s1, 128
      %v530 = vld [vmem:[%s529] sm:$0xf]
      %v531 = vld [vmem:[%s529 + $0x4] sm:$0xf]
      %v532 = vld [vmem:[%s529 + $0x8] sm:$0xf]
      %v533 = vld [vmem:[%s529 + $0xc] sm:$0xf]
      %v534 = vld [vmem:[%s529 + $0x10] sm:$0xf]
      %v535 = vld [vmem:[%s529 + $0x14] sm:$0xf]
      %v536 = vld [vmem:[%s529 + $0x18] sm:$0xf]
      %v537 = vld [vmem:[%s529 + $0x1c] sm:$0xf]
      %v546 = vunpack.c.l.b16 %v530
      %v547 = vunpack.c.l.b16 %v531
      %v548 = vunpack.c.l.b16 %v532
      %v549 = vunpack.c.l.b16 %v533
      %v550 = vunpack.c.l.b16 %v534
      %v551 = vunpack.c.l.b16 %v535
      %v552 = vunpack.c.l.b16 %v536
      %v553 = vunpack.c.l.b16 %v537
      %v554 = vpack.c.b16 %v547, %v546
      %v555 = vpack.c.b16 %v549, %v548
      %v556 = vpack.c.b16 %v551, %v550
      %v557 = vpack.c.b16 %v553, %v552
      %558 = vrot.lane.b32.xlu0 %v248, 124
      %v559 = vpop.permute.xlu0 %558
      %560 = vrot.lane.b32.xlu0 %v249, 124
      %v561 = vpop.permute.xlu0 %560
      %v565 = vsel %vm256, %v554, 0
      %v568 = vsel %vm256, %v555, 0
      %v571 = vsel %vm256, %v556, 0
      %v574 = vsel %vm256, %v557, 0
      %576 = vmatpush.bf16.msra.mxu0 0
      %577 = vmatpush.bf16.msra.mxu0 0
      %578 = vmatpush.bf16.msra.mxu0 0
      %579 = vmatpush.bf16.msra.mxu0 0
      %580 = vmatpush.bf16.msra.mxu0 0
      %581 = vmatpush.bf16.msra.mxu0 0
      %582 = vmatpush.bf16.msra.mxu0 %v561
      %583 = vmatpush.bf16.msra.mxu0 %v559
      %584 = vmatmul.bf16.gmra.mxu0 %v565
      %v585 = vpop.f32.mrf.mxu0
      %v586 = vadd.f32 0.0, %v585
      %v587 = vpop.f32.mrf.mxu0
      %v588 = vadd.f32 0.0, %v587
      %589 = vmatmul.bf16.gmra.mxu0 %v568
      %v590 = vpop.f32.mrf.mxu0
      %v591 = vadd.f32 0.0, %v590
      %v592 = vpop.f32.mrf.mxu0
      %v593 = vadd.f32 0.0, %v592
      %594 = vmatmul.bf16.gmra.mxu0 %v571
      %v595 = vpop.f32.mrf.mxu0
      %v596 = vadd.f32 0.0, %v595
      %v597 = vpop.f32.mrf.mxu0
      %v598 = vadd.f32 0.0, %v597
      %599 = vmatmul.bf16.gmra.mxu0 %v574
      %v600 = vpop.f32.mrf.mxu0
      %v601 = vadd.f32 0.0, %v600
      %v602 = vpop.f32.mrf.mxu0
      %v603 = vadd.f32 0.0, %v602
      %604 = vdwg.mxu0
      %v605 = vadd.f32 %v521, %v586
      %v606 = vadd.f32 %v522, %v588
      %v607 = vadd.f32 %v523, %v591
      %v608 = vadd.f32 %v524, %v593
      %v609 = vadd.f32 %v525, %v596
      %v610 = vadd.f32 %v526, %v598
      %v611 = vadd.f32 %v527, %v601
      %v612 = vadd.f32 %v528, %v603
      %s613 = scalar_lea.vmem %s1, 160
      %v614 = vld [vmem:[%s613] sm:$0xf]
      %v615 = vld [vmem:[%s613 + $0x4] sm:$0xf]
      %v616 = vld [vmem:[%s613 + $0x8] sm:$0xf]
      %v617 = vld [vmem:[%s613 + $0xc] sm:$0xf]
      %v618 = vld [vmem:[%s613 + $0x10] sm:$0xf]
      %v619 = vld [vmem:[%s613 + $0x14] sm:$0xf]
      %v620 = vld [vmem:[%s613 + $0x18] sm:$0xf]
      %v621 = vld [vmem:[%s613 + $0x1c] sm:$0xf]
      %v630 = vunpack.c.l.b16 %v614
      %v631 = vunpack.c.l.b16 %v615
      %v632 = vunpack.c.l.b16 %v616
      %v633 = vunpack.c.l.b16 %v617
      %v634 = vunpack.c.l.b16 %v618
      %v635 = vunpack.c.l.b16 %v619
      %v636 = vunpack.c.l.b16 %v620
      %v637 = vunpack.c.l.b16 %v621
      %v638 = vpack.c.b16 %v631, %v630
      %v639 = vpack.c.b16 %v633, %v632
      %v640 = vpack.c.b16 %v635, %v634
      %v641 = vpack.c.b16 %v637, %v636
      %642 = vrot.lane.b32.xlu0 %v248, 116
      %v643 = vpop.permute.xlu0 %642
      %644 = vrot.lane.b32.xlu0 %v249, 116
      %v645 = vpop.permute.xlu0 %644
      %v649 = vsel %vm256, %v638, 0
      %v652 = vsel %vm256, %v639, 0
      %v655 = vsel %vm256, %v640, 0
      %v658 = vsel %vm256, %v641, 0
      %660 = vmatpush.bf16.msra.mxu0 0
      %661 = vmatpush.bf16.msra.mxu0 0
      %662 = vmatpush.bf16.msra.mxu0 0
      %663 = vmatpush.bf16.msra.mxu0 0
      %664 = vmatpush.bf16.msra.mxu0 0
      %665 = vmatpush.bf16.msra.mxu0 0
      %666 = vmatpush.bf16.msra.mxu0 %v645
      %667 = vmatpush.bf16.msra.mxu0 %v643
      %668 = vmatmul.bf16.gmra.mxu0 %v649
      %v669 = vpop.f32.mrf.mxu0
      %v670 = vadd.f32 0.0, %v669
      %v671 = vpop.f32.mrf.mxu0
      %v672 = vadd.f32 0.0, %v671
      %673 = vmatmul.bf16.gmra.mxu0 %v652
      %v674 = vpop.f32.mrf.mxu0
      %v675 = vadd.f32 0.0, %v674
      %v676 = vpop.f32.mrf.mxu0
      %v677 = vadd.f32 0.0, %v676
      %678 = vmatmul.bf16.gmra.mxu0 %v655
      %v679 = vpop.f32.mrf.mxu0
      %v680 = vadd.f32 0.0, %v679
      %v681 = vpop.f32.mrf.mxu0
      %v682 = vadd.f32 0.0, %v681
      %683 = vmatmul.bf16.gmra.mxu0 %v658
      %v684 = vpop.f32.mrf.mxu0
      %v685 = vadd.f32 0.0, %v684
      %v686 = vpop.f32.mrf.mxu0
      %v687 = vadd.f32 0.0, %v686
      %688 = vdwg.mxu0
      %v689 = vadd.f32 %v605, %v670
      %v690 = vadd.f32 %v606, %v672
      %v691 = vadd.f32 %v607, %v675
      %v692 = vadd.f32 %v608, %v677
      %v693 = vadd.f32 %v609, %v680
      %v694 = vadd.f32 %v610, %v682
      %v695 = vadd.f32 %v611, %v685
      %v696 = vadd.f32 %v612, %v687
      %s697 = scalar_lea.vmem %s1, 192
      %v698 = vld [vmem:[%s697] sm:$0xf]
      %v699 = vld [vmem:[%s697 + $0x4] sm:$0xf]
      %v700 = vld [vmem:[%s697 + $0x8] sm:$0xf]
      %v701 = vld [vmem:[%s697 + $0xc] sm:$0xf]
      %v702 = vld [vmem:[%s697 + $0x10] sm:$0xf]
      %v703 = vld [vmem:[%s697 + $0x14] sm:$0xf]
      %v704 = vld [vmem:[%s697 + $0x18] sm:$0xf]
      %v705 = vld [vmem:[%s697 + $0x1c] sm:$0xf]
      %v714 = vunpack.c.l.b16 %v698
      %v715 = vunpack.c.l.b16 %v699
      %v716 = vunpack.c.l.b16 %v700
      %v717 = vunpack.c.l.b16 %v701
      %v718 = vunpack.c.l.b16 %v702
      %v719 = vunpack.c.l.b16 %v703
      %v720 = vunpack.c.l.b16 %v704
      %v721 = vunpack.c.l.b16 %v705
      %v722 = vpack.c.b16 %v715, %v714
      %v723 = vpack.c.b16 %v717, %v716
      %v724 = vpack.c.b16 %v719, %v718
      %v725 = vpack.c.b16 %v721, %v720
      %726 = vrot.lane.b32.xlu0 %v248, 115
      %v727 = vpop.permute.xlu0 %726
      %728 = vrot.lane.b32.xlu0 %v249, 115
      %v729 = vpop.permute.xlu0 %728
      %v733 = vsel %vm256, %v722, 0
      %v736 = vsel %vm256, %v723, 0
      %v739 = vsel %vm256, %v724, 0
      %v742 = vsel %vm256, %v725, 0
      %744 = vmatpush.bf16.msra.mxu0 0
      %745 = vmatpush.bf16.msra.mxu0 0
      %746 = vmatpush.bf16.msra.mxu0 0
      %747 = vmatpush.bf16.msra.mxu0 0
      %748 = vmatpush.bf16.msra.mxu0 0
      %749 = vmatpush.bf16.msra.mxu0 0
      %750 = vmatpush.bf16.msra.mxu0 %v729
      %751 = vmatpush.bf16.msra.mxu0 %v727
      %752 = vmatmul.bf16.gmra.mxu0 %v733
      %v753 = vpop.f32.mrf.mxu0
      %v754 = vadd.f32 0.0, %v753
      %v755 = vpop.f32.mrf.mxu0
      %v756 = vadd.f32 0.0, %v755
      %757 = vmatmul.bf16.gmra.mxu0 %v736
      %v758 = vpop.f32.mrf.mxu0
      %v759 = vadd.f32 0.0, %v758
      %v760 = vpop.f32.mrf.mxu0
      %v761 = vadd.f32 0.0, %v760
      %762 = vmatmul.bf16.gmra.mxu0 %v739
      %v763 = vpop.f32.mrf.mxu0
      %v764 = vadd.f32 0.0, %v763
      %v765 = vpop.f32.mrf.mxu0
      %v766 = vadd.f32 0.0, %v765
      %767 = vmatmul.bf16.gmra.mxu0 %v742
      %v768 = vpop.f32.mrf.mxu0
      %v769 = vadd.f32 0.0, %v768
      %v770 = vpop.f32.mrf.mxu0
      %v771 = vadd.f32 0.0, %v770
      %772 = vdwg.mxu0
      %v773 = vadd.f32 %v689, %v754
      %v774 = vadd.f32 %v690, %v756
      %v775 = vadd.f32 %v691, %v759
      %v776 = vadd.f32 %v692, %v761
      %v777 = vadd.f32 %v693, %v764
      %v778 = vadd.f32 %v694, %v766
      %v779 = vadd.f32 %v695, %v769
      %v780 = vadd.f32 %v696, %v771
      %s781 = scalar_lea.vmem %s1, 224
      %v782 = vld [vmem:[%s781] sm:$0xf]
      %v783 = vld [vmem:[%s781 + $0x4] sm:$0xf]
      %v784 = vld [vmem:[%s781 + $0x8] sm:$0xf]
      %v785 = vld [vmem:[%s781 + $0xc] sm:$0xf]
      %v786 = vld [vmem:[%s781 + $0x10] sm:$0xf]
      %v787 = vld [vmem:[%s781 + $0x14] sm:$0xf]
      %v788 = vld [vmem:[%s781 + $0x18] sm:$0xf]
      %v789 = vld [vmem:[%s781 + $0x1c] sm:$0xf]
      %v798 = vunpack.c.l.b16 %v782
      %v799 = vunpack.c.l.b16 %v783
      %v800 = vunpack.c.l.b16 %v784
      %v801 = vunpack.c.l.b16 %v785
      %v802 = vunpack.c.l.b16 %v786
      %v803 = vunpack.c.l.b16 %v787
      %v804 = vunpack.c.l.b16 %v788
      %v805 = vunpack.c.l.b16 %v789
      %v806 = vpack.c.b16 %v799, %v798
      %v807 = vpack.c.b16 %v801, %v800
      %v808 = vpack.c.b16 %v803, %v802
      %v809 = vpack.c.b16 %v805, %v804
      %810 = vrot.lane.b32.xlu0 %v248, 114
      %v811 = vpop.permute.xlu0 %810
      %812 = vrot.lane.b32.xlu0 %v249, 114
      %v813 = vpop.permute.xlu0 %812
      %v817 = vsel %vm256, %v806, 0
      %v820 = vsel %vm256, %v807, 0
      %v823 = vsel %vm256, %v808, 0
      %v826 = vsel %vm256, %v809, 0
      %828 = vmatpush.bf16.msra.mxu0 0
      %829 = vmatpush.bf16.msra.mxu0 0
      %830 = vmatpush.bf16.msra.mxu0 0
      %831 = vmatpush.bf16.msra.mxu0 0
      %832 = vmatpush.bf16.msra.mxu0 0
      %833 = vmatpush.bf16.msra.mxu0 0
      %834 = vmatpush.bf16.msra.mxu0 %v813
      %835 = vmatpush.bf16.msra.mxu0 %v811
      %836 = vmatmul.bf16.gmra.mxu0 %v817
      %v837 = vpop.f32.mrf.mxu0
      %v838 = vadd.f32 0.0, %v837
      %v839 = vpop.f32.mrf.mxu0
      %v840 = vadd.f32 0.0, %v839
      %841 = vmatmul.bf16.gmra.mxu0 %v820
      %v842 = vpop.f32.mrf.mxu0
      %v843 = vadd.f32 0.0, %v842
      %v844 = vpop.f32.mrf.mxu0
      %v845 = vadd.f32 0.0, %v844
      %846 = vmatmul.bf16.gmra.mxu0 %v823
      %v847 = vpop.f32.mrf.mxu0
      %v848 = vadd.f32 0.0, %v847
      %v849 = vpop.f32.mrf.mxu0
      %v850 = vadd.f32 0.0, %v849
      %851 = vmatmul.bf16.gmra.mxu0 %v826
      %v852 = vpop.f32.mrf.mxu0
      %v853 = vadd.f32 0.0, %v852
      %v854 = vpop.f32.mrf.mxu0
      %v855 = vadd.f32 0.0, %v854
      %856 = vdwg.mxu0
      %v857 = vadd.f32 %v773, %v838
      %v858 = vadd.f32 %v774, %v840
      %v859 = vadd.f32 %v775, %v843
      %v860 = vadd.f32 %v776, %v845
      %v861 = vadd.f32 %v777, %v848
      %v862 = vadd.f32 %v778, %v850
      %v863 = vadd.f32 %v779, %v853
      %v864 = vadd.f32 %v780, %v855
      %s865 = scalar_lea.vmem %s1, 256
      %v866 = vld [vmem:[%s865] sm:$0xf]
      %v867 = vld [vmem:[%s865 + $0x4] sm:$0xf]
      %v868 = vld [vmem:[%s865 + $0x8] sm:$0xf]
      %v869 = vld [vmem:[%s865 + $0xc] sm:$0xf]
      %v870 = vld [vmem:[%s865 + $0x10] sm:$0xf]
      %v871 = vld [vmem:[%s865 + $0x14] sm:$0xf]
      %v872 = vld [vmem:[%s865 + $0x18] sm:$0xf]
      %v873 = vld [vmem:[%s865 + $0x1c] sm:$0xf]
      %v882 = vunpack.c.l.b16 %v866
      %v883 = vunpack.c.l.b16 %v867
      %v884 = vunpack.c.l.b16 %v868
      %v885 = vunpack.c.l.b16 %v869
      %v886 = vunpack.c.l.b16 %v870
      %v887 = vunpack.c.l.b16 %v871
      %v888 = vunpack.c.l.b16 %v872
      %v889 = vunpack.c.l.b16 %v873
      %v890 = vpack.c.b16 %v883, %v882
      %v891 = vpack.c.b16 %v885, %v884
      %v892 = vpack.c.b16 %v887, %v886
      %v893 = vpack.c.b16 %v889, %v888
      %894 = vrot.lane.b32.xlu0 %v248, 113
      %v895 = vpop.permute.xlu0 %894
      %896 = vrot.lane.b32.xlu0 %v249, 113
      %v897 = vpop.permute.xlu0 %896
      %v901 = vsel %vm256, %v890, 0
      %v904 = vsel %vm256, %v891, 0
      %v907 = vsel %vm256, %v892, 0
      %v910 = vsel %vm256, %v893, 0
      %912 = vmatpush.bf16.msra.mxu0 0
      %913 = vmatpush.bf16.msra.mxu0 0
      %914 = vmatpush.bf16.msra.mxu0 0
      %915 = vmatpush.bf16.msra.mxu0 0
      %916 = vmatpush.bf16.msra.mxu0 0
      %917 = vmatpush.bf16.msra.mxu0 0
      %918 = vmatpush.bf16.msra.mxu0 %v897
      %919 = vmatpush.bf16.msra.mxu0 %v895
      %920 = vmatmul.bf16.gmra.mxu0 %v901
      %v921 = vpop.f32.mrf.mxu0
      %v922 = vadd.f32 0.0, %v921
      %v923 = vpop.f32.mrf.mxu0
      %v924 = vadd.f32 0.0, %v923
      %925 = vmatmul.bf16.gmra.mxu0 %v904
      %v926 = vpop.f32.mrf.mxu0
      %v927 = vadd.f32 0.0, %v926
      %v928 = vpop.f32.mrf.mxu0
      %v929 = vadd.f32 0.0, %v928
      %930 = vmatmul.bf16.gmra.mxu0 %v907
      %v931 = vpop.f32.mrf.mxu0
      %v932 = vadd.f32 0.0, %v931
      %v933 = vpop.f32.mrf.mxu0
      %v934 = vadd.f32 0.0, %v933
      %935 = vmatmul.bf16.gmra.mxu0 %v910
      %v936 = vpop.f32.mrf.mxu0
      %v937 = vadd.f32 0.0, %v936
      %v938 = vpop.f32.mrf.mxu0
      %v939 = vadd.f32 0.0, %v938
      %940 = vdwg.mxu0
      %v941 = vadd.f32 %v857, %v922
      %v942 = vadd.f32 %v858, %v924
      %v943 = vadd.f32 %v859, %v927
      %v944 = vadd.f32 %v860, %v929
      %v945 = vadd.f32 %v861, %v932
      %v946 = vadd.f32 %v862, %v934
      %v947 = vadd.f32 %v863, %v937
      %v948 = vadd.f32 %v864, %v939
      %s949 = scalar_lea.vmem %s1, 288
      %v950 = vld [vmem:[%s949] sm:$0xf]
      %v951 = vld [vmem:[%s949 + $0x4] sm:$0xf]
      %v952 = vld [vmem:[%s949 + $0x8] sm:$0xf]
      %v953 = vld [vmem:[%s949 + $0xc] sm:$0xf]
      %v954 = vld [vmem:[%s949 + $0x10] sm:$0xf]
      %v955 = vld [vmem:[%s949 + $0x14] sm:$0xf]
      %v956 = vld [vmem:[%s949 + $0x18] sm:$0xf]
      %v957 = vld [vmem:[%s949 + $0x1c] sm:$0xf]
      %v966 = vunpack.c.l.b16 %v950
      %v967 = vunpack.c.l.b16 %v951
      %v968 = vunpack.c.l.b16 %v952
      %v969 = vunpack.c.l.b16 %v953
      %v970 = vunpack.c.l.b16 %v954
      %v971 = vunpack.c.l.b16 %v955
      %v972 = vunpack.c.l.b16 %v956
      %v973 = vunpack.c.l.b16 %v957
      %v974 = vpack.c.b16 %v967, %v966
      %v975 = vpack.c.b16 %v969, %v968
      %v976 = vpack.c.b16 %v971, %v970
      %v977 = vpack.c.b16 %v973, %v972
      %978 = vrot.lane.b32.xlu0 %v248, 112
      %v979 = vpop.permute.xlu0 %978
      %980 = vrot.lane.b32.xlu0 %v249, 112
      %v981 = vpop.permute.xlu0 %980
      %v985 = vsel %vm256, %v974, 0
      %v988 = vsel %vm256, %v975, 0
      %v991 = vsel %vm256, %v976, 0
      %v994 = vsel %vm256, %v977, 0
      %996 = vmatpush.bf16.msra.mxu0 0
      %997 = vmatpush.bf16.msra.mxu0 0
      %998 = vmatpush.bf16.msra.mxu0 0
      %999 = vmatpush.bf16.msra.mxu0 0
      %1000 = vmatpush.bf16.msra.mxu0 0
      %1001 = vmatpush.bf16.msra.mxu0 0
      %1002 = vmatpush.bf16.msra.mxu0 %v981
      %1003 = vmatpush.bf16.msra.mxu0 %v979
      %1004 = vmatmul.bf16.gmra.mxu0 %v985
      %v1005 = vpop.f32.mrf.mxu0
      %v1006 = vadd.f32 0.0, %v1005
      %v1007 = vpop.f32.mrf.mxu0
      %v1008 = vadd.f32 0.0, %v1007
      %1009 = vmatmul.bf16.gmra.mxu0 %v988
      %v1010 = vpop.f32.mrf.mxu0
      %v1011 = vadd.f32 0.0, %v1010
      %v1012 = vpop.f32.mrf.mxu0
      %v1013 = vadd.f32 0.0, %v1012
      %1014 = vmatmul.bf16.gmra.mxu0 %v991
      %v1015 = vpop.f32.mrf.mxu0
      %v1016 = vadd.f32 0.0, %v1015
      %v1017 = vpop.f32.mrf.mxu0
      %v1018 = vadd.f32 0.0, %v1017
      %1019 = vmatmul.bf16.gmra.mxu0 %v994
      %v1020 = vpop.f32.mrf.mxu0
      %v1021 = vadd.f32 0.0, %v1020
      %v1022 = vpop.f32.mrf.mxu0
      %v1023 = vadd.f32 0.0, %v1022
      %1024 = vdwg.mxu0
      %v1025 = vadd.f32 %v941, %v1006
      %v1026 = vadd.f32 %v942, %v1008
      %v1027 = vadd.f32 %v943, %v1011
      %v1028 = vadd.f32 %v944, %v1013
      %v1029 = vadd.f32 %v945, %v1016
      %v1030 = vadd.f32 %v946, %v1018
      %v1031 = vadd.f32 %v947, %v1021
      %v1032 = vadd.f32 %v948, %v1023
      %s1033 = scalar_lea.vmem %s1, 320
      %v1034 = vld [vmem:[%s1033] sm:$0xf]
      %v1035 = vld [vmem:[%s1033 + $0x4] sm:$0xf]
      %v1036 = vld [vmem:[%s1033 + $0x8] sm:$0xf]
      %v1037 = vld [vmem:[%s1033 + $0xc] sm:$0xf]
      %v1038 = vld [vmem:[%s1033 + $0x10] sm:$0xf]
      %v1039 = vld [vmem:[%s1033 + $0x14] sm:$0xf]
      %v1040 = vld [vmem:[%s1033 + $0x18] sm:$0xf]
      %v1041 = vld [vmem:[%s1033 + $0x1c] sm:$0xf]
      %v1050 = vunpack.c.l.b16 %v1034
      %v1051 = vunpack.c.l.b16 %v1035
      %v1052 = vunpack.c.l.b16 %v1036
      %v1053 = vunpack.c.l.b16 %v1037
      %v1054 = vunpack.c.l.b16 %v1038
      %v1055 = vunpack.c.l.b16 %v1039
      %v1056 = vunpack.c.l.b16 %v1040
      %v1057 = vunpack.c.l.b16 %v1041
      %v1058 = vpack.c.b16 %v1051, %v1050
      %v1059 = vpack.c.b16 %v1053, %v1052
      %v1060 = vpack.c.b16 %v1055, %v1054
      %v1061 = vpack.c.b16 %v1057, %v1056
      %1062 = vrot.lane.b32.xlu0 %v248, 104
      %v1063 = vpop.permute.xlu0 %1062
      %1064 = vrot.lane.b32.xlu0 %v249, 104
      %v1065 = vpop.permute.xlu0 %1064
      %v1069 = vsel %vm256, %v1058, 0
      %v1072 = vsel %vm256, %v1059, 0
      %v1075 = vsel %vm256, %v1060, 0
      %v1078 = vsel %vm256, %v1061, 0
      %1080 = vmatpush.bf16.msra.mxu0 0
      %1081 = vmatpush.bf16.msra.mxu0 0
      %1082 = vmatpush.bf16.msra.mxu0 0
      %1083 = vmatpush.bf16.msra.mxu0 0
      %1084 = vmatpush.bf16.msra.mxu0 0
      %1085 = vmatpush.bf16.msra.mxu0 0
      %1086 = vmatpush.bf16.msra.mxu0 %v1065
      %1087 = vmatpush.bf16.msra.mxu0 %v1063
      %1088 = vmatmul.bf16.gmra.mxu0 %v1069
      %v1089 = vpop.f32.mrf.mxu0
      %v1090 = vadd.f32 0.0, %v1089
      %v1091 = vpop.f32.mrf.mxu0
      %v1092 = vadd.f32 0.0, %v1091
      %1093 = vmatmul.bf16.gmra.mxu0 %v1072
      %v1094 = vpop.f32.mrf.mxu0
      %v1095 = vadd.f32 0.0, %v1094
      %v1096 = vpop.f32.mrf.mxu0
      %v1097 = vadd.f32 0.0, %v1096
      %1098 = vmatmul.bf16.gmra.mxu0 %v1075
      %v1099 = vpop.f32.mrf.mxu0
      %v1100 = vadd.f32 0.0, %v1099
      %v1101 = vpop.f32.mrf.mxu0
      %v1102 = vadd.f32 0.0, %v1101
      %1103 = vmatmul.bf16.gmra.mxu0 %v1078
      %v1104 = vpop.f32.mrf.mxu0
      %v1105 = vadd.f32 0.0, %v1104
      %v1106 = vpop.f32.mrf.mxu0
      %v1107 = vadd.f32 0.0, %v1106
      %1108 = vdwg.mxu0
      %v1109 = vadd.f32 %v1025, %v1090
      %v1110 = vadd.f32 %v1026, %v1092
      %v1111 = vadd.f32 %v1027, %v1095
      %v1112 = vadd.f32 %v1028, %v1097
      %v1113 = vadd.f32 %v1029, %v1100
      %v1114 = vadd.f32 %v1030, %v1102
      %v1115 = vadd.f32 %v1031, %v1105
      %v1116 = vadd.f32 %v1032, %v1107
      %s1117 = scalar_lea.vmem %s1, 352
      %v1118 = vld [vmem:[%s1117] sm:$0xf]
      %v1119 = vld [vmem:[%s1117 + $0x4] sm:$0xf]
      %v1120 = vld [vmem:[%s1117 + $0x8] sm:$0xf]
      %v1121 = vld [vmem:[%s1117 + $0xc] sm:$0xf]
      %v1122 = vld [vmem:[%s1117 + $0x10] sm:$0xf]
      %v1123 = vld [vmem:[%s1117 + $0x14] sm:$0xf]
      %v1124 = vld [vmem:[%s1117 + $0x18] sm:$0xf]
      %v1125 = vld [vmem:[%s1117 + $0x1c] sm:$0xf]
      %v1134 = vunpack.c.l.b16 %v1118
      %v1135 = vunpack.c.l.b16 %v1119
      %v1136 = vunpack.c.l.b16 %v1120
      %v1137 = vunpack.c.l.b16 %v1121
      %v1138 = vunpack.c.l.b16 %v1122
      %v1139 = vunpack.c.l.b16 %v1123
      %v1140 = vunpack.c.l.b16 %v1124
      %v1141 = vunpack.c.l.b16 %v1125
      %v1142 = vpack.c.b16 %v1135, %v1134
      %v1143 = vpack.c.b16 %v1137, %v1136
      %v1144 = vpack.c.b16 %v1139, %v1138
      %v1145 = vpack.c.b16 %v1141, %v1140
      %1146 = vrot.lane.b32.xlu0 %v248, 103
      %v1147 = vpop.permute.xlu0 %1146
      %1148 = vrot.lane.b32.xlu0 %v249, 103
      %v1149 = vpop.permute.xlu0 %1148
      %v1153 = vsel %vm256, %v1142, 0
      %v1156 = vsel %vm256, %v1143, 0
      %v1159 = vsel %vm256, %v1144, 0
      %v1162 = vsel %vm256, %v1145, 0
      %1164 = vmatpush.bf16.msra.mxu0 0
      %1165 = vmatpush.bf16.msra.mxu0 0
      %1166 = vmatpush.bf16.msra.mxu0 0
      %1167 = vmatpush.bf16.msra.mxu0 0
      %1168 = vmatpush.bf16.msra.mxu0 0
      %1169 = vmatpush.bf16.msra.mxu0 0
      %1170 = vmatpush.bf16.msra.mxu0 %v1149
      %1171 = vmatpush.bf16.msra.mxu0 %v1147
      %1172 = vmatmul.bf16.gmra.mxu0 %v1153
      %v1173 = vpop.f32.mrf.mxu0
      %v1174 = vadd.f32 0.0, %v1173
      %v1175 = vpop.f32.mrf.mxu0
      %v1176 = vadd.f32 0.0, %v1175
      %1177 = vmatmul.bf16.gmra.mxu0 %v1156
      %v1178 = vpop.f32.mrf.mxu0
      %v1179 = vadd.f32 0.0, %v1178
      %v1180 = vpop.f32.mrf.mxu0
      %v1181 = vadd.f32 0.0, %v1180
      %1182 = vmatmul.bf16.gmra.mxu0 %v1159
      %v1183 = vpop.f32.mrf.mxu0
      %v1184 = vadd.f32 0.0, %v1183
      %v1185 = vpop.f32.mrf.mxu0
      %v1186 = vadd.f32 0.0, %v1185
      %1187 = vmatmul.bf16.gmra.mxu0 %v1162
      %v1188 = vpop.f32.mrf.mxu0
      %v1189 = vadd.f32 0.0, %v1188
      %v1190 = vpop.f32.mrf.mxu0
      %v1191 = vadd.f32 0.0, %v1190
      %1192 = vdwg.mxu0
      %v1193 = vadd.f32 %v1109, %v1174
      %v1194 = vadd.f32 %v1110, %v1176
      %v1195 = vadd.f32 %v1111, %v1179
      %v1196 = vadd.f32 %v1112, %v1181
      %v1197 = vadd.f32 %v1113, %v1184
      %v1198 = vadd.f32 %v1114, %v1186
      %v1199 = vadd.f32 %v1115, %v1189
      %v1200 = vadd.f32 %v1116, %v1191
      %s1201 = scalar_lea.vmem %s1, 384
      %v1202 = vld [vmem:[%s1201] sm:$0xf]
      %v1203 = vld [vmem:[%s1201 + $0x4] sm:$0xf]
      %v1204 = vld [vmem:[%s1201 + $0x8] sm:$0xf]
      %v1205 = vld [vmem:[%s1201 + $0xc] sm:$0xf]
      %v1206 = vld [vmem:[%s1201 + $0x10] sm:$0xf]
      %v1207 = vld [vmem:[%s1201 + $0x14] sm:$0xf]
      %v1208 = vld [vmem:[%s1201 + $0x18] sm:$0xf]
      %v1209 = vld [vmem:[%s1201 + $0x1c] sm:$0xf]
      %v1218 = vunpack.c.l.b16 %v1202
      %v1219 = vunpack.c.l.b16 %v1203
      %v1220 = vunpack.c.l.b16 %v1204
      %v1221 = vunpack.c.l.b16 %v1205
      %v1222 = vunpack.c.l.b16 %v1206
      %v1223 = vunpack.c.l.b16 %v1207
      %v1224 = vunpack.c.l.b16 %v1208
      %v1225 = vunpack.c.l.b16 %v1209
      %v1226 = vpack.c.b16 %v1219, %v1218
      %v1227 = vpack.c.b16 %v1221, %v1220
      %v1228 = vpack.c.b16 %v1223, %v1222
      %v1229 = vpack.c.b16 %v1225, %v1224
      %1230 = vrot.lane.b32.xlu0 %v248, 102
      %v1231 = vpop.permute.xlu0 %1230
      %1232 = vrot.lane.b32.xlu0 %v249, 102
      %v1233 = vpop.permute.xlu0 %1232
      %v1237 = vsel %vm256, %v1226, 0
      %v1240 = vsel %vm256, %v1227, 0
      %v1243 = vsel %vm256, %v1228, 0
      %v1246 = vsel %vm256, %v1229, 0
      %1248 = vmatpush.bf16.msra.mxu0 0
      %1249 = vmatpush.bf16.msra.mxu0 0
      %1250 = vmatpush.bf16.msra.mxu0 0
      %1251 = vmatpush.bf16.msra.mxu0 0
      %1252 = vmatpush.bf16.msra.mxu0 0
      %1253 = vmatpush.bf16.msra.mxu0 0
      %1254 = vmatpush.bf16.msra.mxu0 %v1233
      %1255 = vmatpush.bf16.msra.mxu0 %v1231
      %1256 = vmatmul.bf16.gmra.mxu0 %v1237
      %v1257 = vpop.f32.mrf.mxu0
      %v1258 = vadd.f32 0.0, %v1257
      %v1259 = vpop.f32.mrf.mxu0
      %v1260 = vadd.f32 0.0, %v1259
      %1261 = vmatmul.bf16.gmra.mxu0 %v1240
      %v1262 = vpop.f32.mrf.mxu0
      %v1263 = vadd.f32 0.0, %v1262
      %v1264 = vpop.f32.mrf.mxu0
      %v1265 = vadd.f32 0.0, %v1264
      %1266 = vmatmul.bf16.gmra.mxu0 %v1243
      %v1267 = vpop.f32.mrf.mxu0
      %v1268 = vadd.f32 0.0, %v1267
      %v1269 = vpop.f32.mrf.mxu0
      %v1270 = vadd.f32 0.0, %v1269
      %1271 = vmatmul.bf16.gmra.mxu0 %v1246
      %v1272 = vpop.f32.mrf.mxu0
      %v1273 = vadd.f32 0.0, %v1272
      %v1274 = vpop.f32.mrf.mxu0
      %v1275 = vadd.f32 0.0, %v1274
      %1276 = vdwg.mxu0
      %v1277 = vadd.f32 %v1193, %v1258
      %v1278 = vadd.f32 %v1194, %v1260
      %v1279 = vadd.f32 %v1195, %v1263
      %v1280 = vadd.f32 %v1196, %v1265
      %v1281 = vadd.f32 %v1197, %v1268
      %v1282 = vadd.f32 %v1198, %v1270
      %v1283 = vadd.f32 %v1199, %v1273
      %v1284 = vadd.f32 %v1200, %v1275
      %s1285 = scalar_lea.vmem %s1, 416
      %v1286 = vld [vmem:[%s1285] sm:$0xf]
      %v1287 = vld [vmem:[%s1285 + $0x4] sm:$0xf]
      %v1288 = vld [vmem:[%s1285 + $0x8] sm:$0xf]
      %v1289 = vld [vmem:[%s1285 + $0xc] sm:$0xf]
      %v1290 = vld [vmem:[%s1285 + $0x10] sm:$0xf]
      %v1291 = vld [vmem:[%s1285 + $0x14] sm:$0xf]
      %v1292 = vld [vmem:[%s1285 + $0x18] sm:$0xf]
      %v1293 = vld [vmem:[%s1285 + $0x1c] sm:$0xf]
      %v1302 = vunpack.c.l.b16 %v1286
      %v1303 = vunpack.c.l.b16 %v1287
      %v1304 = vunpack.c.l.b16 %v1288
      %v1305 = vunpack.c.l.b16 %v1289
      %v1306 = vunpack.c.l.b16 %v1290
      %v1307 = vunpack.c.l.b16 %v1291
      %v1308 = vunpack.c.l.b16 %v1292
      %v1309 = vunpack.c.l.b16 %v1293
      %v1310 = vpack.c.b16 %v1303, %v1302
      %v1311 = vpack.c.b16 %v1305, %v1304
      %v1312 = vpack.c.b16 %v1307, %v1306
      %v1313 = vpack.c.b16 %v1309, %v1308
      %1314 = vrot.lane.b32.xlu0 %v248, 101
      %v1315 = vpop.permute.xlu0 %1314
      %1316 = vrot.lane.b32.xlu0 %v249, 101
      %v1317 = vpop.permute.xlu0 %1316
      %v1321 = vsel %vm256, %v1310, 0
      %v1324 = vsel %vm256, %v1311, 0
      %v1327 = vsel %vm256, %v1312, 0
      %v1330 = vsel %vm256, %v1313, 0
      %1332 = vmatpush.bf16.msra.mxu0 0
      %1333 = vmatpush.bf16.msra.mxu0 0
      %1334 = vmatpush.bf16.msra.mxu0 0
      %1335 = vmatpush.bf16.msra.mxu0 0
      %1336 = vmatpush.bf16.msra.mxu0 0
      %1337 = vmatpush.bf16.msra.mxu0 0
      %1338 = vmatpush.bf16.msra.mxu0 %v1317
      %1339 = vmatpush.bf16.msra.mxu0 %v1315
      %1340 = vmatmul.bf16.gmra.mxu0 %v1321
      %v1341 = vpop.f32.mrf.mxu0
      %v1342 = vadd.f32 0.0, %v1341
      %v1343 = vpop.f32.mrf.mxu0
      %v1344 = vadd.f32 0.0, %v1343
      %1345 = vmatmul.bf16.gmra.mxu0 %v1324
      %v1346 = vpop.f32.mrf.mxu0
      %v1347 = vadd.f32 0.0, %v1346
      %v1348 = vpop.f32.mrf.mxu0
      %v1349 = vadd.f32 0.0, %v1348
      %1350 = vmatmul.bf16.gmra.mxu0 %v1327
      %v1351 = vpop.f32.mrf.mxu0
      %v1352 = vadd.f32 0.0, %v1351
      %v1353 = vpop.f32.mrf.mxu0
      %v1354 = vadd.f32 0.0, %v1353
      %1355 = vmatmul.bf16.gmra.mxu0 %v1330
      %v1356 = vpop.f32.mrf.mxu0
      %v1357 = vadd.f32 0.0, %v1356
      %v1358 = vpop.f32.mrf.mxu0
      %v1359 = vadd.f32 0.0, %v1358
      %1360 = vdwg.mxu0
      %v1361 = vadd.f32 %v1277, %v1342
      %v1362 = vadd.f32 %v1278, %v1344
      %v1363 = vadd.f32 %v1279, %v1347
      %v1364 = vadd.f32 %v1280, %v1349
      %v1365 = vadd.f32 %v1281, %v1352
      %v1366 = vadd.f32 %v1282, %v1354
      %v1367 = vadd.f32 %v1283, %v1357
      %v1368 = vadd.f32 %v1284, %v1359
      %s1369 = scalar_lea.vmem %s1, 448
      %v1370 = vld [vmem:[%s1369] sm:$0xf]
      %v1371 = vld [vmem:[%s1369 + $0x4] sm:$0xf]
      %v1372 = vld [vmem:[%s1369 + $0x8] sm:$0xf]
      %v1373 = vld [vmem:[%s1369 + $0xc] sm:$0xf]
      %v1374 = vld [vmem:[%s1369 + $0x10] sm:$0xf]
      %v1375 = vld [vmem:[%s1369 + $0x14] sm:$0xf]
      %v1376 = vld [vmem:[%s1369 + $0x18] sm:$0xf]
      %v1377 = vld [vmem:[%s1369 + $0x1c] sm:$0xf]
      %v1386 = vunpack.c.l.b16 %v1370
      %v1387 = vunpack.c.l.b16 %v1371
      %v1388 = vunpack.c.l.b16 %v1372
      %v1389 = vunpack.c.l.b16 %v1373
      %v1390 = vunpack.c.l.b16 %v1374
      %v1391 = vunpack.c.l.b16 %v1375
      %v1392 = vunpack.c.l.b16 %v1376
      %v1393 = vunpack.c.l.b16 %v1377
      %v1394 = vpack.c.b16 %v1387, %v1386
      %v1395 = vpack.c.b16 %v1389, %v1388
      %v1396 = vpack.c.b16 %v1391, %v1390
      %v1397 = vpack.c.b16 %v1393, %v1392
      %1398 = vrot.lane.b32.xlu0 %v248, 100
      %v1399 = vpop.permute.xlu0 %1398
      %1400 = vrot.lane.b32.xlu0 %v249, 100
      %v1401 = vpop.permute.xlu0 %1400
      %v1405 = vsel %vm256, %v1394, 0
      %v1408 = vsel %vm256, %v1395, 0
      %v1411 = vsel %vm256, %v1396, 0
      %v1414 = vsel %vm256, %v1397, 0
      %1416 = vmatpush.bf16.msra.mxu0 0
      %1417 = vmatpush.bf16.msra.mxu0 0
      %1418 = vmatpush.bf16.msra.mxu0 0
      %1419 = vmatpush.bf16.msra.mxu0 0
      %1420 = vmatpush.bf16.msra.mxu0 0
      %1421 = vmatpush.bf16.msra.mxu0 0
      %1422 = vmatpush.bf16.msra.mxu0 %v1401
      %1423 = vmatpush.bf16.msra.mxu0 %v1399
      %1424 = vmatmul.bf16.gmra.mxu0 %v1405
      %v1425 = vpop.f32.mrf.mxu0
      %v1426 = vadd.f32 0.0, %v1425
      %v1427 = vpop.f32.mrf.mxu0
      %v1428 = vadd.f32 0.0, %v1427
      %1429 = vmatmul.bf16.gmra.mxu0 %v1408
      %v1430 = vpop.f32.mrf.mxu0
      %v1431 = vadd.f32 0.0, %v1430
      %v1432 = vpop.f32.mrf.mxu0
      %v1433 = vadd.f32 0.0, %v1432
      %1434 = vmatmul.bf16.gmra.mxu0 %v1411
      %v1435 = vpop.f32.mrf.mxu0
      %v1436 = vadd.f32 0.0, %v1435
      %v1437 = vpop.f32.mrf.mxu0
      %v1438 = vadd.f32 0.0, %v1437
      %1439 = vmatmul.bf16.gmra.mxu0 %v1414
      %v1440 = vpop.f32.mrf.mxu0
      %v1441 = vadd.f32 0.0, %v1440
      %v1442 = vpop.f32.mrf.mxu0
      %v1443 = vadd.f32 0.0, %v1442
      %1444 = vdwg.mxu0
      %v1445 = vadd.f32 %v1361, %v1426
      %v1446 = vadd.f32 %v1362, %v1428
      %v1447 = vadd.f32 %v1363, %v1431
      %v1448 = vadd.f32 %v1364, %v1433
      %v1449 = vadd.f32 %v1365, %v1436
      %v1450 = vadd.f32 %v1366, %v1438
      %v1451 = vadd.f32 %v1367, %v1441
      %v1452 = vadd.f32 %v1368, %v1443
      %s1453 = scalar_lea.vmem %s1, 480
      %v1454 = vld [vmem:[%s1453] sm:$0xf]
      %v1455 = vld [vmem:[%s1453 + $0x4] sm:$0xf]
      %v1456 = vld [vmem:[%s1453 + $0x8] sm:$0xf]
      %v1457 = vld [vmem:[%s1453 + $0xc] sm:$0xf]
      %v1458 = vld [vmem:[%s1453 + $0x10] sm:$0xf]
      %v1459 = vld [vmem:[%s1453 + $0x14] sm:$0xf]
      %v1460 = vld [vmem:[%s1453 + $0x18] sm:$0xf]
      %v1461 = vld [vmem:[%s1453 + $0x1c] sm:$0xf]
      %v1470 = vunpack.c.l.b16 %v1454
      %v1471 = vunpack.c.l.b16 %v1455
      %v1472 = vunpack.c.l.b16 %v1456
      %v1473 = vunpack.c.l.b16 %v1457
      %v1474 = vunpack.c.l.b16 %v1458
      %v1475 = vunpack.c.l.b16 %v1459
      %v1476 = vunpack.c.l.b16 %v1460
      %v1477 = vunpack.c.l.b16 %v1461
      %v1478 = vpack.c.b16 %v1471, %v1470
      %v1479 = vpack.c.b16 %v1473, %v1472
      %v1480 = vpack.c.b16 %v1475, %v1474
      %v1481 = vpack.c.b16 %v1477, %v1476
      %v1482 = vunpack.c.h.b16 %v199
      %v1483 = vunpack.c.h.b16 %v200
      %v1484 = vunpack.c.h.b16 %v201
      %v1485 = vunpack.c.h.b16 %v202
      %v1486 = vpack.c.b16 %v1483, %v1482
      %v1487 = vpack.c.b16 %v1485, %v1484
      %1488 = vrot.lane.b32.xlu0 %v248, 92
      %v1489 = vpop.permute.xlu0 %1488
      %1490 = vrot.lane.b32.xlu0 %v1486, 92
      %v1491 = vpop.permute.xlu0 %1490
      %1492 = vrot.lane.b32.xlu0 %v249, 92
      %v1493 = vpop.permute.xlu0 %1492
      %1494 = vrot.lane.b32.xlu0 %v1487, 92
      %v1495 = vpop.permute.xlu0 %1494
      %vm1496 = vcmask 752640
      %v1497 = vsel %vm1496, %v1489, %v1491
      %v1498 = vsel %vm1496, %v1493, %v1495
      %v1502 = vsel %vm256, %v1478, 0
      %v1505 = vsel %vm256, %v1479, 0
      %v1508 = vsel %vm256, %v1480, 0
      %v1511 = vsel %vm256, %v1481, 0
      %1513 = vmatpush.bf16.msra.mxu0 0
      %1514 = vmatpush.bf16.msra.mxu0 0
      %1515 = vmatpush.bf16.msra.mxu0 0
      %1516 = vmatpush.bf16.msra.mxu0 0
      %1517 = vmatpush.bf16.msra.mxu0 0
      %1518 = vmatpush.bf16.msra.mxu0 0
      %1519 = vmatpush.bf16.msra.mxu0 %v1498
      %1520 = vmatpush.bf16.msra.mxu0 %v1497
      %1521 = vmatmul.bf16.gmra.mxu0 %v1502
      %v1522 = vpop.f32.mrf.mxu0
      %v1523 = vadd.f32 0.0, %v1522
      %v1524 = vpop.f32.mrf.mxu0
      %v1525 = vadd.f32 0.0, %v1524
      %1526 = vmatmul.bf16.gmra.mxu0 %v1505
      %v1527 = vpop.f32.mrf.mxu0
      %v1528 = vadd.f32 0.0, %v1527
      %v1529 = vpop.f32.mrf.mxu0
      %v1530 = vadd.f32 0.0, %v1529
      %1531 = vmatmul.bf16.gmra.mxu0 %v1508
      %v1532 = vpop.f32.mrf.mxu0
      %v1533 = vadd.f32 0.0, %v1532
      %v1534 = vpop.f32.mrf.mxu0
      %v1535 = vadd.f32 0.0, %v1534
      %1536 = vmatmul.bf16.gmra.mxu0 %v1511
      %v1537 = vpop.f32.mrf.mxu0
      %v1538 = vadd.f32 0.0, %v1537
      %v1539 = vpop.f32.mrf.mxu0
      %v1540 = vadd.f32 0.0, %v1539
      %1541 = vdwg.mxu0
      %v1542 = vadd.f32 %v1445, %v1523
      %v1543 = vadd.f32 %v1446, %v1525
      %v1544 = vadd.f32 %v1447, %v1528
      %v1545 = vadd.f32 %v1448, %v1530
      %v1546 = vadd.f32 %v1449, %v1533
      %v1547 = vadd.f32 %v1450, %v1535
      %v1548 = vadd.f32 %v1451, %v1538
      %v1549 = vadd.f32 %v1452, %v1540
      %s1550 = scalar_lea.vmem %s1, 512
      %v1551 = vld [vmem:[%s1550] sm:$0xf]
      %v1552 = vld [vmem:[%s1550 + $0x4] sm:$0xf]
      %v1553 = vld [vmem:[%s1550 + $0x8] sm:$0xf]
      %v1554 = vld [vmem:[%s1550 + $0xc] sm:$0xf]
      %v1555 = vld [vmem:[%s1550 + $0x10] sm:$0xf]
      %v1556 = vld [vmem:[%s1550 + $0x14] sm:$0xf]
      %v1557 = vld [vmem:[%s1550 + $0x18] sm:$0xf]
      %v1558 = vld [vmem:[%s1550 + $0x1c] sm:$0xf]
      %v1567 = vunpack.c.l.b16 %v1551
      %v1568 = vunpack.c.l.b16 %v1552
      %v1569 = vunpack.c.l.b16 %v1553
      %v1570 = vunpack.c.l.b16 %v1554
      %v1571 = vunpack.c.l.b16 %v1555
      %v1572 = vunpack.c.l.b16 %v1556
      %v1573 = vunpack.c.l.b16 %v1557
      %v1574 = vunpack.c.l.b16 %v1558
      %v1575 = vpack.c.b16 %v1568, %v1567
      %v1576 = vpack.c.b16 %v1570, %v1569
      %v1577 = vpack.c.b16 %v1572, %v1571
      %v1578 = vpack.c.b16 %v1574, %v1573
      %1579 = vrot.lane.b32.xlu0 %v248, 91
      %v1580 = vpop.permute.xlu0 %1579
      %1581 = vrot.lane.b32.xlu0 %v1486, 91
      %v1582 = vpop.permute.xlu0 %1581
      %1583 = vrot.lane.b32.xlu0 %v249, 91
      %v1584 = vpop.permute.xlu0 %1583
      %1585 = vrot.lane.b32.xlu0 %v1487, 91
      %v1586 = vpop.permute.xlu0 %1585
      %vm1587 = vcmask 744448
      %v1588 = vsel %vm1587, %v1580, %v1582
      %v1589 = vsel %vm1587, %v1584, %v1586
      %v1593 = vsel %vm256, %v1575, 0
      %v1596 = vsel %vm256, %v1576, 0
      %v1599 = vsel %vm256, %v1577, 0
      %v1602 = vsel %vm256, %v1578, 0
      %1604 = vmatpush.bf16.msra.mxu0 0
      %1605 = vmatpush.bf16.msra.mxu0 0
      %1606 = vmatpush.bf16.msra.mxu0 0
      %1607 = vmatpush.bf16.msra.mxu0 0
      %1608 = vmatpush.bf16.msra.mxu0 0
      %1609 = vmatpush.bf16.msra.mxu0 0
      %1610 = vmatpush.bf16.msra.mxu0 %v1589
      %1611 = vmatpush.bf16.msra.mxu0 %v1588
      %1612 = vmatmul.bf16.gmra.mxu0 %v1593
      %v1613 = vpop.f32.mrf.mxu0
      %v1614 = vadd.f32 0.0, %v1613
      %v1615 = vpop.f32.mrf.mxu0
      %v1616 = vadd.f32 0.0, %v1615
      %1617 = vmatmul.bf16.gmra.mxu0 %v1596
      %v1618 = vpop.f32.mrf.mxu0
      %v1619 = vadd.f32 0.0, %v1618
      %v1620 = vpop.f32.mrf.mxu0
      %v1621 = vadd.f32 0.0, %v1620
      %1622 = vmatmul.bf16.gmra.mxu0 %v1599
      %v1623 = vpop.f32.mrf.mxu0
      %v1624 = vadd.f32 0.0, %v1623
      %v1625 = vpop.f32.mrf.mxu0
      %v1626 = vadd.f32 0.0, %v1625
      %1627 = vmatmul.bf16.gmra.mxu0 %v1602
      %v1628 = vpop.f32.mrf.mxu0
      %v1629 = vadd.f32 0.0, %v1628
      %v1630 = vpop.f32.mrf.mxu0
      %v1631 = vadd.f32 0.0, %v1630
      %1632 = vdwg.mxu0
      %v1633 = vadd.f32 %v1542, %v1614
      %v1634 = vadd.f32 %v1543, %v1616
      %v1635 = vadd.f32 %v1544, %v1619
      %v1636 = vadd.f32 %v1545, %v1621
      %v1637 = vadd.f32 %v1546, %v1624
      %v1638 = vadd.f32 %v1547, %v1626
      %v1639 = vadd.f32 %v1548, %v1629
      %v1640 = vadd.f32 %v1549, %v1631
      %s1641 = scalar_lea.vmem %s1, 544
      %v1642 = vld [vmem:[%s1641] sm:$0xf]
      %v1643 = vld [vmem:[%s1641 + $0x4] sm:$0xf]
      %v1644 = vld [vmem:[%s1641 + $0x8] sm:$0xf]
      %v1645 = vld [vmem:[%s1641 + $0xc] sm:$0xf]
      %v1646 = vld [vmem:[%s1641 + $0x10] sm:$0xf]
      %v1647 = vld [vmem:[%s1641 + $0x14] sm:$0xf]
      %v1648 = vld [vmem:[%s1641 + $0x18] sm:$0xf]
      %v1649 = vld [vmem:[%s1641 + $0x1c] sm:$0xf]
      %v1658 = vunpack.c.l.b16 %v1642
      %v1659 = vunpack.c.l.b16 %v1643
      %v1660 = vunpack.c.l.b16 %v1644
      %v1661 = vunpack.c.l.b16 %v1645
      %v1662 = vunpack.c.l.b16 %v1646
      %v1663 = vunpack.c.l.b16 %v1647
      %v1664 = vunpack.c.l.b16 %v1648
      %v1665 = vunpack.c.l.b16 %v1649
      %v1666 = vpack.c.b16 %v1659, %v1658
      %v1667 = vpack.c.b16 %v1661, %v1660
      %v1668 = vpack.c.b16 %v1663, %v1662
      %v1669 = vpack.c.b16 %v1665, %v1664
      %1670 = vrot.lane.b32.xlu0 %v248, 90
      %v1671 = vpop.permute.xlu0 %1670
      %1672 = vrot.lane.b32.xlu0 %v1486, 90
      %v1673 = vpop.permute.xlu0 %1672
      %1674 = vrot.lane.b32.xlu0 %v249, 90
      %v1675 = vpop.permute.xlu0 %1674
      %1676 = vrot.lane.b32.xlu0 %v1487, 90
      %v1677 = vpop.permute.xlu0 %1676
      %vm1678 = vcmask 736256
      %v1679 = vsel %vm1678, %v1671, %v1673
      %v1680 = vsel %vm1678, %v1675, %v1677
      %v1684 = vsel %vm256, %v1666, 0
      %v1687 = vsel %vm256, %v1667, 0
      %v1690 = vsel %vm256, %v1668, 0
      %v1693 = vsel %vm256, %v1669, 0
      %1695 = vmatpush.bf16.msra.mxu0 0
      %1696 = vmatpush.bf16.msra.mxu0 0
      %1697 = vmatpush.bf16.msra.mxu0 0
      %1698 = vmatpush.bf16.msra.mxu0 0
      %1699 = vmatpush.bf16.msra.mxu0 0
      %1700 = vmatpush.bf16.msra.mxu0 0
      %1701 = vmatpush.bf16.msra.mxu0 %v1680
      %1702 = vmatpush.bf16.msra.mxu0 %v1679
      %1703 = vmatmul.bf16.gmra.mxu0 %v1684
      %v1704 = vpop.f32.mrf.mxu0
      %v1705 = vadd.f32 0.0, %v1704
      %v1706 = vpop.f32.mrf.mxu0
      %v1707 = vadd.f32 0.0, %v1706
      %1708 = vmatmul.bf16.gmra.mxu0 %v1687
      %v1709 = vpop.f32.mrf.mxu0
      %v1710 = vadd.f32 0.0, %v1709
      %v1711 = vpop.f32.mrf.mxu0
      %v1712 = vadd.f32 0.0, %v1711
      %1713 = vmatmul.bf16.gmra.mxu0 %v1690
      %v1714 = vpop.f32.mrf.mxu0
      %v1715 = vadd.f32 0.0, %v1714
      %v1716 = vpop.f32.mrf.mxu0
      %v1717 = vadd.f32 0.0, %v1716
      %1718 = vmatmul.bf16.gmra.mxu0 %v1693
      %v1719 = vpop.f32.mrf.mxu0
      %v1720 = vadd.f32 0.0, %v1719
      %v1721 = vpop.f32.mrf.mxu0
      %v1722 = vadd.f32 0.0, %v1721
      %1723 = vdwg.mxu0
      %v1724 = vadd.f32 %v1633, %v1705
      %v1725 = vadd.f32 %v1634, %v1707
      %v1726 = vadd.f32 %v1635, %v1710
      %v1727 = vadd.f32 %v1636, %v1712
      %v1728 = vadd.f32 %v1637, %v1715
      %v1729 = vadd.f32 %v1638, %v1717
      %v1730 = vadd.f32 %v1639, %v1720
      %v1731 = vadd.f32 %v1640, %v1722
      %s1732 = scalar_lea.vmem %s1, 576
      %v1733 = vld [vmem:[%s1732] sm:$0xf]
      %v1734 = vld [vmem:[%s1732 + $0x4] sm:$0xf]
      %v1735 = vld [vmem:[%s1732 + $0x8] sm:$0xf]
      %v1736 = vld [vmem:[%s1732 + $0xc] sm:$0xf]
      %v1737 = vld [vmem:[%s1732 + $0x10] sm:$0xf]
      %v1738 = vld [vmem:[%s1732 + $0x14] sm:$0xf]
      %v1739 = vld [vmem:[%s1732 + $0x18] sm:$0xf]
      %v1740 = vld [vmem:[%s1732 + $0x1c] sm:$0xf]
      %v1749 = vunpack.c.l.b16 %v1733
      %v1750 = vunpack.c.l.b16 %v1734
      %v1751 = vunpack.c.l.b16 %v1735
      %v1752 = vunpack.c.l.b16 %v1736
      %v1753 = vunpack.c.l.b16 %v1737
      %v1754 = vunpack.c.l.b16 %v1738
      %v1755 = vunpack.c.l.b16 %v1739
      %v1756 = vunpack.c.l.b16 %v1740
      %v1757 = vpack.c.b16 %v1750, %v1749
      %v1758 = vpack.c.b16 %v1752, %v1751
      %v1759 = vpack.c.b16 %v1754, %v1753
      %v1760 = vpack.c.b16 %v1756, %v1755
      %1761 = vrot.lane.b32.xlu0 %v248, 89
      %v1762 = vpop.permute.xlu0 %1761
      %1763 = vrot.lane.b32.xlu0 %v1486, 89
      %v1764 = vpop.permute.xlu0 %1763
      %1765 = vrot.lane.b32.xlu0 %v249, 89
      %v1766 = vpop.permute.xlu0 %1765
      %1767 = vrot.lane.b32.xlu0 %v1487, 89
      %v1768 = vpop.permute.xlu0 %1767
      %vm1769 = vcmask 728064
      %v1770 = vsel %vm1769, %v1762, %v1764
      %v1771 = vsel %vm1769, %v1766, %v1768
      %v1775 = vsel %vm256, %v1757, 0
      %v1778 = vsel %vm256, %v1758, 0
      %v1781 = vsel %vm256, %v1759, 0
      %v1784 = vsel %vm256, %v1760, 0
      %1786 = vmatpush.bf16.msra.mxu0 0
      %1787 = vmatpush.bf16.msra.mxu0 0
      %1788 = vmatpush.bf16.msra.mxu0 0
      %1789 = vmatpush.bf16.msra.mxu0 0
      %1790 = vmatpush.bf16.msra.mxu0 0
      %1791 = vmatpush.bf16.msra.mxu0 0
      %1792 = vmatpush.bf16.msra.mxu0 %v1771
      %1793 = vmatpush.bf16.msra.mxu0 %v1770
      %1794 = vmatmul.bf16.gmra.mxu0 %v1775
      %v1795 = vpop.f32.mrf.mxu0
      %v1796 = vadd.f32 0.0, %v1795
      %v1797 = vpop.f32.mrf.mxu0
      %v1798 = vadd.f32 0.0, %v1797
      %1799 = vmatmul.bf16.gmra.mxu0 %v1778
      %v1800 = vpop.f32.mrf.mxu0
      %v1801 = vadd.f32 0.0, %v1800
      %v1802 = vpop.f32.mrf.mxu0
      %v1803 = vadd.f32 0.0, %v1802
      %1804 = vmatmul.bf16.gmra.mxu0 %v1781
      %v1805 = vpop.f32.mrf.mxu0
      %v1806 = vadd.f32 0.0, %v1805
      %v1807 = vpop.f32.mrf.mxu0
      %v1808 = vadd.f32 0.0, %v1807
      %1809 = vmatmul.bf16.gmra.mxu0 %v1784
      %v1810 = vpop.f32.mrf.mxu0
      %v1811 = vadd.f32 0.0, %v1810
      %v1812 = vpop.f32.mrf.mxu0
      %v1813 = vadd.f32 0.0, %v1812
      %1814 = vdwg.mxu0
      %v1815 = vadd.f32 %v1724, %v1796
      %v1816 = vadd.f32 %v1725, %v1798
      %v1817 = vadd.f32 %v1726, %v1801
      %v1818 = vadd.f32 %v1727, %v1803
      %v1819 = vadd.f32 %v1728, %v1806
      %v1820 = vadd.f32 %v1729, %v1808
      %v1821 = vadd.f32 %v1730, %v1811
      %v1822 = vadd.f32 %v1731, %v1813
      %s1823 = scalar_lea.vmem %s1, 608
      %v1824 = vld [vmem:[%s1823] sm:$0xf]
      %v1825 = vld [vmem:[%s1823 + $0x4] sm:$0xf]
      %v1826 = vld [vmem:[%s1823 + $0x8] sm:$0xf]
      %v1827 = vld [vmem:[%s1823 + $0xc] sm:$0xf]
      %v1828 = vld [vmem:[%s1823 + $0x10] sm:$0xf]
      %v1829 = vld [vmem:[%s1823 + $0x14] sm:$0xf]
      %v1830 = vld [vmem:[%s1823 + $0x18] sm:$0xf]
      %v1831 = vld [vmem:[%s1823 + $0x1c] sm:$0xf]
      %v1840 = vunpack.c.l.b16 %v1824
      %v1841 = vunpack.c.l.b16 %v1825
      %v1842 = vunpack.c.l.b16 %v1826
      %v1843 = vunpack.c.l.b16 %v1827
      %v1844 = vunpack.c.l.b16 %v1828
      %v1845 = vunpack.c.l.b16 %v1829
      %v1846 = vunpack.c.l.b16 %v1830
      %v1847 = vunpack.c.l.b16 %v1831
      %v1848 = vpack.c.b16 %v1841, %v1840
      %v1849 = vpack.c.b16 %v1843, %v1842
      %v1850 = vpack.c.b16 %v1845, %v1844
      %v1851 = vpack.c.b16 %v1847, %v1846
      %1852 = vrot.lane.b32.xlu0 %v248, 88
      %v1853 = vpop.permute.xlu0 %1852
      %1854 = vrot.lane.b32.xlu0 %v1486, 88
      %v1855 = vpop.permute.xlu0 %1854
      %1856 = vrot.lane.b32.xlu0 %v249, 88
      %v1857 = vpop.permute.xlu0 %1856
      %1858 = vrot.lane.b32.xlu0 %v1487, 88
      %v1859 = vpop.permute.xlu0 %1858
      %vm1860 = vcmask 719872
      %v1861 = vsel %vm1860, %v1853, %v1855
      %v1862 = vsel %vm1860, %v1857, %v1859
      %v1866 = vsel %vm256, %v1848, 0
      %v1869 = vsel %vm256, %v1849, 0
      %v1872 = vsel %vm256, %v1850, 0
      %v1875 = vsel %vm256, %v1851, 0
      %1877 = vmatpush.bf16.msra.mxu0 0
      %1878 = vmatpush.bf16.msra.mxu0 0
      %1879 = vmatpush.bf16.msra.mxu0 0
      %1880 = vmatpush.bf16.msra.mxu0 0
      %1881 = vmatpush.bf16.msra.mxu0 0
      %1882 = vmatpush.bf16.msra.mxu0 0
      %1883 = vmatpush.bf16.msra.mxu0 %v1862
      %1884 = vmatpush.bf16.msra.mxu0 %v1861
      %1885 = vmatmul.bf16.gmra.mxu0 %v1866
      %v1886 = vpop.f32.mrf.mxu0
      %v1887 = vadd.f32 0.0, %v1886
      %v1888 = vpop.f32.mrf.mxu0
      %v1889 = vadd.f32 0.0, %v1888
      %1890 = vmatmul.bf16.gmra.mxu0 %v1869
      %v1891 = vpop.f32.mrf.mxu0
      %v1892 = vadd.f32 0.0, %v1891
      %v1893 = vpop.f32.mrf.mxu0
      %v1894 = vadd.f32 0.0, %v1893
      %1895 = vmatmul.bf16.gmra.mxu0 %v1872
      %v1896 = vpop.f32.mrf.mxu0
      %v1897 = vadd.f32 0.0, %v1896
      %v1898 = vpop.f32.mrf.mxu0
      %v1899 = vadd.f32 0.0, %v1898
      %1900 = vmatmul.bf16.gmra.mxu0 %v1875
      %v1901 = vpop.f32.mrf.mxu0
      %v1902 = vadd.f32 0.0, %v1901
      %v1903 = vpop.f32.mrf.mxu0
      %v1904 = vadd.f32 0.0, %v1903
      %1905 = vdwg.mxu0
      %v1906 = vadd.f32 %v1815, %v1887
      %v1907 = vadd.f32 %v1816, %v1889
      %v1908 = vadd.f32 %v1817, %v1892
      %v1909 = vadd.f32 %v1818, %v1894
      %v1910 = vadd.f32 %v1819, %v1897
      %v1911 = vadd.f32 %v1820, %v1899
      %v1912 = vadd.f32 %v1821, %v1902
      %v1913 = vadd.f32 %v1822, %v1904
      %s1914 = scalar_lea.vmem %s1, 640
      %v1915 = vld [vmem:[%s1914] sm:$0xf]
      %v1916 = vld [vmem:[%s1914 + $0x4] sm:$0xf]
      %v1917 = vld [vmem:[%s1914 + $0x8] sm:$0xf]
      %v1918 = vld [vmem:[%s1914 + $0xc] sm:$0xf]
      %v1919 = vld [vmem:[%s1914 + $0x10] sm:$0xf]
      %v1920 = vld [vmem:[%s1914 + $0x14] sm:$0xf]
      %v1921 = vld [vmem:[%s1914 + $0x18] sm:$0xf]
      %v1922 = vld [vmem:[%s1914 + $0x1c] sm:$0xf]
      %v1931 = vunpack.c.l.b16 %v1915
      %v1932 = vunpack.c.l.b16 %v1916
      %v1933 = vunpack.c.l.b16 %v1917
      %v1934 = vunpack.c.l.b16 %v1918
      %v1935 = vunpack.c.l.b16 %v1919
      %v1936 = vunpack.c.l.b16 %v1920
      %v1937 = vunpack.c.l.b16 %v1921
      %v1938 = vunpack.c.l.b16 %v1922
      %v1939 = vpack.c.b16 %v1932, %v1931
      %v1940 = vpack.c.b16 %v1934, %v1933
      %v1941 = vpack.c.b16 %v1936, %v1935
      %v1942 = vpack.c.b16 %v1938, %v1937
      %1943 = vrot.lane.b32.xlu0 %v248, 80
      %v1944 = vpop.permute.xlu0 %1943
      %1945 = vrot.lane.b32.xlu0 %v1486, 80
      %v1946 = vpop.permute.xlu0 %1945
      %1947 = vrot.lane.b32.xlu0 %v249, 80
      %v1948 = vpop.permute.xlu0 %1947
      %1949 = vrot.lane.b32.xlu0 %v1487, 80
      %v1950 = vpop.permute.xlu0 %1949
      %vm1951 = vcmask 654336
      %v1952 = vsel %vm1951, %v1944, %v1946
      %v1953 = vsel %vm1951, %v1948, %v1950
      %v1957 = vsel %vm256, %v1939, 0
      %v1960 = vsel %vm256, %v1940, 0
      %v1963 = vsel %vm256, %v1941, 0
      %v1966 = vsel %vm256, %v1942, 0
      %1968 = vmatpush.bf16.msra.mxu0 0
      %1969 = vmatpush.bf16.msra.mxu0 0
      %1970 = vmatpush.bf16.msra.mxu0 0
      %1971 = vmatpush.bf16.msra.mxu0 0
      %1972 = vmatpush.bf16.msra.mxu0 0
      %1973 = vmatpush.bf16.msra.mxu0 0
      %1974 = vmatpush.bf16.msra.mxu0 %v1953
      %1975 = vmatpush.bf16.msra.mxu0 %v1952
      %1976 = vmatmul.bf16.gmra.mxu0 %v1957
      %v1977 = vpop.f32.mrf.mxu0
      %v1978 = vadd.f32 0.0, %v1977
      %v1979 = vpop.f32.mrf.mxu0
      %v1980 = vadd.f32 0.0, %v1979
      %1981 = vmatmul.bf16.gmra.mxu0 %v1960
      %v1982 = vpop.f32.mrf.mxu0
      %v1983 = vadd.f32 0.0, %v1982
      %v1984 = vpop.f32.mrf.mxu0
      %v1985 = vadd.f32 0.0, %v1984
      %1986 = vmatmul.bf16.gmra.mxu0 %v1963
      %v1987 = vpop.f32.mrf.mxu0
      %v1988 = vadd.f32 0.0, %v1987
      %v1989 = vpop.f32.mrf.mxu0
      %v1990 = vadd.f32 0.0, %v1989
      %1991 = vmatmul.bf16.gmra.mxu0 %v1966
      %v1992 = vpop.f32.mrf.mxu0
      %v1993 = vadd.f32 0.0, %v1992
      %v1994 = vpop.f32.mrf.mxu0
      %v1995 = vadd.f32 0.0, %v1994
      %1996 = vdwg.mxu0
      %v1997 = vadd.f32 %v1906, %v1978
      %v1998 = vadd.f32 %v1907, %v1980
      %v1999 = vadd.f32 %v1908, %v1983
      %v2000 = vadd.f32 %v1909, %v1985
      %v2001 = vadd.f32 %v1910, %v1988
      %v2002 = vadd.f32 %v1911, %v1990
      %v2003 = vadd.f32 %v1912, %v1993
      %v2004 = vadd.f32 %v1913, %v1995
      %s2005 = scalar_lea.vmem %s1, 672
      %v2006 = vld [vmem:[%s2005] sm:$0xf]
      %v2007 = vld [vmem:[%s2005 + $0x4] sm:$0xf]
      %v2008 = vld [vmem:[%s2005 + $0x8] sm:$0xf]
      %v2009 = vld [vmem:[%s2005 + $0xc] sm:$0xf]
      %v2010 = vld [vmem:[%s2005 + $0x10] sm:$0xf]
      %v2011 = vld [vmem:[%s2005 + $0x14] sm:$0xf]
      %v2012 = vld [vmem:[%s2005 + $0x18] sm:$0xf]
      %v2013 = vld [vmem:[%s2005 + $0x1c] sm:$0xf]
      %v2022 = vunpack.c.l.b16 %v2006
      %v2023 = vunpack.c.l.b16 %v2007
      %v2024 = vunpack.c.l.b16 %v2008
      %v2025 = vunpack.c.l.b16 %v2009
      %v2026 = vunpack.c.l.b16 %v2010
      %v2027 = vunpack.c.l.b16 %v2011
      %v2028 = vunpack.c.l.b16 %v2012
      %v2029 = vunpack.c.l.b16 %v2013
      %v2030 = vpack.c.b16 %v2023, %v2022
      %v2031 = vpack.c.b16 %v2025, %v2024
      %v2032 = vpack.c.b16 %v2027, %v2026
      %v2033 = vpack.c.b16 %v2029, %v2028
      %2034 = vrot.lane.b32.xlu0 %v248, 79
      %v2035 = vpop.permute.xlu0 %2034
      %2036 = vrot.lane.b32.xlu0 %v1486, 79
      %v2037 = vpop.permute.xlu0 %2036
      %2038 = vrot.lane.b32.xlu0 %v249, 79
      %v2039 = vpop.permute.xlu0 %2038
      %2040 = vrot.lane.b32.xlu0 %v1487, 79
      %v2041 = vpop.permute.xlu0 %2040
      %vm2042 = vcmask 646144
      %v2043 = vsel %vm2042, %v2035, %v2037
      %v2044 = vsel %vm2042, %v2039, %v2041
      %v2048 = vsel %vm256, %v2030, 0
      %v2051 = vsel %vm256, %v2031, 0
      %v2054 = vsel %vm256, %v2032, 0
      %v2057 = vsel %vm256, %v2033, 0
      %2059 = vmatpush.bf16.msra.mxu0 0
      %2060 = vmatpush.bf16.msra.mxu0 0
      %2061 = vmatpush.bf16.msra.mxu0 0
      %2062 = vmatpush.bf16.msra.mxu0 0
      %2063 = vmatpush.bf16.msra.mxu0 0
      %2064 = vmatpush.bf16.msra.mxu0 0
      %2065 = vmatpush.bf16.msra.mxu0 %v2044
      %2066 = vmatpush.bf16.msra.mxu0 %v2043
      %2067 = vmatmul.bf16.gmra.mxu0 %v2048
      %v2068 = vpop.f32.mrf.mxu0
      %v2069 = vadd.f32 0.0, %v2068
      %v2070 = vpop.f32.mrf.mxu0
      %v2071 = vadd.f32 0.0, %v2070
      %2072 = vmatmul.bf16.gmra.mxu0 %v2051
      %v2073 = vpop.f32.mrf.mxu0
      %v2074 = vadd.f32 0.0, %v2073
      %v2075 = vpop.f32.mrf.mxu0
      %v2076 = vadd.f32 0.0, %v2075
      %2077 = vmatmul.bf16.gmra.mxu0 %v2054
      %v2078 = vpop.f32.mrf.mxu0
      %v2079 = vadd.f32 0.0, %v2078
      %v2080 = vpop.f32.mrf.mxu0
      %v2081 = vadd.f32 0.0, %v2080
      %2082 = vmatmul.bf16.gmra.mxu0 %v2057
      %v2083 = vpop.f32.mrf.mxu0
      %v2084 = vadd.f32 0.0, %v2083
      %v2085 = vpop.f32.mrf.mxu0
      %v2086 = vadd.f32 0.0, %v2085
      %2087 = vdwg.mxu0
      %v2088 = vadd.f32 %v1997, %v2069
      %v2089 = vadd.f32 %v1998, %v2071
      %v2090 = vadd.f32 %v1999, %v2074
      %v2091 = vadd.f32 %v2000, %v2076
      %v2092 = vadd.f32 %v2001, %v2079
      %v2093 = vadd.f32 %v2002, %v2081
      %v2094 = vadd.f32 %v2003, %v2084
      %v2095 = vadd.f32 %v2004, %v2086
      %s2096 = scalar_lea.vmem %s1, 704
      %v2097 = vld [vmem:[%s2096] sm:$0xf]
      %v2098 = vld [vmem:[%s2096 + $0x4] sm:$0xf]
      %v2099 = vld [vmem:[%s2096 + $0x8] sm:$0xf]
      %v2100 = vld [vmem:[%s2096 + $0xc] sm:$0xf]
      %v2101 = vld [vmem:[%s2096 + $0x10] sm:$0xf]
      %v2102 = vld [vmem:[%s2096 + $0x14] sm:$0xf]
      %v2103 = vld [vmem:[%s2096 + $0x18] sm:$0xf]
      %v2104 = vld [vmem:[%s2096 + $0x1c] sm:$0xf]
      %v2113 = vunpack.c.l.b16 %v2097
      %v2114 = vunpack.c.l.b16 %v2098
      %v2115 = vunpack.c.l.b16 %v2099
      %v2116 = vunpack.c.l.b16 %v2100
      %v2117 = vunpack.c.l.b16 %v2101
      %v2118 = vunpack.c.l.b16 %v2102
      %v2119 = vunpack.c.l.b16 %v2103
      %v2120 = vunpack.c.l.b16 %v2104
      %v2121 = vpack.c.b16 %v2114, %v2113
      %v2122 = vpack.c.b16 %v2116, %v2115
      %v2123 = vpack.c.b16 %v2118, %v2117
      %v2124 = vpack.c.b16 %v2120, %v2119
      %2125 = vrot.lane.b32.xlu0 %v248, 78
      %v2126 = vpop.permute.xlu0 %2125
      %2127 = vrot.lane.b32.xlu0 %v1486, 78
      %v2128 = vpop.permute.xlu0 %2127
      %2129 = vrot.lane.b32.xlu0 %v249, 78
      %v2130 = vpop.permute.xlu0 %2129
      %2131 = vrot.lane.b32.xlu0 %v1487, 78
      %v2132 = vpop.permute.xlu0 %2131
      %vm2133 = vcmask 637952
      %v2134 = vsel %vm2133, %v2126, %v2128
      %v2135 = vsel %vm2133, %v2130, %v2132
      %v2139 = vsel %vm256, %v2121, 0
      %v2142 = vsel %vm256, %v2122, 0
      %v2145 = vsel %vm256, %v2123, 0
      %v2148 = vsel %vm256, %v2124, 0
      %2150 = vmatpush.bf16.msra.mxu0 0
      %2151 = vmatpush.bf16.msra.mxu0 0
      %2152 = vmatpush.bf16.msra.mxu0 0
      %2153 = vmatpush.bf16.msra.mxu0 0
      %2154 = vmatpush.bf16.msra.mxu0 0
      %2155 = vmatpush.bf16.msra.mxu0 0
      %2156 = vmatpush.bf16.msra.mxu0 %v2135
      %2157 = vmatpush.bf16.msra.mxu0 %v2134
      %2158 = vmatmul.bf16.gmra.mxu0 %v2139
      %v2159 = vpop.f32.mrf.mxu0
      %v2160 = vadd.f32 0.0, %v2159
      %v2161 = vpop.f32.mrf.mxu0
      %v2162 = vadd.f32 0.0, %v2161
      %2163 = vmatmul.bf16.gmra.mxu0 %v2142
      %v2164 = vpop.f32.mrf.mxu0
      %v2165 = vadd.f32 0.0, %v2164
      %v2166 = vpop.f32.mrf.mxu0
      %v2167 = vadd.f32 0.0, %v2166
      %2168 = vmatmul.bf16.gmra.mxu0 %v2145
      %v2169 = vpop.f32.mrf.mxu0
      %v2170 = vadd.f32 0.0, %v2169
      %v2171 = vpop.f32.mrf.mxu0
      %v2172 = vadd.f32 0.0, %v2171
      %2173 = vmatmul.bf16.gmra.mxu0 %v2148
      %v2174 = vpop.f32.mrf.mxu0
      %v2175 = vadd.f32 0.0, %v2174
      %v2176 = vpop.f32.mrf.mxu0
      %v2177 = vadd.f32 0.0, %v2176
      %2178 = vdwg.mxu0
      %v2179 = vadd.f32 %v2088, %v2160
      %v2180 = vadd.f32 %v2089, %v2162
      %v2181 = vadd.f32 %v2090, %v2165
      %v2182 = vadd.f32 %v2091, %v2167
      %v2183 = vadd.f32 %v2092, %v2170
      %v2184 = vadd.f32 %v2093, %v2172
      %v2185 = vadd.f32 %v2094, %v2175
      %v2186 = vadd.f32 %v2095, %v2177
      %s2187 = scalar_lea.vmem %s1, 736
      %v2188 = vld [vmem:[%s2187] sm:$0xf]
      %v2189 = vld [vmem:[%s2187 + $0x4] sm:$0xf]
      %v2190 = vld [vmem:[%s2187 + $0x8] sm:$0xf]
      %v2191 = vld [vmem:[%s2187 + $0xc] sm:$0xf]
      %v2192 = vld [vmem:[%s2187 + $0x10] sm:$0xf]
      %v2193 = vld [vmem:[%s2187 + $0x14] sm:$0xf]
      %v2194 = vld [vmem:[%s2187 + $0x18] sm:$0xf]
      %v2195 = vld [vmem:[%s2187 + $0x1c] sm:$0xf]
      %v2204 = vunpack.c.l.b16 %v2188
      %v2205 = vunpack.c.l.b16 %v2189
      %v2206 = vunpack.c.l.b16 %v2190
      %v2207 = vunpack.c.l.b16 %v2191
      %v2208 = vunpack.c.l.b16 %v2192
      %v2209 = vunpack.c.l.b16 %v2193
      %v2210 = vunpack.c.l.b16 %v2194
      %v2211 = vunpack.c.l.b16 %v2195
      %v2212 = vpack.c.b16 %v2205, %v2204
      %v2213 = vpack.c.b16 %v2207, %v2206
      %v2214 = vpack.c.b16 %v2209, %v2208
      %v2215 = vpack.c.b16 %v2211, %v2210
      %2216 = vrot.lane.b32.xlu0 %v248, 77
      %v2217 = vpop.permute.xlu0 %2216
      %2218 = vrot.lane.b32.xlu0 %v1486, 77
      %v2219 = vpop.permute.xlu0 %2218
      %2220 = vrot.lane.b32.xlu0 %v249, 77
      %v2221 = vpop.permute.xlu0 %2220
      %2222 = vrot.lane.b32.xlu0 %v1487, 77
      %v2223 = vpop.permute.xlu0 %2222
      %vm2224 = vcmask 629760
      %v2225 = vsel %vm2224, %v2217, %v2219
      %v2226 = vsel %vm2224, %v2221, %v2223
      %v2230 = vsel %vm256, %v2212, 0
      %v2233 = vsel %vm256, %v2213, 0
      %v2236 = vsel %vm256, %v2214, 0
      %v2239 = vsel %vm256, %v2215, 0
      %2241 = vmatpush.bf16.msra.mxu0 0
      %2242 = vmatpush.bf16.msra.mxu0 0
      %2243 = vmatpush.bf16.msra.mxu0 0
      %2244 = vmatpush.bf16.msra.mxu0 0
      %2245 = vmatpush.bf16.msra.mxu0 0
      %2246 = vmatpush.bf16.msra.mxu0 0
      %2247 = vmatpush.bf16.msra.mxu0 %v2226
      %2248 = vmatpush.bf16.msra.mxu0 %v2225
      %2249 = vmatmul.bf16.gmra.mxu0 %v2230
      %v2250 = vpop.f32.mrf.mxu0
      %v2251 = vadd.f32 0.0, %v2250
      %v2252 = vpop.f32.mrf.mxu0
      %v2253 = vadd.f32 0.0, %v2252
      %2254 = vmatmul.bf16.gmra.mxu0 %v2233
      %v2255 = vpop.f32.mrf.mxu0
      %v2256 = vadd.f32 0.0, %v2255
      %v2257 = vpop.f32.mrf.mxu0
      %v2258 = vadd.f32 0.0, %v2257
      %2259 = vmatmul.bf16.gmra.mxu0 %v2236
      %v2260 = vpop.f32.mrf.mxu0
      %v2261 = vadd.f32 0.0, %v2260
      %v2262 = vpop.f32.mrf.mxu0
      %v2263 = vadd.f32 0.0, %v2262
      %2264 = vmatmul.bf16.gmra.mxu0 %v2239
      %v2265 = vpop.f32.mrf.mxu0
      %v2266 = vadd.f32 0.0, %v2265
      %v2267 = vpop.f32.mrf.mxu0
      %v2268 = vadd.f32 0.0, %v2267
      %2269 = vdwg.mxu0
      %v2270 = vadd.f32 %v2179, %v2251
      %v2271 = vadd.f32 %v2180, %v2253
      %v2272 = vadd.f32 %v2181, %v2256
      %v2273 = vadd.f32 %v2182, %v2258
      %v2274 = vadd.f32 %v2183, %v2261
      %v2275 = vadd.f32 %v2184, %v2263
      %v2276 = vadd.f32 %v2185, %v2266
      %v2277 = vadd.f32 %v2186, %v2268
      %s2278 = scalar_lea.vmem %s1, 768
      %v2279 = vld [vmem:[%s2278] sm:$0xf]
      %v2280 = vld [vmem:[%s2278 + $0x4] sm:$0xf]
      %v2281 = vld [vmem:[%s2278 + $0x8] sm:$0xf]
      %v2282 = vld [vmem:[%s2278 + $0xc] sm:$0xf]
      %v2283 = vld [vmem:[%s2278 + $0x10] sm:$0xf]
      %v2284 = vld [vmem:[%s2278 + $0x14] sm:$0xf]
      %v2285 = vld [vmem:[%s2278 + $0x18] sm:$0xf]
      %v2286 = vld [vmem:[%s2278 + $0x1c] sm:$0xf]
      %v2295 = vunpack.c.l.b16 %v2279
      %v2296 = vunpack.c.l.b16 %v2280
      %v2297 = vunpack.c.l.b16 %v2281
      %v2298 = vunpack.c.l.b16 %v2282
      %v2299 = vunpack.c.l.b16 %v2283
      %v2300 = vunpack.c.l.b16 %v2284
      %v2301 = vunpack.c.l.b16 %v2285
      %v2302 = vunpack.c.l.b16 %v2286
      %v2303 = vpack.c.b16 %v2296, %v2295
      %v2304 = vpack.c.b16 %v2298, %v2297
      %v2305 = vpack.c.b16 %v2300, %v2299
      %v2306 = vpack.c.b16 %v2302, %v2301
      %2307 = vrot.lane.b32.xlu0 %v248, 76
      %v2308 = vpop.permute.xlu0 %2307
      %2309 = vrot.lane.b32.xlu0 %v1486, 76
      %v2310 = vpop.permute.xlu0 %2309
      %2311 = vrot.lane.b32.xlu0 %v249, 76
      %v2312 = vpop.permute.xlu0 %2311
      %2313 = vrot.lane.b32.xlu0 %v1487, 76
      %v2314 = vpop.permute.xlu0 %2313
      %vm2315 = vcmask 621568
      %v2316 = vsel %vm2315, %v2308, %v2310
      %v2317 = vsel %vm2315, %v2312, %v2314
      %v2321 = vsel %vm256, %v2303, 0
      %v2324 = vsel %vm256, %v2304, 0
      %v2327 = vsel %vm256, %v2305, 0
      %v2330 = vsel %vm256, %v2306, 0
      %2332 = vmatpush.bf16.msra.mxu0 0
      %2333 = vmatpush.bf16.msra.mxu0 0
      %2334 = vmatpush.bf16.msra.mxu0 0
      %2335 = vmatpush.bf16.msra.mxu0 0
      %2336 = vmatpush.bf16.msra.mxu0 0
      %2337 = vmatpush.bf16.msra.mxu0 0
      %2338 = vmatpush.bf16.msra.mxu0 %v2317
      %2339 = vmatpush.bf16.msra.mxu0 %v2316
      %2340 = vmatmul.bf16.gmra.mxu0 %v2321
      %v2341 = vpop.f32.mrf.mxu0
      %v2342 = vadd.f32 0.0, %v2341
      %v2343 = vpop.f32.mrf.mxu0
      %v2344 = vadd.f32 0.0, %v2343
      %2345 = vmatmul.bf16.gmra.mxu0 %v2324
      %v2346 = vpop.f32.mrf.mxu0
      %v2347 = vadd.f32 0.0, %v2346
      %v2348 = vpop.f32.mrf.mxu0
      %v2349 = vadd.f32 0.0, %v2348
      %2350 = vmatmul.bf16.gmra.mxu0 %v2327
      %v2351 = vpop.f32.mrf.mxu0
      %v2352 = vadd.f32 0.0, %v2351
      %v2353 = vpop.f32.mrf.mxu0
      %v2354 = vadd.f32 0.0, %v2353
      %2355 = vmatmul.bf16.gmra.mxu0 %v2330
      %v2356 = vpop.f32.mrf.mxu0
      %v2357 = vadd.f32 0.0, %v2356
      %v2358 = vpop.f32.mrf.mxu0
      %v2359 = vadd.f32 0.0, %v2358
      %2360 = vdwg.mxu0
      %v2361 = vadd.f32 %v2270, %v2342
      %v2362 = vadd.f32 %v2271, %v2344
      %v2363 = vadd.f32 %v2272, %v2347
      %v2364 = vadd.f32 %v2273, %v2349
      %v2365 = vadd.f32 %v2274, %v2352
      %v2366 = vadd.f32 %v2275, %v2354
      %v2367 = vadd.f32 %v2276, %v2357
      %v2368 = vadd.f32 %v2277, %v2359
      %2377 = vrot.lane.b32.xlu0 %v2361, 127
      %v2378 = vpop.permute.xlu0 %2377
      %2379 = vrot.lane.b32.xlu0 %v2362, 127
      %v2380 = vpop.permute.xlu0 %2379
      %2381 = vrot.lane.b32.xlu0 %v2363, 127
      %v2382 = vpop.permute.xlu0 %2381
      %2383 = vrot.lane.b32.xlu0 %v2364, 127
      %v2384 = vpop.permute.xlu0 %2383
      %2385 = vrot.lane.b32.xlu0 %v2365, 127
      %v2386 = vpop.permute.xlu0 %2385
      %2387 = vrot.lane.b32.xlu0 %v2366, 127
      %v2388 = vpop.permute.xlu0 %2387
      %2389 = vrot.lane.b32.xlu0 %v2367, 127
      %v2390 = vpop.permute.xlu0 %2389
      %2391 = vrot.lane.b32.xlu0 %v2368, 127
      %v2392 = vpop.permute.xlu0 %2391
      %v2401 = vmax.f32 %v2361, %v2378
      %v2402 = vmax.f32 %v2362, %v2380
      %v2403 = vmax.f32 %v2363, %v2382
      %v2404 = vmax.f32 %v2364, %v2384
      %v2405 = vmax.f32 %v2365, %v2386
      %v2406 = vmax.f32 %v2366, %v2388
      %v2407 = vmax.f32 %v2367, %v2390
      %v2408 = vmax.f32 %v2368, %v2392
      %2417 = vrot.lane.b32.xlu0 %v2401, 116
      %v2418 = vpop.permute.xlu0 %2417
      %2419 = vrot.lane.b32.xlu0 %v2402, 116
      %v2420 = vpop.permute.xlu0 %2419
      %2421 = vrot.lane.b32.xlu0 %v2403, 116
      %v2422 = vpop.permute.xlu0 %2421
      %2423 = vrot.lane.b32.xlu0 %v2404, 116
      %v2424 = vpop.permute.xlu0 %2423
      %2425 = vrot.lane.b32.xlu0 %v2405, 116
      %v2426 = vpop.permute.xlu0 %2425
      %2427 = vrot.lane.b32.xlu0 %v2406, 116
      %v2428 = vpop.permute.xlu0 %2427
      %2429 = vrot.lane.b32.xlu0 %v2407, 116
      %v2430 = vpop.permute.xlu0 %2429
      %2431 = vrot.lane.b32.xlu0 %v2408, 116
      %v2432 = vpop.permute.xlu0 %2431
      %v2441 = vmax.f32 %v2401, %v2418
      %v2442 = vmax.f32 %v2402, %v2420
      %v2443 = vmax.f32 %v2403, %v2422
      %v2444 = vmax.f32 %v2404, %v2424
      %v2445 = vmax.f32 %v2405, %v2426
      %v2446 = vmax.f32 %v2406, %v2428
      %v2447 = vmax.f32 %v2407, %v2430
      %v2448 = vmax.f32 %v2408, %v2432
      %v2449 = vld [vmem:[%s3] sm:$0xff]
      %v2450 = vld [vmem:[%s3 + $0x8] sm:$0xff]
      %v2451 = vld [vmem:[%s3 + $0x10] sm:$0xff]
      %v2452 = vld [vmem:[%s3 + $0x18] sm:$0xff]
      %v2453 = vld [vmem:[%s3 + $0x20] sm:$0xff]
      %v2454 = vld [vmem:[%s3 + $0x28] sm:$0xff]
      %v2455 = vld [vmem:[%s3 + $0x30] sm:$0xff]
      %v2456 = vld [vmem:[%s3 + $0x38] sm:$0xff]
      %v2457 = vld [vmem:[%s3 + $0x40] sm:$0xff]
      %v2458 = vld [vmem:[%s3 + $0x48] sm:$0xff]
      %v2459 = vld [vmem:[%s2] sm:$0xff]
      %v2460 = vld [vmem:[%s2 + $0x8] sm:$0xff]
      %v2461 = vld [vmem:[%s2 + $0x10] sm:$0xff]
      %v2462 = vld [vmem:[%s2 + $0x18] sm:$0xff]
      %v2463 = vld [vmem:[%s2 + $0x20] sm:$0xff]
      %v2464 = vld [vmem:[%s2 + $0x28] sm:$0xff]
      %v2465 = vld [vmem:[%s2 + $0x30] sm:$0xff]
      %v2466 = vld [vmem:[%s2 + $0x38] sm:$0xff]
      %2468 = vset.pattern.permute.xlu0 0
      %2469 = vperm.xlu0 %2468, %v2459
      %v2470 = vpop.permute.xlu0 %2469
      %2473 = vset.pattern.permute.xlu0 0
      %2474 = vperm.xlu0 %2473, %v2460
      %v2475 = vpop.permute.xlu0 %2474
      %2478 = vset.pattern.permute.xlu0 0
      %2479 = vperm.xlu0 %2478, %v2461
      %v2480 = vpop.permute.xlu0 %2479
      %2483 = vset.pattern.permute.xlu0 0
      %2484 = vperm.xlu0 %2483, %v2462
      %v2485 = vpop.permute.xlu0 %2484
      %2488 = vset.pattern.permute.xlu0 0
      %2489 = vperm.xlu0 %2488, %v2463
      %v2490 = vpop.permute.xlu0 %2489
      %2493 = vset.pattern.permute.xlu0 0
      %2494 = vperm.xlu0 %2493, %v2464
      %v2495 = vpop.permute.xlu0 %2494
      %2498 = vset.pattern.permute.xlu0 0
      %2499 = vperm.xlu0 %2498, %v2465
      %v2500 = vpop.permute.xlu0 %2499
      %2503 = vset.pattern.permute.xlu0 0
      %2504 = vperm.xlu0 %2503, %v2466
      %v2505 = vpop.permute.xlu0 %2504
      %vm2507 = vcmask 654336
      %v2509 = vsel %vm2507, %v2441, 0
      %v2512 = vsel %vm2507, %v2442, 0
      %v2515 = vsel %vm2507, %v2443, 0
      %v2518 = vsel %vm2507, %v2444, 0
      %v2521 = vsel %vm2507, %v2445, 0
      %v2524 = vsel %vm2507, %v2446, 0
      %v2527 = vsel %vm2507, %v2447, 0
      %v2530 = vsel %vm2507, %v2448, 0
      %2532 = vmatpush.msra.mxu0 0.0
      %2533 = vmatpush.msra.mxu0 0.0
      %2534 = vmatpush.msra.mxu0 0.0
      %2535 = vmatpush.msra.mxu0 0.0
      %2536 = vmatpush.msra.mxu0 0.0
      %2537 = vmatpush.msra.mxu0 0.0
      %2538 = vmatpush.msra.mxu0 %v2458
      %2539 = vmatpush.msra.mxu0 %v2457
      %2540 = vmatpush.msra.mxu0 %v2456
      %2541 = vmatpush.msra.mxu0 %v2455
      %2542 = vmatpush.msra.mxu0 %v2454
      %2543 = vmatpush.msra.mxu0 %v2453
      %2544 = vmatpush.msra.mxu0 %v2452
      %2545 = vmatpush.msra.mxu0 %v2451
      %2546 = vmatpush.msra.mxu0 %v2450
      %2547 = vmatpush.msra.mxu0 %v2449
      %2548 = vmatmul.f32.gmra.mxu0 %v2509
      %v2549 = vpop.f32.mrf.mxu0
      %v2550 = vadd.f32 %v2470, %v2549
      %2551 = vmatmul.f32.gmra.mxu0 %v2512
      %v2552 = vpop.f32.mrf.mxu0
      %v2553 = vadd.f32 %v2475, %v2552
      %2554 = vmatmul.f32.gmra.mxu0 %v2515
      %v2555 = vpop.f32.mrf.mxu0
      %v2556 = vadd.f32 %v2480, %v2555
      %2557 = vmatmul.f32.gmra.mxu0 %v2518
      %v2558 = vpop.f32.mrf.mxu0
      %v2559 = vadd.f32 %v2485, %v2558
      %2560 = vmatmul.f32.gmra.mxu0 %v2521
      %v2561 = vpop.f32.mrf.mxu0
      %v2562 = vadd.f32 %v2490, %v2561
      %2563 = vmatmul.f32.gmra.mxu0 %v2524
      %v2564 = vpop.f32.mrf.mxu0
      %v2565 = vadd.f32 %v2495, %v2564
      %2566 = vmatmul.f32.gmra.mxu0 %v2527
      %v2567 = vpop.f32.mrf.mxu0
      %v2568 = vadd.f32 %v2500, %v2567
      %2569 = vmatmul.f32.gmra.mxu0 %v2530
      %v2570 = vpop.f32.mrf.mxu0
      %v2571 = vadd.f32 %v2505, %v2570
      %2572 = vdwg.mxu0
      %vm2573 = vcmp.ge.f32.partialorder %v2550, 0.0
      %vm2574 = vcmp.ge.f32.partialorder %v2553, 0.0
      %vm2575 = vcmp.ge.f32.partialorder %v2556, 0.0
      %vm2576 = vcmp.ge.f32.partialorder %v2559, 0.0
      %vm2577 = vcmp.ge.f32.partialorder %v2562, 0.0
      %vm2578 = vcmp.ge.f32.partialorder %v2565, 0.0
      %vm2579 = vcmp.ge.f32.partialorder %v2568, 0.0
      %vm2580 = vcmp.ge.f32.partialorder %v2571, 0.0
      %v2581 = vmul.f32 %v2550, 0.01
      %v2582 = vmul.f32 %v2553, 0.01
      %v2583 = vmul.f32 %v2556, 0.01
      %v2584 = vmul.f32 %v2559, 0.01
      %v2585 = vmul.f32 %v2562, 0.01
      %v2586 = vmul.f32 %v2565, 0.01
      %v2587 = vmul.f32 %v2568, 0.01
      %v2588 = vmul.f32 %v2571, 0.01
      %v2589 = vsel %vm2573, %v2550, %v2581
      %v2590 = vsel %vm2574, %v2553, %v2582
      %v2591 = vsel %vm2575, %v2556, %v2583
      %v2592 = vsel %vm2576, %v2559, %v2584
      %v2593 = vsel %vm2577, %v2562, %v2585
      %v2594 = vsel %vm2578, %v2565, %v2586
      %v2595 = vsel %vm2579, %v2568, %v2587
      %v2596 = vsel %vm2580, %v2571, %v2588
      %v2597 = vpack.c.bf16 %v2589, %v2589
      %v2598 = vpack.c.bf16 %v2590, %v2590
      %v2599 = vpack.c.bf16 %v2591, %v2591
      %v2600 = vpack.c.bf16 %v2592, %v2592
      %v2601 = vpack.c.bf16 %v2593, %v2593
      %v2602 = vpack.c.bf16 %v2594, %v2594
      %v2603 = vpack.c.bf16 %v2595, %v2595
      %v2604 = vpack.c.bf16 %v2596, %v2596
      %vm2605 = vcmask 125952
      %2606 = vst.msk [vmem:[%s197] sm:$0xf] %vm2605, %v2597
      %2607 = vst.msk [vmem:[%s197 + $0x4] sm:$0xf] %vm2605, %v2598
      %2608 = vst.msk [vmem:[%s197 + $0x8] sm:$0xf] %vm2605, %v2599
      %2609 = vst.msk [vmem:[%s197 + $0xc] sm:$0xf] %vm2605, %v2600
      %2610 = vst.msk [vmem:[%s197 + $0x10] sm:$0xf] %vm2605, %v2601
      %2611 = vst.msk [vmem:[%s197 + $0x14] sm:$0xf] %vm2605, %v2602
      %2612 = vst.msk [vmem:[%s197 + $0x18] sm:$0xf] %vm2605, %v2603
      %2613 = vst.msk [vmem:[%s197 + $0x1c] sm:$0xf] %vm2605, %v2604
      %p2614 = scmp.lt.s32.totalorder %s15, 1
      %s2615 = scalar_select %p2614, %s15, 1
      %s2616 = smul.addr %s2615, 8
      %s2617 = smul.addr %s2616, 4
      %s2618 = scalar_lea.vmem %s4, %s2617
      // Predicated region
      $region37: #{_forward.4} parent=35 // pred_check
        %p2619 = pneg %p122
      $region38: #{_forward.4} parent=35 // pred_check_branch
        %2621 = sbr.rel (%p2619) target = $region40
      $region39: #{_forward.4} parent=35 // pred_region
        _
      $region40: #{_forward.4} parent=35 // pred_fallthru
        _
    $region36: #{_forward.4} parent=5 // pred_fallthru
      _
    %p2622 = scmp.le.s32.totalorder 2, %s10
    // Predicated region
    $region41: #{_forward.4} parent=5 // pred_check
      %p2623 = pneg %p2622
    $region42: #{_forward.4} parent=5 // pred_check_branch
      %2625 = sbr.rel (%p2623) target = $region44
    $region43: #{_forward.4} parent=5 // pred_region
      %s2626 = ssub.s32 %s10, 2
      // Predicated region
      $region45: #{_forward.4} parent=43 // pred_check
        %p2627 = pneg %p128
      $region46: #{_forward.4} parent=43 // pred_check_branch
        %2629 = sbr.rel (%p2627) target = $region48
      $region47: #{_forward.4} parent=43 // pred_region
        %p2630 = scmp.lt.s32.totalorder %s16, 1
        %s2631 = scalar_select %p2630, %s16, 1
        %s2632 = smul.addr %s2631, 8
        %s2633 = smul.addr %s2632, 4
        %s2634 = scalar_lea.vmem %s4, %s2633
      $region48: #{_forward.4} parent=43 // pred_fallthru
        _
    $region44: #{_forward.4} parent=5 // pred_fallthru
      _
  $region6: #{_forward.4} parent=0 // loop_footer
    %s14 = sadd.s32 1, %s10
  $region7: #{_forward.4} parent=0 // loop_footer_branch
    %9 = sbr.rel target = $region3
  $region8: #{_forward.4} parent=0 // loop_exit
    _

// kernel: _forward.3
$region0: #{_forward.3}
  #allocation0 [shape = 'u32[]', space=smem, size = 0x4, offset = 0x4, fixed_abs, tag = 'smem constant byte address 0x4 - core index']
  #allocation1 [shape = 'u32[72,128]{1,0:T(1,128)}', space=vmem, size = 0x9000, scoped, tag = 'internal scratch']
  %s0 = inlined_call_operand.vmem [shape: f32[2,1,896], index: 0, kind: input, shape index: {}]
  %s1 = inlined_call_operand.hbm [shape: f32[32,25], index: 1, kind: input, shape index: {}]
  %s2 = inlined_call_operand.vmem [shape: f32[32,1], index: 2, kind: input, shape index: {}]
  %s3 = inlined_call_operand.hbm [shape: f32[640,256], index: 3, kind: input, shape index: {}]
  %s4 = inlined_call_operand.vmem [shape: bf16[2,32,256], index: 4, kind: output, shape index: {}]
  %s5 = sld [smem:[#allocation0]]
  $region57: #{_forward.3} parent=0
    _
  %s7 = ssub.s32 1, %s5
  %s8 = scalar_select 0, %s7, %s5
  $region1: #{_forward.3} parent=0
    #allocation2 [shape = 'u8[16384]{0}', space=vmem, size = 0x4000, scoped, tag = 'input window, operand 1, single buffered']
    #allocation3 [shape = 's32[2]{0}', space=sflag, size = 0x8, scoped, tag = 'scoped memory for _forward.3']
    #allocation4 [shape = 'u8[655360]{0}', space=vmem, size = 0xa0000, scoped, tag = 'input window, operand 3, single buffered']
    #allocation5 [shape = 's32[1]{0}', space=sflag, size = 0x4, scoped, tag = 'scoped memory for _forward.3']
    %9 = vsyncpa [#allocation3], 0
    %10 = vsyncpa [#allocation5], 0
    loop: start=0, step=1, limit=4
    $region2: #{_forward.3} parent=1 // loop_pre_header
      _
    $region3: #{_forward.3} parent=1 // loop_header
      %s12 = sphi 0, %s16
      %p13 = scmp.ge.s32.totalorder %s12, 4
      %s22 = sphi 0, %s24
      %s25 = sphi 0, %s22
      %s26 = sphi 0, %s25
      %s42 = sphi 0, %s26
      %s46 = sphi 0, %s46
      %s48 = sphi 0, %s46
      %s49 = sphi 0, %s48
      %s63 = sphi 0, %s49
      %s67 = sphi 0, %s67
      %s69 = sphi 0, %s67
      %s70 = sphi 0, %s69
      %s84 = sphi 0, %s70
      %s88 = sphi 0, %s88
      %s90 = sphi 0, %s88
      %s91 = sphi 0, %s90
      %s105 = sphi 0, %s91
      %s111 = sphi 0, %s113
      %s114 = sphi 0, %s111
      %s115 = sphi 0, %s114
      %s131 = sphi 0, %s115
    $region4: #{_forward.3} parent=1 // loop_header_branch
      %15 = sbr.rel (%p13) target = $region8
    $region5: #{_forward.3} parent=1 // loop_body
      %s17 = ssub.s32 %s12, 1
      %s18 = ssub.s32 %s12, 2
      %s19 = sadd.s32 %s12, 1
      %s20 = ssub.s32 %s12, %s19
      %p21 = scmp.eq.s32.totalorder %s20, 0
      %s23 = sadd.s32 %s22, 1
      %s24 = scalar_select %p21, %s22, %s23
      %p27 = pneg %p21
      %p28 = scmp.eq.s32.totalorder %s12, 1
      %p29 = por %p27, %p28
      %p30 = scmp.ne.s32.totalorder %s22, %s25
      %p31 = scmp.eq.s32.totalorder %s12, 0
      %p32 = por %p30, %p31
      %p33 = scmp.ne.s32.totalorder %s22, %s25
      %p34 = scmp.eq.s32.totalorder %s17, 1
      %p35 = por %p33, %p34
      %p36 = scmp.ne.s32.totalorder %s25, %s26
      %p37 = scmp.eq.s32.totalorder %s17, 0
      %p38 = por %p36, %p37
      %p39 = scmp.ne.s32.totalorder %s25, %s26
      %p40 = scmp.eq.s32.totalorder %s18, 1
      %p41 = por %p39, %p40
      %p43 = scmp.ne.s32.totalorder %s26, %s42
      %p44 = scmp.eq.s32.totalorder %s18, 0
      %p45 = por %p43, %p44
      %s47 = sadd.s32 %s46, 1
      %p50 = scmp.eq.s32.totalorder %s12, 1
      %p51 = scmp.ne.s32.totalorder %s46, %s48
      %p52 = scmp.eq.s32.totalorder %s12, 0
      %p53 = por %p51, %p52
      %p54 = scmp.ne.s32.totalorder %s46, %s48
      %p55 = scmp.eq.s32.totalorder %s17, 1
      %p56 = por %p54, %p55
      %p57 = scmp.ne.s32.totalorder %s48, %s49
      %p58 = scmp.eq.s32.totalorder %s17, 0
      %p59 = por %p57, %p58
      %p60 = scmp.ne.s32.totalorder %s48, %s49
      %p61 = scmp.eq.s32.totalorder %s18, 1
      %p62 = por %p60, %p61
      %p64 = scmp.ne.s32.totalorder %s49, %s63
      %p65 = scmp.eq.s32.totalorder %s18, 0
      %p66 = por %p64, %p65
      %s68 = sadd.s32 %s67, 1
      %p71 = scmp.eq.s32.totalorder %s12, 1
      %p72 = scmp.ne.s32.totalorder %s67, %s69
      %p73 = scmp.eq.s32.totalorder %s12, 0
      %p74 = por %p72, %p73
      %p75 = scmp.ne.s32.totalorder %s67, %s69
      %p76 = scmp.eq.s32.totalorder %s17, 1
      %p77 = por %p75, %p76
      %p78 = scmp.ne.s32.totalorder %s69, %s70
      %p79 = scmp.eq.s32.totalorder %s17, 0
      %p80 = por %p78, %p79
      %p81 = scmp.ne.s32.totalorder %s69, %s70
      %p82 = scmp.eq.s32.totalorder %s18, 1
      %p83 = por %p81, %p82
      %p85 = scmp.ne.s32.totalorder %s70, %s84
      %p86 = scmp.eq.s32.totalorder %s18, 0
      %p87 = por %p85, %p86
      %s89 = sadd.s32 %s88, 1
      %p92 = scmp.eq.s32.totalorder %s12, 1
      %p93 = scmp.ne.s32.totalorder %s88, %s90
      %p94 = scmp.eq.s32.totalorder %s12, 0
      %p95 = por %p93, %p94
      %p96 = scmp.ne.s32.totalorder %s88, %s90
      %p97 = scmp.eq.s32.totalorder %s17, 1
      %p98 = por %p96, %p97
      %p99 = scmp.ne.s32.totalorder %s90, %s91
      %p100 = scmp.eq.s32.totalorder %s17, 0
      %p101 = por %p99, %p100
      %p102 = scmp.ne.s32.totalorder %s90, %s91
      %p103 = scmp.eq.s32.totalorder %s18, 1
      %p104 = por %p102, %p103
      %p106 = scmp.ne.s32.totalorder %s91, %s105
      %p107 = scmp.eq.s32.totalorder %s18, 0
      %p108 = por %p106, %p107
      %s109 = ssub.s32 %s12, %s19
      %p110 = scmp.eq.s32.totalorder %s109, 0
      %s112 = sadd.s32 %s111, 1
      %s113 = scalar_select %p110, %s111, %s112
      %p116 = pneg %p110
      %p117 = scmp.eq.s32.totalorder %s12, 1
      %p118 = por %p116, %p117
      %p119 = scmp.ne.s32.totalorder %s111, %s114
      %p120 = scmp.eq.s32.totalorder %s12, 0
      %p121 = por %p119, %p120
      %p122 = scmp.ne.s32.totalorder %s111, %s114
      %p123 = scmp.eq.s32.totalorder %s17, 1
      %p124 = por %p122, %p123
      %p125 = scmp.ne.s32.totalorder %s114, %s115
      %p126 = scmp.eq.s32.totalorder %s17, 0
      %p127 = por %p125, %p126
      %p128 = scmp.ne.s32.totalorder %s114, %s115
      %p129 = scmp.eq.s32.totalorder %s18, 1
      %p130 = por %p128, %p129
      %p132 = scmp.ne.s32.totalorder %s115, %s131
      %p133 = scmp.eq.s32.totalorder %s18, 0
      %p134 = por %p132, %p133
      %p135 = scmp.le.s32.totalorder 1, %s12
      %p136 = scmp.lt.s32.totalorder %s12, 3
      %p137 = pnand %p135, %p136
      %p138 = pneg %p137
      // Predicated region
      $region9: #{_forward.3} parent=5 // pred_check
        _
      $region10: #{_forward.3} parent=5 // pred_check_branch
        %140 = sbr.rel (%p137) target = $region12
      $region11: #{_forward.3} parent=5 // pred_region
        %s141 = ssub.s32 %s12, 1
        // Predicated region
        $region13: #{_forward.3} parent=11 // pred_check
          %p142 = pneg %p59
        $region14: #{_forward.3} parent=11 // pred_check_branch
          %144 = sbr.rel (%p142) target = $region16
        $region15: #{_forward.3} parent=11 // pred_region
          %146 = vsyncadd [#allocation3], 0
          %s147 = sshll.u32 %s1, 4
          %s148 = int_to_ptr.hbm [resolvable:$true] %s147
          %s149 = sshll.u32 [#allocation2], 4
          %s150 = int_to_ptr.vmem [resolvable:$true] %s149
          %155 = dma.hbm_to_vmem [thread:$0]  %s148, 512, %s150, [#allocation3], 128, 128, 8
        $region16: #{_forward.3} parent=11 // pred_fallthru
          _
        // Predicated region
        $region17: #{_forward.3} parent=11 // pred_check
          %p156 = pneg %p80
        $region18: #{_forward.3} parent=11 // pred_check_branch
          %158 = sbr.rel (%p156) target = $region20
        $region19: #{_forward.3} parent=11 // pred_region
          _
        $region20: #{_forward.3} parent=11 // pred_fallthru
          _
        // Predicated region
        $region21: #{_forward.3} parent=11 // pred_check
          %p159 = pneg %p101
        $region22: #{_forward.3} parent=11 // pred_check_branch
          %161 = sbr.rel (%p159) target = $region24
        $region23: #{_forward.3} parent=11 // pred_region
          %163 = vsyncadd [#allocation5], 0
          %s164 = sshll.u32 %s3, 4
          %s165 = int_to_ptr.hbm [resolvable:$true] %s164
          %s166 = sshll.u32 [#allocation4], 4
          %s167 = int_to_ptr.vmem [resolvable:$true] %s166
          %172 = dma.hbm_to_vmem [thread:$0]  %s165, 20480, %s167, [#allocation5], 256, 256, 16
        $region24: #{_forward.3} parent=11 // pred_fallthru
          _
      $region12: #{_forward.3} parent=5 // pred_fallthru
        _
      %p173 = scmp.lt.s32.totalorder %s12, 2
      // Predicated region
      $region25: #{_forward.3} parent=5 // pred_check
        %p174 = pneg %p173
      $region26: #{_forward.3} parent=5 // pred_check_branch
        %176 = sbr.rel (%p174) target = $region28
      $region27: #{_forward.3} parent=5 // pred_region
        // Predicated region
        $region29: #{_forward.3} parent=27 // pred_check
          %p177 = pneg %p32
        $region30: #{_forward.3} parent=27 // pred_check_branch
          %179 = sbr.rel (%p177) target = $region32
        $region31: #{_forward.3} parent=27 // pred_region
          %p180 = scmp.lt.s32.totalorder %s12, 1
          %s181 = scalar_select %p180, %s12, 1
          %s182 = smul.addr %s181, 7
          %s183 = scalar_lea.vmem %s0, %s182
        $region32: #{_forward.3} parent=27 // pred_fallthru
          _
      $region28: #{_forward.3} parent=5 // pred_fallthru
        _
      %p184 = scmp.le.s32.totalorder 1, %s12
      %p185 = scmp.lt.s32.totalorder %s12, 3
      %p186 = pnand %p184, %p185
      %p187 = pneg %p186
      // Predicated region
      $region33: #{_forward.3} parent=5 // pred_check
        _
      $region34: #{_forward.3} parent=5 // pred_check_branch
        %189 = sbr.rel (%p186) target = $region36
      $region35: #{_forward.3} parent=5 // pred_region
        %s190 = ssub.s32 %s12, 1
        // Predicated region
        $region37: #{_forward.3} parent=35 // pred_check
          %p191 = pneg %p59
        $region38: #{_forward.3} parent=35 // pred_check_branch
          %193 = sbr.rel (%p191) target = $region40
        $region39: #{_forward.3} parent=35 // pred_region
          %195 = dma.done [#allocation3], 512
        $region40: #{_forward.3} parent=35 // pred_fallthru
          _
        // Predicated region
        $region41: #{_forward.3} parent=35 // pred_check
          %p196 = pneg %p101
        $region42: #{_forward.3} parent=35 // pred_check_branch
          %198 = sbr.rel (%p196) target = $region44
        $region43: #{_forward.3} parent=35 // pred_region
          %200 = dma.done [#allocation5], 20480
        $region44: #{_forward.3} parent=35 // pred_fallthru
          _
        %p201 = scmp.lt.s32.totalorder %s17, 1
        %s202 = scalar_select %p201, %s17, 1
        %s203 = smul.addr %s202, 7
        %s204 = scalar_lea.vmem %s0, %s203
        %p205 = pneg %p38
        %p206 = pneg %p35
        %p207 = pneg %p59
        %p208 = pneg %p56
        %p209 = pneg %p80
        %p210 = pneg %p77
        %p211 = pneg %p101
        %p212 = pneg %p98
        %p213 = pneg %p127
        %p214 = pneg %p124
        %p215 = scmp.lt.s32.totalorder %s17, 1
        %s216 = scalar_select %p215, %s17, 1
        %s217 = smul.addr %s216, 8
        %s218 = smul.addr %s217, 4
        %s219 = scalar_lea.vmem %s4, %s218
        %p220 = scmp.lt.s32.totalorder %s17, 1
        %s221 = scalar_select %p220, %s17, 1
        %s222 = smul.addr %s221, 7
        %s223 = scalar_lea.vmem %s0, %s222
        %p224 = scmp.lt.s32.totalorder %s17, 1
        %s225 = scalar_select %p224, %s17, 1
        %s226 = smul.addr %s225, 8
        %s227 = smul.addr %s226, 4
        %s228 = scalar_lea.vmem %s4, %s227
        %v229 = vld [vmem:[%s223] sm:$0xff]
        %v230 = vld [vmem:[#allocation2] sm:$0xff]
        %v231 = vld [vmem:[#allocation2 + $0x8] sm:$0xff]
        %v232 = vld [vmem:[#allocation2 + $0x10] sm:$0xff]
        %v233 = vld [vmem:[#allocation2 + $0x18] sm:$0xff]
        %235 = vset.pattern.permute.xlu0 0
        %236 = vperm.xlu0 %235, %v230
        %v237 = vpop.permute.xlu0 %236
        %240 = vset.pattern.permute.xlu0 0
        %241 = vperm.xlu0 %240, %v231
        %v242 = vpop.permute.xlu0 %241
        %245 = vset.pattern.permute.xlu0 0
        %246 = vperm.xlu0 %245, %v232
        %v247 = vpop.permute.xlu0 %246
        %250 = vset.pattern.permute.xlu0 0
        %251 = vperm.xlu0 %250, %v233
        %v252 = vpop.permute.xlu0 %251
        %v255 = vperm.slane %v229, 0
        %v256 = vperm.slane %v229, 1
        %v257 = vperm.slane %v229, 2
        %v258 = vperm.slane %v229, 3
        %v259 = vperm.slane %v229, 4
        %v260 = vperm.slane %v229, 5
        %v267 = vmul.f32 %v237, %v255
        %v268 = vmul.f32 %v237, %v256
        %v269 = vmul.f32 %v237, %v257
        %v270 = vmul.f32 %v237, %v258
        %v271 = vmul.f32 %v237, %v259
        %v272 = vmul.f32 %v237, %v260
        %v273 = vmul.f32 %v242, %v255
        %v274 = vmul.f32 %v242, %v256
        %v275 = vmul.f32 %v242, %v257
        %v276 = vmul.f32 %v242, %v258
        %v277 = vmul.f32 %v242, %v259
        %v278 = vmul.f32 %v242, %v260
        %v279 = vmul.f32 %v247, %v255
        %v280 = vmul.f32 %v247, %v256
        %v281 = vmul.f32 %v247, %v257
        %v282 = vmul.f32 %v247, %v258
        %v283 = vmul.f32 %v247, %v259
        %v284 = vmul.f32 %v247, %v260
        %v285 = vmul.f32 %v252, %v255
        %v286 = vmul.f32 %v252, %v256
        %v287 = vmul.f32 %v252, %v257
        %v288 = vmul.f32 %v252, %v258
        %v289 = vmul.f32 %v252, %v259
        %v290 = vmul.f32 %v252, %v260
        %v291 = vadd.f32 %v267, 0.0
        %v292 = vadd.f32 %v268, 0.0
        %v293 = vadd.f32 %v269, 0.0
        %v294 = vadd.f32 %v270, 0.0
        %v295 = vadd.f32 %v271, 0.0
        %v296 = vadd.f32 %v272, 0.0
        %v297 = vadd.f32 %v273, 0.0
        %v298 = vadd.f32 %v274, 0.0
        %v299 = vadd.f32 %v275, 0.0
        %v300 = vadd.f32 %v276, 0.0
        %v301 = vadd.f32 %v277, 0.0
        %v302 = vadd.f32 %v278, 0.0
        %v303 = vadd.f32 %v279, 0.0
        %v304 = vadd.f32 %v280, 0.0
        %v305 = vadd.f32 %v281, 0.0
        %v306 = vadd.f32 %v282, 0.0
        %v307 = vadd.f32 %v283, 0.0
        %v308 = vadd.f32 %v284, 0.0
        %v309 = vadd.f32 %v285, 0.0
        %v310 = vadd.f32 %v286, 0.0
        %v311 = vadd.f32 %v287, 0.0
        %v312 = vadd.f32 %v288, 0.0
        %v313 = vadd.f32 %v289, 0.0
        %v314 = vadd.f32 %v290, 0.0
        %315 = vset.pattern.permute.xlu0 1
        %316 = vperm.xlu0 %315, %v230
        %v317 = vpop.permute.xlu0 %316
        %319 = vset.pattern.permute.xlu0 1
        %320 = vperm.xlu0 %319, %v231
        %v321 = vpop.permute.xlu0 %320
        %323 = vset.pattern.permute.xlu0 1
        %324 = vperm.xlu0 %323, %v232
        %v325 = vpop.permute.xlu0 %324
        %327 = vset.pattern.permute.xlu0 1
        %328 = vperm.xlu0 %327, %v233
        %v329 = vpop.permute.xlu0 %328
        %v331 = vmul.f32 %v317, %v255
        %v332 = vmul.f32 %v317, %v256
        %v333 = vmul.f32 %v317, %v257
        %v334 = vmul.f32 %v317, %v258
        %v335 = vmul.f32 %v317, %v259
        %v336 = vmul.f32 %v317, %v260
        %v337 = vmul.f32 %v321, %v255
        %v338 = vmul.f32 %v321, %v256
        %v339 = vmul.f32 %v321, %v257
        %v340 = vmul.f32 %v321, %v258
        %v341 = vmul.f32 %v321, %v259
        %v342 = vmul.f32 %v321, %v260
        %v343 = vmul.f32 %v325, %v255
        %v344 = vmul.f32 %v325, %v256
        %v345 = vmul.f32 %v325, %v257
        %v346 = vmul.f32 %v325, %v258
        %v347 = vmul.f32 %v325, %v259
        %v348 = vmul.f32 %v325, %v260
        %v349 = vmul.f32 %v329, %v255
        %v350 = vmul.f32 %v329, %v256
        %v351 = vmul.f32 %v329, %v257
        %v352 = vmul.f32 %v329, %v258
        %v353 = vmul.f32 %v329, %v259
        %v354 = vmul.f32 %v329, %v260
        %379 = vrot.lane.b32.xlu0 %v331, 127
        %v380 = vpop.permute.xlu0 %379
        %381 = vrot.lane.b32.xlu0 %v332, 127
        %v382 = vpop.permute.xlu0 %381
        %383 = vrot.lane.b32.xlu0 %v333, 127
        %v384 = vpop.permute.xlu0 %383
        %385 = vrot.lane.b32.xlu0 %v334, 127
        %v386 = vpop.permute.xlu0 %385
        %387 = vrot.lane.b32.xlu0 %v335, 127
        %v388 = vpop.permute.xlu0 %387
        %389 = vrot.lane.b32.xlu0 %v336, 127
        %v390 = vpop.permute.xlu0 %389
        %391 = vrot.lane.b32.xlu0 %v337, 127
        %v392 = vpop.permute.xlu0 %391
        %393 = vrot.lane.b32.xlu0 %v338, 127
        %v394 = vpop.permute.xlu0 %393
        %395 = vrot.lane.b32.xlu0 %v339, 127
        %v396 = vpop.permute.xlu0 %395
        %397 = vrot.lane.b32.xlu0 %v340, 127
        %v398 = vpop.permute.xlu0 %397
        %399 = vrot.lane.b32.xlu0 %v341, 127
        %v400 = vpop.permute.xlu0 %399
        %401 = vrot.lane.b32.xlu0 %v342, 127
        %v402 = vpop.permute.xlu0 %401
        %403 = vrot.lane.b32.xlu0 %v343, 127
        %v404 = vpop.permute.xlu0 %403
        %405 = vrot.lane.b32.xlu0 %v344, 127
        %v406 = vpop.permute.xlu0 %405
        %407 = vrot.lane.b32.xlu0 %v345, 127
        %v408 = vpop.permute.xlu0 %407
        %409 = vrot.lane.b32.xlu0 %v346, 127
        %v410 = vpop.permute.xlu0 %409
        %411 = vrot.lane.b32.xlu0 %v347, 127
        %v412 = vpop.permute.xlu0 %411
        %413 = vrot.lane.b32.xlu0 %v348, 127
        %v414 = vpop.permute.xlu0 %413
        %415 = vrot.lane.b32.xlu0 %v349, 127
        %v416 = vpop.permute.xlu0 %415
        %417 = vrot.lane.b32.xlu0 %v350, 127
        %v418 = vpop.permute.xlu0 %417
        %419 = vrot.lane.b32.xlu0 %v351, 127
        %v420 = vpop.permute.xlu0 %419
        %421 = vrot.lane.b32.xlu0 %v352, 127
        %v422 = vpop.permute.xlu0 %421
        %423 = vrot.lane.b32.xlu0 %v353, 127
        %v424 = vpop.permute.xlu0 %423
        %425 = vrot.lane.b32.xlu0 %v354, 127
        %v426 = vpop.permute.xlu0 %425
        %vm427 = vcmask 1039360
        %v428 = vsel %vm427, %v380, %v382
        %v429 = vsel %vm427, %v382, %v384
        %v430 = vsel %vm427, %v384, %v386
        %v431 = vsel %vm427, %v386, %v388
        %v432 = vsel %vm427, %v388, %v390
        %v433 = vsel %vm427, %v392, %v394
        %v434 = vsel %vm427, %v394, %v396
        %v435 = vsel %vm427, %v396, %v398
        %v436 = vsel %vm427, %v398, %v400
        %v437 = vsel %vm427, %v400, %v402
        %v438 = vsel %vm427, %v404, %v406
        %v439 = vsel %vm427, %v406, %v408
        %v440 = vsel %vm427, %v408, %v410
        %v441 = vsel %vm427, %v410, %v412
        %v442 = vsel %vm427, %v412, %v414
        %v443 = vsel %vm427, %v416, %v418
        %v444 = vsel %vm427, %v418, %v420
        %v445 = vsel %vm427, %v420, %v422
        %v446 = vsel %vm427, %v422, %v424
        %v447 = vsel %vm427, %v424, %v426
        %v472 = vadd.f32 %v291, %v428
        %v473 = vadd.f32 %v292, %v429
        %v474 = vadd.f32 %v293, %v430
        %v475 = vadd.f32 %v294, %v431
        %v476 = vadd.f32 %v295, %v432
        %v477 = vadd.f32 %v296, %v390
        %v478 = vadd.f32 %v297, %v433
        %v479 = vadd.f32 %v298, %v434
        %v480 = vadd.f32 %v299, %v435
        %v481 = vadd.f32 %v300, %v436
        %v482 = vadd.f32 %v301, %v437
        %v483 = vadd.f32 %v302, %v402
        %v484 = vadd.f32 %v303, %v438
        %v485 = vadd.f32 %v304, %v439
        %v486 = vadd.f32 %v305, %v440
        %v487 = vadd.f32 %v306, %v441
        %v488 = vadd.f32 %v307, %v442
        %v489 = vadd.f32 %v308, %v414
        %v490 = vadd.f32 %v309, %v443
        %v491 = vadd.f32 %v310, %v444
        %v492 = vadd.f32 %v311, %v445
        %v493 = vadd.f32 %v312, %v446
        %v494 = vadd.f32 %v313, %v447
        %v495 = vadd.f32 %v314, %v426
        %496 = vset.pattern.permute.xlu0 2
        %497 = vperm.xlu0 %496, %v230
        %v498 = vpop.permute.xlu0 %497
        %500 = vset.pattern.permute.xlu0 2
        %501 = vperm.xlu0 %500, %v231
        %v502 = vpop.permute.xlu0 %501
        %504 = vset.pattern.permute.xlu0 2
        %505 = vperm.xlu0 %504, %v232
        %v506 = vpop.permute.xlu0 %505
        %508 = vset.pattern.permute.xlu0 2
        %509 = vperm.xlu0 %508, %v233
        %v510 = vpop.permute.xlu0 %509
        %v512 = vmul.f32 %v498, %v255
        %v513 = vmul.f32 %v498, %v256
        %v514 = vmul.f32 %v498, %v257
        %v515 = vmul.f32 %v498, %v258
        %v516 = vmul.f32 %v498, %v259
        %v517 = vmul.f32 %v498, %v260
        %v518 = vmul.f32 %v502, %v255
        %v519 = vmul.f32 %v502, %v256
        %v520 = vmul.f32 %v502, %v257
        %v521 = vmul.f32 %v502, %v258
        %v522 = vmul.f32 %v502, %v259
        %v523 = vmul.f32 %v502, %v260
        %v524 = vmul.f32 %v506, %v255
        %v525 = vmul.f32 %v506, %v256
        %v526 = vmul.f32 %v506, %v257
        %v527 = vmul.f32 %v506, %v258
        %v528 = vmul.f32 %v506, %v259
        %v529 = vmul.f32 %v506, %v260
        %v530 = vmul.f32 %v510, %v255
        %v531 = vmul.f32 %v510, %v256
        %v532 = vmul.f32 %v510, %v257
        %v533 = vmul.f32 %v510, %v258
        %v534 = vmul.f32 %v510, %v259
        %v535 = vmul.f32 %v510, %v260
        %560 = vrot.lane.b32.xlu0 %v512, 126
        %v561 = vpop.permute.xlu0 %560
        %562 = vrot.lane.b32.xlu0 %v513, 126
        %v563 = vpop.permute.xlu0 %562
        %564 = vrot.lane.b32.xlu0 %v514, 126
        %v565 = vpop.permute.xlu0 %564
        %566 = vrot.lane.b32.xlu0 %v515, 126
        %v567 = vpop.permute.xlu0 %566
        %568 = vrot.lane.b32.xlu0 %v516, 126
        %v569 = vpop.permute.xlu0 %568
        %570 = vrot.lane.b32.xlu0 %v517, 126
        %v571 = vpop.permute.xlu0 %570
        %572 = vrot.lane.b32.xlu0 %v518, 126
        %v573 = vpop.permute.xlu0 %572
        %574 = vrot.lane.b32.xlu0 %v519, 126
        %v575 = vpop.permute.xlu0 %574
        %576 = vrot.lane.b32.xlu0 %v520, 126
        %v577 = vpop.permute.xlu0 %576
        %578 = vrot.lane.b32.xlu0 %v521, 126
        %v579 = vpop.permute.xlu0 %578
        %580 = vrot.lane.b32.xlu0 %v522, 126
        %v581 = vpop.permute.xlu0 %580
        %582 = vrot.lane.b32.xlu0 %v523, 126
        %v583 = vpop.permute.xlu0 %582
        %584 = vrot.lane.b32.xlu0 %v524, 126
        %v585 = vpop.permute.xlu0 %584
        %586 = vrot.lane.b32.xlu0 %v525, 126
        %v587 = vpop.permute.xlu0 %586
        %588 = vrot.lane.b32.xlu0 %v526, 126
        %v589 = vpop.permute.xlu0 %588
        %590 = vrot.lane.b32.xlu0 %v527, 126
        %v591 = vpop.permute.xlu0 %590
        %592 = vrot.lane.b32.xlu0 %v528, 126
        %v593 = vpop.permute.xlu0 %592
        %594 = vrot.lane.b32.xlu0 %v529, 126
        %v595 = vpop.permute.xlu0 %594
        %596 = vrot.lane.b32.xlu0 %v530, 126
        %v597 = vpop.permute.xlu0 %596
        %598 = vrot.lane.b32.xlu0 %v531, 126
        %v599 = vpop.permute.xlu0 %598
        %600 = vrot.lane.b32.xlu0 %v532, 126
        %v601 = vpop.permute.xlu0 %600
        %602 = vrot.lane.b32.xlu0 %v533, 126
        %v603 = vpop.permute.xlu0 %602
        %604 = vrot.lane.b32.xlu0 %v534, 126
        %v605 = vpop.permute.xlu0 %604
        %606 = vrot.lane.b32.xlu0 %v535, 126
        %v607 = vpop.permute.xlu0 %606
        %vm608 = vcmask 1031168
        %v609 = vsel %vm608, %v561, %v563
        %v610 = vsel %vm608, %v563, %v565
        %v611 = vsel %vm608, %v565, %v567
        %v612 = vsel %vm608, %v567, %v569
        %v613 = vsel %vm608, %v569, %v571
        %v614 = vsel %vm608, %v573, %v575
        %v615 = vsel %vm608, %v575, %v577
        %v616 = vsel %vm608, %v577, %v579
        %v617 = vsel %vm608, %v579, %v581
        %v618 = vsel %vm608, %v581, %v583
        %v619 = vsel %vm608, %v585, %v587
        %v620 = vsel %vm608, %v587, %v589
        %v621 = vsel %vm608, %v589, %v591
        %v622 = vsel %vm608, %v591, %v593
        %v623 = vsel %vm608, %v593, %v595
        %v624 = vsel %vm608, %v597, %v599
        %v625 = vsel %vm608, %v599, %v601
        %v626 = vsel %vm608, %v601, %v603
        %v627 = vsel %vm608, %v603, %v605
        %v628 = vsel %vm608, %v605, %v607
        %v653 = vadd.f32 %v472, %v609
        %v654 = vadd.f32 %v473, %v610
        %v655 = vadd.f32 %v474, %v611
        %v656 = vadd.f32 %v475, %v612
        %v657 = vadd.f32 %v476, %v613
        %v658 = vadd.f32 %v477, %v571
        %v659 = vadd.f32 %v478, %v614
        %v660 = vadd.f32 %v479, %v615
        %v661 = vadd.f32 %v480, %v616
        %v662 = vadd.f32 %v481, %v617
        %v663 = vadd.f32 %v482, %v618
        %v664 = vadd.f32 %v483, %v583
        %v665 = vadd.f32 %v484, %v619
        %v666 = vadd.f32 %v485, %v620
        %v667 = vadd.f32 %v486, %v621
        %v668 = vadd.f32 %v487, %v622
        %v669 = vadd.f32 %v488, %v623
        %v670 = vadd.f32 %v489, %v595
        %v671 = vadd.f32 %v490, %v624
        %v672 = vadd.f32 %v491, %v625
        %v673 = vadd.f32 %v492, %v626
        %v674 = vadd.f32 %v493, %v627
        %v675 = vadd.f32 %v494, %v628
        %v676 = vadd.f32 %v495, %v607
        %677 = vset.pattern.permute.xlu0 3
        %678 = vperm.xlu0 %677, %v230
        %v679 = vpop.permute.xlu0 %678
        %681 = vset.pattern.permute.xlu0 3
        %682 = vperm.xlu0 %681, %v231
        %v683 = vpop.permute.xlu0 %682
        %685 = vset.pattern.permute.xlu0 3
        %686 = vperm.xlu0 %685, %v232
        %v687 = vpop.permute.xlu0 %686
        %689 = vset.pattern.permute.xlu0 3
        %690 = vperm.xlu0 %689, %v233
        %v691 = vpop.permute.xlu0 %690
        %v693 = vmul.f32 %v679, %v255
        %v694 = vmul.f32 %v679, %v256
        %v695 = vmul.f32 %v679, %v257
        %v696 = vmul.f32 %v679, %v258
        %v697 = vmul.f32 %v679, %v259
        %v698 = vmul.f32 %v679, %v260
        %v699 = vmul.f32 %v683, %v255
        %v700 = vmul.f32 %v683, %v256
        %v701 = vmul.f32 %v683, %v257
        %v702 = vmul.f32 %v683, %v258
        %v703 = vmul.f32 %v683, %v259
        %v704 = vmul.f32 %v683, %v260
        %v705 = vmul.f32 %v687, %v255
        %v706 = vmul.f32 %v687, %v256
        %v707 = vmul.f32 %v687, %v257
        %v708 = vmul.f32 %v687, %v258
        %v709 = vmul.f32 %v687, %v259
        %v710 = vmul.f32 %v687, %v260
        %v711 = vmul.f32 %v691, %v255
        %v712 = vmul.f32 %v691, %v256
        %v713 = vmul.f32 %v691, %v257
        %v714 = vmul.f32 %v691, %v258
        %v715 = vmul.f32 %v691, %v259
        %v716 = vmul.f32 %v691, %v260
        %741 = vrot.lane.b32.xlu0 %v693, 125
        %v742 = vpop.permute.xlu0 %741
        %743 = vrot.lane.b32.xlu0 %v694, 125
        %v744 = vpop.permute.xlu0 %743
        %745 = vrot.lane.b32.xlu0 %v695, 125
        %v746 = vpop.permute.xlu0 %745
        %747 = vrot.lane.b32.xlu0 %v696, 125
        %v748 = vpop.permute.xlu0 %747
        %749 = vrot.lane.b32.xlu0 %v697, 125
        %v750 = vpop.permute.xlu0 %749
        %751 = vrot.lane.b32.xlu0 %v698, 125
        %v752 = vpop.permute.xlu0 %751
        %753 = vrot.lane.b32.xlu0 %v699, 125
        %v754 = vpop.permute.xlu0 %753
        %755 = vrot.lane.b32.xlu0 %v700, 125
        %v756 = vpop.permute.xlu0 %755
        %757 = vrot.lane.b32.xlu0 %v701, 125
        %v758 = vpop.permute.xlu0 %757
        %759 = vrot.lane.b32.xlu0 %v702, 125
        %v760 = vpop.permute.xlu0 %759
        %761 = vrot.lane.b32.xlu0 %v703, 125
        %v762 = vpop.permute.xlu0 %761
        %763 = vrot.lane.b32.xlu0 %v704, 125
        %v764 = vpop.permute.xlu0 %763
        %765 = vrot.lane.b32.xlu0 %v705, 125
        %v766 = vpop.permute.xlu0 %765
        %767 = vrot.lane.b32.xlu0 %v706, 125
        %v768 = vpop.permute.xlu0 %767
        %769 = vrot.lane.b32.xlu0 %v707, 125
        %v770 = vpop.permute.xlu0 %769
        %771 = vrot.lane.b32.xlu0 %v708, 125
        %v772 = vpop.permute.xlu0 %771
        %773 = vrot.lane.b32.xlu0 %v709, 125
        %v774 = vpop.permute.xlu0 %773
        %775 = vrot.lane.b32.xlu0 %v710, 125
        %v776 = vpop.permute.xlu0 %775
        %777 = vrot.lane.b32.xlu0 %v711, 125
        %v778 = vpop.permute.xlu0 %777
        %779 = vrot.lane.b32.xlu0 %v712, 125
        %v780 = vpop.permute.xlu0 %779
        %781 = vrot.lane.b32.xlu0 %v713, 125
        %v782 = vpop.permute.xlu0 %781
        %783 = vrot.lane.b32.xlu0 %v714, 125
        %v784 = vpop.permute.xlu0 %783
        %785 = vrot.lane.b32.xlu0 %v715, 125
        %v786 = vpop.permute.xlu0 %785
        %787 = vrot.lane.b32.xlu0 %v716, 125
        %v788 = vpop.permute.xlu0 %787
        %vm789 = vcmask 1022976
        %v790 = vsel %vm789, %v742, %v744
        %v791 = vsel %vm789, %v744, %v746
        %v792 = vsel %vm789, %v746, %v748
        %v793 = vsel %vm789, %v748, %v750
        %v794 = vsel %vm789, %v750, %v752
        %v795 = vsel %vm789, %v754, %v756
        %v796 = vsel %vm789, %v756, %v758
        %v797 = vsel %vm789, %v758, %v760
        %v798 = vsel %vm789, %v760, %v762
        %v799 = vsel %vm789, %v762, %v764
        %v800 = vsel %vm789, %v766, %v768
        %v801 = vsel %vm789, %v768, %v770
        %v802 = vsel %vm789, %v770, %v772
        %v803 = vsel %vm789, %v772, %v774
        %v804 = vsel %vm789, %v774, %v776
        %v805 = vsel %vm789, %v778, %v780
        %v806 = vsel %vm789, %v780, %v782
        %v807 = vsel %vm789, %v782, %v784
        %v808 = vsel %vm789, %v784, %v786
        %v809 = vsel %vm789, %v786, %v788
        %v834 = vadd.f32 %v653, %v790
        %v835 = vadd.f32 %v654, %v791
        %v836 = vadd.f32 %v655, %v792
        %v837 = vadd.f32 %v656, %v793
        %v838 = vadd.f32 %v657, %v794
        %v839 = vadd.f32 %v658, %v752
        %v840 = vadd.f32 %v659, %v795
        %v841 = vadd.f32 %v660, %v796
        %v842 = vadd.f32 %v661, %v797
        %v843 = vadd.f32 %v662, %v798
        %v844 = vadd.f32 %v663, %v799
        %v845 = vadd.f32 %v664, %v764
        %v846 = vadd.f32 %v665, %v800
        %v847 = vadd.f32 %v666, %v801
        %v848 = vadd.f32 %v667, %v802
        %v849 = vadd.f32 %v668, %v803
        %v850 = vadd.f32 %v669, %v804
        %v851 = vadd.f32 %v670, %v776
        %v852 = vadd.f32 %v671, %v805
        %v853 = vadd.f32 %v672, %v806
        %v854 = vadd.f32 %v673, %v807
        %v855 = vadd.f32 %v674, %v808
        %v856 = vadd.f32 %v675, %v809
        %v857 = vadd.f32 %v676, %v788
        %858 = vset.pattern.permute.xlu0 4
        %859 = vperm.xlu0 %858, %v230
        %v860 = vpop.permute.xlu0 %859
        %862 = vset.pattern.permute.xlu0 4
        %863 = vperm.xlu0 %862, %v231
        %v864 = vpop.permute.xlu0 %863
        %866 = vset.pattern.permute.xlu0 4
        %867 = vperm.xlu0 %866, %v232
        %v868 = vpop.permute.xlu0 %867
        %870 = vset.pattern.permute.xlu0 4
        %871 = vperm.xlu0 %870, %v233
        %v872 = vpop.permute.xlu0 %871
        %v874 = vmul.f32 %v860, %v255
        %v875 = vmul.f32 %v860, %v256
        %v876 = vmul.f32 %v860, %v257
        %v877 = vmul.f32 %v860, %v258
        %v878 = vmul.f32 %v860, %v259
        %v879 = vmul.f32 %v860, %v260
        %v880 = vmul.f32 %v864, %v255
        %v881 = vmul.f32 %v864, %v256
        %v882 = vmul.f32 %v864, %v257
        %v883 = vmul.f32 %v864, %v258
        %v884 = vmul.f32 %v864, %v259
        %v885 = vmul.f32 %v864, %v260
        %v886 = vmul.f32 %v868, %v255
        %v887 = vmul.f32 %v868, %v256
        %v888 = vmul.f32 %v868, %v257
        %v889 = vmul.f32 %v868, %v258
        %v890 = vmul.f32 %v868, %v259
        %v891 = vmul.f32 %v868, %v260
        %v892 = vmul.f32 %v872, %v255
        %v893 = vmul.f32 %v872, %v256
        %v894 = vmul.f32 %v872, %v257
        %v895 = vmul.f32 %v872, %v258
        %v896 = vmul.f32 %v872, %v259
        %v897 = vmul.f32 %v872, %v260
        %922 = vrot.lane.b32.xlu0 %v874, 124
        %v923 = vpop.permute.xlu0 %922
        %924 = vrot.lane.b32.xlu0 %v875, 124
        %v925 = vpop.permute.xlu0 %924
        %926 = vrot.lane.b32.xlu0 %v876, 124
        %v927 = vpop.permute.xlu0 %926
        %928 = vrot.lane.b32.xlu0 %v877, 124
        %v929 = vpop.permute.xlu0 %928
        %930 = vrot.lane.b32.xlu0 %v878, 124
        %v931 = vpop.permute.xlu0 %930
        %932 = vrot.lane.b32.xlu0 %v879, 124
        %v933 = vpop.permute.xlu0 %932
        %934 = vrot.lane.b32.xlu0 %v880, 124
        %v935 = vpop.permute.xlu0 %934
        %936 = vrot.lane.b32.xlu0 %v881, 124
        %v937 = vpop.permute.xlu0 %936
        %938 = vrot.lane.b32.xlu0 %v882, 124
        %v939 = vpop.permute.xlu0 %938
        %940 = vrot.lane.b32.xlu0 %v883, 124
        %v941 = vpop.permute.xlu0 %940
        %942 = vrot.lane.b32.xlu0 %v884, 124
        %v943 = vpop.permute.xlu0 %942
        %944 = vrot.lane.b32.xlu0 %v885, 124
        %v945 = vpop.permute.xlu0 %944
        %946 = vrot.lane.b32.xlu0 %v886, 124
        %v947 = vpop.permute.xlu0 %946
        %948 = vrot.lane.b32.xlu0 %v887, 124
        %v949 = vpop.permute.xlu0 %948
        %950 = vrot.lane.b32.xlu0 %v888, 124
        %v951 = vpop.permute.xlu0 %950
        %952 = vrot.lane.b32.xlu0 %v889, 124
        %v953 = vpop.permute.xlu0 %952
        %954 = vrot.lane.b32.xlu0 %v890, 124
        %v955 = vpop.permute.xlu0 %954
        %956 = vrot.lane.b32.xlu0 %v891, 124
        %v957 = vpop.permute.xlu0 %956
        %958 = vrot.lane.b32.xlu0 %v892, 124
        %v959 = vpop.permute.xlu0 %958
        %960 = vrot.lane.b32.xlu0 %v893, 124
        %v961 = vpop.permute.xlu0 %960
        %962 = vrot.lane.b32.xlu0 %v894, 124
        %v963 = vpop.permute.xlu0 %962
        %964 = vrot.lane.b32.xlu0 %v895, 124
        %v965 = vpop.permute.xlu0 %964
        %966 = vrot.lane.b32.xlu0 %v896, 124
        %v967 = vpop.permute.xlu0 %966
        %968 = vrot.lane.b32.xlu0 %v897, 124
        %v969 = vpop.permute.xlu0 %968
        %vm970 = vcmask 1014784
        %v971 = vsel %vm970, %v923, %v925
        %v972 = vsel %vm970, %v925, %v927
        %v973 = vsel %vm970, %v927, %v929
        %v974 = vsel %vm970, %v929, %v931
        %v975 = vsel %vm970, %v931, %v933
        %v976 = vsel %vm970, %v935, %v937
        %v977 = vsel %vm970, %v937, %v939
        %v978 = vsel %vm970, %v939, %v941
        %v979 = vsel %vm970, %v941, %v943
        %v980 = vsel %vm970, %v943, %v945
        %v981 = vsel %vm970, %v947, %v949
        %v982 = vsel %vm970, %v949, %v951
        %v983 = vsel %vm970, %v951, %v953
        %v984 = vsel %vm970, %v953, %v955
        %v985 = vsel %vm970, %v955, %v957
        %v986 = vsel %vm970, %v959, %v961
        %v987 = vsel %vm970, %v961, %v963
        %v988 = vsel %vm970, %v963, %v965
        %v989 = vsel %vm970, %v965, %v967
        %v990 = vsel %vm970, %v967, %v969
        %v1015 = vadd.f32 %v834, %v971
        %v1016 = vadd.f32 %v835, %v972
        %v1017 = vadd.f32 %v836, %v973
        %v1018 = vadd.f32 %v837, %v974
        %v1019 = vadd.f32 %v838, %v975
        %v1020 = vadd.f32 %v839, %v933
        %v1021 = vadd.f32 %v840, %v976
        %v1022 = vadd.f32 %v841, %v977
        %v1023 = vadd.f32 %v842, %v978
        %v1024 = vadd.f32 %v843, %v979
        %v1025 = vadd.f32 %v844, %v980
        %v1026 = vadd.f32 %v845, %v945
        %v1027 = vadd.f32 %v846, %v981
        %v1028 = vadd.f32 %v847, %v982
        %v1029 = vadd.f32 %v848, %v983
        %v1030 = vadd.f32 %v849, %v984
        %v1031 = vadd.f32 %v850, %v985
        %v1032 = vadd.f32 %v851, %v957
        %v1033 = vadd.f32 %v852, %v986
        %v1034 = vadd.f32 %v853, %v987
        %v1035 = vadd.f32 %v854, %v988
        %v1036 = vadd.f32 %v855, %v989
        %v1037 = vadd.f32 %v856, %v990
        %v1038 = vadd.f32 %v857, %v969
        %1039 = vset.pattern.permute.xlu0 5
        %1040 = vperm.xlu0 %1039, %v230
        %v1041 = vpop.permute.xlu0 %1040
        %1043 = vset.pattern.permute.xlu0 5
        %1044 = vperm.xlu0 %1043, %v231
        %v1045 = vpop.permute.xlu0 %1044
        %1047 = vset.pattern.permute.xlu0 5
        %1048 = vperm.xlu0 %1047, %v232
        %v1049 = vpop.permute.xlu0 %1048
        %1051 = vset.pattern.permute.xlu0 5
        %1052 = vperm.xlu0 %1051, %v233
        %v1053 = vpop.permute.xlu0 %1052
        %v1055 = vmul.f32 %v1041, %v255
        %v1056 = vmul.f32 %v1041, %v256
        %v1057 = vmul.f32 %v1041, %v257
        %v1058 = vmul.f32 %v1041, %v258
        %v1059 = vmul.f32 %v1041, %v259
        %v1060 = vmul.f32 %v1041, %v260
        %v1061 = vmul.f32 %v1045, %v255
        %v1062 = vmul.f32 %v1045, %v256
        %v1063 = vmul.f32 %v1045, %v257
        %v1064 = vmul.f32 %v1045, %v258
        %v1065 = vmul.f32 %v1045, %v259
        %v1066 = vmul.f32 %v1045, %v260
        %v1067 = vmul.f32 %v1049, %v255
        %v1068 = vmul.f32 %v1049, %v256
        %v1069 = vmul.f32 %v1049, %v257
        %v1070 = vmul.f32 %v1049, %v258
        %v1071 = vmul.f32 %v1049, %v259
        %v1072 = vmul.f32 %v1049, %v260
        %v1073 = vmul.f32 %v1053, %v255
        %v1074 = vmul.f32 %v1053, %v256
        %v1075 = vmul.f32 %v1053, %v257
        %v1076 = vmul.f32 %v1053, %v258
        %v1077 = vmul.f32 %v1053, %v259
        %v1078 = vmul.f32 %v1053, %v260
        %1103 = vrot.lane.b32.xlu0 %v1055, 100
        %v1104 = vpop.permute.xlu0 %1103
        %1105 = vrot.lane.b32.xlu0 %v1056, 100
        %v1106 = vpop.permute.xlu0 %1105
        %1107 = vrot.lane.b32.xlu0 %v1057, 100
        %v1108 = vpop.permute.xlu0 %1107
        %1109 = vrot.lane.b32.xlu0 %v1058, 100
        %v1110 = vpop.permute.xlu0 %1109
        %1111 = vrot.lane.b32.xlu0 %v1059, 100
        %v1112 = vpop.permute.xlu0 %1111
        %1113 = vrot.lane.b32.xlu0 %v1060, 100
        %v1114 = vpop.permute.xlu0 %1113
        %1115 = vrot.lane.b32.xlu0 %v1061, 100
        %v1116 = vpop.permute.xlu0 %1115
        %1117 = vrot.lane.b32.xlu0 %v1062, 100
        %v1118 = vpop.permute.xlu0 %1117
        %1119 = vrot.lane.b32.xlu0 %v1063, 100
        %v1120 = vpop.permute.xlu0 %1119
        %1121 = vrot.lane.b32.xlu0 %v1064, 100
        %v1122 = vpop.permute.xlu0 %1121
        %1123 = vrot.lane.b32.xlu0 %v1065, 100
        %v1124 = vpop.permute.xlu0 %1123
        %1125 = vrot.lane.b32.xlu0 %v1066, 100
        %v1126 = vpop.permute.xlu0 %1125
        %1127 = vrot.lane.b32.xlu0 %v1067, 100
        %v1128 = vpop.permute.xlu0 %1127
        %1129 = vrot.lane.b32.xlu0 %v1068, 100
        %v1130 = vpop.permute.xlu0 %1129
        %1131 = vrot.lane.b32.xlu0 %v1069, 100
        %v1132 = vpop.permute.xlu0 %1131
        %1133 = vrot.lane.b32.xlu0 %v1070, 100
        %v1134 = vpop.permute.xlu0 %1133
        %1135 = vrot.lane.b32.xlu0 %v1071, 100
        %v1136 = vpop.permute.xlu0 %1135
        %1137 = vrot.lane.b32.xlu0 %v1072, 100
        %v1138 = vpop.permute.xlu0 %1137
        %1139 = vrot.lane.b32.xlu0 %v1073, 100
        %v1140 = vpop.permute.xlu0 %1139
        %1141 = vrot.lane.b32.xlu0 %v1074, 100
        %v1142 = vpop.permute.xlu0 %1141
        %1143 = vrot.lane.b32.xlu0 %v1075, 100
        %v1144 = vpop.permute.xlu0 %1143
        %1145 = vrot.lane.b32.xlu0 %v1076, 100
        %v1146 = vpop.permute.xlu0 %1145
        %1147 = vrot.lane.b32.xlu0 %v1077, 100
        %v1148 = vpop.permute.xlu0 %1147
        %1149 = vrot.lane.b32.xlu0 %v1078, 100
        %v1150 = vpop.permute.xlu0 %1149
        %vm1151 = vcmask 818176
        %v1152 = vsel %vm1151, %v1104, %v1106
        %v1153 = vsel %vm1151, %v1106, %v1108
        %v1154 = vsel %vm1151, %v1108, %v1110
        %v1155 = vsel %vm1151, %v1110, %v1112
        %v1156 = vsel %vm1151, %v1112, %v1114
        %v1157 = vsel %vm1151, %v1116, %v1118
        %v1158 = vsel %vm1151, %v1118, %v1120
        %v1159 = vsel %vm1151, %v1120, %v1122
        %v1160 = vsel %vm1151, %v1122, %v1124
        %v1161 = vsel %vm1151, %v1124, %v1126
        %v1162 = vsel %vm1151, %v1128, %v1130
        %v1163 = vsel %vm1151, %v1130, %v1132
        %v1164 = vsel %vm1151, %v1132, %v1134
        %v1165 = vsel %vm1151, %v1134, %v1136
        %v1166 = vsel %vm1151, %v1136, %v1138
        %v1167 = vsel %vm1151, %v1140, %v1142
        %v1168 = vsel %vm1151, %v1142, %v1144
        %v1169 = vsel %vm1151, %v1144, %v1146
        %v1170 = vsel %vm1151, %v1146, %v1148
        %v1171 = vsel %vm1151, %v1148, %v1150
        %v1196 = vadd.f32 %v1015, %v1152
        %v1197 = vadd.f32 %v1016, %v1153
        %v1198 = vadd.f32 %v1017, %v1154
        %v1199 = vadd.f32 %v1018, %v1155
        %v1200 = vadd.f32 %v1019, %v1156
        %v1201 = vadd.f32 %v1020, %v1114
        %v1202 = vadd.f32 %v1021, %v1157
        %v1203 = vadd.f32 %v1022, %v1158
        %v1204 = vadd.f32 %v1023, %v1159
        %v1205 = vadd.f32 %v1024, %v1160
        %v1206 = vadd.f32 %v1025, %v1161
        %v1207 = vadd.f32 %v1026, %v1126
        %v1208 = vadd.f32 %v1027, %v1162
        %v1209 = vadd.f32 %v1028, %v1163
        %v1210 = vadd.f32 %v1029, %v1164
        %v1211 = vadd.f32 %v1030, %v1165
        %v1212 = vadd.f32 %v1031, %v1166
        %v1213 = vadd.f32 %v1032, %v1138
        %v1214 = vadd.f32 %v1033, %v1167
        %v1215 = vadd.f32 %v1034, %v1168
        %v1216 = vadd.f32 %v1035, %v1169
        %v1217 = vadd.f32 %v1036, %v1170
        %v1218 = vadd.f32 %v1037, %v1171
        %v1219 = vadd.f32 %v1038, %v1150
        %1220 = vset.pattern.permute.xlu0 6
        %1221 = vperm.xlu0 %1220, %v230
        %v1222 = vpop.permute.xlu0 %1221
        %1224 = vset.pattern.permute.xlu0 6
        %1225 = vperm.xlu0 %1224, %v231
        %v1226 = vpop.permute.xlu0 %1225
        %1228 = vset.pattern.permute.xlu0 6
        %1229 = vperm.xlu0 %1228, %v232
        %v1230 = vpop.permute.xlu0 %1229
        %1232 = vset.pattern.permute.xlu0 6
        %1233 = vperm.xlu0 %1232, %v233
        %v1234 = vpop.permute.xlu0 %1233
        %v1236 = vmul.f32 %v1222, %v255
        %v1237 = vmul.f32 %v1222, %v256
        %v1238 = vmul.f32 %v1222, %v257
        %v1239 = vmul.f32 %v1222, %v258
        %v1240 = vmul.f32 %v1222, %v259
        %v1241 = vmul.f32 %v1222, %v260
        %v1242 = vmul.f32 %v1226, %v255
        %v1243 = vmul.f32 %v1226, %v256
        %v1244 = vmul.f32 %v1226, %v257
        %v1245 = vmul.f32 %v1226, %v258
        %v1246 = vmul.f32 %v1226, %v259
        %v1247 = vmul.f32 %v1226, %v260
        %v1248 = vmul.f32 %v1230, %v255
        %v1249 = vmul.f32 %v1230, %v256
        %v1250 = vmul.f32 %v1230, %v257
        %v1251 = vmul.f32 %v1230, %v258
        %v1252 = vmul.f32 %v1230, %v259
        %v1253 = vmul.f32 %v1230, %v260
        %v1254 = vmul.f32 %v1234, %v255
        %v1255 = vmul.f32 %v1234, %v256
        %v1256 = vmul.f32 %v1234, %v257
        %v1257 = vmul.f32 %v1234, %v258
        %v1258 = vmul.f32 %v1234, %v259
        %v1259 = vmul.f32 %v1234, %v260
        %1284 = vrot.lane.b32.xlu0 %v1236, 99
        %v1285 = vpop.permute.xlu0 %1284
        %1286 = vrot.lane.b32.xlu0 %v1237, 99
        %v1287 = vpop.permute.xlu0 %1286
        %1288 = vrot.lane.b32.xlu0 %v1238, 99
        %v1289 = vpop.permute.xlu0 %1288
        %1290 = vrot.lane.b32.xlu0 %v1239, 99
        %v1291 = vpop.permute.xlu0 %1290
        %1292 = vrot.lane.b32.xlu0 %v1240, 99
        %v1293 = vpop.permute.xlu0 %1292
        %1294 = vrot.lane.b32.xlu0 %v1241, 99
        %v1295 = vpop.permute.xlu0 %1294
        %1296 = vrot.lane.b32.xlu0 %v1242, 99
        %v1297 = vpop.permute.xlu0 %1296
        %1298 = vrot.lane.b32.xlu0 %v1243, 99
        %v1299 = vpop.permute.xlu0 %1298
        %1300 = vrot.lane.b32.xlu0 %v1244, 99
        %v1301 = vpop.permute.xlu0 %1300
        %1302 = vrot.lane.b32.xlu0 %v1245, 99
        %v1303 = vpop.permute.xlu0 %1302
        %1304 = vrot.lane.b32.xlu0 %v1246, 99
        %v1305 = vpop.permute.xlu0 %1304
        %1306 = vrot.lane.b32.xlu0 %v1247, 99
        %v1307 = vpop.permute.xlu0 %1306
        %1308 = vrot.lane.b32.xlu0 %v1248, 99
        %v1309 = vpop.permute.xlu0 %1308
        %1310 = vrot.lane.b32.xlu0 %v1249, 99
        %v1311 = vpop.permute.xlu0 %1310
        %1312 = vrot.lane.b32.xlu0 %v1250, 99
        %v1313 = vpop.permute.xlu0 %1312
        %1314 = vrot.lane.b32.xlu0 %v1251, 99
        %v1315 = vpop.permute.xlu0 %1314
        %1316 = vrot.lane.b32.xlu0 %v1252, 99
        %v1317 = vpop.permute.xlu0 %1316
        %1318 = vrot.lane.b32.xlu0 %v1253, 99
        %v1319 = vpop.permute.xlu0 %1318
        %1320 = vrot.lane.b32.xlu0 %v1254, 99
        %v1321 = vpop.permute.xlu0 %1320
        %1322 = vrot.lane.b32.xlu0 %v1255, 99
        %v1323 = vpop.permute.xlu0 %1322
        %1324 = vrot.lane.b32.xlu0 %v1256, 99
        %v1325 = vpop.permute.xlu0 %1324
        %1326 = vrot.lane.b32.xlu0 %v1257, 99
        %v1327 = vpop.permute.xlu0 %1326
        %1328 = vrot.lane.b32.xlu0 %v1258, 99
        %v1329 = vpop.permute.xlu0 %1328
        %1330 = vrot.lane.b32.xlu0 %v1259, 99
        %v1331 = vpop.permute.xlu0 %1330
        %vm1332 = vcmask 809984
        %v1333 = vsel %vm1332, %v1285, %v1287
        %v1334 = vsel %vm1332, %v1287, %v1289
        %v1335 = vsel %vm1332, %v1289, %v1291
        %v1336 = vsel %vm1332, %v1291, %v1293
        %v1337 = vsel %vm1332, %v1293, %v1295
        %v1338 = vsel %vm1332, %v1297, %v1299
        %v1339 = vsel %vm1332, %v1299, %v1301
        %v1340 = vsel %vm1332, %v1301, %v1303
        %v1341 = vsel %vm1332, %v1303, %v1305
        %v1342 = vsel %vm1332, %v1305, %v1307
        %v1343 = vsel %vm1332, %v1309, %v1311
        %v1344 = vsel %vm1332, %v1311, %v1313
        %v1345 = vsel %vm1332, %v1313, %v1315
        %v1346 = vsel %vm1332, %v1315, %v1317
        %v1347 = vsel %vm1332, %v1317, %v1319
        %v1348 = vsel %vm1332, %v1321, %v1323
        %v1349 = vsel %vm1332, %v1323, %v1325
        %v1350 = vsel %vm1332, %v1325, %v1327
        %v1351 = vsel %vm1332, %v1327, %v1329
        %v1352 = vsel %vm1332, %v1329, %v1331
        %v1377 = vadd.f32 %v1196, %v1333
        %v1378 = vadd.f32 %v1197, %v1334
        %v1379 = vadd.f32 %v1198, %v1335
        %v1380 = vadd.f32 %v1199, %v1336
        %v1381 = vadd.f32 %v1200, %v1337
        %v1382 = vadd.f32 %v1201, %v1295
        %v1383 = vadd.f32 %v1202, %v1338
        %v1384 = vadd.f32 %v1203, %v1339
        %v1385 = vadd.f32 %v1204, %v1340
        %v1386 = vadd.f32 %v1205, %v1341
        %v1387 = vadd.f32 %v1206, %v1342
        %v1388 = vadd.f32 %v1207, %v1307
        %v1389 = vadd.f32 %v1208, %v1343
        %v1390 = vadd.f32 %v1209, %v1344
        %v1391 = vadd.f32 %v1210, %v1345
        %v1392 = vadd.f32 %v1211, %v1346
        %v1393 = vadd.f32 %v1212, %v1347
        %v1394 = vadd.f32 %v1213, %v1319
        %v1395 = vadd.f32 %v1214, %v1348
        %v1396 = vadd.f32 %v1215, %v1349
        %v1397 = vadd.f32 %v1216, %v1350
        %v1398 = vadd.f32 %v1217, %v1351
        %v1399 = vadd.f32 %v1218, %v1352
        %v1400 = vadd.f32 %v1219, %v1331
        %1401 = vset.pattern.permute.xlu0 7
        %1402 = vperm.xlu0 %1401, %v230
        %v1403 = vpop.permute.xlu0 %1402
        %1405 = vset.pattern.permute.xlu0 7
        %1406 = vperm.xlu0 %1405, %v231
        %v1407 = vpop.permute.xlu0 %1406
        %1409 = vset.pattern.permute.xlu0 7
        %1410 = vperm.xlu0 %1409, %v232
        %v1411 = vpop.permute.xlu0 %1410
        %1413 = vset.pattern.permute.xlu0 7
        %1414 = vperm.xlu0 %1413, %v233
        %v1415 = vpop.permute.xlu0 %1414
        %v1417 = vmul.f32 %v1403, %v255
        %v1418 = vmul.f32 %v1403, %v256
        %v1419 = vmul.f32 %v1403, %v257
        %v1420 = vmul.f32 %v1403, %v258
        %v1421 = vmul.f32 %v1403, %v259
        %v1422 = vmul.f32 %v1403, %v260
        %v1423 = vmul.f32 %v1407, %v255
        %v1424 = vmul.f32 %v1407, %v256
        %v1425 = vmul.f32 %v1407, %v257
        %v1426 = vmul.f32 %v1407, %v258
        %v1427 = vmul.f32 %v1407, %v259
        %v1428 = vmul.f32 %v1407, %v260
        %v1429 = vmul.f32 %v1411, %v255
        %v1430 = vmul.f32 %v1411, %v256
        %v1431 = vmul.f32 %v1411, %v257
        %v1432 = vmul.f32 %v1411, %v258
        %v1433 = vmul.f32 %v1411, %v259
        %v1434 = vmul.f32 %v1411, %v260
        %v1435 = vmul.f32 %v1415, %v255
        %v1436 = vmul.f32 %v1415, %v256
        %v1437 = vmul.f32 %v1415, %v257
        %v1438 = vmul.f32 %v1415, %v258
        %v1439 = vmul.f32 %v1415, %v259
        %v1440 = vmul.f32 %v1415, %v260
        %1465 = vrot.lane.b32.xlu0 %v1417, 98
        %v1466 = vpop.permute.xlu0 %1465
        %1467 = vrot.lane.b32.xlu0 %v1418, 98
        %v1468 = vpop.permute.xlu0 %1467
        %1469 = vrot.lane.b32.xlu0 %v1419, 98
        %v1470 = vpop.permute.xlu0 %1469
        %1471 = vrot.lane.b32.xlu0 %v1420, 98
        %v1472 = vpop.permute.xlu0 %1471
        %1473 = vrot.lane.b32.xlu0 %v1421, 98
        %v1474 = vpop.permute.xlu0 %1473
        %1475 = vrot.lane.b32.xlu0 %v1422, 98
        %v1476 = vpop.permute.xlu0 %1475
        %1477 = vrot.lane.b32.xlu0 %v1423, 98
        %v1478 = vpop.permute.xlu0 %1477
        %1479 = vrot.lane.b32.xlu0 %v1424, 98
        %v1480 = vpop.permute.xlu0 %1479
        %1481 = vrot.lane.b32.xlu0 %v1425, 98
        %v1482 = vpop.permute.xlu0 %1481
        %1483 = vrot.lane.b32.xlu0 %v1426, 98
        %v1484 = vpop.permute.xlu0 %1483
        %1485 = vrot.lane.b32.xlu0 %v1427, 98
        %v1486 = vpop.permute.xlu0 %1485
        %1487 = vrot.lane.b32.xlu0 %v1428, 98
        %v1488 = vpop.permute.xlu0 %1487
        %1489 = vrot.lane.b32.xlu0 %v1429, 98
        %v1490 = vpop.permute.xlu0 %1489
        %1491 = vrot.lane.b32.xlu0 %v1430, 98
        %v1492 = vpop.permute.xlu0 %1491
        %1493 = vrot.lane.b32.xlu0 %v1431, 98
        %v1494 = vpop.permute.xlu0 %1493
        %1495 = vrot.lane.b32.xlu0 %v1432, 98
        %v1496 = vpop.permute.xlu0 %1495
        %1497 = vrot.lane.b32.xlu0 %v1433, 98
        %v1498 = vpop.permute.xlu0 %1497
        %1499 = vrot.lane.b32.xlu0 %v1434, 98
        %v1500 = vpop.permute.xlu0 %1499
        %1501 = vrot.lane.b32.xlu0 %v1435, 98
        %v1502 = vpop.permute.xlu0 %1501
        %1503 = vrot.lane.b32.xlu0 %v1436, 98
        %v1504 = vpop.permute.xlu0 %1503
        %1505 = vrot.lane.b32.xlu0 %v1437, 98
        %v1506 = vpop.permute.xlu0 %1505
        %1507 = vrot.lane.b32.xlu0 %v1438, 98
        %v1508 = vpop.permute.xlu0 %1507
        %1509 = vrot.lane.b32.xlu0 %v1439, 98
        %v1510 = vpop.permute.xlu0 %1509
        %1511 = vrot.lane.b32.xlu0 %v1440, 98
        %v1512 = vpop.permute.xlu0 %1511
        %vm1513 = vcmask 801792
        %v1514 = vsel %vm1513, %v1466, %v1468
        %v1515 = vsel %vm1513, %v1468, %v1470
        %v1516 = vsel %vm1513, %v1470, %v1472
        %v1517 = vsel %vm1513, %v1472, %v1474
        %v1518 = vsel %vm1513, %v1474, %v1476
        %v1519 = vsel %vm1513, %v1478, %v1480
        %v1520 = vsel %vm1513, %v1480, %v1482
        %v1521 = vsel %vm1513, %v1482, %v1484
        %v1522 = vsel %vm1513, %v1484, %v1486
        %v1523 = vsel %vm1513, %v1486, %v1488
        %v1524 = vsel %vm1513, %v1490, %v1492
        %v1525 = vsel %vm1513, %v1492, %v1494
        %v1526 = vsel %vm1513, %v1494, %v1496
        %v1527 = vsel %vm1513, %v1496, %v1498
        %v1528 = vsel %vm1513, %v1498, %v1500
        %v1529 = vsel %vm1513, %v1502, %v1504
        %v1530 = vsel %vm1513, %v1504, %v1506
        %v1531 = vsel %vm1513, %v1506, %v1508
        %v1532 = vsel %vm1513, %v1508, %v1510
        %v1533 = vsel %vm1513, %v1510, %v1512
        %v1558 = vadd.f32 %v1377, %v1514
        %v1559 = vadd.f32 %v1378, %v1515
        %v1560 = vadd.f32 %v1379, %v1516
        %v1561 = vadd.f32 %v1380, %v1517
        %v1562 = vadd.f32 %v1381, %v1518
        %v1563 = vadd.f32 %v1382, %v1476
        %v1564 = vadd.f32 %v1383, %v1519
        %v1565 = vadd.f32 %v1384, %v1520
        %v1566 = vadd.f32 %v1385, %v1521
        %v1567 = vadd.f32 %v1386, %v1522
        %v1568 = vadd.f32 %v1387, %v1523
        %v1569 = vadd.f32 %v1388, %v1488
        %v1570 = vadd.f32 %v1389, %v1524
        %v1571 = vadd.f32 %v1390, %v1525
        %v1572 = vadd.f32 %v1391, %v1526
        %v1573 = vadd.f32 %v1392, %v1527
        %v1574 = vadd.f32 %v1393, %v1528
        %v1575 = vadd.f32 %v1394, %v1500
        %v1576 = vadd.f32 %v1395, %v1529
        %v1577 = vadd.f32 %v1396, %v1530
        %v1578 = vadd.f32 %v1397, %v1531
        %v1579 = vadd.f32 %v1398, %v1532
        %v1580 = vadd.f32 %v1399, %v1533
        %v1581 = vadd.f32 %v1400, %v1512
        %1582 = vset.pattern.permute.xlu0 8
        %1583 = vperm.xlu0 %1582, %v230
        %v1584 = vpop.permute.xlu0 %1583
        %1586 = vset.pattern.permute.xlu0 8
        %1587 = vperm.xlu0 %1586, %v231
        %v1588 = vpop.permute.xlu0 %1587
        %1590 = vset.pattern.permute.xlu0 8
        %1591 = vperm.xlu0 %1590, %v232
        %v1592 = vpop.permute.xlu0 %1591
        %1594 = vset.pattern.permute.xlu0 8
        %1595 = vperm.xlu0 %1594, %v233
        %v1596 = vpop.permute.xlu0 %1595
        %v1598 = vmul.f32 %v1584, %v255
        %v1599 = vmul.f32 %v1584, %v256
        %v1600 = vmul.f32 %v1584, %v257
        %v1601 = vmul.f32 %v1584, %v258
        %v1602 = vmul.f32 %v1584, %v259
        %v1603 = vmul.f32 %v1584, %v260
        %v1604 = vmul.f32 %v1588, %v255
        %v1605 = vmul.f32 %v1588, %v256
        %v1606 = vmul.f32 %v1588, %v257
        %v1607 = vmul.f32 %v1588, %v258
        %v1608 = vmul.f32 %v1588, %v259
        %v1609 = vmul.f32 %v1588, %v260
        %v1610 = vmul.f32 %v1592, %v255
        %v1611 = vmul.f32 %v1592, %v256
        %v1612 = vmul.f32 %v1592, %v257
        %v1613 = vmul.f32 %v1592, %v258
        %v1614 = vmul.f32 %v1592, %v259
        %v1615 = vmul.f32 %v1592, %v260
        %v1616 = vmul.f32 %v1596, %v255
        %v1617 = vmul.f32 %v1596, %v256
        %v1618 = vmul.f32 %v1596, %v257
        %v1619 = vmul.f32 %v1596, %v258
        %v1620 = vmul.f32 %v1596, %v259
        %v1621 = vmul.f32 %v1596, %v260
        %1646 = vrot.lane.b32.xlu0 %v1598, 97
        %v1647 = vpop.permute.xlu0 %1646
        %1648 = vrot.lane.b32.xlu0 %v1599, 97
        %v1649 = vpop.permute.xlu0 %1648
        %1650 = vrot.lane.b32.xlu0 %v1600, 97
        %v1651 = vpop.permute.xlu0 %1650
        %1652 = vrot.lane.b32.xlu0 %v1601, 97
        %v1653 = vpop.permute.xlu0 %1652
        %1654 = vrot.lane.b32.xlu0 %v1602, 97
        %v1655 = vpop.permute.xlu0 %1654
        %1656 = vrot.lane.b32.xlu0 %v1603, 97
        %v1657 = vpop.permute.xlu0 %1656
        %1658 = vrot.lane.b32.xlu0 %v1604, 97
        %v1659 = vpop.permute.xlu0 %1658
        %1660 = vrot.lane.b32.xlu0 %v1605, 97
        %v1661 = vpop.permute.xlu0 %1660
        %1662 = vrot.lane.b32.xlu0 %v1606, 97
        %v1663 = vpop.permute.xlu0 %1662
        %1664 = vrot.lane.b32.xlu0 %v1607, 97
        %v1665 = vpop.permute.xlu0 %1664
        %1666 = vrot.lane.b32.xlu0 %v1608, 97
        %v1667 = vpop.permute.xlu0 %1666
        %1668 = vrot.lane.b32.xlu0 %v1609, 97
        %v1669 = vpop.permute.xlu0 %1668
        %1670 = vrot.lane.b32.xlu0 %v1610, 97
        %v1671 = vpop.permute.xlu0 %1670
        %1672 = vrot.lane.b32.xlu0 %v1611, 97
        %v1673 = vpop.permute.xlu0 %1672
        %1674 = vrot.lane.b32.xlu0 %v1612, 97
        %v1675 = vpop.permute.xlu0 %1674
        %1676 = vrot.lane.b32.xlu0 %v1613, 97
        %v1677 = vpop.permute.xlu0 %1676
        %1678 = vrot.lane.b32.xlu0 %v1614, 97
        %v1679 = vpop.permute.xlu0 %1678
        %1680 = vrot.lane.b32.xlu0 %v1615, 97
        %v1681 = vpop.permute.xlu0 %1680
        %1682 = vrot.lane.b32.xlu0 %v1616, 97
        %v1683 = vpop.permute.xlu0 %1682
        %1684 = vrot.lane.b32.xlu0 %v1617, 97
        %v1685 = vpop.permute.xlu0 %1684
        %1686 = vrot.lane.b32.xlu0 %v1618, 97
        %v1687 = vpop.permute.xlu0 %1686
        %1688 = vrot.lane.b32.xlu0 %v1619, 97
        %v1689 = vpop.permute.xlu0 %1688
        %1690 = vrot.lane.b32.xlu0 %v1620, 97
        %v1691 = vpop.permute.xlu0 %1690
        %1692 = vrot.lane.b32.xlu0 %v1621, 97
        %v1693 = vpop.permute.xlu0 %1692
        %vm1694 = vcmask 793600
        %v1695 = vsel %vm1694, %v1647, %v1649
        %v1696 = vsel %vm1694, %v1649, %v1651
        %v1697 = vsel %vm1694, %v1651, %v1653
        %v1698 = vsel %vm1694, %v1653, %v1655
        %v1699 = vsel %vm1694, %v1655, %v1657
        %v1700 = vsel %vm1694, %v1659, %v1661
        %v1701 = vsel %vm1694, %v1661, %v1663
        %v1702 = vsel %vm1694, %v1663, %v1665
        %v1703 = vsel %vm1694, %v1665, %v1667
        %v1704 = vsel %vm1694, %v1667, %v1669
        %v1705 = vsel %vm1694, %v1671, %v1673
        %v1706 = vsel %vm1694, %v1673, %v1675
        %v1707 = vsel %vm1694, %v1675, %v1677
        %v1708 = vsel %vm1694, %v1677, %v1679
        %v1709 = vsel %vm1694, %v1679, %v1681
        %v1710 = vsel %vm1694, %v1683, %v1685
        %v1711 = vsel %vm1694, %v1685, %v1687
        %v1712 = vsel %vm1694, %v1687, %v1689
        %v1713 = vsel %vm1694, %v1689, %v1691
        %v1714 = vsel %vm1694, %v1691, %v1693
        %v1739 = vadd.f32 %v1558, %v1695
        %v1740 = vadd.f32 %v1559, %v1696
        %v1741 = vadd.f32 %v1560, %v1697
        %v1742 = vadd.f32 %v1561, %v1698
        %v1743 = vadd.f32 %v1562, %v1699
        %v1744 = vadd.f32 %v1563, %v1657
        %v1745 = vadd.f32 %v1564, %v1700
        %v1746 = vadd.f32 %v1565, %v1701
        %v1747 = vadd.f32 %v1566, %v1702
        %v1748 = vadd.f32 %v1567, %v1703
        %v1749 = vadd.f32 %v1568, %v1704
        %v1750 = vadd.f32 %v1569, %v1669
        %v1751 = vadd.f32 %v1570, %v1705
        %v1752 = vadd.f32 %v1571, %v1706
        %v1753 = vadd.f32 %v1572, %v1707
        %v1754 = vadd.f32 %v1573, %v1708
        %v1755 = vadd.f32 %v1574, %v1709
        %v1756 = vadd.f32 %v1575, %v1681
        %v1757 = vadd.f32 %v1576, %v1710
        %v1758 = vadd.f32 %v1577, %v1711
        %v1759 = vadd.f32 %v1578, %v1712
        %v1760 = vadd.f32 %v1579, %v1713
        %v1761 = vadd.f32 %v1580, %v1714
        %v1762 = vadd.f32 %v1581, %v1693
        %1763 = vset.pattern.permute.xlu0 9
        %1764 = vperm.xlu0 %1763, %v230
        %v1765 = vpop.permute.xlu0 %1764
        %1767 = vset.pattern.permute.xlu0 9
        %1768 = vperm.xlu0 %1767, %v231
        %v1769 = vpop.permute.xlu0 %1768
        %1771 = vset.pattern.permute.xlu0 9
        %1772 = vperm.xlu0 %1771, %v232
        %v1773 = vpop.permute.xlu0 %1772
        %1775 = vset.pattern.permute.xlu0 9
        %1776 = vperm.xlu0 %1775, %v233
        %v1777 = vpop.permute.xlu0 %1776
        %v1779 = vmul.f32 %v1765, %v255
        %v1780 = vmul.f32 %v1765, %v256
        %v1781 = vmul.f32 %v1765, %v257
        %v1782 = vmul.f32 %v1765, %v258
        %v1783 = vmul.f32 %v1765, %v259
        %v1784 = vmul.f32 %v1765, %v260
        %v1785 = vmul.f32 %v1769, %v255
        %v1786 = vmul.f32 %v1769, %v256
        %v1787 = vmul.f32 %v1769, %v257
        %v1788 = vmul.f32 %v1769, %v258
        %v1789 = vmul.f32 %v1769, %v259
        %v1790 = vmul.f32 %v1769, %v260
        %v1791 = vmul.f32 %v1773, %v255
        %v1792 = vmul.f32 %v1773, %v256
        %v1793 = vmul.f32 %v1773, %v257
        %v1794 = vmul.f32 %v1773, %v258
        %v1795 = vmul.f32 %v1773, %v259
        %v1796 = vmul.f32 %v1773, %v260
        %v1797 = vmul.f32 %v1777, %v255
        %v1798 = vmul.f32 %v1777, %v256
        %v1799 = vmul.f32 %v1777, %v257
        %v1800 = vmul.f32 %v1777, %v258
        %v1801 = vmul.f32 %v1777, %v259
        %v1802 = vmul.f32 %v1777, %v260
        %1827 = vrot.lane.b32.xlu0 %v1779, 96
        %v1828 = vpop.permute.xlu0 %1827
        %1829 = vrot.lane.b32.xlu0 %v1780, 96
        %v1830 = vpop.permute.xlu0 %1829
        %1831 = vrot.lane.b32.xlu0 %v1781, 96
        %v1832 = vpop.permute.xlu0 %1831
        %1833 = vrot.lane.b32.xlu0 %v1782, 96
        %v1834 = vpop.permute.xlu0 %1833
        %1835 = vrot.lane.b32.xlu0 %v1783, 96
        %v1836 = vpop.permute.xlu0 %1835
        %1837 = vrot.lane.b32.xlu0 %v1784, 96
        %v1838 = vpop.permute.xlu0 %1837
        %1839 = vrot.lane.b32.xlu0 %v1785, 96
        %v1840 = vpop.permute.xlu0 %1839
        %1841 = vrot.lane.b32.xlu0 %v1786, 96
        %v1842 = vpop.permute.xlu0 %1841
        %1843 = vrot.lane.b32.xlu0 %v1787, 96
        %v1844 = vpop.permute.xlu0 %1843
        %1845 = vrot.lane.b32.xlu0 %v1788, 96
        %v1846 = vpop.permute.xlu0 %1845
        %1847 = vrot.lane.b32.xlu0 %v1789, 96
        %v1848 = vpop.permute.xlu0 %1847
        %1849 = vrot.lane.b32.xlu0 %v1790, 96
        %v1850 = vpop.permute.xlu0 %1849
        %1851 = vrot.lane.b32.xlu0 %v1791, 96
        %v1852 = vpop.permute.xlu0 %1851
        %1853 = vrot.lane.b32.xlu0 %v1792, 96
        %v1854 = vpop.permute.xlu0 %1853
        %1855 = vrot.lane.b32.xlu0 %v1793, 96
        %v1856 = vpop.permute.xlu0 %1855
        %1857 = vrot.lane.b32.xlu0 %v1794, 96
        %v1858 = vpop.permute.xlu0 %1857
        %1859 = vrot.lane.b32.xlu0 %v1795, 96
        %v1860 = vpop.permute.xlu0 %1859
        %1861 = vrot.lane.b32.xlu0 %v1796, 96
        %v1862 = vpop.permute.xlu0 %1861
        %1863 = vrot.lane.b32.xlu0 %v1797, 96
        %v1864 = vpop.permute.xlu0 %1863
        %1865 = vrot.lane.b32.xlu0 %v1798, 96
        %v1866 = vpop.permute.xlu0 %1865
        %1867 = vrot.lane.b32.xlu0 %v1799, 96
        %v1868 = vpop.permute.xlu0 %1867
        %1869 = vrot.lane.b32.xlu0 %v1800, 96
        %v1870 = vpop.permute.xlu0 %1869
        %1871 = vrot.lane.b32.xlu0 %v1801, 96
        %v1872 = vpop.permute.xlu0 %1871
        %1873 = vrot.lane.b32.xlu0 %v1802, 96
        %v1874 = vpop.permute.xlu0 %1873
        %vm1875 = vcmask 785408
        %v1876 = vsel %vm1875, %v1828, %v1830
        %v1877 = vsel %vm1875, %v1830, %v1832
        %v1878 = vsel %vm1875, %v1832, %v1834
        %v1879 = vsel %vm1875, %v1834, %v1836
        %v1880 = vsel %vm1875, %v1836, %v1838
        %v1881 = vsel %vm1875, %v1840, %v1842
        %v1882 = vsel %vm1875, %v1842, %v1844
        %v1883 = vsel %vm1875, %v1844, %v1846
        %v1884 = vsel %vm1875, %v1846, %v1848
        %v1885 = vsel %vm1875, %v1848, %v1850
        %v1886 = vsel %vm1875, %v1852, %v1854
        %v1887 = vsel %vm1875, %v1854, %v1856
        %v1888 = vsel %vm1875, %v1856, %v1858
        %v1889 = vsel %vm1875, %v1858, %v1860
        %v1890 = vsel %vm1875, %v1860, %v1862
        %v1891 = vsel %vm1875, %v1864, %v1866
        %v1892 = vsel %vm1875, %v1866, %v1868
        %v1893 = vsel %vm1875, %v1868, %v1870
        %v1894 = vsel %vm1875, %v1870, %v1872
        %v1895 = vsel %vm1875, %v1872, %v1874
        %v1920 = vadd.f32 %v1739, %v1876
        %v1921 = vadd.f32 %v1740, %v1877
        %v1922 = vadd.f32 %v1741, %v1878
        %v1923 = vadd.f32 %v1742, %v1879
        %v1924 = vadd.f32 %v1743, %v1880
        %v1925 = vadd.f32 %v1744, %v1838
        %v1926 = vadd.f32 %v1745, %v1881
        %v1927 = vadd.f32 %v1746, %v1882
        %v1928 = vadd.f32 %v1747, %v1883
        %v1929 = vadd.f32 %v1748, %v1884
        %v1930 = vadd.f32 %v1749, %v1885
        %v1931 = vadd.f32 %v1750, %v1850
        %v1932 = vadd.f32 %v1751, %v1886
        %v1933 = vadd.f32 %v1752, %v1887
        %v1934 = vadd.f32 %v1753, %v1888
        %v1935 = vadd.f32 %v1754, %v1889
        %v1936 = vadd.f32 %v1755, %v1890
        %v1937 = vadd.f32 %v1756, %v1862
        %v1938 = vadd.f32 %v1757, %v1891
        %v1939 = vadd.f32 %v1758, %v1892
        %v1940 = vadd.f32 %v1759, %v1893
        %v1941 = vadd.f32 %v1760, %v1894
        %v1942 = vadd.f32 %v1761, %v1895
        %v1943 = vadd.f32 %v1762, %v1874
        %1944 = vset.pattern.permute.xlu0 10
        %1945 = vperm.xlu0 %1944, %v230
        %v1946 = vpop.permute.xlu0 %1945
        %1948 = vset.pattern.permute.xlu0 10
        %1949 = vperm.xlu0 %1948, %v231
        %v1950 = vpop.permute.xlu0 %1949
        %1952 = vset.pattern.permute.xlu0 10
        %1953 = vperm.xlu0 %1952, %v232
        %v1954 = vpop.permute.xlu0 %1953
        %1956 = vset.pattern.permute.xlu0 10
        %1957 = vperm.xlu0 %1956, %v233
        %v1958 = vpop.permute.xlu0 %1957
        %v1960 = vmul.f32 %v1946, %v255
        %v1961 = vmul.f32 %v1946, %v256
        %v1962 = vmul.f32 %v1946, %v257
        %v1963 = vmul.f32 %v1946, %v258
        %v1964 = vmul.f32 %v1946, %v259
        %v1965 = vmul.f32 %v1946, %v260
        %v1966 = vmul.f32 %v1950, %v255
        %v1967 = vmul.f32 %v1950, %v256
        %v1968 = vmul.f32 %v1950, %v257
        %v1969 = vmul.f32 %v1950, %v258
        %v1970 = vmul.f32 %v1950, %v259
        %v1971 = vmul.f32 %v1950, %v260
        %v1972 = vmul.f32 %v1954, %v255
        %v1973 = vmul.f32 %v1954, %v256
        %v1974 = vmul.f32 %v1954, %v257
        %v1975 = vmul.f32 %v1954, %v258
        %v1976 = vmul.f32 %v1954, %v259
        %v1977 = vmul.f32 %v1954, %v260
        %v1978 = vmul.f32 %v1958, %v255
        %v1979 = vmul.f32 %v1958, %v256
        %v1980 = vmul.f32 %v1958, %v257
        %v1981 = vmul.f32 %v1958, %v258
        %v1982 = vmul.f32 %v1958, %v259
        %v1983 = vmul.f32 %v1958, %v260
        %2008 = vrot.lane.b32.xlu0 %v1960, 72
        %v2009 = vpop.permute.xlu0 %2008
        %2010 = vrot.lane.b32.xlu0 %v1961, 72
        %v2011 = vpop.permute.xlu0 %2010
        %2012 = vrot.lane.b32.xlu0 %v1962, 72
        %v2013 = vpop.permute.xlu0 %2012
        %2014 = vrot.lane.b32.xlu0 %v1963, 72
        %v2015 = vpop.permute.xlu0 %2014
        %2016 = vrot.lane.b32.xlu0 %v1964, 72
        %v2017 = vpop.permute.xlu0 %2016
        %2018 = vrot.lane.b32.xlu0 %v1965, 72
        %v2019 = vpop.permute.xlu0 %2018
        %2020 = vrot.lane.b32.xlu0 %v1966, 72
        %v2021 = vpop.permute.xlu0 %2020
        %2022 = vrot.lane.b32.xlu0 %v1967, 72
        %v2023 = vpop.permute.xlu0 %2022
        %2024 = vrot.lane.b32.xlu0 %v1968, 72
        %v2025 = vpop.permute.xlu0 %2024
        %2026 = vrot.lane.b32.xlu0 %v1969, 72
        %v2027 = vpop.permute.xlu0 %2026
        %2028 = vrot.lane.b32.xlu0 %v1970, 72
        %v2029 = vpop.permute.xlu0 %2028
        %2030 = vrot.lane.b32.xlu0 %v1971, 72
        %v2031 = vpop.permute.xlu0 %2030
        %2032 = vrot.lane.b32.xlu0 %v1972, 72
        %v2033 = vpop.permute.xlu0 %2032
        %2034 = vrot.lane.b32.xlu0 %v1973, 72
        %v2035 = vpop.permute.xlu0 %2034
        %2036 = vrot.lane.b32.xlu0 %v1974, 72
        %v2037 = vpop.permute.xlu0 %2036
        %2038 = vrot.lane.b32.xlu0 %v1975, 72
        %v2039 = vpop.permute.xlu0 %2038
        %2040 = vrot.lane.b32.xlu0 %v1976, 72
        %v2041 = vpop.permute.xlu0 %2040
        %2042 = vrot.lane.b32.xlu0 %v1977, 72
        %v2043 = vpop.permute.xlu0 %2042
        %2044 = vrot.lane.b32.xlu0 %v1978, 72
        %v2045 = vpop.permute.xlu0 %2044
        %2046 = vrot.lane.b32.xlu0 %v1979, 72
        %v2047 = vpop.permute.xlu0 %2046
        %2048 = vrot.lane.b32.xlu0 %v1980, 72
        %v2049 = vpop.permute.xlu0 %2048
        %2050 = vrot.lane.b32.xlu0 %v1981, 72
        %v2051 = vpop.permute.xlu0 %2050
        %2052 = vrot.lane.b32.xlu0 %v1982, 72
        %v2053 = vpop.permute.xlu0 %2052
        %2054 = vrot.lane.b32.xlu0 %v1983, 72
        %v2055 = vpop.permute.xlu0 %2054
        %vm2056 = vcmask 588800
        %v2057 = vsel %vm2056, %v2009, %v2011
        %v2058 = vsel %vm2056, %v2011, %v2013
        %v2059 = vsel %vm2056, %v2013, %v2015
        %v2060 = vsel %vm2056, %v2015, %v2017
        %v2061 = vsel %vm2056, %v2017, %v2019
        %v2062 = vsel %vm2056, %v2021, %v2023
        %v2063 = vsel %vm2056, %v2023, %v2025
        %v2064 = vsel %vm2056, %v2025, %v2027
        %v2065 = vsel %vm2056, %v2027, %v2029
        %v2066 = vsel %vm2056, %v2029, %v2031
        %v2067 = vsel %vm2056, %v2033, %v2035
        %v2068 = vsel %vm2056, %v2035, %v2037
        %v2069 = vsel %vm2056, %v2037, %v2039
        %v2070 = vsel %vm2056, %v2039, %v2041
        %v2071 = vsel %vm2056, %v2041, %v2043
        %v2072 = vsel %vm2056, %v2045, %v2047
        %v2073 = vsel %vm2056, %v2047, %v2049
        %v2074 = vsel %vm2056, %v2049, %v2051
        %v2075 = vsel %vm2056, %v2051, %v2053
        %v2076 = vsel %vm2056, %v2053, %v2055
        %v2101 = vadd.f32 %v1920, %v2057
        %v2102 = vadd.f32 %v1921, %v2058
        %v2103 = vadd.f32 %v1922, %v2059
        %v2104 = vadd.f32 %v1923, %v2060
        %v2105 = vadd.f32 %v1924, %v2061
        %v2106 = vadd.f32 %v1925, %v2019
        %v2107 = vadd.f32 %v1926, %v2062
        %v2108 = vadd.f32 %v1927, %v2063
        %v2109 = vadd.f32 %v1928, %v2064
        %v2110 = vadd.f32 %v1929, %v2065
        %v2111 = vadd.f32 %v1930, %v2066
        %v2112 = vadd.f32 %v1931, %v2031
        %v2113 = vadd.f32 %v1932, %v2067
        %v2114 = vadd.f32 %v1933, %v2068
        %v2115 = vadd.f32 %v1934, %v2069
        %v2116 = vadd.f32 %v1935, %v2070
        %v2117 = vadd.f32 %v1936, %v2071
        %v2118 = vadd.f32 %v1937, %v2043
        %v2119 = vadd.f32 %v1938, %v2072
        %v2120 = vadd.f32 %v1939, %v2073
        %v2121 = vadd.f32 %v1940, %v2074
        %v2122 = vadd.f32 %v1941, %v2075
        %v2123 = vadd.f32 %v1942, %v2076
        %v2124 = vadd.f32 %v1943, %v2055
        %2125 = vset.pattern.permute.xlu0 11
        %2126 = vperm.xlu0 %2125, %v230
        %v2127 = vpop.permute.xlu0 %2126
        %2129 = vset.pattern.permute.xlu0 11
        %2130 = vperm.xlu0 %2129, %v231
        %v2131 = vpop.permute.xlu0 %2130
        %2133 = vset.pattern.permute.xlu0 11
        %2134 = vperm.xlu0 %2133, %v232
        %v2135 = vpop.permute.xlu0 %2134
        %2137 = vset.pattern.permute.xlu0 11
        %2138 = vperm.xlu0 %2137, %v233
        %v2139 = vpop.permute.xlu0 %2138
        %v2141 = vmul.f32 %v2127, %v255
        %v2142 = vmul.f32 %v2127, %v256
        %v2143 = vmul.f32 %v2127, %v257
        %v2144 = vmul.f32 %v2127, %v258
        %v2145 = vmul.f32 %v2127, %v259
        %v2146 = vmul.f32 %v2127, %v260
        %v2147 = vmul.f32 %v2131, %v255
        %v2148 = vmul.f32 %v2131, %v256
        %v2149 = vmul.f32 %v2131, %v257
        %v2150 = vmul.f32 %v2131, %v258
        %v2151 = vmul.f32 %v2131, %v259
        %v2152 = vmul.f32 %v2131, %v260
        %v2153 = vmul.f32 %v2135, %v255
        %v2154 = vmul.f32 %v2135, %v256
        %v2155 = vmul.f32 %v2135, %v257
        %v2156 = vmul.f32 %v2135, %v258
        %v2157 = vmul.f32 %v2135, %v259
        %v2158 = vmul.f32 %v2135, %v260
        %v2159 = vmul.f32 %v2139, %v255
        %v2160 = vmul.f32 %v2139, %v256
        %v2161 = vmul.f32 %v2139, %v257
        %v2162 = vmul.f32 %v2139, %v258
        %v2163 = vmul.f32 %v2139, %v259
        %v2164 = vmul.f32 %v2139, %v260
        %2189 = vrot.lane.b32.xlu0 %v2141, 71
        %v2190 = vpop.permute.xlu0 %2189
        %2191 = vrot.lane.b32.xlu0 %v2142, 71
        %v2192 = vpop.permute.xlu0 %2191
        %2193 = vrot.lane.b32.xlu0 %v2143, 71
        %v2194 = vpop.permute.xlu0 %2193
        %2195 = vrot.lane.b32.xlu0 %v2144, 71
        %v2196 = vpop.permute.xlu0 %2195
        %2197 = vrot.lane.b32.xlu0 %v2145, 71
        %v2198 = vpop.permute.xlu0 %2197
        %2199 = vrot.lane.b32.xlu0 %v2146, 71
        %v2200 = vpop.permute.xlu0 %2199
        %2201 = vrot.lane.b32.xlu0 %v2147, 71
        %v2202 = vpop.permute.xlu0 %2201
        %2203 = vrot.lane.b32.xlu0 %v2148, 71
        %v2204 = vpop.permute.xlu0 %2203
        %2205 = vrot.lane.b32.xlu0 %v2149, 71
        %v2206 = vpop.permute.xlu0 %2205
        %2207 = vrot.lane.b32.xlu0 %v2150, 71
        %v2208 = vpop.permute.xlu0 %2207
        %2209 = vrot.lane.b32.xlu0 %v2151, 71
        %v2210 = vpop.permute.xlu0 %2209
        %2211 = vrot.lane.b32.xlu0 %v2152, 71
        %v2212 = vpop.permute.xlu0 %2211
        %2213 = vrot.lane.b32.xlu0 %v2153, 71
        %v2214 = vpop.permute.xlu0 %2213
        %2215 = vrot.lane.b32.xlu0 %v2154, 71
        %v2216 = vpop.permute.xlu0 %2215
        %2217 = vrot.lane.b32.xlu0 %v2155, 71
        %v2218 = vpop.permute.xlu0 %2217
        %2219 = vrot.lane.b32.xlu0 %v2156, 71
        %v2220 = vpop.permute.xlu0 %2219
        %2221 = vrot.lane.b32.xlu0 %v2157, 71
        %v2222 = vpop.permute.xlu0 %2221
        %2223 = vrot.lane.b32.xlu0 %v2158, 71
        %v2224 = vpop.permute.xlu0 %2223
        %2225 = vrot.lane.b32.xlu0 %v2159, 71
        %v2226 = vpop.permute.xlu0 %2225
        %2227 = vrot.lane.b32.xlu0 %v2160, 71
        %v2228 = vpop.permute.xlu0 %2227
        %2229 = vrot.lane.b32.xlu0 %v2161, 71
        %v2230 = vpop.permute.xlu0 %2229
        %2231 = vrot.lane.b32.xlu0 %v2162, 71
        %v2232 = vpop.permute.xlu0 %2231
        %2233 = vrot.lane.b32.xlu0 %v2163, 71
        %v2234 = vpop.permute.xlu0 %2233
        %2235 = vrot.lane.b32.xlu0 %v2164, 71
        %v2236 = vpop.permute.xlu0 %2235
        %vm2237 = vcmask 580608
        %v2238 = vsel %vm2237, %v2190, %v2192
        %v2239 = vsel %vm2237, %v2192, %v2194
        %v2240 = vsel %vm2237, %v2194, %v2196
        %v2241 = vsel %vm2237, %v2196, %v2198
        %v2242 = vsel %vm2237, %v2198, %v2200
        %v2243 = vsel %vm2237, %v2202, %v2204
        %v2244 = vsel %vm2237, %v2204, %v2206
        %v2245 = vsel %vm2237, %v2206, %v2208
        %v2246 = vsel %vm2237, %v2208, %v2210
        %v2247 = vsel %vm2237, %v2210, %v2212
        %v2248 = vsel %vm2237, %v2214, %v2216
        %v2249 = vsel %vm2237, %v2216, %v2218
        %v2250 = vsel %vm2237, %v2218, %v2220
        %v2251 = vsel %vm2237, %v2220, %v2222
        %v2252 = vsel %vm2237, %v2222, %v2224
        %v2253 = vsel %vm2237, %v2226, %v2228
        %v2254 = vsel %vm2237, %v2228, %v2230
        %v2255 = vsel %vm2237, %v2230, %v2232
        %v2256 = vsel %vm2237, %v2232, %v2234
        %v2257 = vsel %vm2237, %v2234, %v2236
        %v2282 = vadd.f32 %v2101, %v2238
        %v2283 = vadd.f32 %v2102, %v2239
        %v2284 = vadd.f32 %v2103, %v2240
        %v2285 = vadd.f32 %v2104, %v2241
        %v2286 = vadd.f32 %v2105, %v2242
        %v2287 = vadd.f32 %v2106, %v2200
        %v2288 = vadd.f32 %v2107, %v2243
        %v2289 = vadd.f32 %v2108, %v2244
        %v2290 = vadd.f32 %v2109, %v2245
        %v2291 = vadd.f32 %v2110, %v2246
        %v2292 = vadd.f32 %v2111, %v2247
        %v2293 = vadd.f32 %v2112, %v2212
        %v2294 = vadd.f32 %v2113, %v2248
        %v2295 = vadd.f32 %v2114, %v2249
        %v2296 = vadd.f32 %v2115, %v2250
        %v2297 = vadd.f32 %v2116, %v2251
        %v2298 = vadd.f32 %v2117, %v2252
        %v2299 = vadd.f32 %v2118, %v2224
        %v2300 = vadd.f32 %v2119, %v2253
        %v2301 = vadd.f32 %v2120, %v2254
        %v2302 = vadd.f32 %v2121, %v2255
        %v2303 = vadd.f32 %v2122, %v2256
        %v2304 = vadd.f32 %v2123, %v2257
        %v2305 = vadd.f32 %v2124, %v2236
        %2306 = vset.pattern.permute.xlu0 12
        %2307 = vperm.xlu0 %2306, %v230
        %v2308 = vpop.permute.xlu0 %2307
        %2310 = vset.pattern.permute.xlu0 12
        %2311 = vperm.xlu0 %2310, %v231
        %v2312 = vpop.permute.xlu0 %2311
        %2314 = vset.pattern.permute.xlu0 12
        %2315 = vperm.xlu0 %2314, %v232
        %v2316 = vpop.permute.xlu0 %2315
        %2318 = vset.pattern.permute.xlu0 12
        %2319 = vperm.xlu0 %2318, %v233
        %v2320 = vpop.permute.xlu0 %2319
        %v2322 = vmul.f32 %v2308, %v255
        %v2323 = vmul.f32 %v2308, %v256
        %v2324 = vmul.f32 %v2308, %v257
        %v2325 = vmul.f32 %v2308, %v258
        %v2326 = vmul.f32 %v2308, %v259
        %v2327 = vmul.f32 %v2308, %v260
        %v2328 = vmul.f32 %v2312, %v255
        %v2329 = vmul.f32 %v2312, %v256
        %v2330 = vmul.f32 %v2312, %v257
        %v2331 = vmul.f32 %v2312, %v258
        %v2332 = vmul.f32 %v2312, %v259
        %v2333 = vmul.f32 %v2312, %v260
        %v2334 = vmul.f32 %v2316, %v255
        %v2335 = vmul.f32 %v2316, %v256
        %v2336 = vmul.f32 %v2316, %v257
        %v2337 = vmul.f32 %v2316, %v258
        %v2338 = vmul.f32 %v2316, %v259
        %v2339 = vmul.f32 %v2316, %v260
        %v2340 = vmul.f32 %v2320, %v255
        %v2341 = vmul.f32 %v2320, %v256
        %v2342 = vmul.f32 %v2320, %v257
        %v2343 = vmul.f32 %v2320, %v258
        %v2344 = vmul.f32 %v2320, %v259
        %v2345 = vmul.f32 %v2320, %v260
        %2370 = vrot.lane.b32.xlu0 %v2322, 70
        %v2371 = vpop.permute.xlu0 %2370
        %2372 = vrot.lane.b32.xlu0 %v2323, 70
        %v2373 = vpop.permute.xlu0 %2372
        %2374 = vrot.lane.b32.xlu0 %v2324, 70
        %v2375 = vpop.permute.xlu0 %2374
        %2376 = vrot.lane.b32.xlu0 %v2325, 70
        %v2377 = vpop.permute.xlu0 %2376
        %2378 = vrot.lane.b32.xlu0 %v2326, 70
        %v2379 = vpop.permute.xlu0 %2378
        %2380 = vrot.lane.b32.xlu0 %v2327, 70
        %v2381 = vpop.permute.xlu0 %2380
        %2382 = vrot.lane.b32.xlu0 %v2328, 70
        %v2383 = vpop.permute.xlu0 %2382
        %2384 = vrot.lane.b32.xlu0 %v2329, 70
        %v2385 = vpop.permute.xlu0 %2384
        %2386 = vrot.lane.b32.xlu0 %v2330, 70
        %v2387 = vpop.permute.xlu0 %2386
        %2388 = vrot.lane.b32.xlu0 %v2331, 70
        %v2389 = vpop.permute.xlu0 %2388
        %2390 = vrot.lane.b32.xlu0 %v2332, 70
        %v2391 = vpop.permute.xlu0 %2390
        %2392 = vrot.lane.b32.xlu0 %v2333, 70
        %v2393 = vpop.permute.xlu0 %2392
        %2394 = vrot.lane.b32.xlu0 %v2334, 70
        %v2395 = vpop.permute.xlu0 %2394
        %2396 = vrot.lane.b32.xlu0 %v2335, 70
        %v2397 = vpop.permute.xlu0 %2396
        %2398 = vrot.lane.b32.xlu0 %v2336, 70
        %v2399 = vpop.permute.xlu0 %2398
        %2400 = vrot.lane.b32.xlu0 %v2337, 70
        %v2401 = vpop.permute.xlu0 %2400
        %2402 = vrot.lane.b32.xlu0 %v2338, 70
        %v2403 = vpop.permute.xlu0 %2402
        %2404 = vrot.lane.b32.xlu0 %v2339, 70
        %v2405 = vpop.permute.xlu0 %2404
        %2406 = vrot.lane.b32.xlu0 %v2340, 70
        %v2407 = vpop.permute.xlu0 %2406
        %2408 = vrot.lane.b32.xlu0 %v2341, 70
        %v2409 = vpop.permute.xlu0 %2408
        %2410 = vrot.lane.b32.xlu0 %v2342, 70
        %v2411 = vpop.permute.xlu0 %2410
        %2412 = vrot.lane.b32.xlu0 %v2343, 70
        %v2413 = vpop.permute.xlu0 %2412
        %2414 = vrot.lane.b32.xlu0 %v2344, 70
        %v2415 = vpop.permute.xlu0 %2414
        %2416 = vrot.lane.b32.xlu0 %v2345, 70
        %v2417 = vpop.permute.xlu0 %2416
        %vm2418 = vcmask 572416
        %v2419 = vsel %vm2418, %v2371, %v2373
        %v2420 = vsel %vm2418, %v2373, %v2375
        %v2421 = vsel %vm2418, %v2375, %v2377
        %v2422 = vsel %vm2418, %v2377, %v2379
        %v2423 = vsel %vm2418, %v2379, %v2381
        %v2424 = vsel %vm2418, %v2383, %v2385
        %v2425 = vsel %vm2418, %v2385, %v2387
        %v2426 = vsel %vm2418, %v2387, %v2389
        %v2427 = vsel %vm2418, %v2389, %v2391
        %v2428 = vsel %vm2418, %v2391, %v2393
        %v2429 = vsel %vm2418, %v2395, %v2397
        %v2430 = vsel %vm2418, %v2397, %v2399
        %v2431 = vsel %vm2418, %v2399, %v2401
        %v2432 = vsel %vm2418, %v2401, %v2403
        %v2433 = vsel %vm2418, %v2403, %v2405
        %v2434 = vsel %vm2418, %v2407, %v2409
        %v2435 = vsel %vm2418, %v2409, %v2411
        %v2436 = vsel %vm2418, %v2411, %v2413
        %v2437 = vsel %vm2418, %v2413, %v2415
        %v2438 = vsel %vm2418, %v2415, %v2417
        %v2463 = vadd.f32 %v2282, %v2419
        %v2464 = vadd.f32 %v2283, %v2420
        %v2465 = vadd.f32 %v2284, %v2421
        %v2466 = vadd.f32 %v2285, %v2422
        %v2467 = vadd.f32 %v2286, %v2423
        %v2468 = vadd.f32 %v2287, %v2381
        %v2469 = vadd.f32 %v2288, %v2424
        %v2470 = vadd.f32 %v2289, %v2425
        %v2471 = vadd.f32 %v2290, %v2426
        %v2472 = vadd.f32 %v2291, %v2427
        %v2473 = vadd.f32 %v2292, %v2428
        %v2474 = vadd.f32 %v2293, %v2393
        %v2475 = vadd.f32 %v2294, %v2429
        %v2476 = vadd.f32 %v2295, %v2430
        %v2477 = vadd.f32 %v2296, %v2431
        %v2478 = vadd.f32 %v2297, %v2432
        %v2479 = vadd.f32 %v2298, %v2433
        %v2480 = vadd.f32 %v2299, %v2405
        %v2481 = vadd.f32 %v2300, %v2434
        %v2482 = vadd.f32 %v2301, %v2435
        %v2483 = vadd.f32 %v2302, %v2436
        %v2484 = vadd.f32 %v2303, %v2437
        %v2485 = vadd.f32 %v2304, %v2438
        %v2486 = vadd.f32 %v2305, %v2417
        %2487 = vset.pattern.permute.xlu0 13
        %2488 = vperm.xlu0 %2487, %v230
        %v2489 = vpop.permute.xlu0 %2488
        %2491 = vset.pattern.permute.xlu0 13
        %2492 = vperm.xlu0 %2491, %v231
        %v2493 = vpop.permute.xlu0 %2492
        %2495 = vset.pattern.permute.xlu0 13
        %2496 = vperm.xlu0 %2495, %v232
        %v2497 = vpop.permute.xlu0 %2496
        %2499 = vset.pattern.permute.xlu0 13
        %2500 = vperm.xlu0 %2499, %v233
        %v2501 = vpop.permute.xlu0 %2500
        %v2503 = vmul.f32 %v2489, %v255
        %v2504 = vmul.f32 %v2489, %v256
        %v2505 = vmul.f32 %v2489, %v257
        %v2506 = vmul.f32 %v2489, %v258
        %v2507 = vmul.f32 %v2489, %v259
        %v2508 = vmul.f32 %v2489, %v260
        %v2509 = vmul.f32 %v2493, %v255
        %v2510 = vmul.f32 %v2493, %v256
        %v2511 = vmul.f32 %v2493, %v257
        %v2512 = vmul.f32 %v2493, %v258
        %v2513 = vmul.f32 %v2493, %v259
        %v2514 = vmul.f32 %v2493, %v260
        %v2515 = vmul.f32 %v2497, %v255
        %v2516 = vmul.f32 %v2497, %v256
        %v2517 = vmul.f32 %v2497, %v257
        %v2518 = vmul.f32 %v2497, %v258
        %v2519 = vmul.f32 %v2497, %v259
        %v2520 = vmul.f32 %v2497, %v260
        %v2521 = vmul.f32 %v2501, %v255
        %v2522 = vmul.f32 %v2501, %v256
        %v2523 = vmul.f32 %v2501, %v257
        %v2524 = vmul.f32 %v2501, %v258
        %v2525 = vmul.f32 %v2501, %v259
        %v2526 = vmul.f32 %v2501, %v260
        %2551 = vrot.lane.b32.xlu0 %v2503, 69
        %v2552 = vpop.permute.xlu0 %2551
        %2553 = vrot.lane.b32.xlu0 %v2504, 69
        %v2554 = vpop.permute.xlu0 %2553
        %2555 = vrot.lane.b32.xlu0 %v2505, 69
        %v2556 = vpop.permute.xlu0 %2555
        %2557 = vrot.lane.b32.xlu0 %v2506, 69
        %v2558 = vpop.permute.xlu0 %2557
        %2559 = vrot.lane.b32.xlu0 %v2507, 69
        %v2560 = vpop.permute.xlu0 %2559
        %2561 = vrot.lane.b32.xlu0 %v2508, 69
        %v2562 = vpop.permute.xlu0 %2561
        %2563 = vrot.lane.b32.xlu0 %v2509, 69
        %v2564 = vpop.permute.xlu0 %2563
        %2565 = vrot.lane.b32.xlu0 %v2510, 69
        %v2566 = vpop.permute.xlu0 %2565
        %2567 = vrot.lane.b32.xlu0 %v2511, 69
        %v2568 = vpop.permute.xlu0 %2567
        %2569 = vrot.lane.b32.xlu0 %v2512, 69
        %v2570 = vpop.permute.xlu0 %2569
        %2571 = vrot.lane.b32.xlu0 %v2513, 69
        %v2572 = vpop.permute.xlu0 %2571
        %2573 = vrot.lane.b32.xlu0 %v2514, 69
        %v2574 = vpop.permute.xlu0 %2573
        %2575 = vrot.lane.b32.xlu0 %v2515, 69
        %v2576 = vpop.permute.xlu0 %2575
        %2577 = vrot.lane.b32.xlu0 %v2516, 69
        %v2578 = vpop.permute.xlu0 %2577
        %2579 = vrot.lane.b32.xlu0 %v2517, 69
        %v2580 = vpop.permute.xlu0 %2579
        %2581 = vrot.lane.b32.xlu0 %v2518, 69
        %v2582 = vpop.permute.xlu0 %2581
        %2583 = vrot.lane.b32.xlu0 %v2519, 69
        %v2584 = vpop.permute.xlu0 %2583
        %2585 = vrot.lane.b32.xlu0 %v2520, 69
        %v2586 = vpop.permute.xlu0 %2585
        %2587 = vrot.lane.b32.xlu0 %v2521, 69
        %v2588 = vpop.permute.xlu0 %2587
        %2589 = vrot.lane.b32.xlu0 %v2522, 69
        %v2590 = vpop.permute.xlu0 %2589
        %2591 = vrot.lane.b32.xlu0 %v2523, 69
        %v2592 = vpop.permute.xlu0 %2591
        %2593 = vrot.lane.b32.xlu0 %v2524, 69
        %v2594 = vpop.permute.xlu0 %2593
        %2595 = vrot.lane.b32.xlu0 %v2525, 69
        %v2596 = vpop.permute.xlu0 %2595
        %2597 = vrot.lane.b32.xlu0 %v2526, 69
        %v2598 = vpop.permute.xlu0 %2597
        %vm2599 = vcmask 564224
        %v2600 = vsel %vm2599, %v2552, %v2554
        %v2601 = vsel %vm2599, %v2554, %v2556
        %v2602 = vsel %vm2599, %v2556, %v2558
        %v2603 = vsel %vm2599, %v2558, %v2560
        %v2604 = vsel %vm2599, %v2560, %v2562
        %v2605 = vsel %vm2599, %v2564, %v2566
        %v2606 = vsel %vm2599, %v2566, %v2568
        %v2607 = vsel %vm2599, %v2568, %v2570
        %v2608 = vsel %vm2599, %v2570, %v2572
        %v2609 = vsel %vm2599, %v2572, %v2574
        %v2610 = vsel %vm2599, %v2576, %v2578
        %v2611 = vsel %vm2599, %v2578, %v2580
        %v2612 = vsel %vm2599, %v2580, %v2582
        %v2613 = vsel %vm2599, %v2582, %v2584
        %v2614 = vsel %vm2599, %v2584, %v2586
        %v2615 = vsel %vm2599, %v2588, %v2590
        %v2616 = vsel %vm2599, %v2590, %v2592
        %v2617 = vsel %vm2599, %v2592, %v2594
        %v2618 = vsel %vm2599, %v2594, %v2596
        %v2619 = vsel %vm2599, %v2596, %v2598
        %v2644 = vadd.f32 %v2463, %v2600
        %v2645 = vadd.f32 %v2464, %v2601
        %v2646 = vadd.f32 %v2465, %v2602
        %v2647 = vadd.f32 %v2466, %v2603
        %v2648 = vadd.f32 %v2467, %v2604
        %v2649 = vadd.f32 %v2468, %v2562
        %v2650 = vadd.f32 %v2469, %v2605
        %v2651 = vadd.f32 %v2470, %v2606
        %v2652 = vadd.f32 %v2471, %v2607
        %v2653 = vadd.f32 %v2472, %v2608
        %v2654 = vadd.f32 %v2473, %v2609
        %v2655 = vadd.f32 %v2474, %v2574
        %v2656 = vadd.f32 %v2475, %v2610
        %v2657 = vadd.f32 %v2476, %v2611
        %v2658 = vadd.f32 %v2477, %v2612
        %v2659 = vadd.f32 %v2478, %v2613
        %v2660 = vadd.f32 %v2479, %v2614
        %v2661 = vadd.f32 %v2480, %v2586
        %v2662 = vadd.f32 %v2481, %v2615
        %v2663 = vadd.f32 %v2482, %v2616
        %v2664 = vadd.f32 %v2483, %v2617
        %v2665 = vadd.f32 %v2484, %v2618
        %v2666 = vadd.f32 %v2485, %v2619
        %v2667 = vadd.f32 %v2486, %v2598
        %2668 = vset.pattern.permute.xlu0 14
        %2669 = vperm.xlu0 %2668, %v230
        %v2670 = vpop.permute.xlu0 %2669
        %2672 = vset.pattern.permute.xlu0 14
        %2673 = vperm.xlu0 %2672, %v231
        %v2674 = vpop.permute.xlu0 %2673
        %2676 = vset.pattern.permute.xlu0 14
        %2677 = vperm.xlu0 %2676, %v232
        %v2678 = vpop.permute.xlu0 %2677
        %2680 = vset.pattern.permute.xlu0 14
        %2681 = vperm.xlu0 %2680, %v233
        %v2682 = vpop.permute.xlu0 %2681
        %v2684 = vmul.f32 %v2670, %v255
        %v2685 = vmul.f32 %v2670, %v256
        %v2686 = vmul.f32 %v2670, %v257
        %v2687 = vmul.f32 %v2670, %v258
        %v2688 = vmul.f32 %v2670, %v259
        %v2689 = vmul.f32 %v2670, %v260
        %v2690 = vmul.f32 %v2674, %v255
        %v2691 = vmul.f32 %v2674, %v256
        %v2692 = vmul.f32 %v2674, %v257
        %v2693 = vmul.f32 %v2674, %v258
        %v2694 = vmul.f32 %v2674, %v259
        %v2695 = vmul.f32 %v2674, %v260
        %v2696 = vmul.f32 %v2678, %v255
        %v2697 = vmul.f32 %v2678, %v256
        %v2698 = vmul.f32 %v2678, %v257
        %v2699 = vmul.f32 %v2678, %v258
        %v2700 = vmul.f32 %v2678, %v259
        %v2701 = vmul.f32 %v2678, %v260
        %v2702 = vmul.f32 %v2682, %v255
        %v2703 = vmul.f32 %v2682, %v256
        %v2704 = vmul.f32 %v2682, %v257
        %v2705 = vmul.f32 %v2682, %v258
        %v2706 = vmul.f32 %v2682, %v259
        %v2707 = vmul.f32 %v2682, %v260
        %2732 = vrot.lane.b32.xlu0 %v2684, 68
        %v2733 = vpop.permute.xlu0 %2732
        %2734 = vrot.lane.b32.xlu0 %v2685, 68
        %v2735 = vpop.permute.xlu0 %2734
        %2736 = vrot.lane.b32.xlu0 %v2686, 68
        %v2737 = vpop.permute.xlu0 %2736
        %2738 = vrot.lane.b32.xlu0 %v2687, 68
        %v2739 = vpop.permute.xlu0 %2738
        %2740 = vrot.lane.b32.xlu0 %v2688, 68
        %v2741 = vpop.permute.xlu0 %2740
        %2742 = vrot.lane.b32.xlu0 %v2689, 68
        %v2743 = vpop.permute.xlu0 %2742
        %2744 = vrot.lane.b32.xlu0 %v2690, 68
        %v2745 = vpop.permute.xlu0 %2744
        %2746 = vrot.lane.b32.xlu0 %v2691, 68
        %v2747 = vpop.permute.xlu0 %2746
        %2748 = vrot.lane.b32.xlu0 %v2692, 68
        %v2749 = vpop.permute.xlu0 %2748
        %2750 = vrot.lane.b32.xlu0 %v2693, 68
        %v2751 = vpop.permute.xlu0 %2750
        %2752 = vrot.lane.b32.xlu0 %v2694, 68
        %v2753 = vpop.permute.xlu0 %2752
        %2754 = vrot.lane.b32.xlu0 %v2695, 68
        %v2755 = vpop.permute.xlu0 %2754
        %2756 = vrot.lane.b32.xlu0 %v2696, 68
        %v2757 = vpop.permute.xlu0 %2756
        %2758 = vrot.lane.b32.xlu0 %v2697, 68
        %v2759 = vpop.permute.xlu0 %2758
        %2760 = vrot.lane.b32.xlu0 %v2698, 68
        %v2761 = vpop.permute.xlu0 %2760
        %2762 = vrot.lane.b32.xlu0 %v2699, 68
        %v2763 = vpop.permute.xlu0 %2762
        %2764 = vrot.lane.b32.xlu0 %v2700, 68
        %v2765 = vpop.permute.xlu0 %2764
        %2766 = vrot.lane.b32.xlu0 %v2701, 68
        %v2767 = vpop.permute.xlu0 %2766
        %2768 = vrot.lane.b32.xlu0 %v2702, 68
        %v2769 = vpop.permute.xlu0 %2768
        %2770 = vrot.lane.b32.xlu0 %v2703, 68
        %v2771 = vpop.permute.xlu0 %2770
        %2772 = vrot.lane.b32.xlu0 %v2704, 68
        %v2773 = vpop.permute.xlu0 %2772
        %2774 = vrot.lane.b32.xlu0 %v2705, 68
        %v2775 = vpop.permute.xlu0 %2774
        %2776 = vrot.lane.b32.xlu0 %v2706, 68
        %v2777 = vpop.permute.xlu0 %2776
        %2778 = vrot.lane.b32.xlu0 %v2707, 68
        %v2779 = vpop.permute.xlu0 %2778
        %vm2780 = vcmask 556032
        %v2781 = vsel %vm2780, %v2733, %v2735
        %v2782 = vsel %vm2780, %v2735, %v2737
        %v2783 = vsel %vm2780, %v2737, %v2739
        %v2784 = vsel %vm2780, %v2739, %v2741
        %v2785 = vsel %vm2780, %v2741, %v2743
        %v2786 = vsel %vm2780, %v2745, %v2747
        %v2787 = vsel %vm2780, %v2747, %v2749
        %v2788 = vsel %vm2780, %v2749, %v2751
        %v2789 = vsel %vm2780, %v2751, %v2753
        %v2790 = vsel %vm2780, %v2753, %v2755
        %v2791 = vsel %vm2780, %v2757, %v2759
        %v2792 = vsel %vm2780, %v2759, %v2761
        %v2793 = vsel %vm2780, %v2761, %v2763
        %v2794 = vsel %vm2780, %v2763, %v2765
        %v2795 = vsel %vm2780, %v2765, %v2767
        %v2796 = vsel %vm2780, %v2769, %v2771
        %v2797 = vsel %vm2780, %v2771, %v2773
        %v2798 = vsel %vm2780, %v2773, %v2775
        %v2799 = vsel %vm2780, %v2775, %v2777
        %v2800 = vsel %vm2780, %v2777, %v2779
        %v2825 = vadd.f32 %v2644, %v2781
        %v2826 = vadd.f32 %v2645, %v2782
        %v2827 = vadd.f32 %v2646, %v2783
        %v2828 = vadd.f32 %v2647, %v2784
        %v2829 = vadd.f32 %v2648, %v2785
        %v2830 = vadd.f32 %v2649, %v2743
        %v2831 = vadd.f32 %v2650, %v2786
        %v2832 = vadd.f32 %v2651, %v2787
        %v2833 = vadd.f32 %v2652, %v2788
        %v2834 = vadd.f32 %v2653, %v2789
        %v2835 = vadd.f32 %v2654, %v2790
        %v2836 = vadd.f32 %v2655, %v2755
        %v2837 = vadd.f32 %v2656, %v2791
        %v2838 = vadd.f32 %v2657, %v2792
        %v2839 = vadd.f32 %v2658, %v2793
        %v2840 = vadd.f32 %v2659, %v2794
        %v2841 = vadd.f32 %v2660, %v2795
        %v2842 = vadd.f32 %v2661, %v2767
        %v2843 = vadd.f32 %v2662, %v2796
        %v2844 = vadd.f32 %v2663, %v2797
        %v2845 = vadd.f32 %v2664, %v2798
        %v2846 = vadd.f32 %v2665, %v2799
        %v2847 = vadd.f32 %v2666, %v2800
        %v2848 = vadd.f32 %v2667, %v2779
        %2849 = vset.pattern.permute.xlu0 15
        %2850 = vperm.xlu0 %2849, %v230
        %v2851 = vpop.permute.xlu0 %2850
        %2853 = vset.pattern.permute.xlu0 15
        %2854 = vperm.xlu0 %2853, %v231
        %v2855 = vpop.permute.xlu0 %2854
        %2857 = vset.pattern.permute.xlu0 15
        %2858 = vperm.xlu0 %2857, %v232
        %v2859 = vpop.permute.xlu0 %2858
        %2861 = vset.pattern.permute.xlu0 15
        %2862 = vperm.xlu0 %2861, %v233
        %v2863 = vpop.permute.xlu0 %2862
        %v2865 = vmul.f32 %v2851, %v255
        %v2866 = vmul.f32 %v2851, %v256
        %v2867 = vmul.f32 %v2851, %v257
        %v2868 = vmul.f32 %v2851, %v258
        %v2869 = vmul.f32 %v2851, %v259
        %v2870 = vmul.f32 %v2851, %v260
        %v2871 = vmul.f32 %v2855, %v255
        %v2872 = vmul.f32 %v2855, %v256
        %v2873 = vmul.f32 %v2855, %v257
        %v2874 = vmul.f32 %v2855, %v258
        %v2875 = vmul.f32 %v2855, %v259
        %v2876 = vmul.f32 %v2855, %v260
        %v2877 = vmul.f32 %v2859, %v255
        %v2878 = vmul.f32 %v2859, %v256
        %v2879 = vmul.f32 %v2859, %v257
        %v2880 = vmul.f32 %v2859, %v258
        %v2881 = vmul.f32 %v2859, %v259
        %v2882 = vmul.f32 %v2859, %v260
        %v2883 = vmul.f32 %v2863, %v255
        %v2884 = vmul.f32 %v2863, %v256
        %v2885 = vmul.f32 %v2863, %v257
        %v2886 = vmul.f32 %v2863, %v258
        %v2887 = vmul.f32 %v2863, %v259
        %v2888 = vmul.f32 %v2863, %v260
        %2913 = vrot.lane.b32.xlu0 %v2865, 44
        %v2914 = vpop.permute.xlu0 %2913
        %2915 = vrot.lane.b32.xlu0 %v2866, 44
        %v2916 = vpop.permute.xlu0 %2915
        %2917 = vrot.lane.b32.xlu0 %v2867, 44
        %v2918 = vpop.permute.xlu0 %2917
        %2919 = vrot.lane.b32.xlu0 %v2868, 44
        %v2920 = vpop.permute.xlu0 %2919
        %2921 = vrot.lane.b32.xlu0 %v2869, 44
        %v2922 = vpop.permute.xlu0 %2921
        %2923 = vrot.lane.b32.xlu0 %v2870, 44
        %v2924 = vpop.permute.xlu0 %2923
        %2925 = vrot.lane.b32.xlu0 %v2871, 44
        %v2926 = vpop.permute.xlu0 %2925
        %2927 = vrot.lane.b32.xlu0 %v2872, 44
        %v2928 = vpop.permute.xlu0 %2927
        %2929 = vrot.lane.b32.xlu0 %v2873, 44
        %v2930 = vpop.permute.xlu0 %2929
        %2931 = vrot.lane.b32.xlu0 %v2874, 44
        %v2932 = vpop.permute.xlu0 %2931
        %2933 = vrot.lane.b32.xlu0 %v2875, 44
        %v2934 = vpop.permute.xlu0 %2933
        %2935 = vrot.lane.b32.xlu0 %v2876, 44
        %v2936 = vpop.permute.xlu0 %2935
        %2937 = vrot.lane.b32.xlu0 %v2877, 44
        %v2938 = vpop.permute.xlu0 %2937
        %2939 = vrot.lane.b32.xlu0 %v2878, 44
        %v2940 = vpop.permute.xlu0 %2939
        %2941 = vrot.lane.b32.xlu0 %v2879, 44
        %v2942 = vpop.permute.xlu0 %2941
        %2943 = vrot.lane.b32.xlu0 %v2880, 44
        %v2944 = vpop.permute.xlu0 %2943
        %2945 = vrot.lane.b32.xlu0 %v2881, 44
        %v2946 = vpop.permute.xlu0 %2945
        %2947 = vrot.lane.b32.xlu0 %v2882, 44
        %v2948 = vpop.permute.xlu0 %2947
        %2949 = vrot.lane.b32.xlu0 %v2883, 44
        %v2950 = vpop.permute.xlu0 %2949
        %2951 = vrot.lane.b32.xlu0 %v2884, 44
        %v2952 = vpop.permute.xlu0 %2951
        %2953 = vrot.lane.b32.xlu0 %v2885, 44
        %v2954 = vpop.permute.xlu0 %2953
        %2955 = vrot.lane.b32.xlu0 %v2886, 44
        %v2956 = vpop.permute.xlu0 %2955
        %2957 = vrot.lane.b32.xlu0 %v2887, 44
        %v2958 = vpop.permute.xlu0 %2957
        %2959 = vrot.lane.b32.xlu0 %v2888, 44
        %v2960 = vpop.permute.xlu0 %2959
        %vm2961 = vcmask 359424
        %v2962 = vsel %vm2961, %v2914, %v2916
        %v2963 = vsel %vm2961, %v2916, %v2918
        %v2964 = vsel %vm2961, %v2918, %v2920
        %v2965 = vsel %vm2961, %v2920, %v2922
        %v2966 = vsel %vm2961, %v2922, %v2924
        %v2967 = vsel %vm2961, %v2926, %v2928
        %v2968 = vsel %vm2961, %v2928, %v2930
        %v2969 = vsel %vm2961, %v2930, %v2932
        %v2970 = vsel %vm2961, %v2932, %v2934
        %v2971 = vsel %vm2961, %v2934, %v2936
        %v2972 = vsel %vm2961, %v2938, %v2940
        %v2973 = vsel %vm2961, %v2940, %v2942
        %v2974 = vsel %vm2961, %v2942, %v2944
        %v2975 = vsel %vm2961, %v2944, %v2946
        %v2976 = vsel %vm2961, %v2946, %v2948
        %v2977 = vsel %vm2961, %v2950, %v2952
        %v2978 = vsel %vm2961, %v2952, %v2954
        %v2979 = vsel %vm2961, %v2954, %v2956
        %v2980 = vsel %vm2961, %v2956, %v2958
        %v2981 = vsel %vm2961, %v2958, %v2960
        %v3006 = vadd.f32 %v2825, %v2962
        %v3007 = vadd.f32 %v2826, %v2963
        %v3008 = vadd.f32 %v2827, %v2964
        %v3009 = vadd.f32 %v2828, %v2965
        %v3010 = vadd.f32 %v2829, %v2966
        %v3011 = vadd.f32 %v2830, %v2924
        %v3012 = vadd.f32 %v2831, %v2967
        %v3013 = vadd.f32 %v2832, %v2968
        %v3014 = vadd.f32 %v2833, %v2969
        %v3015 = vadd.f32 %v2834, %v2970
        %v3016 = vadd.f32 %v2835, %v2971
        %v3017 = vadd.f32 %v2836, %v2936
        %v3018 = vadd.f32 %v2837, %v2972
        %v3019 = vadd.f32 %v2838, %v2973
        %v3020 = vadd.f32 %v2839, %v2974
        %v3021 = vadd.f32 %v2840, %v2975
        %v3022 = vadd.f32 %v2841, %v2976
        %v3023 = vadd.f32 %v2842, %v2948
        %v3024 = vadd.f32 %v2843, %v2977
        %v3025 = vadd.f32 %v2844, %v2978
        %v3026 = vadd.f32 %v2845, %v2979
        %v3027 = vadd.f32 %v2846, %v2980
        %v3028 = vadd.f32 %v2847, %v2981
        %v3029 = vadd.f32 %v2848, %v2960
        %3030 = vset.pattern.permute.xlu0 16
        %3031 = vperm.xlu0 %3030, %v230
        %v3032 = vpop.permute.xlu0 %3031
        %3034 = vset.pattern.permute.xlu0 16
        %3035 = vperm.xlu0 %3034, %v231
        %v3036 = vpop.permute.xlu0 %3035
        %3038 = vset.pattern.permute.xlu0 16
        %3039 = vperm.xlu0 %3038, %v232
        %v3040 = vpop.permute.xlu0 %3039
        %3042 = vset.pattern.permute.xlu0 16
        %3043 = vperm.xlu0 %3042, %v233
        %v3044 = vpop.permute.xlu0 %3043
        %v3046 = vmul.f32 %v3032, %v255
        %v3047 = vmul.f32 %v3032, %v256
        %v3048 = vmul.f32 %v3032, %v257
        %v3049 = vmul.f32 %v3032, %v258
        %v3050 = vmul.f32 %v3032, %v259
        %v3051 = vmul.f32 %v3032, %v260
        %v3052 = vmul.f32 %v3036, %v255
        %v3053 = vmul.f32 %v3036, %v256
        %v3054 = vmul.f32 %v3036, %v257
        %v3055 = vmul.f32 %v3036, %v258
        %v3056 = vmul.f32 %v3036, %v259
        %v3057 = vmul.f32 %v3036, %v260
        %v3058 = vmul.f32 %v3040, %v255
        %v3059 = vmul.f32 %v3040, %v256
        %v3060 = vmul.f32 %v3040, %v257
        %v3061 = vmul.f32 %v3040, %v258
        %v3062 = vmul.f32 %v3040, %v259
        %v3063 = vmul.f32 %v3040, %v260
        %v3064 = vmul.f32 %v3044, %v255
        %v3065 = vmul.f32 %v3044, %v256
        %v3066 = vmul.f32 %v3044, %v257
        %v3067 = vmul.f32 %v3044, %v258
        %v3068 = vmul.f32 %v3044, %v259
        %v3069 = vmul.f32 %v3044, %v260
        %3094 = vrot.lane.b32.xlu0 %v3046, 43
        %v3095 = vpop.permute.xlu0 %3094
        %3096 = vrot.lane.b32.xlu0 %v3047, 43
        %v3097 = vpop.permute.xlu0 %3096
        %3098 = vrot.lane.b32.xlu0 %v3048, 43
        %v3099 = vpop.permute.xlu0 %3098
        %3100 = vrot.lane.b32.xlu0 %v3049, 43
        %v3101 = vpop.permute.xlu0 %3100
        %3102 = vrot.lane.b32.xlu0 %v3050, 43
        %v3103 = vpop.permute.xlu0 %3102
        %3104 = vrot.lane.b32.xlu0 %v3051, 43
        %v3105 = vpop.permute.xlu0 %3104
        %3106 = vrot.lane.b32.xlu0 %v3052, 43
        %v3107 = vpop.permute.xlu0 %3106
        %3108 = vrot.lane.b32.xlu0 %v3053, 43
        %v3109 = vpop.permute.xlu0 %3108
        %3110 = vrot.lane.b32.xlu0 %v3054, 43
        %v3111 = vpop.permute.xlu0 %3110
        %3112 = vrot.lane.b32.xlu0 %v3055, 43
        %v3113 = vpop.permute.xlu0 %3112
        %3114 = vrot.lane.b32.xlu0 %v3056, 43
        %v3115 = vpop.permute.xlu0 %3114
        %3116 = vrot.lane.b32.xlu0 %v3057, 43
        %v3117 = vpop.permute.xlu0 %3116
        %3118 = vrot.lane.b32.xlu0 %v3058, 43
        %v3119 = vpop.permute.xlu0 %3118
        %3120 = vrot.lane.b32.xlu0 %v3059, 43
        %v3121 = vpop.permute.xlu0 %3120
        %3122 = vrot.lane.b32.xlu0 %v3060, 43
        %v3123 = vpop.permute.xlu0 %3122
        %3124 = vrot.lane.b32.xlu0 %v3061, 43
        %v3125 = vpop.permute.xlu0 %3124
        %3126 = vrot.lane.b32.xlu0 %v3062, 43
        %v3127 = vpop.permute.xlu0 %3126
        %3128 = vrot.lane.b32.xlu0 %v3063, 43
        %v3129 = vpop.permute.xlu0 %3128
        %3130 = vrot.lane.b32.xlu0 %v3064, 43
        %v3131 = vpop.permute.xlu0 %3130
        %3132 = vrot.lane.b32.xlu0 %v3065, 43
        %v3133 = vpop.permute.xlu0 %3132
        %3134 = vrot.lane.b32.xlu0 %v3066, 43
        %v3135 = vpop.permute.xlu0 %3134
        %3136 = vrot.lane.b32.xlu0 %v3067, 43
        %v3137 = vpop.permute.xlu0 %3136
        %3138 = vrot.lane.b32.xlu0 %v3068, 43
        %v3139 = vpop.permute.xlu0 %3138
        %3140 = vrot.lane.b32.xlu0 %v3069, 43
        %v3141 = vpop.permute.xlu0 %3140
        %vm3142 = vcmask 351232
        %v3143 = vsel %vm3142, %v3095, %v3097
        %v3144 = vsel %vm3142, %v3097, %v3099
        %v3145 = vsel %vm3142, %v3099, %v3101
        %v3146 = vsel %vm3142, %v3101, %v3103
        %v3147 = vsel %vm3142, %v3103, %v3105
        %v3148 = vsel %vm3142, %v3107, %v3109
        %v3149 = vsel %vm3142, %v3109, %v3111
        %v3150 = vsel %vm3142, %v3111, %v3113
        %v3151 = vsel %vm3142, %v3113, %v3115
        %v3152 = vsel %vm3142, %v3115, %v3117
        %v3153 = vsel %vm3142, %v3119, %v3121
        %v3154 = vsel %vm3142, %v3121, %v3123
        %v3155 = vsel %vm3142, %v3123, %v3125
        %v3156 = vsel %vm3142, %v3125, %v3127
        %v3157 = vsel %vm3142, %v3127, %v3129
        %v3158 = vsel %vm3142, %v3131, %v3133
        %v3159 = vsel %vm3142, %v3133, %v3135
        %v3160 = vsel %vm3142, %v3135, %v3137
        %v3161 = vsel %vm3142, %v3137, %v3139
        %v3162 = vsel %vm3142, %v3139, %v3141
        %v3187 = vadd.f32 %v3006, %v3143
        %v3188 = vadd.f32 %v3007, %v3144
        %v3189 = vadd.f32 %v3008, %v3145
        %v3190 = vadd.f32 %v3009, %v3146
        %v3191 = vadd.f32 %v3010, %v3147
        %v3192 = vadd.f32 %v3011, %v3105
        %v3193 = vadd.f32 %v3012, %v3148
        %v3194 = vadd.f32 %v3013, %v3149
        %v3195 = vadd.f32 %v3014, %v3150
        %v3196 = vadd.f32 %v3015, %v3151
        %v3197 = vadd.f32 %v3016, %v3152
        %v3198 = vadd.f32 %v3017, %v3117
        %v3199 = vadd.f32 %v3018, %v3153
        %v3200 = vadd.f32 %v3019, %v3154
        %v3201 = vadd.f32 %v3020, %v3155
        %v3202 = vadd.f32 %v3021, %v3156
        %v3203 = vadd.f32 %v3022, %v3157
        %v3204 = vadd.f32 %v3023, %v3129
        %v3205 = vadd.f32 %v3024, %v3158
        %v3206 = vadd.f32 %v3025, %v3159
        %v3207 = vadd.f32 %v3026, %v3160
        %v3208 = vadd.f32 %v3027, %v3161
        %v3209 = vadd.f32 %v3028, %v3162
        %v3210 = vadd.f32 %v3029, %v3141
        %3211 = vset.pattern.permute.xlu0 17
        %3212 = vperm.xlu0 %3211, %v230
        %v3213 = vpop.permute.xlu0 %3212
        %3215 = vset.pattern.permute.xlu0 17
        %3216 = vperm.xlu0 %3215, %v231
        %v3217 = vpop.permute.xlu0 %3216
        %3219 = vset.pattern.permute.xlu0 17
        %3220 = vperm.xlu0 %3219, %v232
        %v3221 = vpop.permute.xlu0 %3220
        %3223 = vset.pattern.permute.xlu0 17
        %3224 = vperm.xlu0 %3223, %v233
        %v3225 = vpop.permute.xlu0 %3224
        %v3227 = vmul.f32 %v3213, %v255
        %v3228 = vmul.f32 %v3213, %v256
        %v3229 = vmul.f32 %v3213, %v257
        %v3230 = vmul.f32 %v3213, %v258
        %v3231 = vmul.f32 %v3213, %v259
        %v3232 = vmul.f32 %v3213, %v260
        %v3233 = vmul.f32 %v3217, %v255
        %v3234 = vmul.f32 %v3217, %v256
        %v3235 = vmul.f32 %v3217, %v257
        %v3236 = vmul.f32 %v3217, %v258
        %v3237 = vmul.f32 %v3217, %v259
        %v3238 = vmul.f32 %v3217, %v260
        %v3239 = vmul.f32 %v3221, %v255
        %v3240 = vmul.f32 %v3221, %v256
        %v3241 = vmul.f32 %v3221, %v257
        %v3242 = vmul.f32 %v3221, %v258
        %v3243 = vmul.f32 %v3221, %v259
        %v3244 = vmul.f32 %v3221, %v260
        %v3245 = vmul.f32 %v3225, %v255
        %v3246 = vmul.f32 %v3225, %v256
        %v3247 = vmul.f32 %v3225, %v257
        %v3248 = vmul.f32 %v3225, %v258
        %v3249 = vmul.f32 %v3225, %v259
        %v3250 = vmul.f32 %v3225, %v260
        %3275 = vrot.lane.b32.xlu0 %v3227, 42
        %v3276 = vpop.permute.xlu0 %3275
        %3277 = vrot.lane.b32.xlu0 %v3228, 42
        %v3278 = vpop.permute.xlu0 %3277
        %3279 = vrot.lane.b32.xlu0 %v3229, 42
        %v3280 = vpop.permute.xlu0 %3279
        %3281 = vrot.lane.b32.xlu0 %v3230, 42
        %v3282 = vpop.permute.xlu0 %3281
        %3283 = vrot.lane.b32.xlu0 %v3231, 42
        %v3284 = vpop.permute.xlu0 %3283
        %3285 = vrot.lane.b32.xlu0 %v3232, 42
        %v3286 = vpop.permute.xlu0 %3285
        %3287 = vrot.lane.b32.xlu0 %v3233, 42
        %v3288 = vpop.permute.xlu0 %3287
        %3289 = vrot.lane.b32.xlu0 %v3234, 42
        %v3290 = vpop.permute.xlu0 %3289
        %3291 = vrot.lane.b32.xlu0 %v3235, 42
        %v3292 = vpop.permute.xlu0 %3291
        %3293 = vrot.lane.b32.xlu0 %v3236, 42
        %v3294 = vpop.permute.xlu0 %3293
        %3295 = vrot.lane.b32.xlu0 %v3237, 42
        %v3296 = vpop.permute.xlu0 %3295
        %3297 = vrot.lane.b32.xlu0 %v3238, 42
        %v3298 = vpop.permute.xlu0 %3297
        %3299 = vrot.lane.b32.xlu0 %v3239, 42
        %v3300 = vpop.permute.xlu0 %3299
        %3301 = vrot.lane.b32.xlu0 %v3240, 42
        %v3302 = vpop.permute.xlu0 %3301
        %3303 = vrot.lane.b32.xlu0 %v3241, 42
        %v3304 = vpop.permute.xlu0 %3303
        %3305 = vrot.lane.b32.xlu0 %v3242, 42
        %v3306 = vpop.permute.xlu0 %3305
        %3307 = vrot.lane.b32.xlu0 %v3243, 42
        %v3308 = vpop.permute.xlu0 %3307
        %3309 = vrot.lane.b32.xlu0 %v3244, 42
        %v3310 = vpop.permute.xlu0 %3309
        %3311 = vrot.lane.b32.xlu0 %v3245, 42
        %v3312 = vpop.permute.xlu0 %3311
        %3313 = vrot.lane.b32.xlu0 %v3246, 42
        %v3314 = vpop.permute.xlu0 %3313
        %3315 = vrot.lane.b32.xlu0 %v3247, 42
        %v3316 = vpop.permute.xlu0 %3315
        %3317 = vrot.lane.b32.xlu0 %v3248, 42
        %v3318 = vpop.permute.xlu0 %3317
        %3319 = vrot.lane.b32.xlu0 %v3249, 42
        %v3320 = vpop.permute.xlu0 %3319
        %3321 = vrot.lane.b32.xlu0 %v3250, 42
        %v3322 = vpop.permute.xlu0 %3321
        %vm3323 = vcmask 343040
        %v3324 = vsel %vm3323, %v3276, %v3278
        %v3325 = vsel %vm3323, %v3278, %v3280
        %v3326 = vsel %vm3323, %v3280, %v3282
        %v3327 = vsel %vm3323, %v3282, %v3284
        %v3328 = vsel %vm3323, %v3284, %v3286
        %v3329 = vsel %vm3323, %v3288, %v3290
        %v3330 = vsel %vm3323, %v3290, %v3292
        %v3331 = vsel %vm3323, %v3292, %v3294
        %v3332 = vsel %vm3323, %v3294, %v3296
        %v3333 = vsel %vm3323, %v3296, %v3298
        %v3334 = vsel %vm3323, %v3300, %v3302
        %v3335 = vsel %vm3323, %v3302, %v3304
        %v3336 = vsel %vm3323, %v3304, %v3306
        %v3337 = vsel %vm3323, %v3306, %v3308
        %v3338 = vsel %vm3323, %v3308, %v3310
        %v3339 = vsel %vm3323, %v3312, %v3314
        %v3340 = vsel %vm3323, %v3314, %v3316
        %v3341 = vsel %vm3323, %v3316, %v3318
        %v3342 = vsel %vm3323, %v3318, %v3320
        %v3343 = vsel %vm3323, %v3320, %v3322
        %v3368 = vadd.f32 %v3187, %v3324
        %v3369 = vadd.f32 %v3188, %v3325
        %v3370 = vadd.f32 %v3189, %v3326
        %v3371 = vadd.f32 %v3190, %v3327
        %v3372 = vadd.f32 %v3191, %v3328
        %v3373 = vadd.f32 %v3192, %v3286
        %v3374 = vadd.f32 %v3193, %v3329
        %v3375 = vadd.f32 %v3194, %v3330
        %v3376 = vadd.f32 %v3195, %v3331
        %v3377 = vadd.f32 %v3196, %v3332
        %v3378 = vadd.f32 %v3197, %v3333
        %v3379 = vadd.f32 %v3198, %v3298
        %v3380 = vadd.f32 %v3199, %v3334
        %v3381 = vadd.f32 %v3200, %v3335
        %v3382 = vadd.f32 %v3201, %v3336
        %v3383 = vadd.f32 %v3202, %v3337
        %v3384 = vadd.f32 %v3203, %v3338
        %v3385 = vadd.f32 %v3204, %v3310
        %v3386 = vadd.f32 %v3205, %v3339
        %v3387 = vadd.f32 %v3206, %v3340
        %v3388 = vadd.f32 %v3207, %v3341
        %v3389 = vadd.f32 %v3208, %v3342
        %v3390 = vadd.f32 %v3209, %v3343
        %v3391 = vadd.f32 %v3210, %v3322
        %3392 = vset.pattern.permute.xlu0 18
        %3393 = vperm.xlu0 %3392, %v230
        %v3394 = vpop.permute.xlu0 %3393
        %3396 = vset.pattern.permute.xlu0 18
        %3397 = vperm.xlu0 %3396, %v231
        %v3398 = vpop.permute.xlu0 %3397
        %3400 = vset.pattern.permute.xlu0 18
        %3401 = vperm.xlu0 %3400, %v232
        %v3402 = vpop.permute.xlu0 %3401
        %3404 = vset.pattern.permute.xlu0 18
        %3405 = vperm.xlu0 %3404, %v233
        %v3406 = vpop.permute.xlu0 %3405
        %v3408 = vmul.f32 %v3394, %v255
        %v3409 = vmul.f32 %v3394, %v256
        %v3410 = vmul.f32 %v3394, %v257
        %v3411 = vmul.f32 %v3394, %v258
        %v3412 = vmul.f32 %v3394, %v259
        %v3413 = vmul.f32 %v3394, %v260
        %v3414 = vmul.f32 %v3398, %v255
        %v3415 = vmul.f32 %v3398, %v256
        %v3416 = vmul.f32 %v3398, %v257
        %v3417 = vmul.f32 %v3398, %v258
        %v3418 = vmul.f32 %v3398, %v259
        %v3419 = vmul.f32 %v3398, %v260
        %v3420 = vmul.f32 %v3402, %v255
        %v3421 = vmul.f32 %v3402, %v256
        %v3422 = vmul.f32 %v3402, %v257
        %v3423 = vmul.f32 %v3402, %v258
        %v3424 = vmul.f32 %v3402, %v259
        %v3425 = vmul.f32 %v3402, %v260
        %v3426 = vmul.f32 %v3406, %v255
        %v3427 = vmul.f32 %v3406, %v256
        %v3428 = vmul.f32 %v3406, %v257
        %v3429 = vmul.f32 %v3406, %v258
        %v3430 = vmul.f32 %v3406, %v259
        %v3431 = vmul.f32 %v3406, %v260
        %3456 = vrot.lane.b32.xlu0 %v3408, 41
        %v3457 = vpop.permute.xlu0 %3456
        %3458 = vrot.lane.b32.xlu0 %v3409, 41
        %v3459 = vpop.permute.xlu0 %3458
        %3460 = vrot.lane.b32.xlu0 %v3410, 41
        %v3461 = vpop.permute.xlu0 %3460
        %3462 = vrot.lane.b32.xlu0 %v3411, 41
        %v3463 = vpop.permute.xlu0 %3462
        %3464 = vrot.lane.b32.xlu0 %v3412, 41
        %v3465 = vpop.permute.xlu0 %3464
        %3466 = vrot.lane.b32.xlu0 %v3413, 41
        %v3467 = vpop.permute.xlu0 %3466
        %3468 = vrot.lane.b32.xlu0 %v3414, 41
        %v3469 = vpop.permute.xlu0 %3468
        %3470 = vrot.lane.b32.xlu0 %v3415, 41
        %v3471 = vpop.permute.xlu0 %3470
        %3472 = vrot.lane.b32.xlu0 %v3416, 41
        %v3473 = vpop.permute.xlu0 %3472
        %3474 = vrot.lane.b32.xlu0 %v3417, 41
        %v3475 = vpop.permute.xlu0 %3474
        %3476 = vrot.lane.b32.xlu0 %v3418, 41
        %v3477 = vpop.permute.xlu0 %3476
        %3478 = vrot.lane.b32.xlu0 %v3419, 41
        %v3479 = vpop.permute.xlu0 %3478
        %3480 = vrot.lane.b32.xlu0 %v3420, 41
        %v3481 = vpop.permute.xlu0 %3480
        %3482 = vrot.lane.b32.xlu0 %v3421, 41
        %v3483 = vpop.permute.xlu0 %3482
        %3484 = vrot.lane.b32.xlu0 %v3422, 41
        %v3485 = vpop.permute.xlu0 %3484
        %3486 = vrot.lane.b32.xlu0 %v3423, 41
        %v3487 = vpop.permute.xlu0 %3486
        %3488 = vrot.lane.b32.xlu0 %v3424, 41
        %v3489 = vpop.permute.xlu0 %3488
        %3490 = vrot.lane.b32.xlu0 %v3425, 41
        %v3491 = vpop.permute.xlu0 %3490
        %3492 = vrot.lane.b32.xlu0 %v3426, 41
        %v3493 = vpop.permute.xlu0 %3492
        %3494 = vrot.lane.b32.xlu0 %v3427, 41
        %v3495 = vpop.permute.xlu0 %3494
        %3496 = vrot.lane.b32.xlu0 %v3428, 41
        %v3497 = vpop.permute.xlu0 %3496
        %3498 = vrot.lane.b32.xlu0 %v3429, 41
        %v3499 = vpop.permute.xlu0 %3498
        %3500 = vrot.lane.b32.xlu0 %v3430, 41
        %v3501 = vpop.permute.xlu0 %3500
        %3502 = vrot.lane.b32.xlu0 %v3431, 41
        %v3503 = vpop.permute.xlu0 %3502
        %vm3504 = vcmask 334848
        %v3505 = vsel %vm3504, %v3457, %v3459
        %v3506 = vsel %vm3504, %v3459, %v3461
        %v3507 = vsel %vm3504, %v3461, %v3463
        %v3508 = vsel %vm3504, %v3463, %v3465
        %v3509 = vsel %vm3504, %v3465, %v3467
        %v3510 = vsel %vm3504, %v3469, %v3471
        %v3511 = vsel %vm3504, %v3471, %v3473
        %v3512 = vsel %vm3504, %v3473, %v3475
        %v3513 = vsel %vm3504, %v3475, %v3477
        %v3514 = vsel %vm3504, %v3477, %v3479
        %v3515 = vsel %vm3504, %v3481, %v3483
        %v3516 = vsel %vm3504, %v3483, %v3485
        %v3517 = vsel %vm3504, %v3485, %v3487
        %v3518 = vsel %vm3504, %v3487, %v3489
        %v3519 = vsel %vm3504, %v3489, %v3491
        %v3520 = vsel %vm3504, %v3493, %v3495
        %v3521 = vsel %vm3504, %v3495, %v3497
        %v3522 = vsel %vm3504, %v3497, %v3499
        %v3523 = vsel %vm3504, %v3499, %v3501
        %v3524 = vsel %vm3504, %v3501, %v3503
        %v3549 = vadd.f32 %v3368, %v3505
        %v3550 = vadd.f32 %v3369, %v3506
        %v3551 = vadd.f32 %v3370, %v3507
        %v3552 = vadd.f32 %v3371, %v3508
        %v3553 = vadd.f32 %v3372, %v3509
        %v3554 = vadd.f32 %v3373, %v3467
        %v3555 = vadd.f32 %v3374, %v3510
        %v3556 = vadd.f32 %v3375, %v3511
        %v3557 = vadd.f32 %v3376, %v3512
        %v3558 = vadd.f32 %v3377, %v3513
        %v3559 = vadd.f32 %v3378, %v3514
        %v3560 = vadd.f32 %v3379, %v3479
        %v3561 = vadd.f32 %v3380, %v3515
        %v3562 = vadd.f32 %v3381, %v3516
        %v3563 = vadd.f32 %v3382, %v3517
        %v3564 = vadd.f32 %v3383, %v3518
        %v3565 = vadd.f32 %v3384, %v3519
        %v3566 = vadd.f32 %v3385, %v3491
        %v3567 = vadd.f32 %v3386, %v3520
        %v3568 = vadd.f32 %v3387, %v3521
        %v3569 = vadd.f32 %v3388, %v3522
        %v3570 = vadd.f32 %v3389, %v3523
        %v3571 = vadd.f32 %v3390, %v3524
        %v3572 = vadd.f32 %v3391, %v3503
        %3573 = vset.pattern.permute.xlu0 19
        %3574 = vperm.xlu0 %3573, %v230
        %v3575 = vpop.permute.xlu0 %3574
        %3577 = vset.pattern.permute.xlu0 19
        %3578 = vperm.xlu0 %3577, %v231
        %v3579 = vpop.permute.xlu0 %3578
        %3581 = vset.pattern.permute.xlu0 19
        %3582 = vperm.xlu0 %3581, %v232
        %v3583 = vpop.permute.xlu0 %3582
        %3585 = vset.pattern.permute.xlu0 19
        %3586 = vperm.xlu0 %3585, %v233
        %v3587 = vpop.permute.xlu0 %3586
        %v3589 = vmul.f32 %v3575, %v255
        %v3590 = vmul.f32 %v3575, %v256
        %v3591 = vmul.f32 %v3575, %v257
        %v3592 = vmul.f32 %v3575, %v258
        %v3593 = vmul.f32 %v3575, %v259
        %v3594 = vmul.f32 %v3575, %v260
        %v3595 = vmul.f32 %v3579, %v255
        %v3596 = vmul.f32 %v3579, %v256
        %v3597 = vmul.f32 %v3579, %v257
        %v3598 = vmul.f32 %v3579, %v258
        %v3599 = vmul.f32 %v3579, %v259
        %v3600 = vmul.f32 %v3579, %v260
        %v3601 = vmul.f32 %v3583, %v255
        %v3602 = vmul.f32 %v3583, %v256
        %v3603 = vmul.f32 %v3583, %v257
        %v3604 = vmul.f32 %v3583, %v258
        %v3605 = vmul.f32 %v3583, %v259
        %v3606 = vmul.f32 %v3583, %v260
        %v3607 = vmul.f32 %v3587, %v255
        %v3608 = vmul.f32 %v3587, %v256
        %v3609 = vmul.f32 %v3587, %v257
        %v3610 = vmul.f32 %v3587, %v258
        %v3611 = vmul.f32 %v3587, %v259
        %v3612 = vmul.f32 %v3587, %v260
        %3637 = vrot.lane.b32.xlu0 %v3589, 40
        %v3638 = vpop.permute.xlu0 %3637
        %3639 = vrot.lane.b32.xlu0 %v3590, 40
        %v3640 = vpop.permute.xlu0 %3639
        %3641 = vrot.lane.b32.xlu0 %v3591, 40
        %v3642 = vpop.permute.xlu0 %3641
        %3643 = vrot.lane.b32.xlu0 %v3592, 40
        %v3644 = vpop.permute.xlu0 %3643
        %3645 = vrot.lane.b32.xlu0 %v3593, 40
        %v3646 = vpop.permute.xlu0 %3645
        %3647 = vrot.lane.b32.xlu0 %v3594, 40
        %v3648 = vpop.permute.xlu0 %3647
        %3649 = vrot.lane.b32.xlu0 %v3595, 40
        %v3650 = vpop.permute.xlu0 %3649
        %3651 = vrot.lane.b32.xlu0 %v3596, 40
        %v3652 = vpop.permute.xlu0 %3651
        %3653 = vrot.lane.b32.xlu0 %v3597, 40
        %v3654 = vpop.permute.xlu0 %3653
        %3655 = vrot.lane.b32.xlu0 %v3598, 40
        %v3656 = vpop.permute.xlu0 %3655
        %3657 = vrot.lane.b32.xlu0 %v3599, 40
        %v3658 = vpop.permute.xlu0 %3657
        %3659 = vrot.lane.b32.xlu0 %v3600, 40
        %v3660 = vpop.permute.xlu0 %3659
        %3661 = vrot.lane.b32.xlu0 %v3601, 40
        %v3662 = vpop.permute.xlu0 %3661
        %3663 = vrot.lane.b32.xlu0 %v3602, 40
        %v3664 = vpop.permute.xlu0 %3663
        %3665 = vrot.lane.b32.xlu0 %v3603, 40
        %v3666 = vpop.permute.xlu0 %3665
        %3667 = vrot.lane.b32.xlu0 %v3604, 40
        %v3668 = vpop.permute.xlu0 %3667
        %3669 = vrot.lane.b32.xlu0 %v3605, 40
        %v3670 = vpop.permute.xlu0 %3669
        %3671 = vrot.lane.b32.xlu0 %v3606, 40
        %v3672 = vpop.permute.xlu0 %3671
        %3673 = vrot.lane.b32.xlu0 %v3607, 40
        %v3674 = vpop.permute.xlu0 %3673
        %3675 = vrot.lane.b32.xlu0 %v3608, 40
        %v3676 = vpop.permute.xlu0 %3675
        %3677 = vrot.lane.b32.xlu0 %v3609, 40
        %v3678 = vpop.permute.xlu0 %3677
        %3679 = vrot.lane.b32.xlu0 %v3610, 40
        %v3680 = vpop.permute.xlu0 %3679
        %3681 = vrot.lane.b32.xlu0 %v3611, 40
        %v3682 = vpop.permute.xlu0 %3681
        %3683 = vrot.lane.b32.xlu0 %v3612, 40
        %v3684 = vpop.permute.xlu0 %3683
        %vm3685 = vcmask 326656
        %v3686 = vsel %vm3685, %v3638, %v3640
        %v3687 = vsel %vm3685, %v3640, %v3642
        %v3688 = vsel %vm3685, %v3642, %v3644
        %v3689 = vsel %vm3685, %v3644, %v3646
        %v3690 = vsel %vm3685, %v3646, %v3648
        %v3691 = vsel %vm3685, %v3650, %v3652
        %v3692 = vsel %vm3685, %v3652, %v3654
        %v3693 = vsel %vm3685, %v3654, %v3656
        %v3694 = vsel %vm3685, %v3656, %v3658
        %v3695 = vsel %vm3685, %v3658, %v3660
        %v3696 = vsel %vm3685, %v3662, %v3664
        %v3697 = vsel %vm3685, %v3664, %v3666
        %v3698 = vsel %vm3685, %v3666, %v3668
        %v3699 = vsel %vm3685, %v3668, %v3670
        %v3700 = vsel %vm3685, %v3670, %v3672
        %v3701 = vsel %vm3685, %v3674, %v3676
        %v3702 = vsel %vm3685, %v3676, %v3678
        %v3703 = vsel %vm3685, %v3678, %v3680
        %v3704 = vsel %vm3685, %v3680, %v3682
        %v3705 = vsel %vm3685, %v3682, %v3684
        %v3730 = vadd.f32 %v3549, %v3686
        %v3731 = vadd.f32 %v3550, %v3687
        %v3732 = vadd.f32 %v3551, %v3688
        %v3733 = vadd.f32 %v3552, %v3689
        %v3734 = vadd.f32 %v3553, %v3690
        %v3735 = vadd.f32 %v3554, %v3648
        %v3736 = vadd.f32 %v3555, %v3691
        %v3737 = vadd.f32 %v3556, %v3692
        %v3738 = vadd.f32 %v3557, %v3693
        %v3739 = vadd.f32 %v3558, %v3694
        %v3740 = vadd.f32 %v3559, %v3695
        %v3741 = vadd.f32 %v3560, %v3660
        %v3742 = vadd.f32 %v3561, %v3696
        %v3743 = vadd.f32 %v3562, %v3697
        %v3744 = vadd.f32 %v3563, %v3698
        %v3745 = vadd.f32 %v3564, %v3699
        %v3746 = vadd.f32 %v3565, %v3700
        %v3747 = vadd.f32 %v3566, %v3672
        %v3748 = vadd.f32 %v3567, %v3701
        %v3749 = vadd.f32 %v3568, %v3702
        %v3750 = vadd.f32 %v3569, %v3703
        %v3751 = vadd.f32 %v3570, %v3704
        %v3752 = vadd.f32 %v3571, %v3705
        %v3753 = vadd.f32 %v3572, %v3684
        %3754 = vset.pattern.permute.xlu0 20
        %3755 = vperm.xlu0 %3754, %v230
        %v3756 = vpop.permute.xlu0 %3755
        %3758 = vset.pattern.permute.xlu0 20
        %3759 = vperm.xlu0 %3758, %v231
        %v3760 = vpop.permute.xlu0 %3759
        %3762 = vset.pattern.permute.xlu0 20
        %3763 = vperm.xlu0 %3762, %v232
        %v3764 = vpop.permute.xlu0 %3763
        %3766 = vset.pattern.permute.xlu0 20
        %3767 = vperm.xlu0 %3766, %v233
        %v3768 = vpop.permute.xlu0 %3767
        %v3770 = vperm.slane %v229, 6
        %v3772 = vmul.f32 %v3756, %v255
        %v3773 = vmul.f32 %v3756, %v256
        %v3774 = vmul.f32 %v3756, %v257
        %v3775 = vmul.f32 %v3756, %v258
        %v3776 = vmul.f32 %v3756, %v259
        %v3777 = vmul.f32 %v3756, %v260
        %v3778 = vmul.f32 %v3756, %v3770
        %v3779 = vmul.f32 %v3760, %v255
        %v3780 = vmul.f32 %v3760, %v256
        %v3781 = vmul.f32 %v3760, %v257
        %v3782 = vmul.f32 %v3760, %v258
        %v3783 = vmul.f32 %v3760, %v259
        %v3784 = vmul.f32 %v3760, %v260
        %v3785 = vmul.f32 %v3760, %v3770
        %v3786 = vmul.f32 %v3764, %v255
        %v3787 = vmul.f32 %v3764, %v256
        %v3788 = vmul.f32 %v3764, %v257
        %v3789 = vmul.f32 %v3764, %v258
        %v3790 = vmul.f32 %v3764, %v259
        %v3791 = vmul.f32 %v3764, %v260
        %v3792 = vmul.f32 %v3764, %v3770
        %v3793 = vmul.f32 %v3768, %v255
        %v3794 = vmul.f32 %v3768, %v256
        %v3795 = vmul.f32 %v3768, %v257
        %v3796 = vmul.f32 %v3768, %v258
        %v3797 = vmul.f32 %v3768, %v259
        %v3798 = vmul.f32 %v3768, %v260
        %v3799 = vmul.f32 %v3768, %v3770
        %3828 = vrot.lane.b32.xlu0 %v3772, 16
        %v3829 = vpop.permute.xlu0 %3828
        %3830 = vrot.lane.b32.xlu0 %v3773, 16
        %v3831 = vpop.permute.xlu0 %3830
        %3832 = vrot.lane.b32.xlu0 %v3774, 16
        %v3833 = vpop.permute.xlu0 %3832
        %3834 = vrot.lane.b32.xlu0 %v3775, 16
        %v3835 = vpop.permute.xlu0 %3834
        %3836 = vrot.lane.b32.xlu0 %v3776, 16
        %v3837 = vpop.permute.xlu0 %3836
        %3838 = vrot.lane.b32.xlu0 %v3777, 16
        %v3839 = vpop.permute.xlu0 %3838
        %3840 = vrot.lane.b32.xlu0 %v3778, 16
        %v3841 = vpop.permute.xlu0 %3840
        %3842 = vrot.lane.b32.xlu0 %v3779, 16
        %v3843 = vpop.permute.xlu0 %3842
        %3844 = vrot.lane.b32.xlu0 %v3780, 16
        %v3845 = vpop.permute.xlu0 %3844
        %3846 = vrot.lane.b32.xlu0 %v3781, 16
        %v3847 = vpop.permute.xlu0 %3846
        %3848 = vrot.lane.b32.xlu0 %v3782, 16
        %v3849 = vpop.permute.xlu0 %3848
        %3850 = vrot.lane.b32.xlu0 %v3783, 16
        %v3851 = vpop.permute.xlu0 %3850
        %3852 = vrot.lane.b32.xlu0 %v3784, 16
        %v3853 = vpop.permute.xlu0 %3852
        %3854 = vrot.lane.b32.xlu0 %v3785, 16
        %v3855 = vpop.permute.xlu0 %3854
        %3856 = vrot.lane.b32.xlu0 %v3786, 16
        %v3857 = vpop.permute.xlu0 %3856
        %3858 = vrot.lane.b32.xlu0 %v3787, 16
        %v3859 = vpop.permute.xlu0 %3858
        %3860 = vrot.lane.b32.xlu0 %v3788, 16
        %v3861 = vpop.permute.xlu0 %3860
        %3862 = vrot.lane.b32.xlu0 %v3789, 16
        %v3863 = vpop.permute.xlu0 %3862
        %3864 = vrot.lane.b32.xlu0 %v3790, 16
        %v3865 = vpop.permute.xlu0 %3864
        %3866 = vrot.lane.b32.xlu0 %v3791, 16
        %v3867 = vpop.permute.xlu0 %3866
        %3868 = vrot.lane.b32.xlu0 %v3792, 16
        %v3869 = vpop.permute.xlu0 %3868
        %3870 = vrot.lane.b32.xlu0 %v3793, 16
        %v3871 = vpop.permute.xlu0 %3870
        %3872 = vrot.lane.b32.xlu0 %v3794, 16
        %v3873 = vpop.permute.xlu0 %3872
        %3874 = vrot.lane.b32.xlu0 %v3795, 16
        %v3875 = vpop.permute.xlu0 %3874
        %3876 = vrot.lane.b32.xlu0 %v3796, 16
        %v3877 = vpop.permute.xlu0 %3876
        %3878 = vrot.lane.b32.xlu0 %v3797, 16
        %v3879 = vpop.permute.xlu0 %3878
        %3880 = vrot.lane.b32.xlu0 %v3798, 16
        %v3881 = vpop.permute.xlu0 %3880
        %3882 = vrot.lane.b32.xlu0 %v3799, 16
        %v3883 = vpop.permute.xlu0 %3882
        %vm3884 = vcmask 130048
        %v3885 = vsel %vm3884, %v3829, %v3831
        %v3886 = vsel %vm3884, %v3831, %v3833
        %v3887 = vsel %vm3884, %v3833, %v3835
        %v3888 = vsel %vm3884, %v3835, %v3837
        %v3889 = vsel %vm3884, %v3837, %v3839
        %v3890 = vsel %vm3884, %v3839, %v3841
        %v3891 = vsel %vm3884, %v3843, %v3845
        %v3892 = vsel %vm3884, %v3845, %v3847
        %v3893 = vsel %vm3884, %v3847, %v3849
        %v3894 = vsel %vm3884, %v3849, %v3851
        %v3895 = vsel %vm3884, %v3851, %v3853
        %v3896 = vsel %vm3884, %v3853, %v3855
        %v3897 = vsel %vm3884, %v3857, %v3859
        %v3898 = vsel %vm3884, %v3859, %v3861
        %v3899 = vsel %vm3884, %v3861, %v3863
        %v3900 = vsel %vm3884, %v3863, %v3865
        %v3901 = vsel %vm3884, %v3865, %v3867
        %v3902 = vsel %vm3884, %v3867, %v3869
        %v3903 = vsel %vm3884, %v3871, %v3873
        %v3904 = vsel %vm3884, %v3873, %v3875
        %v3905 = vsel %vm3884, %v3875, %v3877
        %v3906 = vsel %vm3884, %v3877, %v3879
        %v3907 = vsel %vm3884, %v3879, %v3881
        %v3908 = vsel %vm3884, %v3881, %v3883
        %v3933 = vadd.f32 %v3730, %v3885
        %v3934 = vadd.f32 %v3731, %v3886
        %v3935 = vadd.f32 %v3732, %v3887
        %v3936 = vadd.f32 %v3733, %v3888
        %v3937 = vadd.f32 %v3734, %v3889
        %v3938 = vadd.f32 %v3735, %v3890
        %v3939 = vadd.f32 %v3736, %v3891
        %v3940 = vadd.f32 %v3737, %v3892
        %v3941 = vadd.f32 %v3738, %v3893
        %v3942 = vadd.f32 %v3739, %v3894
        %v3943 = vadd.f32 %v3740, %v3895
        %v3944 = vadd.f32 %v3741, %v3896
        %v3945 = vadd.f32 %v3742, %v3897
        %v3946 = vadd.f32 %v3743, %v3898
        %v3947 = vadd.f32 %v3744, %v3899
        %v3948 = vadd.f32 %v3745, %v3900
        %v3949 = vadd.f32 %v3746, %v3901
        %v3950 = vadd.f32 %v3747, %v3902
        %v3951 = vadd.f32 %v3748, %v3903
        %v3952 = vadd.f32 %v3749, %v3904
        %v3953 = vadd.f32 %v3750, %v3905
        %v3954 = vadd.f32 %v3751, %v3906
        %v3955 = vadd.f32 %v3752, %v3907
        %v3956 = vadd.f32 %v3753, %v3908
        %3957 = vset.pattern.permute.xlu0 21
        %3958 = vperm.xlu0 %3957, %v230
        %v3959 = vpop.permute.xlu0 %3958
        %3961 = vset.pattern.permute.xlu0 21
        %3962 = vperm.xlu0 %3961, %v231
        %v3963 = vpop.permute.xlu0 %3962
        %3965 = vset.pattern.permute.xlu0 21
        %3966 = vperm.xlu0 %3965, %v232
        %v3967 = vpop.permute.xlu0 %3966
        %3969 = vset.pattern.permute.xlu0 21
        %3970 = vperm.xlu0 %3969, %v233
        %v3971 = vpop.permute.xlu0 %3970
        %v3973 = vmul.f32 %v3959, %v255
        %v3974 = vmul.f32 %v3959, %v256
        %v3975 = vmul.f32 %v3959, %v257
        %v3976 = vmul.f32 %v3959, %v258
        %v3977 = vmul.f32 %v3959, %v259
        %v3978 = vmul.f32 %v3959, %v260
        %v3979 = vmul.f32 %v3959, %v3770
        %v3980 = vmul.f32 %v3963, %v255
        %v3981 = vmul.f32 %v3963, %v256
        %v3982 = vmul.f32 %v3963, %v257
        %v3983 = vmul.f32 %v3963, %v258
        %v3984 = vmul.f32 %v3963, %v259
        %v3985 = vmul.f32 %v3963, %v260
        %v3986 = vmul.f32 %v3963, %v3770
        %v3987 = vmul.f32 %v3967, %v255
        %v3988 = vmul.f32 %v3967, %v256
        %v3989 = vmul.f32 %v3967, %v257
        %v3990 = vmul.f32 %v3967, %v258
        %v3991 = vmul.f32 %v3967, %v259
        %v3992 = vmul.f32 %v3967, %v260
        %v3993 = vmul.f32 %v3967, %v3770
        %v3994 = vmul.f32 %v3971, %v255
        %v3995 = vmul.f32 %v3971, %v256
        %v3996 = vmul.f32 %v3971, %v257
        %v3997 = vmul.f32 %v3971, %v258
        %v3998 = vmul.f32 %v3971, %v259
        %v3999 = vmul.f32 %v3971, %v260
        %v4000 = vmul.f32 %v3971, %v3770
        %4029 = vrot.lane.b32.xlu0 %v3973, 15
        %v4030 = vpop.permute.xlu0 %4029
        %4031 = vrot.lane.b32.xlu0 %v3974, 15
        %v4032 = vpop.permute.xlu0 %4031
        %4033 = vrot.lane.b32.xlu0 %v3975, 15
        %v4034 = vpop.permute.xlu0 %4033
        %4035 = vrot.lane.b32.xlu0 %v3976, 15
        %v4036 = vpop.permute.xlu0 %4035
        %4037 = vrot.lane.b32.xlu0 %v3977, 15
        %v4038 = vpop.permute.xlu0 %4037
        %4039 = vrot.lane.b32.xlu0 %v3978, 15
        %v4040 = vpop.permute.xlu0 %4039
        %4041 = vrot.lane.b32.xlu0 %v3979, 15
        %v4042 = vpop.permute.xlu0 %4041
        %4043 = vrot.lane.b32.xlu0 %v3980, 15
        %v4044 = vpop.permute.xlu0 %4043
        %4045 = vrot.lane.b32.xlu0 %v3981, 15
        %v4046 = vpop.permute.xlu0 %4045
        %4047 = vrot.lane.b32.xlu0 %v3982, 15
        %v4048 = vpop.permute.xlu0 %4047
        %4049 = vrot.lane.b32.xlu0 %v3983, 15
        %v4050 = vpop.permute.xlu0 %4049
        %4051 = vrot.lane.b32.xlu0 %v3984, 15
        %v4052 = vpop.permute.xlu0 %4051
        %4053 = vrot.lane.b32.xlu0 %v3985, 15
        %v4054 = vpop.permute.xlu0 %4053
        %4055 = vrot.lane.b32.xlu0 %v3986, 15
        %v4056 = vpop.permute.xlu0 %4055
        %4057 = vrot.lane.b32.xlu0 %v3987, 15
        %v4058 = vpop.permute.xlu0 %4057
        %4059 = vrot.lane.b32.xlu0 %v3988, 15
        %v4060 = vpop.permute.xlu0 %4059
        %4061 = vrot.lane.b32.xlu0 %v3989, 15
        %v4062 = vpop.permute.xlu0 %4061
        %4063 = vrot.lane.b32.xlu0 %v3990, 15
        %v4064 = vpop.permute.xlu0 %4063
        %4065 = vrot.lane.b32.xlu0 %v3991, 15
        %v4066 = vpop.permute.xlu0 %4065
        %4067 = vrot.lane.b32.xlu0 %v3992, 15
        %v4068 = vpop.permute.xlu0 %4067
        %4069 = vrot.lane.b32.xlu0 %v3993, 15
        %v4070 = vpop.permute.xlu0 %4069
        %4071 = vrot.lane.b32.xlu0 %v3994, 15
        %v4072 = vpop.permute.xlu0 %4071
        %4073 = vrot.lane.b32.xlu0 %v3995, 15
        %v4074 = vpop.permute.xlu0 %4073
        %4075 = vrot.lane.b32.xlu0 %v3996, 15
        %v4076 = vpop.permute.xlu0 %4075
        %4077 = vrot.lane.b32.xlu0 %v3997, 15
        %v4078 = vpop.permute.xlu0 %4077
        %4079 = vrot.lane.b32.xlu0 %v3998, 15
        %v4080 = vpop.permute.xlu0 %4079
        %4081 = vrot.lane.b32.xlu0 %v3999, 15
        %v4082 = vpop.permute.xlu0 %4081
        %4083 = vrot.lane.b32.xlu0 %v4000, 15
        %v4084 = vpop.permute.xlu0 %4083
        %vm4085 = vcmask 121856
        %v4086 = vsel %vm4085, %v4030, %v4032
        %v4087 = vsel %vm4085, %v4032, %v4034
        %v4088 = vsel %vm4085, %v4034, %v4036
        %v4089 = vsel %vm4085, %v4036, %v4038
        %v4090 = vsel %vm4085, %v4038, %v4040
        %v4091 = vsel %vm4085, %v4040, %v4042
        %v4092 = vsel %vm4085, %v4044, %v4046
        %v4093 = vsel %vm4085, %v4046, %v4048
        %v4094 = vsel %vm4085, %v4048, %v4050
        %v4095 = vsel %vm4085, %v4050, %v4052
        %v4096 = vsel %vm4085, %v4052, %v4054
        %v4097 = vsel %vm4085, %v4054, %v4056
        %v4098 = vsel %vm4085, %v4058, %v4060
        %v4099 = vsel %vm4085, %v4060, %v4062
        %v4100 = vsel %vm4085, %v4062, %v4064
        %v4101 = vsel %vm4085, %v4064, %v4066
        %v4102 = vsel %vm4085, %v4066, %v4068
        %v4103 = vsel %vm4085, %v4068, %v4070
        %v4104 = vsel %vm4085, %v4072, %v4074
        %v4105 = vsel %vm4085, %v4074, %v4076
        %v4106 = vsel %vm4085, %v4076, %v4078
        %v4107 = vsel %vm4085, %v4078, %v4080
        %v4108 = vsel %vm4085, %v4080, %v4082
        %v4109 = vsel %vm4085, %v4082, %v4084
        %v4134 = vadd.f32 %v3933, %v4086
        %v4135 = vadd.f32 %v3934, %v4087
        %v4136 = vadd.f32 %v3935, %v4088
        %v4137 = vadd.f32 %v3936, %v4089
        %v4138 = vadd.f32 %v3937, %v4090
        %v4139 = vadd.f32 %v3938, %v4091
        %v4140 = vadd.f32 %v3939, %v4092
        %v4141 = vadd.f32 %v3940, %v4093
        %v4142 = vadd.f32 %v3941, %v4094
        %v4143 = vadd.f32 %v3942, %v4095
        %v4144 = vadd.f32 %v3943, %v4096
        %v4145 = vadd.f32 %v3944, %v4097
        %v4146 = vadd.f32 %v3945, %v4098
        %v4147 = vadd.f32 %v3946, %v4099
        %v4148 = vadd.f32 %v3947, %v4100
        %v4149 = vadd.f32 %v3948, %v4101
        %v4150 = vadd.f32 %v3949, %v4102
        %v4151 = vadd.f32 %v3950, %v4103
        %v4152 = vadd.f32 %v3951, %v4104
        %v4153 = vadd.f32 %v3952, %v4105
        %v4154 = vadd.f32 %v3953, %v4106
        %v4155 = vadd.f32 %v3954, %v4107
        %v4156 = vadd.f32 %v3955, %v4108
        %v4157 = vadd.f32 %v3956, %v4109
        %4158 = vset.pattern.permute.xlu0 22
        %4159 = vperm.xlu0 %4158, %v230
        %v4160 = vpop.permute.xlu0 %4159
        %4162 = vset.pattern.permute.xlu0 22
        %4163 = vperm.xlu0 %4162, %v231
        %v4164 = vpop.permute.xlu0 %4163
        %4166 = vset.pattern.permute.xlu0 22
        %4167 = vperm.xlu0 %4166, %v232
        %v4168 = vpop.permute.xlu0 %4167
        %4170 = vset.pattern.permute.xlu0 22
        %4171 = vperm.xlu0 %4170, %v233
        %v4172 = vpop.permute.xlu0 %4171
        %v4174 = vmul.f32 %v4160, %v255
        %v4175 = vmul.f32 %v4160, %v256
        %v4176 = vmul.f32 %v4160, %v257
        %v4177 = vmul.f32 %v4160, %v258
        %v4178 = vmul.f32 %v4160, %v259
        %v4179 = vmul.f32 %v4160, %v260
        %v4180 = vmul.f32 %v4160, %v3770
        %v4181 = vmul.f32 %v4164, %v255
        %v4182 = vmul.f32 %v4164, %v256
        %v4183 = vmul.f32 %v4164, %v257
        %v4184 = vmul.f32 %v4164, %v258
        %v4185 = vmul.f32 %v4164, %v259
        %v4186 = vmul.f32 %v4164, %v260
        %v4187 = vmul.f32 %v4164, %v3770
        %v4188 = vmul.f32 %v4168, %v255
        %v4189 = vmul.f32 %v4168, %v256
        %v4190 = vmul.f32 %v4168, %v257
        %v4191 = vmul.f32 %v4168, %v258
        %v4192 = vmul.f32 %v4168, %v259
        %v4193 = vmul.f32 %v4168, %v260
        %v4194 = vmul.f32 %v4168, %v3770
        %v4195 = vmul.f32 %v4172, %v255
        %v4196 = vmul.f32 %v4172, %v256
        %v4197 = vmul.f32 %v4172, %v257
        %v4198 = vmul.f32 %v4172, %v258
        %v4199 = vmul.f32 %v4172, %v259
        %v4200 = vmul.f32 %v4172, %v260
        %v4201 = vmul.f32 %v4172, %v3770
        %4230 = vrot.lane.b32.xlu0 %v4174, 14
        %v4231 = vpop.permute.xlu0 %4230
        %4232 = vrot.lane.b32.xlu0 %v4175, 14
        %v4233 = vpop.permute.xlu0 %4232
        %4234 = vrot.lane.b32.xlu0 %v4176, 14
        %v4235 = vpop.permute.xlu0 %4234
        %4236 = vrot.lane.b32.xlu0 %v4177, 14
        %v4237 = vpop.permute.xlu0 %4236
        %4238 = vrot.lane.b32.xlu0 %v4178, 14
        %v4239 = vpop.permute.xlu0 %4238
        %4240 = vrot.lane.b32.xlu0 %v4179, 14
        %v4241 = vpop.permute.xlu0 %4240
        %4242 = vrot.lane.b32.xlu0 %v4180, 14
        %v4243 = vpop.permute.xlu0 %4242
        %4244 = vrot.lane.b32.xlu0 %v4181, 14
        %v4245 = vpop.permute.xlu0 %4244
        %4246 = vrot.lane.b32.xlu0 %v4182, 14
        %v4247 = vpop.permute.xlu0 %4246
        %4248 = vrot.lane.b32.xlu0 %v4183, 14
        %v4249 = vpop.permute.xlu0 %4248
        %4250 = vrot.lane.b32.xlu0 %v4184, 14
        %v4251 = vpop.permute.xlu0 %4250
        %4252 = vrot.lane.b32.xlu0 %v4185, 14
        %v4253 = vpop.permute.xlu0 %4252
        %4254 = vrot.lane.b32.xlu0 %v4186, 14
        %v4255 = vpop.permute.xlu0 %4254
        %4256 = vrot.lane.b32.xlu0 %v4187, 14
        %v4257 = vpop.permute.xlu0 %4256
        %4258 = vrot.lane.b32.xlu0 %v4188, 14
        %v4259 = vpop.permute.xlu0 %4258
        %4260 = vrot.lane.b32.xlu0 %v4189, 14
        %v4261 = vpop.permute.xlu0 %4260
        %4262 = vrot.lane.b32.xlu0 %v4190, 14
        %v4263 = vpop.permute.xlu0 %4262
        %4264 = vrot.lane.b32.xlu0 %v4191, 14
        %v4265 = vpop.permute.xlu0 %4264
        %4266 = vrot.lane.b32.xlu0 %v4192, 14
        %v4267 = vpop.permute.xlu0 %4266
        %4268 = vrot.lane.b32.xlu0 %v4193, 14
        %v4269 = vpop.permute.xlu0 %4268
        %4270 = vrot.lane.b32.xlu0 %v4194, 14
        %v4271 = vpop.permute.xlu0 %4270
        %4272 = vrot.lane.b32.xlu0 %v4195, 14
        %v4273 = vpop.permute.xlu0 %4272
        %4274 = vrot.lane.b32.xlu0 %v4196, 14
        %v4275 = vpop.permute.xlu0 %4274
        %4276 = vrot.lane.b32.xlu0 %v4197, 14
        %v4277 = vpop.permute.xlu0 %4276
        %4278 = vrot.lane.b32.xlu0 %v4198, 14
        %v4279 = vpop.permute.xlu0 %4278
        %4280 = vrot.lane.b32.xlu0 %v4199, 14
        %v4281 = vpop.permute.xlu0 %4280
        %4282 = vrot.lane.b32.xlu0 %v4200, 14
        %v4283 = vpop.permute.xlu0 %4282
        %4284 = vrot.lane.b32.xlu0 %v4201, 14
        %v4285 = vpop.permute.xlu0 %4284
        %vm4286 = vcmask 113664
        %v4287 = vsel %vm4286, %v4231, %v4233
        %v4288 = vsel %vm4286, %v4233, %v4235
        %v4289 = vsel %vm4286, %v4235, %v4237
        %v4290 = vsel %vm4286, %v4237, %v4239
        %v4291 = vsel %vm4286, %v4239, %v4241
        %v4292 = vsel %vm4286, %v4241, %v4243
        %v4293 = vsel %vm4286, %v4245, %v4247
        %v4294 = vsel %vm4286, %v4247, %v4249
        %v4295 = vsel %vm4286, %v4249, %v4251
        %v4296 = vsel %vm4286, %v4251, %v4253
        %v4297 = vsel %vm4286, %v4253, %v4255
        %v4298 = vsel %vm4286, %v4255, %v4257
        %v4299 = vsel %vm4286, %v4259, %v4261
        %v4300 = vsel %vm4286, %v4261, %v4263
        %v4301 = vsel %vm4286, %v4263, %v4265
        %v4302 = vsel %vm4286, %v4265, %v4267
        %v4303 = vsel %vm4286, %v4267, %v4269
        %v4304 = vsel %vm4286, %v4269, %v4271
        %v4305 = vsel %vm4286, %v4273, %v4275
        %v4306 = vsel %vm4286, %v4275, %v4277
        %v4307 = vsel %vm4286, %v4277, %v4279
        %v4308 = vsel %vm4286, %v4279, %v4281
        %v4309 = vsel %vm4286, %v4281, %v4283
        %v4310 = vsel %vm4286, %v4283, %v4285
        %v4335 = vadd.f32 %v4134, %v4287
        %v4336 = vadd.f32 %v4135, %v4288
        %v4337 = vadd.f32 %v4136, %v4289
        %v4338 = vadd.f32 %v4137, %v4290
        %v4339 = vadd.f32 %v4138, %v4291
        %v4340 = vadd.f32 %v4139, %v4292
        %v4341 = vadd.f32 %v4140, %v4293
        %v4342 = vadd.f32 %v4141, %v4294
        %v4343 = vadd.f32 %v4142, %v4295
        %v4344 = vadd.f32 %v4143, %v4296
        %v4345 = vadd.f32 %v4144, %v4297
        %v4346 = vadd.f32 %v4145, %v4298
        %v4347 = vadd.f32 %v4146, %v4299
        %v4348 = vadd.f32 %v4147, %v4300
        %v4349 = vadd.f32 %v4148, %v4301
        %v4350 = vadd.f32 %v4149, %v4302
        %v4351 = vadd.f32 %v4150, %v4303
        %v4352 = vadd.f32 %v4151, %v4304
        %v4353 = vadd.f32 %v4152, %v4305
        %v4354 = vadd.f32 %v4153, %v4306
        %v4355 = vadd.f32 %v4154, %v4307
        %v4356 = vadd.f32 %v4155, %v4308
        %v4357 = vadd.f32 %v4156, %v4309
        %v4358 = vadd.f32 %v4157, %v4310
        %4359 = vset.pattern.permute.xlu0 23
        %4360 = vperm.xlu0 %4359, %v230
        %v4361 = vpop.permute.xlu0 %4360
        %4363 = vset.pattern.permute.xlu0 23
        %4364 = vperm.xlu0 %4363, %v231
        %v4365 = vpop.permute.xlu0 %4364
        %4367 = vset.pattern.permute.xlu0 23
        %4368 = vperm.xlu0 %4367, %v232
        %v4369 = vpop.permute.xlu0 %4368
        %4371 = vset.pattern.permute.xlu0 23
        %4372 = vperm.xlu0 %4371, %v233
        %v4373 = vpop.permute.xlu0 %4372
        %v4375 = vmul.f32 %v4361, %v255
        %v4376 = vmul.f32 %v4361, %v256
        %v4377 = vmul.f32 %v4361, %v257
        %v4378 = vmul.f32 %v4361, %v258
        %v4379 = vmul.f32 %v4361, %v259
        %v4380 = vmul.f32 %v4361, %v260
        %v4381 = vmul.f32 %v4361, %v3770
        %v4382 = vmul.f32 %v4365, %v255
        %v4383 = vmul.f32 %v4365, %v256
        %v4384 = vmul.f32 %v4365, %v257
        %v4385 = vmul.f32 %v4365, %v258
        %v4386 = vmul.f32 %v4365, %v259
        %v4387 = vmul.f32 %v4365, %v260
        %v4388 = vmul.f32 %v4365, %v3770
        %v4389 = vmul.f32 %v4369, %v255
        %v4390 = vmul.f32 %v4369, %v256
        %v4391 = vmul.f32 %v4369, %v257
        %v4392 = vmul.f32 %v4369, %v258
        %v4393 = vmul.f32 %v4369, %v259
        %v4394 = vmul.f32 %v4369, %v260
        %v4395 = vmul.f32 %v4369, %v3770
        %v4396 = vmul.f32 %v4373, %v255
        %v4397 = vmul.f32 %v4373, %v256
        %v4398 = vmul.f32 %v4373, %v257
        %v4399 = vmul.f32 %v4373, %v258
        %v4400 = vmul.f32 %v4373, %v259
        %v4401 = vmul.f32 %v4373, %v260
        %v4402 = vmul.f32 %v4373, %v3770
        %4431 = vrot.lane.b32.xlu0 %v4375, 13
        %v4432 = vpop.permute.xlu0 %4431
        %4433 = vrot.lane.b32.xlu0 %v4376, 13
        %v4434 = vpop.permute.xlu0 %4433
        %4435 = vrot.lane.b32.xlu0 %v4377, 13
        %v4436 = vpop.permute.xlu0 %4435
        %4437 = vrot.lane.b32.xlu0 %v4378, 13
        %v4438 = vpop.permute.xlu0 %4437
        %4439 = vrot.lane.b32.xlu0 %v4379, 13
        %v4440 = vpop.permute.xlu0 %4439
        %4441 = vrot.lane.b32.xlu0 %v4380, 13
        %v4442 = vpop.permute.xlu0 %4441
        %4443 = vrot.lane.b32.xlu0 %v4381, 13
        %v4444 = vpop.permute.xlu0 %4443
        %4445 = vrot.lane.b32.xlu0 %v4382, 13
        %v4446 = vpop.permute.xlu0 %4445
        %4447 = vrot.lane.b32.xlu0 %v4383, 13
        %v4448 = vpop.permute.xlu0 %4447
        %4449 = vrot.lane.b32.xlu0 %v4384, 13
        %v4450 = vpop.permute.xlu0 %4449
        %4451 = vrot.lane.b32.xlu0 %v4385, 13
        %v4452 = vpop.permute.xlu0 %4451
        %4453 = vrot.lane.b32.xlu0 %v4386, 13
        %v4454 = vpop.permute.xlu0 %4453
        %4455 = vrot.lane.b32.xlu0 %v4387, 13
        %v4456 = vpop.permute.xlu0 %4455
        %4457 = vrot.lane.b32.xlu0 %v4388, 13
        %v4458 = vpop.permute.xlu0 %4457
        %4459 = vrot.lane.b32.xlu0 %v4389, 13
        %v4460 = vpop.permute.xlu0 %4459
        %4461 = vrot.lane.b32.xlu0 %v4390, 13
        %v4462 = vpop.permute.xlu0 %4461
        %4463 = vrot.lane.b32.xlu0 %v4391, 13
        %v4464 = vpop.permute.xlu0 %4463
        %4465 = vrot.lane.b32.xlu0 %v4392, 13
        %v4466 = vpop.permute.xlu0 %4465
        %4467 = vrot.lane.b32.xlu0 %v4393, 13
        %v4468 = vpop.permute.xlu0 %4467
        %4469 = vrot.lane.b32.xlu0 %v4394, 13
        %v4470 = vpop.permute.xlu0 %4469
        %4471 = vrot.lane.b32.xlu0 %v4395, 13
        %v4472 = vpop.permute.xlu0 %4471
        %4473 = vrot.lane.b32.xlu0 %v4396, 13
        %v4474 = vpop.permute.xlu0 %4473
        %4475 = vrot.lane.b32.xlu0 %v4397, 13
        %v4476 = vpop.permute.xlu0 %4475
        %4477 = vrot.lane.b32.xlu0 %v4398, 13
        %v4478 = vpop.permute.xlu0 %4477
        %4479 = vrot.lane.b32.xlu0 %v4399, 13
        %v4480 = vpop.permute.xlu0 %4479
        %4481 = vrot.lane.b32.xlu0 %v4400, 13
        %v4482 = vpop.permute.xlu0 %4481
        %4483 = vrot.lane.b32.xlu0 %v4401, 13
        %v4484 = vpop.permute.xlu0 %4483
        %4485 = vrot.lane.b32.xlu0 %v4402, 13
        %v4486 = vpop.permute.xlu0 %4485
        %vm4487 = vcmask 105472
        %v4488 = vsel %vm4487, %v4432, %v4434
        %v4489 = vsel %vm4487, %v4434, %v4436
        %v4490 = vsel %vm4487, %v4436, %v4438
        %v4491 = vsel %vm4487, %v4438, %v4440
        %v4492 = vsel %vm4487, %v4440, %v4442
        %v4493 = vsel %vm4487, %v4442, %v4444
        %v4494 = vsel %vm4487, %v4446, %v4448
        %v4495 = vsel %vm4487, %v4448, %v4450
        %v4496 = vsel %vm4487, %v4450, %v4452
        %v4497 = vsel %vm4487, %v4452, %v4454
        %v4498 = vsel %vm4487, %v4454, %v4456
        %v4499 = vsel %vm4487, %v4456, %v4458
        %v4500 = vsel %vm4487, %v4460, %v4462
        %v4501 = vsel %vm4487, %v4462, %v4464
        %v4502 = vsel %vm4487, %v4464, %v4466
        %v4503 = vsel %vm4487, %v4466, %v4468
        %v4504 = vsel %vm4487, %v4468, %v4470
        %v4505 = vsel %vm4487, %v4470, %v4472
        %v4506 = vsel %vm4487, %v4474, %v4476
        %v4507 = vsel %vm4487, %v4476, %v4478
        %v4508 = vsel %vm4487, %v4478, %v4480
        %v4509 = vsel %vm4487, %v4480, %v4482
        %v4510 = vsel %vm4487, %v4482, %v4484
        %v4511 = vsel %vm4487, %v4484, %v4486
        %v4536 = vadd.f32 %v4335, %v4488
        %v4537 = vadd.f32 %v4336, %v4489
        %v4538 = vadd.f32 %v4337, %v4490
        %v4539 = vadd.f32 %v4338, %v4491
        %v4540 = vadd.f32 %v4339, %v4492
        %v4541 = vadd.f32 %v4340, %v4493
        %v4542 = vadd.f32 %v4341, %v4494
        %v4543 = vadd.f32 %v4342, %v4495
        %v4544 = vadd.f32 %v4343, %v4496
        %v4545 = vadd.f32 %v4344, %v4497
        %v4546 = vadd.f32 %v4345, %v4498
        %v4547 = vadd.f32 %v4346, %v4499
        %v4548 = vadd.f32 %v4347, %v4500
        %v4549 = vadd.f32 %v4348, %v4501
        %v4550 = vadd.f32 %v4349, %v4502
        %v4551 = vadd.f32 %v4350, %v4503
        %v4552 = vadd.f32 %v4351, %v4504
        %v4553 = vadd.f32 %v4352, %v4505
        %v4554 = vadd.f32 %v4353, %v4506
        %v4555 = vadd.f32 %v4354, %v4507
        %v4556 = vadd.f32 %v4355, %v4508
        %v4557 = vadd.f32 %v4356, %v4509
        %v4558 = vadd.f32 %v4357, %v4510
        %v4559 = vadd.f32 %v4358, %v4511
        %4560 = vset.pattern.permute.xlu0 24
        %4561 = vperm.xlu0 %4560, %v230
        %v4562 = vpop.permute.xlu0 %4561
        %4564 = vset.pattern.permute.xlu0 24
        %4565 = vperm.xlu0 %4564, %v231
        %v4566 = vpop.permute.xlu0 %4565
        %4568 = vset.pattern.permute.xlu0 24
        %4569 = vperm.xlu0 %4568, %v232
        %v4570 = vpop.permute.xlu0 %4569
        %4572 = vset.pattern.permute.xlu0 24
        %4573 = vperm.xlu0 %4572, %v233
        %v4574 = vpop.permute.xlu0 %4573
        %v4576 = vmul.f32 %v4562, %v255
        %v4577 = vmul.f32 %v4562, %v256
        %v4578 = vmul.f32 %v4562, %v257
        %v4579 = vmul.f32 %v4562, %v258
        %v4580 = vmul.f32 %v4562, %v259
        %v4581 = vmul.f32 %v4562, %v260
        %v4582 = vmul.f32 %v4562, %v3770
        %v4583 = vmul.f32 %v4566, %v255
        %v4584 = vmul.f32 %v4566, %v256
        %v4585 = vmul.f32 %v4566, %v257
        %v4586 = vmul.f32 %v4566, %v258
        %v4587 = vmul.f32 %v4566, %v259
        %v4588 = vmul.f32 %v4566, %v260
        %v4589 = vmul.f32 %v4566, %v3770
        %v4590 = vmul.f32 %v4570, %v255
        %v4591 = vmul.f32 %v4570, %v256
        %v4592 = vmul.f32 %v4570, %v257
        %v4593 = vmul.f32 %v4570, %v258
        %v4594 = vmul.f32 %v4570, %v259
        %v4595 = vmul.f32 %v4570, %v260
        %v4596 = vmul.f32 %v4570, %v3770
        %v4597 = vmul.f32 %v4574, %v255
        %v4598 = vmul.f32 %v4574, %v256
        %v4599 = vmul.f32 %v4574, %v257
        %v4600 = vmul.f32 %v4574, %v258
        %v4601 = vmul.f32 %v4574, %v259
        %v4602 = vmul.f32 %v4574, %v260
        %v4603 = vmul.f32 %v4574, %v3770
        %4632 = vrot.lane.b32.xlu0 %v4576, 12
        %v4633 = vpop.permute.xlu0 %4632
        %4634 = vrot.lane.b32.xlu0 %v4577, 12
        %v4635 = vpop.permute.xlu0 %4634
        %4636 = vrot.lane.b32.xlu0 %v4578, 12
        %v4637 = vpop.permute.xlu0 %4636
        %4638 = vrot.lane.b32.xlu0 %v4579, 12
        %v4639 = vpop.permute.xlu0 %4638
        %4640 = vrot.lane.b32.xlu0 %v4580, 12
        %v4641 = vpop.permute.xlu0 %4640
        %4642 = vrot.lane.b32.xlu0 %v4581, 12
        %v4643 = vpop.permute.xlu0 %4642
        %4644 = vrot.lane.b32.xlu0 %v4582, 12
        %v4645 = vpop.permute.xlu0 %4644
        %4646 = vrot.lane.b32.xlu0 %v4583, 12
        %v4647 = vpop.permute.xlu0 %4646
        %4648 = vrot.lane.b32.xlu0 %v4584, 12
        %v4649 = vpop.permute.xlu0 %4648
        %4650 = vrot.lane.b32.xlu0 %v4585, 12
        %v4651 = vpop.permute.xlu0 %4650
        %4652 = vrot.lane.b32.xlu0 %v4586, 12
        %v4653 = vpop.permute.xlu0 %4652
        %4654 = vrot.lane.b32.xlu0 %v4587, 12
        %v4655 = vpop.permute.xlu0 %4654
        %4656 = vrot.lane.b32.xlu0 %v4588, 12
        %v4657 = vpop.permute.xlu0 %4656
        %4658 = vrot.lane.b32.xlu0 %v4589, 12
        %v4659 = vpop.permute.xlu0 %4658
        %4660 = vrot.lane.b32.xlu0 %v4590, 12
        %v4661 = vpop.permute.xlu0 %4660
        %4662 = vrot.lane.b32.xlu0 %v4591, 12
        %v4663 = vpop.permute.xlu0 %4662
        %4664 = vrot.lane.b32.xlu0 %v4592, 12
        %v4665 = vpop.permute.xlu0 %4664
        %4666 = vrot.lane.b32.xlu0 %v4593, 12
        %v4667 = vpop.permute.xlu0 %4666
        %4668 = vrot.lane.b32.xlu0 %v4594, 12
        %v4669 = vpop.permute.xlu0 %4668
        %4670 = vrot.lane.b32.xlu0 %v4595, 12
        %v4671 = vpop.permute.xlu0 %4670
        %4672 = vrot.lane.b32.xlu0 %v4596, 12
        %v4673 = vpop.permute.xlu0 %4672
        %4674 = vrot.lane.b32.xlu0 %v4597, 12
        %v4675 = vpop.permute.xlu0 %4674
        %4676 = vrot.lane.b32.xlu0 %v4598, 12
        %v4677 = vpop.permute.xlu0 %4676
        %4678 = vrot.lane.b32.xlu0 %v4599, 12
        %v4679 = vpop.permute.xlu0 %4678
        %4680 = vrot.lane.b32.xlu0 %v4600, 12
        %v4681 = vpop.permute.xlu0 %4680
        %4682 = vrot.lane.b32.xlu0 %v4601, 12
        %v4683 = vpop.permute.xlu0 %4682
        %4684 = vrot.lane.b32.xlu0 %v4602, 12
        %v4685 = vpop.permute.xlu0 %4684
        %4686 = vrot.lane.b32.xlu0 %v4603, 12
        %v4687 = vpop.permute.xlu0 %4686
        %vm4688 = vcmask 97280
        %v4689 = vsel %vm4688, %v4633, %v4635
        %v4690 = vsel %vm4688, %v4635, %v4637
        %v4691 = vsel %vm4688, %v4637, %v4639
        %v4692 = vsel %vm4688, %v4639, %v4641
        %v4693 = vsel %vm4688, %v4641, %v4643
        %v4694 = vsel %vm4688, %v4643, %v4645
        %v4695 = vsel %vm4688, %v4647, %v4649
        %v4696 = vsel %vm4688, %v4649, %v4651
        %v4697 = vsel %vm4688, %v4651, %v4653
        %v4698 = vsel %vm4688, %v4653, %v4655
        %v4699 = vsel %vm4688, %v4655, %v4657
        %v4700 = vsel %vm4688, %v4657, %v4659
        %v4701 = vsel %vm4688, %v4661, %v4663
        %v4702 = vsel %vm4688, %v4663, %v4665
        %v4703 = vsel %vm4688, %v4665, %v4667
        %v4704 = vsel %vm4688, %v4667, %v4669
        %v4705 = vsel %vm4688, %v4669, %v4671
        %v4706 = vsel %vm4688, %v4671, %v4673
        %v4707 = vsel %vm4688, %v4675, %v4677
        %v4708 = vsel %vm4688, %v4677, %v4679
        %v4709 = vsel %vm4688, %v4679, %v4681
        %v4710 = vsel %vm4688, %v4681, %v4683
        %v4711 = vsel %vm4688, %v4683, %v4685
        %v4712 = vsel %vm4688, %v4685, %v4687
        %v4737 = vadd.f32 %v4536, %v4689
        %v4738 = vadd.f32 %v4537, %v4690
        %v4739 = vadd.f32 %v4538, %v4691
        %v4740 = vadd.f32 %v4539, %v4692
        %v4741 = vadd.f32 %v4540, %v4693
        %v4742 = vadd.f32 %v4541, %v4694
        %v4743 = vadd.f32 %v4542, %v4695
        %v4744 = vadd.f32 %v4543, %v4696
        %v4745 = vadd.f32 %v4544, %v4697
        %v4746 = vadd.f32 %v4545, %v4698
        %v4747 = vadd.f32 %v4546, %v4699
        %v4748 = vadd.f32 %v4547, %v4700
        %v4749 = vadd.f32 %v4548, %v4701
        %v4750 = vadd.f32 %v4549, %v4702
        %v4751 = vadd.f32 %v4550, %v4703
        %v4752 = vadd.f32 %v4551, %v4704
        %v4753 = vadd.f32 %v4552, %v4705
        %v4754 = vadd.f32 %v4553, %v4706
        %v4755 = vadd.f32 %v4554, %v4707
        %v4756 = vadd.f32 %v4555, %v4708
        %v4757 = vadd.f32 %v4556, %v4709
        %v4758 = vadd.f32 %v4557, %v4710
        %v4759 = vadd.f32 %v4558, %v4711
        %v4760 = vadd.f32 %v4559, %v4712
        %4785 = vrot.lane.b32.xlu0 %v4737, 127
        %v4786 = vpop.permute.xlu0 %4785
        %4787 = vrot.lane.b32.xlu0 %v4738, 127
        %v4788 = vpop.permute.xlu0 %4787
        %4789 = vrot.lane.b32.xlu0 %v4739, 127
        %v4790 = vpop.permute.xlu0 %4789
        %4791 = vrot.lane.b32.xlu0 %v4740, 127
        %v4792 = vpop.permute.xlu0 %4791
        %4793 = vrot.lane.b32.xlu0 %v4741, 127
        %v4794 = vpop.permute.xlu0 %4793
        %4795 = vrot.lane.b32.xlu0 %v4742, 127
        %v4796 = vpop.permute.xlu0 %4795
        %4797 = vrot.lane.b32.xlu0 %v4743, 127
        %v4798 = vpop.permute.xlu0 %4797
        %4799 = vrot.lane.b32.xlu0 %v4744, 127
        %v4800 = vpop.permute.xlu0 %4799
        %4801 = vrot.lane.b32.xlu0 %v4745, 127
        %v4802 = vpop.permute.xlu0 %4801
        %4803 = vrot.lane.b32.xlu0 %v4746, 127
        %v4804 = vpop.permute.xlu0 %4803
        %4805 = vrot.lane.b32.xlu0 %v4747, 127
        %v4806 = vpop.permute.xlu0 %4805
        %4807 = vrot.lane.b32.xlu0 %v4748, 127
        %v4808 = vpop.permute.xlu0 %4807
        %4809 = vrot.lane.b32.xlu0 %v4749, 127
        %v4810 = vpop.permute.xlu0 %4809
        %4811 = vrot.lane.b32.xlu0 %v4750, 127
        %v4812 = vpop.permute.xlu0 %4811
        %4813 = vrot.lane.b32.xlu0 %v4751, 127
        %v4814 = vpop.permute.xlu0 %4813
        %4815 = vrot.lane.b32.xlu0 %v4752, 127
        %v4816 = vpop.permute.xlu0 %4815
        %4817 = vrot.lane.b32.xlu0 %v4753, 127
        %v4818 = vpop.permute.xlu0 %4817
        %4819 = vrot.lane.b32.xlu0 %v4754, 127
        %v4820 = vpop.permute.xlu0 %4819
        %4821 = vrot.lane.b32.xlu0 %v4755, 127
        %v4822 = vpop.permute.xlu0 %4821
        %4823 = vrot.lane.b32.xlu0 %v4756, 127
        %v4824 = vpop.permute.xlu0 %4823
        %4825 = vrot.lane.b32.xlu0 %v4757, 127
        %v4826 = vpop.permute.xlu0 %4825
        %4827 = vrot.lane.b32.xlu0 %v4758, 127
        %v4828 = vpop.permute.xlu0 %4827
        %4829 = vrot.lane.b32.xlu0 %v4759, 127
        %v4830 = vpop.permute.xlu0 %4829
        %4831 = vrot.lane.b32.xlu0 %v4760, 127
        %v4832 = vpop.permute.xlu0 %4831
        %v4833 = vsel %vm427, %v4786, %v4788
        %v4834 = vsel %vm427, %v4788, %v4790
        %v4835 = vsel %vm427, %v4790, %v4792
        %v4836 = vsel %vm427, %v4792, %v4794
        %v4837 = vsel %vm427, %v4794, %v4796
        %v4838 = vsel %vm427, %v4798, %v4800
        %v4839 = vsel %vm427, %v4800, %v4802
        %v4840 = vsel %vm427, %v4802, %v4804
        %v4841 = vsel %vm427, %v4804, %v4806
        %v4842 = vsel %vm427, %v4806, %v4808
        %v4843 = vsel %vm427, %v4810, %v4812
        %v4844 = vsel %vm427, %v4812, %v4814
        %v4845 = vsel %vm427, %v4814, %v4816
        %v4846 = vsel %vm427, %v4816, %v4818
        %v4847 = vsel %vm427, %v4818, %v4820
        %v4848 = vsel %vm427, %v4822, %v4824
        %v4849 = vsel %vm427, %v4824, %v4826
        %v4850 = vsel %vm427, %v4826, %v4828
        %v4851 = vsel %vm427, %v4828, %v4830
        %v4852 = vsel %vm427, %v4830, %v4832
        %v4873 = vmax.f32 %v4737, %v4833
        %v4874 = vmax.f32 %v4738, %v4834
        %v4875 = vmax.f32 %v4739, %v4835
        %v4876 = vmax.f32 %v4740, %v4836
        %v4877 = vmax.f32 %v4741, %v4837
        %v4878 = vmax.f32 %v4743, %v4838
        %v4879 = vmax.f32 %v4744, %v4839
        %v4880 = vmax.f32 %v4745, %v4840
        %v4881 = vmax.f32 %v4746, %v4841
        %v4882 = vmax.f32 %v4747, %v4842
        %v4883 = vmax.f32 %v4749, %v4843
        %v4884 = vmax.f32 %v4750, %v4844
        %v4885 = vmax.f32 %v4751, %v4845
        %v4886 = vmax.f32 %v4752, %v4846
        %v4887 = vmax.f32 %v4753, %v4847
        %v4888 = vmax.f32 %v4755, %v4848
        %v4889 = vmax.f32 %v4756, %v4849
        %v4890 = vmax.f32 %v4757, %v4850
        %v4891 = vmax.f32 %v4758, %v4851
        %v4892 = vmax.f32 %v4759, %v4852
        %v4897 = vmax.f32 %v4742, %v4796
        %v4898 = vmax.f32 %v4748, %v4808
        %v4899 = vmax.f32 %v4754, %v4820
        %v4900 = vmax.f32 %v4760, %v4832
        %4925 = vrot.lane.b32.xlu0 %v4873, 100
        %v4926 = vpop.permute.xlu0 %4925
        %4927 = vrot.lane.b32.xlu0 %v4874, 100
        %v4928 = vpop.permute.xlu0 %4927
        %4929 = vrot.lane.b32.xlu0 %v4875, 100
        %v4930 = vpop.permute.xlu0 %4929
        %4931 = vrot.lane.b32.xlu0 %v4876, 100
        %v4932 = vpop.permute.xlu0 %4931
        %4933 = vrot.lane.b32.xlu0 %v4877, 100
        %v4934 = vpop.permute.xlu0 %4933
        %4935 = vrot.lane.b32.xlu0 %v4897, 100
        %v4936 = vpop.permute.xlu0 %4935
        %4937 = vrot.lane.b32.xlu0 %v4878, 100
        %v4938 = vpop.permute.xlu0 %4937
        %4939 = vrot.lane.b32.xlu0 %v4879, 100
        %v4940 = vpop.permute.xlu0 %4939
        %4941 = vrot.lane.b32.xlu0 %v4880, 100
        %v4942 = vpop.permute.xlu0 %4941
        %4943 = vrot.lane.b32.xlu0 %v4881, 100
        %v4944 = vpop.permute.xlu0 %4943
        %4945 = vrot.lane.b32.xlu0 %v4882, 100
        %v4946 = vpop.permute.xlu0 %4945
        %4947 = vrot.lane.b32.xlu0 %v4898, 100
        %v4948 = vpop.permute.xlu0 %4947
        %4949 = vrot.lane.b32.xlu0 %v4883, 100
        %v4950 = vpop.permute.xlu0 %4949
        %4951 = vrot.lane.b32.xlu0 %v4884, 100
        %v4952 = vpop.permute.xlu0 %4951
        %4953 = vrot.lane.b32.xlu0 %v4885, 100
        %v4954 = vpop.permute.xlu0 %4953
        %4955 = vrot.lane.b32.xlu0 %v4886, 100
        %v4956 = vpop.permute.xlu0 %4955
        %4957 = vrot.lane.b32.xlu0 %v4887, 100
        %v4958 = vpop.permute.xlu0 %4957
        %4959 = vrot.lane.b32.xlu0 %v4899, 100
        %v4960 = vpop.permute.xlu0 %4959
        %4961 = vrot.lane.b32.xlu0 %v4888, 100
        %v4962 = vpop.permute.xlu0 %4961
        %4963 = vrot.lane.b32.xlu0 %v4889, 100
        %v4964 = vpop.permute.xlu0 %4963
        %4965 = vrot.lane.b32.xlu0 %v4890, 100
        %v4966 = vpop.permute.xlu0 %4965
        %4967 = vrot.lane.b32.xlu0 %v4891, 100
        %v4968 = vpop.permute.xlu0 %4967
        %4969 = vrot.lane.b32.xlu0 %v4892, 100
        %v4970 = vpop.permute.xlu0 %4969
        %4971 = vrot.lane.b32.xlu0 %v4900, 100
        %v4972 = vpop.permute.xlu0 %4971
        %v4973 = vsel %vm1151, %v4926, %v4928
        %v4974 = vsel %vm1151, %v4928, %v4930
        %v4975 = vsel %vm1151, %v4930, %v4932
        %v4976 = vsel %vm1151, %v4932, %v4934
        %v4977 = vsel %vm1151, %v4934, %v4936
        %v4978 = vsel %vm1151, %v4938, %v4940
        %v4979 = vsel %vm1151, %v4940, %v4942
        %v4980 = vsel %vm1151, %v4942, %v4944
        %v4981 = vsel %vm1151, %v4944, %v4946
        %v4982 = vsel %vm1151, %v4946, %v4948
        %v4983 = vsel %vm1151, %v4950, %v4952
        %v4984 = vsel %vm1151, %v4952, %v4954
        %v4985 = vsel %vm1151, %v4954, %v4956
        %v4986 = vsel %vm1151, %v4956, %v4958
        %v4987 = vsel %vm1151, %v4958, %v4960
        %v4988 = vsel %vm1151, %v4962, %v4964
        %v4989 = vsel %vm1151, %v4964, %v4966
        %v4990 = vsel %vm1151, %v4966, %v4968
        %v4991 = vsel %vm1151, %v4968, %v4970
        %v4992 = vsel %vm1151, %v4970, %v4972
        %v5013 = vmax.f32 %v4873, %v4973
        %v5014 = vmax.f32 %v4874, %v4974
        %v5015 = vmax.f32 %v4875, %v4975
        %v5016 = vmax.f32 %v4876, %v4976
        %v5017 = vmax.f32 %v4877, %v4977
        %v5018 = vmax.f32 %v4878, %v4978
        %v5019 = vmax.f32 %v4879, %v4979
        %v5020 = vmax.f32 %v4880, %v4980
        %v5021 = vmax.f32 %v4881, %v4981
        %v5022 = vmax.f32 %v4882, %v4982
        %v5023 = vmax.f32 %v4883, %v4983
        %v5024 = vmax.f32 %v4884, %v4984
        %v5025 = vmax.f32 %v4885, %v4985
        %v5026 = vmax.f32 %v4886, %v4986
        %v5027 = vmax.f32 %v4887, %v4987
        %v5028 = vmax.f32 %v4888, %v4988
        %v5029 = vmax.f32 %v4889, %v4989
        %v5030 = vmax.f32 %v4890, %v4990
        %v5031 = vmax.f32 %v4891, %v4991
        %v5032 = vmax.f32 %v4892, %v4992
        %v5033 = vld [vmem:[#allocation4] sm:$0xff]
        %v5034 = vld [vmem:[#allocation4 + $0x8] sm:$0xff]
        %v5035 = vld [vmem:[#allocation4 + $0x10] sm:$0xff]
        %v5036 = vld [vmem:[#allocation4 + $0x18] sm:$0xff]
        %v5037 = vld [vmem:[#allocation4 + $0x20] sm:$0xff]
        %v5038 = vld [vmem:[#allocation4 + $0x28] sm:$0xff]
        %v5039 = vld [vmem:[#allocation4 + $0x30] sm:$0xff]
        %v5040 = vld [vmem:[#allocation4 + $0x38] sm:$0xff]
        %v5041 = vld [vmem:[#allocation4 + $0x40] sm:$0xff]
        %v5042 = vld [vmem:[#allocation4 + $0x48] sm:$0xff]
        %v5043 = vld [vmem:[#allocation4 + $0x50] sm:$0xff]
        %v5044 = vld [vmem:[#allocation4 + $0x58] sm:$0xff]
        %v5045 = vld [vmem:[#allocation4 + $0x60] sm:$0xff]
        %v5046 = vld [vmem:[#allocation4 + $0x68] sm:$0xff]
        %v5047 = vld [vmem:[#allocation4 + $0x70] sm:$0xff]
        %v5048 = vld [vmem:[#allocation4 + $0x78] sm:$0xff]
        %v5049 = vld [vmem:[#allocation4 + $0x80] sm:$0xff]
        %v5050 = vld [vmem:[#allocation4 + $0x88] sm:$0xff]
        %v5051 = vld [vmem:[#allocation4 + $0x90] sm:$0xff]
        %v5052 = vld [vmem:[#allocation4 + $0x98] sm:$0xff]
        %v5053 = vld [vmem:[#allocation4 + $0xa0] sm:$0xff]
        %v5054 = vld [vmem:[#allocation4 + $0xa8] sm:$0xff]
        %v5055 = vld [vmem:[#allocation4 + $0xb0] sm:$0xff]
        %v5056 = vld [vmem:[#allocation4 + $0xb8] sm:$0xff]
        %v5057 = vld [vmem:[#allocation4 + $0xc0] sm:$0xff]
        %v5058 = vld [vmem:[#allocation4 + $0xc8] sm:$0xff]
        %v5059 = vld [vmem:[#allocation4 + $0xd0] sm:$0xff]
        %v5060 = vld [vmem:[#allocation4 + $0xd8] sm:$0xff]
        %v5061 = vld [vmem:[#allocation4 + $0xe0] sm:$0xff]
        %v5062 = vld [vmem:[#allocation4 + $0xe8] sm:$0xff]
        %v5063 = vld [vmem:[#allocation4 + $0xf0] sm:$0xff]
        %v5064 = vld [vmem:[#allocation4 + $0xf8] sm:$0xff]
        %v5065 = vld [vmem:[#allocation4 + $0x100] sm:$0xff]
        %v5066 = vld [vmem:[#allocation4 + $0x108] sm:$0xff]
        %v5067 = vld [vmem:[#allocation4 + $0x110] sm:$0xff]
        %v5068 = vld [vmem:[#allocation4 + $0x118] sm:$0xff]
        %v5069 = vld [vmem:[#allocation4 + $0x120] sm:$0xff]
        %v5070 = vld [vmem:[#allocation4 + $0x128] sm:$0xff]
        %v5071 = vld [vmem:[#allocation4 + $0x130] sm:$0xff]
        %v5072 = vld [vmem:[#allocation4 + $0x138] sm:$0xff]
        %v5073 = vld [vmem:[#allocation4 + $0x140] sm:$0xff]
        %v5074 = vld [vmem:[#allocation4 + $0x148] sm:$0xff]
        %v5075 = vld [vmem:[#allocation4 + $0x150] sm:$0xff]
        %v5076 = vld [vmem:[#allocation4 + $0x158] sm:$0xff]
        %v5077 = vld [vmem:[#allocation4 + $0x160] sm:$0xff]
        %v5078 = vld [vmem:[#allocation4 + $0x168] sm:$0xff]
        %v5079 = vld [vmem:[#allocation4 + $0x170] sm:$0xff]
        %v5080 = vld [vmem:[#allocation4 + $0x178] sm:$0xff]
        %v5081 = vld [vmem:[#allocation4 + $0x180] sm:$0xff]
        %v5082 = vld [vmem:[#allocation4 + $0x188] sm:$0xff]
        %v5083 = vld [vmem:[#allocation4 + $0x190] sm:$0xff]
        %v5084 = vld [vmem:[#allocation4 + $0x198] sm:$0xff]
        %v5085 = vld [vmem:[#allocation4 + $0x1a0] sm:$0xff]
        %v5086 = vld [vmem:[#allocation4 + $0x1a8] sm:$0xff]
        %v5087 = vld [vmem:[#allocation4 + $0x1b0] sm:$0xff]
        %v5088 = vld [vmem:[#allocation4 + $0x1b8] sm:$0xff]
        %v5089 = vld [vmem:[#allocation4 + $0x1c0] sm:$0xff]
        %v5090 = vld [vmem:[#allocation4 + $0x1c8] sm:$0xff]
        %v5091 = vld [vmem:[#allocation4 + $0x1d0] sm:$0xff]
        %v5092 = vld [vmem:[#allocation4 + $0x1d8] sm:$0xff]
        %v5093 = vld [vmem:[#allocation4 + $0x1e0] sm:$0xff]
        %v5094 = vld [vmem:[#allocation4 + $0x1e8] sm:$0xff]
        %v5095 = vld [vmem:[#allocation4 + $0x1f0] sm:$0xff]
        %v5096 = vld [vmem:[#allocation4 + $0x1f8] sm:$0xff]
        %v5097 = vld [vmem:[#allocation4 + $0x200] sm:$0xff]
        %v5098 = vld [vmem:[#allocation4 + $0x208] sm:$0xff]
        %v5099 = vld [vmem:[#allocation4 + $0x210] sm:$0xff]
        %v5100 = vld [vmem:[#allocation4 + $0x218] sm:$0xff]
        %v5101 = vld [vmem:[#allocation4 + $0x220] sm:$0xff]
        %v5102 = vld [vmem:[#allocation4 + $0x228] sm:$0xff]
        %v5103 = vld [vmem:[#allocation4 + $0x230] sm:$0xff]
        %v5104 = vld [vmem:[#allocation4 + $0x238] sm:$0xff]
        %v5105 = vld [vmem:[#allocation4 + $0x240] sm:$0xff]
        %v5106 = vld [vmem:[#allocation4 + $0x248] sm:$0xff]
        %v5107 = vld [vmem:[#allocation4 + $0x250] sm:$0xff]
        %v5108 = vld [vmem:[#allocation4 + $0x258] sm:$0xff]
        %v5109 = vld [vmem:[#allocation4 + $0x260] sm:$0xff]
        %v5110 = vld [vmem:[#allocation4 + $0x268] sm:$0xff]
        %v5111 = vld [vmem:[#allocation4 + $0x270] sm:$0xff]
        %v5112 = vld [vmem:[#allocation4 + $0x278] sm:$0xff]
        %v5113 = vld [vmem:[#allocation4 + $0x280] sm:$0xff]
        %v5114 = vld [vmem:[#allocation4 + $0x288] sm:$0xff]
        %v5115 = vld [vmem:[#allocation4 + $0x290] sm:$0xff]
        %v5116 = vld [vmem:[#allocation4 + $0x298] sm:$0xff]
        %v5117 = vld [vmem:[#allocation4 + $0x2a0] sm:$0xff]
        %v5118 = vld [vmem:[#allocation4 + $0x2a8] sm:$0xff]
        %v5119 = vld [vmem:[#allocation4 + $0x2b0] sm:$0xff]
        %v5120 = vld [vmem:[#allocation4 + $0x2b8] sm:$0xff]
        %v5121 = vld [vmem:[#allocation4 + $0x2c0] sm:$0xff]
        %v5122 = vld [vmem:[#allocation4 + $0x2c8] sm:$0xff]
        %v5123 = vld [vmem:[#allocation4 + $0x2d0] sm:$0xff]
        %v5124 = vld [vmem:[#allocation4 + $0x2d8] sm:$0xff]
        %v5125 = vld [vmem:[#allocation4 + $0x2e0] sm:$0xff]
        %v5126 = vld [vmem:[#allocation4 + $0x2e8] sm:$0xff]
        %v5127 = vld [vmem:[#allocation4 + $0x2f0] sm:$0xff]
        %v5128 = vld [vmem:[#allocation4 + $0x2f8] sm:$0xff]
        %v5129 = vld [vmem:[#allocation4 + $0x300] sm:$0xff]
        %v5130 = vld [vmem:[#allocation4 + $0x308] sm:$0xff]
        %v5131 = vld [vmem:[#allocation4 + $0x310] sm:$0xff]
        %v5132 = vld [vmem:[#allocation4 + $0x318] sm:$0xff]
        %v5133 = vld [vmem:[#allocation4 + $0x320] sm:$0xff]
        %v5134 = vld [vmem:[#allocation4 + $0x328] sm:$0xff]
        %v5135 = vld [vmem:[#allocation4 + $0x330] sm:$0xff]
        %v5136 = vld [vmem:[#allocation4 + $0x338] sm:$0xff]
        %v5137 = vld [vmem:[#allocation4 + $0x340] sm:$0xff]
        %v5138 = vld [vmem:[#allocation4 + $0x348] sm:$0xff]
        %v5139 = vld [vmem:[#allocation4 + $0x350] sm:$0xff]
        %v5140 = vld [vmem:[#allocation4 + $0x358] sm:$0xff]
        %v5141 = vld [vmem:[#allocation4 + $0x360] sm:$0xff]
        %v5142 = vld [vmem:[#allocation4 + $0x368] sm:$0xff]
        %v5143 = vld [vmem:[#allocation4 + $0x370] sm:$0xff]
        %v5144 = vld [vmem:[#allocation4 + $0x378] sm:$0xff]
        %v5145 = vld [vmem:[#allocation4 + $0x380] sm:$0xff]
        %v5146 = vld [vmem:[#allocation4 + $0x388] sm:$0xff]
        %v5147 = vld [vmem:[#allocation4 + $0x390] sm:$0xff]
        %v5148 = vld [vmem:[#allocation4 + $0x398] sm:$0xff]
        %v5149 = vld [vmem:[#allocation4 + $0x3a0] sm:$0xff]
        %v5150 = vld [vmem:[#allocation4 + $0x3a8] sm:$0xff]
        %v5151 = vld [vmem:[#allocation4 + $0x3b0] sm:$0xff]
        %v5152 = vld [vmem:[#allocation4 + $0x3b8] sm:$0xff]
        %v5153 = vld [vmem:[#allocation4 + $0x3c0] sm:$0xff]
        %v5154 = vld [vmem:[#allocation4 + $0x3c8] sm:$0xff]
        %v5155 = vld [vmem:[#allocation4 + $0x3d0] sm:$0xff]
        %v5156 = vld [vmem:[#allocation4 + $0x3d8] sm:$0xff]
        %v5157 = vld [vmem:[#allocation4 + $0x3e0] sm:$0xff]
        %v5158 = vld [vmem:[#allocation4 + $0x3e8] sm:$0xff]
        %v5159 = vld [vmem:[#allocation4 + $0x3f0] sm:$0xff]
        %v5160 = vld [vmem:[#allocation4 + $0x3f8] sm:$0xff]
        %v5161 = vld [vmem:[#allocation4 + $0x400] sm:$0xff]
        %v5162 = vld [vmem:[#allocation4 + $0x408] sm:$0xff]
        %v5163 = vld [vmem:[#allocation4 + $0x410] sm:$0xff]
        %v5164 = vld [vmem:[#allocation4 + $0x418] sm:$0xff]
        %v5165 = vld [vmem:[#allocation4 + $0x420] sm:$0xff]
        %v5166 = vld [vmem:[#allocation4 + $0x428] sm:$0xff]
        %v5167 = vld [vmem:[#allocation4 + $0x430] sm:$0xff]
        %v5168 = vld [vmem:[#allocation4 + $0x438] sm:$0xff]
        %v5169 = vld [vmem:[#allocation4 + $0x440] sm:$0xff]
        %v5170 = vld [vmem:[#allocation4 + $0x448] sm:$0xff]
        %v5171 = vld [vmem:[#allocation4 + $0x450] sm:$0xff]
        %v5172 = vld [vmem:[#allocation4 + $0x458] sm:$0xff]
        %v5173 = vld [vmem:[#allocation4 + $0x460] sm:$0xff]
        %v5174 = vld [vmem:[#allocation4 + $0x468] sm:$0xff]
        %v5175 = vld [vmem:[#allocation4 + $0x470] sm:$0xff]
        %v5176 = vld [vmem:[#allocation4 + $0x478] sm:$0xff]
        %v5177 = vld [vmem:[#allocation4 + $0x480] sm:$0xff]
        %v5178 = vld [vmem:[#allocation4 + $0x488] sm:$0xff]
        %v5179 = vld [vmem:[#allocation4 + $0x490] sm:$0xff]
        %v5180 = vld [vmem:[#allocation4 + $0x498] sm:$0xff]
        %v5181 = vld [vmem:[#allocation4 + $0x4a0] sm:$0xff]
        %v5182 = vld [vmem:[#allocation4 + $0x4a8] sm:$0xff]
        %v5183 = vld [vmem:[#allocation4 + $0x4b0] sm:$0xff]
        %v5184 = vld [vmem:[#allocation4 + $0x4b8] sm:$0xff]
        %v5185 = vld [vmem:[#allocation4 + $0x4c0] sm:$0xff]
        %v5186 = vld [vmem:[#allocation4 + $0x4c8] sm:$0xff]
        %v5187 = vld [vmem:[#allocation4 + $0x4d0] sm:$0xff]
        %v5188 = vld [vmem:[#allocation4 + $0x4d8] sm:$0xff]
        %v5189 = vld [vmem:[#allocation4 + $0x4e0] sm:$0xff]
        %v5190 = vld [vmem:[#allocation4 + $0x4e8] sm:$0xff]
        %v5191 = vld [vmem:[#allocation4 + $0x4f0] sm:$0xff]
        %v5192 = vld [vmem:[#allocation4 + $0x4f8] sm:$0xff]
        %v5193 = vld [vmem:[%s2] sm:$0xff]
        %v5194 = vld [vmem:[%s2 + $0x8] sm:$0xff]
        %v5195 = vld [vmem:[%s2 + $0x10] sm:$0xff]
        %v5196 = vld [vmem:[%s2 + $0x18] sm:$0xff]
        %5198 = vset.pattern.permute.xlu0 0
        %5199 = vperm.xlu0 %5198, %v5193
        %v5200 = vpop.permute.xlu0 %5199
        %5203 = vset.pattern.permute.xlu0 0
        %5204 = vperm.xlu0 %5203, %v5194
        %v5205 = vpop.permute.xlu0 %5204
        %5208 = vset.pattern.permute.xlu0 0
        %5209 = vperm.xlu0 %5208, %v5195
        %v5210 = vpop.permute.xlu0 %5209
        %5213 = vset.pattern.permute.xlu0 0
        %5214 = vperm.xlu0 %5213, %v5196
        %v5215 = vpop.permute.xlu0 %5214
        %5217 = vmatpush.msra.mxu0 %v5063
        %5218 = vmatpush.msra.mxu0 %v5061
        %5219 = vmatpush.msra.mxu0 %v5059
        %5220 = vmatpush.msra.mxu0 %v5057
        %5221 = vmatpush.msra.mxu0 %v5055
        %5222 = vmatpush.msra.mxu0 %v5053
        %5223 = vmatpush.msra.mxu0 %v5051
        %5224 = vmatpush.msra.mxu0 %v5049
        %5225 = vmatpush.msra.mxu0 %v5047
        %5226 = vmatpush.msra.mxu0 %v5045
        %5227 = vmatpush.msra.mxu0 %v5043
        %5228 = vmatpush.msra.mxu0 %v5041
        %5229 = vmatpush.msra.mxu0 %v5039
        %5230 = vmatpush.msra.mxu0 %v5037
        %5231 = vmatpush.msra.mxu0 %v5035
        %5232 = vmatpush.msra.mxu0 %v5033
        %5233 = vmatmul.f32.gmra.mxu0 %v5013
        %v5234 = vpop.f32.mrf.mxu0
        %v5235 = vadd.f32 %v5200, %v5234
        %5236 = vmatmul.f32.gmra.mxu0 %v5018
        %v5237 = vpop.f32.mrf.mxu0
        %v5238 = vadd.f32 %v5205, %v5237
        %5239 = vmatmul.f32.gmra.mxu0 %v5023
        %v5240 = vpop.f32.mrf.mxu0
        %v5241 = vadd.f32 %v5210, %v5240
        %5242 = vmatmul.f32.gmra.mxu0 %v5028
        %v5243 = vpop.f32.mrf.mxu0
        %v5244 = vadd.f32 %v5215, %v5243
        %5245 = vdwg.mxu0
        %5246 = vmatpush.msra.mxu0 %v5095
        %5247 = vmatpush.msra.mxu0 %v5093
        %5248 = vmatpush.msra.mxu0 %v5091
        %5249 = vmatpush.msra.mxu0 %v5089
        %5250 = vmatpush.msra.mxu0 %v5087
        %5251 = vmatpush.msra.mxu0 %v5085
        %5252 = vmatpush.msra.mxu0 %v5083
        %5253 = vmatpush.msra.mxu0 %v5081
        %5254 = vmatpush.msra.mxu0 %v5079
        %5255 = vmatpush.msra.mxu0 %v5077
        %5256 = vmatpush.msra.mxu0 %v5075
        %5257 = vmatpush.msra.mxu0 %v5073
        %5258 = vmatpush.msra.mxu0 %v5071
        %5259 = vmatpush.msra.mxu0 %v5069
        %5260 = vmatpush.msra.mxu0 %v5067
        %5261 = vmatpush.msra.mxu0 %v5065
        %5262 = vmatmul.f32.gmra.mxu0 %v5014
        %v5263 = vpop.f32.mrf.mxu0
        %v5264 = vadd.f32 %v5235, %v5263
        %5265 = vmatmul.f32.gmra.mxu0 %v5019
        %v5266 = vpop.f32.mrf.mxu0
        %v5267 = vadd.f32 %v5238, %v5266
        %5268 = vmatmul.f32.gmra.mxu0 %v5024
        %v5269 = vpop.f32.mrf.mxu0
        %v5270 = vadd.f32 %v5241, %v5269
        %5271 = vmatmul.f32.gmra.mxu0 %v5029
        %v5272 = vpop.f32.mrf.mxu0
        %v5273 = vadd.f32 %v5244, %v5272
        %5274 = vdwg.mxu0
        %5275 = vmatpush.msra.mxu0 %v5127
        %5276 = vmatpush.msra.mxu0 %v5125
        %5277 = vmatpush.msra.mxu0 %v5123
        %5278 = vmatpush.msra.mxu0 %v5121
        %5279 = vmatpush.msra.mxu0 %v5119
        %5280 = vmatpush.msra.mxu0 %v5117
        %5281 = vmatpush.msra.mxu0 %v5115
        %5282 = vmatpush.msra.mxu0 %v5113
        %5283 = vmatpush.msra.mxu0 %v5111
        %5284 = vmatpush.msra.mxu0 %v5109
        %5285 = vmatpush.msra.mxu0 %v5107
        %5286 = vmatpush.msra.mxu0 %v5105
        %5287 = vmatpush.msra.mxu0 %v5103
        %5288 = vmatpush.msra.mxu0 %v5101
        %5289 = vmatpush.msra.mxu0 %v5099
        %5290 = vmatpush.msra.mxu0 %v5097
        %5291 = vmatmul.f32.gmra.mxu0 %v5015
        %v5292 = vpop.f32.mrf.mxu0
        %v5293 = vadd.f32 %v5264, %v5292
        %5294 = vmatmul.f32.gmra.mxu0 %v5020
        %v5295 = vpop.f32.mrf.mxu0
        %v5296 = vadd.f32 %v5267, %v5295
        %5297 = vmatmul.f32.gmra.mxu0 %v5025
        %v5298 = vpop.f32.mrf.mxu0
        %v5299 = vadd.f32 %v5270, %v5298
        %5300 = vmatmul.f32.gmra.mxu0 %v5030
        %v5301 = vpop.f32.mrf.mxu0
        %v5302 = vadd.f32 %v5273, %v5301
        %5303 = vdwg.mxu0
        %5304 = vmatpush.msra.mxu0 %v5159
        %5305 = vmatpush.msra.mxu0 %v5157
        %5306 = vmatpush.msra.mxu0 %v5155
        %5307 = vmatpush.msra.mxu0 %v5153
        %5308 = vmatpush.msra.mxu0 %v5151
        %5309 = vmatpush.msra.mxu0 %v5149
        %5310 = vmatpush.msra.mxu0 %v5147
        %5311 = vmatpush.msra.mxu0 %v5145
        %5312 = vmatpush.msra.mxu0 %v5143
        %5313 = vmatpush.msra.mxu0 %v5141
        %5314 = vmatpush.msra.mxu0 %v5139
        %5315 = vmatpush.msra.mxu0 %v5137
        %5316 = vmatpush.msra.mxu0 %v5135
        %5317 = vmatpush.msra.mxu0 %v5133
        %5318 = vmatpush.msra.mxu0 %v5131
        %5319 = vmatpush.msra.mxu0 %v5129
        %5320 = vmatmul.f32.gmra.mxu0 %v5016
        %v5321 = vpop.f32.mrf.mxu0
        %v5322 = vadd.f32 %v5293, %v5321
        %5323 = vmatmul.f32.gmra.mxu0 %v5021
        %v5324 = vpop.f32.mrf.mxu0
        %v5325 = vadd.f32 %v5296, %v5324
        %5326 = vmatmul.f32.gmra.mxu0 %v5026
        %v5327 = vpop.f32.mrf.mxu0
        %v5328 = vadd.f32 %v5299, %v5327
        %5329 = vmatmul.f32.gmra.mxu0 %v5031
        %v5330 = vpop.f32.mrf.mxu0
        %v5331 = vadd.f32 %v5302, %v5330
        %5332 = vdwg.mxu0
        %5333 = vmatpush.msra.mxu0 %v5191
        %5334 = vmatpush.msra.mxu0 %v5189
        %5335 = vmatpush.msra.mxu0 %v5187
        %5336 = vmatpush.msra.mxu0 %v5185
        %5337 = vmatpush.msra.mxu0 %v5183
        %5338 = vmatpush.msra.mxu0 %v5181
        %5339 = vmatpush.msra.mxu0 %v5179
        %5340 = vmatpush.msra.mxu0 %v5177
        %5341 = vmatpush.msra.mxu0 %v5175
        %5342 = vmatpush.msra.mxu0 %v5173
        %5343 = vmatpush.msra.mxu0 %v5171
        %5344 = vmatpush.msra.mxu0 %v5169
        %5345 = vmatpush.msra.mxu0 %v5167
        %5346 = vmatpush.msra.mxu0 %v5165
        %5347 = vmatpush.msra.mxu0 %v5163
        %5348 = vmatpush.msra.mxu0 %v5161
        %5349 = vmatmul.f32.gmra.mxu0 %v5017
        %v5350 = vpop.f32.mrf.mxu0
        %v5351 = vadd.f32 %v5322, %v5350
        %5352 = vmatmul.f32.gmra.mxu0 %v5022
        %v5353 = vpop.f32.mrf.mxu0
        %v5354 = vadd.f32 %v5325, %v5353
        %5355 = vmatmul.f32.gmra.mxu0 %v5027
        %v5356 = vpop.f32.mrf.mxu0
        %v5357 = vadd.f32 %v5328, %v5356
        %5358 = vmatmul.f32.gmra.mxu0 %v5032
        %v5359 = vpop.f32.mrf.mxu0
        %v5360 = vadd.f32 %v5331, %v5359
        %5361 = vdwg.mxu0
        %5362 = vmatpush.msra.mxu0 %v5064
        %5363 = vmatpush.msra.mxu0 %v5062
        %5364 = vmatpush.msra.mxu0 %v5060
        %5365 = vmatpush.msra.mxu0 %v5058
        %5366 = vmatpush.msra.mxu0 %v5056
        %5367 = vmatpush.msra.mxu0 %v5054
        %5368 = vmatpush.msra.mxu0 %v5052
        %5369 = vmatpush.msra.mxu0 %v5050
        %5370 = vmatpush.msra.mxu0 %v5048
        %5371 = vmatpush.msra.mxu0 %v5046
        %5372 = vmatpush.msra.mxu0 %v5044
        %5373 = vmatpush.msra.mxu0 %v5042
        %5374 = vmatpush.msra.mxu0 %v5040
        %5375 = vmatpush.msra.mxu0 %v5038
        %5376 = vmatpush.msra.mxu0 %v5036
        %5377 = vmatpush.msra.mxu0 %v5034
        %5378 = vmatmul.f32.gmra.mxu0 %v5013
        %v5379 = vpop.f32.mrf.mxu0
        %v5380 = vadd.f32 %v5200, %v5379
        %5381 = vmatmul.f32.gmra.mxu0 %v5018
        %v5382 = vpop.f32.mrf.mxu0
        %v5383 = vadd.f32 %v5205, %v5382
        %5384 = vmatmul.f32.gmra.mxu0 %v5023
        %v5385 = vpop.f32.mrf.mxu0
        %v5386 = vadd.f32 %v5210, %v5385
        %5387 = vmatmul.f32.gmra.mxu0 %v5028
        %v5388 = vpop.f32.mrf.mxu0
        %v5389 = vadd.f32 %v5215, %v5388
        %5390 = vdwg.mxu0
        %5391 = vmatpush.msra.mxu0 %v5096
        %5392 = vmatpush.msra.mxu0 %v5094
        %5393 = vmatpush.msra.mxu0 %v5092
        %5394 = vmatpush.msra.mxu0 %v5090
        %5395 = vmatpush.msra.mxu0 %v5088
        %5396 = vmatpush.msra.mxu0 %v5086
        %5397 = vmatpush.msra.mxu0 %v5084
        %5398 = vmatpush.msra.mxu0 %v5082
        %5399 = vmatpush.msra.mxu0 %v5080
        %5400 = vmatpush.msra.mxu0 %v5078
        %5401 = vmatpush.msra.mxu0 %v5076
        %5402 = vmatpush.msra.mxu0 %v5074
        %5403 = vmatpush.msra.mxu0 %v5072
        %5404 = vmatpush.msra.mxu0 %v5070
        %5405 = vmatpush.msra.mxu0 %v5068
        %5406 = vmatpush.msra.mxu0 %v5066
        %5407 = vmatmul.f32.gmra.mxu0 %v5014
        %v5408 = vpop.f32.mrf.mxu0
        %v5409 = vadd.f32 %v5380, %v5408
        %5410 = vmatmul.f32.gmra.mxu0 %v5019
        %v5411 = vpop.f32.mrf.mxu0
        %v5412 = vadd.f32 %v5383, %v5411
        %5413 = vmatmul.f32.gmra.mxu0 %v5024
        %v5414 = vpop.f32.mrf.mxu0
        %v5415 = vadd.f32 %v5386, %v5414
        %5416 = vmatmul.f32.gmra.mxu0 %v5029
        %v5417 = vpop.f32.mrf.mxu0
        %v5418 = vadd.f32 %v5389, %v5417
        %5419 = vdwg.mxu0
        %5420 = vmatpush.msra.mxu0 %v5128
        %5421 = vmatpush.msra.mxu0 %v5126
        %5422 = vmatpush.msra.mxu0 %v5124
        %5423 = vmatpush.msra.mxu0 %v5122
        %5424 = vmatpush.msra.mxu0 %v5120
        %5425 = vmatpush.msra.mxu0 %v5118
        %5426 = vmatpush.msra.mxu0 %v5116
        %5427 = vmatpush.msra.mxu0 %v5114
        %5428 = vmatpush.msra.mxu0 %v5112
        %5429 = vmatpush.msra.mxu0 %v5110
        %5430 = vmatpush.msra.mxu0 %v5108
        %5431 = vmatpush.msra.mxu0 %v5106
        %5432 = vmatpush.msra.mxu0 %v5104
        %5433 = vmatpush.msra.mxu0 %v5102
        %5434 = vmatpush.msra.mxu0 %v5100
        %5435 = vmatpush.msra.mxu0 %v5098
        %5436 = vmatmul.f32.gmra.mxu0 %v5015
        %v5437 = vpop.f32.mrf.mxu0
        %v5438 = vadd.f32 %v5409, %v5437
        %5439 = vmatmul.f32.gmra.mxu0 %v5020
        %v5440 = vpop.f32.mrf.mxu0
        %v5441 = vadd.f32 %v5412, %v5440
        %5442 = vmatmul.f32.gmra.mxu0 %v5025
        %v5443 = vpop.f32.mrf.mxu0
        %v5444 = vadd.f32 %v5415, %v5443
        %5445 = vmatmul.f32.gmra.mxu0 %v5030
        %v5446 = vpop.f32.mrf.mxu0
        %v5447 = vadd.f32 %v5418, %v5446
        %5448 = vdwg.mxu0
        %5449 = vmatpush.msra.mxu0 %v5160
        %5450 = vmatpush.msra.mxu0 %v5158
        %5451 = vmatpush.msra.mxu0 %v5156
        %5452 = vmatpush.msra.mxu0 %v5154
        %5453 = vmatpush.msra.mxu0 %v5152
        %5454 = vmatpush.msra.mxu0 %v5150
        %5455 = vmatpush.msra.mxu0 %v5148
        %5456 = vmatpush.msra.mxu0 %v5146
        %5457 = vmatpush.msra.mxu0 %v5144
        %5458 = vmatpush.msra.mxu0 %v5142
        %5459 = vmatpush.msra.mxu0 %v5140
        %5460 = vmatpush.msra.mxu0 %v5138
        %5461 = vmatpush.msra.mxu0 %v5136
        %5462 = vmatpush.msra.mxu0 %v5134
        %5463 = vmatpush.msra.mxu0 %v5132
        %5464 = vmatpush.msra.mxu0 %v5130
        %5465 = vmatmul.f32.gmra.mxu0 %v5016
        %v5466 = vpop.f32.mrf.mxu0
        %v5467 = vadd.f32 %v5438, %v5466
        %5468 = vmatmul.f32.gmra.mxu0 %v5021
        %v5469 = vpop.f32.mrf.mxu0
        %v5470 = vadd.f32 %v5441, %v5469
        %5471 = vmatmul.f32.gmra.mxu0 %v5026
        %v5472 = vpop.f32.mrf.mxu0
        %v5473 = vadd.f32 %v5444, %v5472
        %5474 = vmatmul.f32.gmra.mxu0 %v5031
        %v5475 = vpop.f32.mrf.mxu0
        %v5476 = vadd.f32 %v5447, %v5475
        %5477 = vdwg.mxu0
        %5478 = vmatpush.msra.mxu0 %v5192
        %5479 = vmatpush.msra.mxu0 %v5190
        %5480 = vmatpush.msra.mxu0 %v5188
        %5481 = vmatpush.msra.mxu0 %v5186
        %5482 = vmatpush.msra.mxu0 %v5184
        %5483 = vmatpush.msra.mxu0 %v5182
        %5484 = vmatpush.msra.mxu0 %v5180
        %5485 = vmatpush.msra.mxu0 %v5178
        %5486 = vmatpush.msra.mxu0 %v5176
        %5487 = vmatpush.msra.mxu0 %v5174
        %5488 = vmatpush.msra.mxu0 %v5172
        %5489 = vmatpush.msra.mxu0 %v5170
        %5490 = vmatpush.msra.mxu0 %v5168
        %5491 = vmatpush.msra.mxu0 %v5166
        %5492 = vmatpush.msra.mxu0 %v5164
        %5493 = vmatpush.msra.mxu0 %v5162
        %5494 = vmatmul.f32.gmra.mxu0 %v5017
        %v5495 = vpop.f32.mrf.mxu0
        %v5496 = vadd.f32 %v5467, %v5495
        %5497 = vmatmul.f32.gmra.mxu0 %v5022
        %v5498 = vpop.f32.mrf.mxu0
        %v5499 = vadd.f32 %v5470, %v5498
        %5500 = vmatmul.f32.gmra.mxu0 %v5027
        %v5501 = vpop.f32.mrf.mxu0
        %v5502 = vadd.f32 %v5473, %v5501
        %5503 = vmatmul.f32.gmra.mxu0 %v5032
        %v5504 = vpop.f32.mrf.mxu0
        %v5505 = vadd.f32 %v5476, %v5504
        %5506 = vdwg.mxu0
        %vm5507 = vcmp.ge.f32.partialorder %v5351, 0.0
        %vm5508 = vcmp.ge.f32.partialorder %v5496, 0.0
        %vm5509 = vcmp.ge.f32.partialorder %v5354, 0.0
        %vm5510 = vcmp.ge.f32.partialorder %v5499, 0.0
        %vm5511 = vcmp.ge.f32.partialorder %v5357, 0.0
        %vm5512 = vcmp.ge.f32.partialorder %v5502, 0.0
        %vm5513 = vcmp.ge.f32.partialorder %v5360, 0.0
        %vm5514 = vcmp.ge.f32.partialorder %v5505, 0.0
        %v5515 = vmul.f32 %v5351, 0.01
        %v5516 = vmul.f32 %v5496, 0.01
        %v5517 = vmul.f32 %v5354, 0.01
        %v5518 = vmul.f32 %v5499, 0.01
        %v5519 = vmul.f32 %v5357, 0.01
        %v5520 = vmul.f32 %v5502, 0.01
        %v5521 = vmul.f32 %v5360, 0.01
        %v5522 = vmul.f32 %v5505, 0.01
        %v5523 = vsel %vm5507, %v5351, %v5515
        %v5524 = vsel %vm5508, %v5496, %v5516
        %v5525 = vsel %vm5509, %v5354, %v5517
        %v5526 = vsel %vm5510, %v5499, %v5518
        %v5527 = vsel %vm5511, %v5357, %v5519
        %v5528 = vsel %vm5512, %v5502, %v5520
        %v5529 = vsel %vm5513, %v5360, %v5521
        %v5530 = vsel %vm5514, %v5505, %v5522
        %v5531 = vpack.c.bf16 %v5524, %v5523
        %v5532 = vpack.c.bf16 %v5526, %v5525
        %v5533 = vpack.c.bf16 %v5528, %v5527
        %v5534 = vpack.c.bf16 %v5530, %v5529
        %5535 = vst [vmem:[%s228] sm:$0xff] %v5531
        %5536 = vst [vmem:[%s228 + $0x8] sm:$0xff] %v5532
        %5537 = vst [vmem:[%s228 + $0x10] sm:$0xff] %v5533
        %5538 = vst [vmem:[%s228 + $0x18] sm:$0xff] %v5534
        %p5539 = scmp.lt.s32.totalorder %s17, 1
        %s5540 = scalar_select %p5539, %s17, 1
        %s5541 = smul.addr %s5540, 8
        %s5542 = smul.addr %s5541, 4
        %s5543 = scalar_lea.vmem %s4, %s5542
        // Predicated region
        $region45: #{_forward.3} parent=35 // pred_check
          %p5544 = pneg %p124
        $region46: #{_forward.3} parent=35 // pred_check_branch
          %5546 = sbr.rel (%p5544) target = $region48
        $region47: #{_forward.3} parent=35 // pred_region
          _
        $region48: #{_forward.3} parent=35 // pred_fallthru
          _
      $region36: #{_forward.3} parent=5 // pred_fallthru
        _
      %p5547 = scmp.le.s32.totalorder 2, %s12
      // Predicated region
      $region49: #{_forward.3} parent=5 // pred_check
        %p5548 = pneg %p5547
      $region50: #{_forward.3} parent=5 // pred_check_branch
        %5550 = sbr.rel (%p5548) target = $region52
      $region51: #{_forward.3} parent=5 // pred_region
        %s5551 = ssub.s32 %s12, 2
        // Predicated region
        $region53: #{_forward.3} parent=51 // pred_check
          %p5552 = pneg %p130
        $region54: #{_forward.3} parent=51 // pred_check_branch
          %5554 = sbr.rel (%p5552) target = $region56
        $region55: #{_forward.3} parent=51 // pred_region
          %p5555 = scmp.lt.s32.totalorder %s18, 1
          %s5556 = scalar_select %p5555, %s18, 1
          %s5557 = smul.addr %s5556, 8
          %s5558 = smul.addr %s5557, 4
          %s5559 = scalar_lea.vmem %s4, %s5558
        $region56: #{_forward.3} parent=51 // pred_fallthru
          _
      $region52: #{_forward.3} parent=5 // pred_fallthru
        _
    $region6: #{_forward.3} parent=1 // loop_footer
      %s16 = sadd.s32 1, %s12
    $region7: #{_forward.3} parent=1 // loop_footer_branch
      %11 = sbr.rel target = $region3
    $region8: #{_forward.3} parent=1 // loop_exit
      _
    %5560 = vsyncpa [#allocation3], 1
    %s5561 = scalar_lea.sflag [#allocation3], 1
    %5562 = vsyncpa %s5561, 1
    %5563 = vsyncpa [#allocation5], 1

// kernel: _forward.5
$region0: #{_forward.5}
  #allocation0 [shape = 'u32[]', space=smem, size = 0x4, offset = 0x4, fixed_abs, tag = 'smem constant byte address 0x4 - core index']
  #allocation1 [shape = 'u32[72,128]{1,0:T(1,128)}', space=vmem, size = 0x9000, scoped, tag = 'internal scratch']
  %s0 = inlined_call_operand.vmem [shape: bf16[8,1024], index: 0, kind: input, shape index: {}]
  %s1 = inlined_call_operand.hbm [shape: bf16[1024,1024], index: 1, kind: input, shape index: {}]
  %s2 = inlined_call_operand.hbm [shape: f32[1,1024], index: 2, kind: input, shape index: {}]
  %s3 = inlined_call_operand.hbm [shape: bf16[1024,128], index: 3, kind: input, shape index: {}]
  %s4 = inlined_call_operand.hbm [shape: f32[1,128], index: 4, kind: input, shape index: {}]
  %s5 = inlined_call_operand.vmem [shape: f32[8,128], index: 5, kind: output, shape index: {}]
  %s6 = sld [smem:[#allocation0]]
  $region46: #{_forward.5} parent=0
    _
  %s8 = ssub.s32 1, %s6
  %s9 = scalar_select 0, %s8, %s6
  $region1: #{_forward.5} parent=0
    #allocation2 [shape = 'u8[2097152]{0}', space=vmem, size = 0x200000, scoped, tag = 'input window, operand 1, single buffered']
    #allocation3 [shape = 's32[1]{0}', space=sflag, size = 0x4, scoped, tag = 'scoped memory for _forward.5']
    #allocation4 [shape = 'u8[4096]{0}', space=vmem, size = 0x1000, scoped, tag = 'input window, operand 2, single buffered']
    #allocation5 [shape = 's32[1]{0}', space=sflag, size = 0x4, scoped, tag = 'scoped memory for _forward.5']
    #allocation6 [shape = 'u8[262144]{0}', space=vmem, size = 0x40000, scoped, tag = 'input window, operand 3, single buffered']
    #allocation7 [shape = 'u8[512]{0}', space=vmem, size = 0x400, scoped, tag = 'input window, operand 4, single buffered']
    #allocation8 [shape = 's32[1]{0}', space=sflag, size = 0x4, scoped, tag = 'scoped memory for _forward.5']
    %10 = vsyncpa [#allocation3], 0
    %11 = vsyncpa [#allocation5], 0
    %12 = vsyncpa [#allocation8], 0
    // Predicated region
    $region2: #{_forward.5} parent=1 // pred_check
      _
    $region3: #{_forward.5} parent=1 // pred_check_branch
      %14 = sbr.rel (0) target = $region5
    $region4: #{_forward.5} parent=1 // pred_region
      _
    $region5: #{_forward.5} parent=1 // pred_fallthru
      _
    // Predicated region
    $region6: #{_forward.5} parent=1 // pred_check
      _
    $region7: #{_forward.5} parent=1 // pred_check_branch
      %16 = sbr.rel (0) target = $region9
    $region8: #{_forward.5} parent=1 // pred_region
      %18 = vsyncadd [#allocation3], 0
      %s19 = sshll.u32 %s1, 4
      %s20 = int_to_ptr.hbm [resolvable:$true] %s19
      %s21 = sshll.u32 [#allocation2], 4
      %s22 = int_to_ptr.vmem [resolvable:$true] %s21
      %27 = dma.hbm_to_vmem [thread:$0]  %s20, 65536, %s22, [#allocation3], 512, 512, 32
    $region9: #{_forward.5} parent=1 // pred_fallthru
      _
    // Predicated region
    $region10: #{_forward.5} parent=1 // pred_check
      _
    $region11: #{_forward.5} parent=1 // pred_check_branch
      %29 = sbr.rel (0) target = $region13
    $region12: #{_forward.5} parent=1 // pred_region
      %31 = vsyncadd [#allocation5], 0
      %s33 = sshll.u32 %s2, 4
      %s34 = int_to_ptr.hbm [resolvable:$true] %s33
      %s35 = sshll.u32 [#allocation4], 4
      %s36 = int_to_ptr.vmem [resolvable:$true] %s35
      %38 = dma.hbm_to_vmem [thread:$0]  %s34, 128, %s36, [#allocation5]
    $region13: #{_forward.5} parent=1 // pred_fallthru
      _
    // Predicated region
    $region14: #{_forward.5} parent=1 // pred_check
      _
    $region15: #{_forward.5} parent=1 // pred_check_branch
      %40 = sbr.rel (0) target = $region17
    $region16: #{_forward.5} parent=1 // pred_region
      %42 = vsyncadd [#allocation5], 0
      %s43 = sshll.u32 %s3, 4
      %s44 = int_to_ptr.hbm [resolvable:$true] %s43
      %s45 = sshll.u32 [#allocation6], 4
      %s46 = int_to_ptr.vmem [resolvable:$true] %s45
      %51 = dma.hbm_to_vmem [thread:$0]  %s44, 8192, %s46, [#allocation5], 64, 64, 4
    $region17: #{_forward.5} parent=1 // pred_fallthru
      _
    // Predicated region
    $region18: #{_forward.5} parent=1 // pred_check
      _
    $region19: #{_forward.5} parent=1 // pred_check_branch
      %53 = sbr.rel (0) target = $region21
    $region20: #{_forward.5} parent=1 // pred_region
      %55 = vsyncadd [#allocation8], 0
      %s57 = sshll.u32 %s4, 4
      %s58 = int_to_ptr.hbm [resolvable:$true] %s57
      %s59 = sshll.u32 [#allocation7], 4
      %s60 = int_to_ptr.vmem [resolvable:$true] %s59
      %62 = dma.hbm_to_vmem [thread:$0]  %s58, 16, %s60, [#allocation8]
    $region21: #{_forward.5} parent=1 // pred_fallthru
      _
    // Predicated region
    $region22: #{_forward.5} parent=1 // pred_check
      _
    $region23: #{_forward.5} parent=1 // pred_check_branch
      %64 = sbr.rel (0) target = $region25
    $region24: #{_forward.5} parent=1 // pred_region
      %66 = dma.done [#allocation3], 65536
    $region25: #{_forward.5} parent=1 // pred_fallthru
      _
    // Predicated region
    $region26: #{_forward.5} parent=1 // pred_check
      _
    $region27: #{_forward.5} parent=1 // pred_check_branch
      %68 = sbr.rel (0) target = $region29
    $region28: #{_forward.5} parent=1 // pred_region
      %70 = dma.done [#allocation5], 128
    $region29: #{_forward.5} parent=1 // pred_fallthru
      _
    // Predicated region
    $region30: #{_forward.5} parent=1 // pred_check
      _
    $region31: #{_forward.5} parent=1 // pred_check_branch
      %72 = sbr.rel (0) target = $region33
    $region32: #{_forward.5} parent=1 // pred_region
      %74 = dma.done [#allocation5], 8192
    $region33: #{_forward.5} parent=1 // pred_fallthru
      _
    // Predicated region
    $region34: #{_forward.5} parent=1 // pred_check
      _
    $region35: #{_forward.5} parent=1 // pred_check_branch
      %76 = sbr.rel (0) target = $region37
    $region36: #{_forward.5} parent=1 // pred_region
      %78 = dma.done [#allocation8], 16
    $region37: #{_forward.5} parent=1 // pred_fallthru
      _
    %v79 = vld [vmem:[%s0] sm:$0xff]
    %v80 = vld [vmem:[%s0 + $0x8] sm:$0xff]
    %v81 = vld [vmem:[%s0 + $0x10] sm:$0xff]
    %v82 = vld [vmem:[%s0 + $0x18] sm:$0xff]
    %v83 = vld [vmem:[#allocation2] sm:$0xff]
    %v84 = vld [vmem:[#allocation2 + $0x8] sm:$0xff]
    %v85 = vld [vmem:[#allocation2 + $0x10] sm:$0xff]
    %v86 = vld [vmem:[#allocation2 + $0x18] sm:$0xff]
    %v87 = vld [vmem:[#allocation2 + $0x20] sm:$0xff]
    %v88 = vld [vmem:[#allocation2 + $0x28] sm:$0xff]
    %v89 = vld [vmem:[#allocation2 + $0x30] sm:$0xff]
    %v90 = vld [vmem:[#allocation2 + $0x38] sm:$0xff]
    %v91 = vld [vmem:[#allocation2 + $0x40] sm:$0xff]
    %v92 = vld [vmem:[#allocation2 + $0x48] sm:$0xff]
    %v93 = vld [vmem:[#allocation2 + $0x50] sm:$0xff]
    %v94 = vld [vmem:[#allocation2 + $0x58] sm:$0xff]
    %v95 = vld [vmem:[#allocation2 + $0x60] sm:$0xff]
    %v96 = vld [vmem:[#allocation2 + $0x68] sm:$0xff]
    %v97 = vld [vmem:[#allocation2 + $0x70] sm:$0xff]
    %v98 = vld [vmem:[#allocation2 + $0x78] sm:$0xff]
    %v99 = vld [vmem:[#allocation2 + $0x80] sm:$0xff]
    %v100 = vld [vmem:[#allocation2 + $0x88] sm:$0xff]
    %v101 = vld [vmem:[#allocation2 + $0x90] sm:$0xff]
    %v102 = vld [vmem:[#allocation2 + $0x98] sm:$0xff]
    %v103 = vld [vmem:[#allocation2 + $0xa0] sm:$0xff]
    %v104 = vld [vmem:[#allocation2 + $0xa8] sm:$0xff]
    %v105 = vld [vmem:[#allocation2 + $0xb0] sm:$0xff]
    %v106 = vld [vmem:[#allocation2 + $0xb8] sm:$0xff]
    %v107 = vld [vmem:[#allocation2 + $0xc0] sm:$0xff]
    %v108 = vld [vmem:[#allocation2 + $0xc8] sm:$0xff]
    %v109 = vld [vmem:[#allocation2 + $0xd0] sm:$0xff]
    %v110 = vld [vmem:[#allocation2 + $0xd8] sm:$0xff]
    %v111 = vld [vmem:[#allocation2 + $0xe0] sm:$0xff]
    %v112 = vld [vmem:[#allocation2 + $0xe8] sm:$0xff]
    %v113 = vld [vmem:[#allocation2 + $0xf0] sm:$0xff]
    %v114 = vld [vmem:[#allocation2 + $0xf8] sm:$0xff]
    %v115 = vld [vmem:[#allocation2 + $0x100] sm:$0xff]
    %v116 = vld [vmem:[#allocation2 + $0x108] sm:$0xff]
    %v117 = vld [vmem:[#allocation2 + $0x110] sm:$0xff]
    %v118 = vld [vmem:[#allocation2 + $0x118] sm:$0xff]
    %v119 = vld [vmem:[#allocation2 + $0x120] sm:$0xff]
    %v120 = vld [vmem:[#allocation2 + $0x128] sm:$0xff]
    %v121 = vld [vmem:[#allocation2 + $0x130] sm:$0xff]
    %v122 = vld [vmem:[#allocation2 + $0x138] sm:$0xff]
    %v123 = vld [vmem:[#allocation2 + $0x140] sm:$0xff]
    %v124 = vld [vmem:[#allocation2 + $0x148] sm:$0xff]
    %v125 = vld [vmem:[#allocation2 + $0x150] sm:$0xff]
    %v126 = vld [vmem:[#allocation2 + $0x158] sm:$0xff]
    %v127 = vld [vmem:[#allocation2 + $0x160] sm:$0xff]
    %v128 = vld [vmem:[#allocation2 + $0x168] sm:$0xff]
    %v129 = vld [vmem:[#allocation2 + $0x170] sm:$0xff]
    %v130 = vld [vmem:[#allocation2 + $0x178] sm:$0xff]
    %v131 = vld [vmem:[#allocation2 + $0x180] sm:$0xff]
    %v132 = vld [vmem:[#allocation2 + $0x188] sm:$0xff]
    %v133 = vld [vmem:[#allocation2 + $0x190] sm:$0xff]
    %v134 = vld [vmem:[#allocation2 + $0x198] sm:$0xff]
    %v135 = vld [vmem:[#allocation2 + $0x1a0] sm:$0xff]
    %v136 = vld [vmem:[#allocation2 + $0x1a8] sm:$0xff]
    %v137 = vld [vmem:[#allocation2 + $0x1b0] sm:$0xff]
    %v138 = vld [vmem:[#allocation2 + $0x1b8] sm:$0xff]
    %v139 = vld [vmem:[#allocation2 + $0x1c0] sm:$0xff]
    %v140 = vld [vmem:[#allocation2 + $0x1c8] sm:$0xff]
    %v141 = vld [vmem:[#allocation2 + $0x1d0] sm:$0xff]
    %v142 = vld [vmem:[#allocation2 + $0x1d8] sm:$0xff]
    %v143 = vld [vmem:[#allocation2 + $0x1e0] sm:$0xff]
    %v144 = vld [vmem:[#allocation2 + $0x1e8] sm:$0xff]
    %v145 = vld [vmem:[#allocation2 + $0x1f0] sm:$0xff]
    %v146 = vld [vmem:[#allocation2 + $0x1f8] sm:$0xff]
    %v147 = vld [vmem:[#allocation2 + $0x200] sm:$0xff]
    %v148 = vld [vmem:[#allocation2 + $0x208] sm:$0xff]
    %v149 = vld [vmem:[#allocation2 + $0x210] sm:$0xff]
    %v150 = vld [vmem:[#allocation2 + $0x218] sm:$0xff]
    %v151 = vld [vmem:[#allocation2 + $0x220] sm:$0xff]
    %v152 = vld [vmem:[#allocation2 + $0x228] sm:$0xff]
    %v153 = vld [vmem:[#allocation2 + $0x230] sm:$0xff]
    %v154 = vld [vmem:[#allocation2 + $0x238] sm:$0xff]
    %v155 = vld [vmem:[#allocation2 + $0x240] sm:$0xff]
    %v156 = vld [vmem:[#allocation2 + $0x248] sm:$0xff]
    %v157 = vld [vmem:[#allocation2 + $0x250] sm:$0xff]
    %v158 = vld [vmem:[#allocation2 + $0x258] sm:$0xff]
    %v159 = vld [vmem:[#allocation2 + $0x260] sm:$0xff]
    %v160 = vld [vmem:[#allocation2 + $0x268] sm:$0xff]
    %v161 = vld [vmem:[#allocation2 + $0x270] sm:$0xff]
    %v162 = vld [vmem:[#allocation2 + $0x278] sm:$0xff]
    %v163 = vld [vmem:[#allocation2 + $0x280] sm:$0xff]
    %v164 = vld [vmem:[#allocation2 + $0x288] sm:$0xff]
    %v165 = vld [vmem:[#allocation2 + $0x290] sm:$0xff]
    %v166 = vld [vmem:[#allocation2 + $0x298] sm:$0xff]
    %v167 = vld [vmem:[#allocation2 + $0x2a0] sm:$0xff]
    %v168 = vld [vmem:[#allocation2 + $0x2a8] sm:$0xff]
    %v169 = vld [vmem:[#allocation2 + $0x2b0] sm:$0xff]
    %v170 = vld [vmem:[#allocation2 + $0x2b8] sm:$0xff]
    %v171 = vld [vmem:[#allocation2 + $0x2c0] sm:$0xff]
    %v172 = vld [vmem:[#allocation2 + $0x2c8] sm:$0xff]
    %v173 = vld [vmem:[#allocation2 + $0x2d0] sm:$0xff]
    %v174 = vld [vmem:[#allocation2 + $0x2d8] sm:$0xff]
    %v175 = vld [vmem:[#allocation2 + $0x2e0] sm:$0xff]
    %v176 = vld [vmem:[#allocation2 + $0x2e8] sm:$0xff]
    %v177 = vld [vmem:[#allocation2 + $0x2f0] sm:$0xff]
    %v178 = vld [vmem:[#allocation2 + $0x2f8] sm:$0xff]
    %v179 = vld [vmem:[#allocation2 + $0x300] sm:$0xff]
    %v180 = vld [vmem:[#allocation2 + $0x308] sm:$0xff]
    %v181 = vld [vmem:[#allocation2 + $0x310] sm:$0xff]
    %v182 = vld [vmem:[#allocation2 + $0x318] sm:$0xff]
    %v183 = vld [vmem:[#allocation2 + $0x320] sm:$0xff]
    %v184 = vld [vmem:[#allocation2 + $0x328] sm:$0xff]
    %v185 = vld [vmem:[#allocation2 + $0x330] sm:$0xff]
    %v186 = vld [vmem:[#allocation2 + $0x338] sm:$0xff]
    %v187 = vld [vmem:[#allocation2 + $0x340] sm:$0xff]
    %v188 = vld [vmem:[#allocation2 + $0x348] sm:$0xff]
    %v189 = vld [vmem:[#allocation2 + $0x350] sm:$0xff]
    %v190 = vld [vmem:[#allocation2 + $0x358] sm:$0xff]
    %v191 = vld [vmem:[#allocation2 + $0x360] sm:$0xff]
    %v192 = vld [vmem:[#allocation2 + $0x368] sm:$0xff]
    %v193 = vld [vmem:[#allocation2 + $0x370] sm:$0xff]
    %v194 = vld [vmem:[#allocation2 + $0x378] sm:$0xff]
    %v195 = vld [vmem:[#allocation2 + $0x380] sm:$0xff]
    %v196 = vld [vmem:[#allocation2 + $0x388] sm:$0xff]
    %v197 = vld [vmem:[#allocation2 + $0x390] sm:$0xff]
    %v198 = vld [vmem:[#allocation2 + $0x398] sm:$0xff]
    %v199 = vld [vmem:[#allocation2 + $0x3a0] sm:$0xff]
    %v200 = vld [vmem:[#allocation2 + $0x3a8] sm:$0xff]
    %v201 = vld [vmem:[#allocation2 + $0x3b0] sm:$0xff]
    %v202 = vld [vmem:[#allocation2 + $0x3b8] sm:$0xff]
    %v203 = vld [vmem:[#allocation2 + $0x3c0] sm:$0xff]
    %v204 = vld [vmem:[#allocation2 + $0x3c8] sm:$0xff]
    %v205 = vld [vmem:[#allocation2 + $0x3d0] sm:$0xff]
    %v206 = vld [vmem:[#allocation2 + $0x3d8] sm:$0xff]
    %v207 = vld [vmem:[#allocation2 + $0x3e0] sm:$0xff]
    %v208 = vld [vmem:[#allocation2 + $0x3e8] sm:$0xff]
    %v209 = vld [vmem:[#allocation2 + $0x3f0] sm:$0xff]
    %v210 = vld [vmem:[#allocation2 + $0x3f8] sm:$0xff]
    %v211 = vld [vmem:[#allocation2 + $0x400] sm:$0xff]
    %v212 = vld [vmem:[#allocation2 + $0x408] sm:$0xff]
    %v213 = vld [vmem:[#allocation2 + $0x410] sm:$0xff]
    %v214 = vld [vmem:[#allocation2 + $0x418] sm:$0xff]
    %v215 = vld [vmem:[#allocation2 + $0x420] sm:$0xff]
    %v216 = vld [vmem:[#allocation2 + $0x428] sm:$0xff]
    %v217 = vld [vmem:[#allocation2 + $0x430] sm:$0xff]
    %v218 = vld [vmem:[#allocation2 + $0x438] sm:$0xff]
    %v219 = vld [vmem:[#allocation2 + $0x440] sm:$0xff]
    %v220 = vld [vmem:[#allocation2 + $0x448] sm:$0xff]
    %v221 = vld [vmem:[#allocation2 + $0x450] sm:$0xff]
    %v222 = vld [vmem:[#allocation2 + $0x458] sm:$0xff]
    %v223 = vld [vmem:[#allocation2 + $0x460] sm:$0xff]
    %v224 = vld [vmem:[#allocation2 + $0x468] sm:$0xff]
    %v225 = vld [vmem:[#allocation2 + $0x470] sm:$0xff]
    %v226 = vld [vmem:[#allocation2 + $0x478] sm:$0xff]
    %v227 = vld [vmem:[#allocation2 + $0x480] sm:$0xff]
    %v228 = vld [vmem:[#allocation2 + $0x488] sm:$0xff]
    %v229 = vld [vmem:[#allocation2 + $0x490] sm:$0xff]
    %v230 = vld [vmem:[#allocation2 + $0x498] sm:$0xff]
    %v231 = vld [vmem:[#allocation2 + $0x4a0] sm:$0xff]
    %v232 = vld [vmem:[#allocation2 + $0x4a8] sm:$0xff]
    %v233 = vld [vmem:[#allocation2 + $0x4b0] sm:$0xff]
    %v234 = vld [vmem:[#allocation2 + $0x4b8] sm:$0xff]
    %v235 = vld [vmem:[#allocation2 + $0x4c0] sm:$0xff]
    %v236 = vld [vmem:[#allocation2 + $0x4c8] sm:$0xff]
    %v237 = vld [vmem:[#allocation2 + $0x4d0] sm:$0xff]
    %v238 = vld [vmem:[#allocation2 + $0x4d8] sm:$0xff]
    %v239 = vld [vmem:[#allocation2 + $0x4e0] sm:$0xff]
    %v240 = vld [vmem:[#allocation2 + $0x4e8] sm:$0xff]
    %v241 = vld [vmem:[#allocation2 + $0x4f0] sm:$0xff]
    %v242 = vld [vmem:[#allocation2 + $0x4f8] sm:$0xff]
    %v243 = vld [vmem:[#allocation2 + $0x500] sm:$0xff]
    %v244 = vld [vmem:[#allocation2 + $0x508] sm:$0xff]
    %v245 = vld [vmem:[#allocation2 + $0x510] sm:$0xff]
    %v246 = vld [vmem:[#allocation2 + $0x518] sm:$0xff]
    %v247 = vld [vmem:[#allocation2 + $0x520] sm:$0xff]
    %v248 = vld [vmem:[#allocation2 + $0x528] sm:$0xff]
    %v249 = vld [vmem:[#allocation2 + $0x530] sm:$0xff]
    %v250 = vld [vmem:[#allocation2 + $0x538] sm:$0xff]
    %v251 = vld [vmem:[#allocation2 + $0x540] sm:$0xff]
    %v252 = vld [vmem:[#allocation2 + $0x548] sm:$0xff]
    %v253 = vld [vmem:[#allocation2 + $0x550] sm:$0xff]
    %v254 = vld [vmem:[#allocation2 + $0x558] sm:$0xff]
    %v255 = vld [vmem:[#allocation2 + $0x560] sm:$0xff]
    %v256 = vld [vmem:[#allocation2 + $0x568] sm:$0xff]
    %v257 = vld [vmem:[#allocation2 + $0x570] sm:$0xff]
    %v258 = vld [vmem:[#allocation2 + $0x578] sm:$0xff]
    %v259 = vld [vmem:[#allocation2 + $0x580] sm:$0xff]
    %v260 = vld [vmem:[#allocation2 + $0x588] sm:$0xff]
    %v261 = vld [vmem:[#allocation2 + $0x590] sm:$0xff]
    %v262 = vld [vmem:[#allocation2 + $0x598] sm:$0xff]
    %v263 = vld [vmem:[#allocation2 + $0x5a0] sm:$0xff]
    %v264 = vld [vmem:[#allocation2 + $0x5a8] sm:$0xff]
    %v265 = vld [vmem:[#allocation2 + $0x5b0] sm:$0xff]
    %v266 = vld [vmem:[#allocation2 + $0x5b8] sm:$0xff]
    %v267 = vld [vmem:[#allocation2 + $0x5c0] sm:$0xff]
    %v268 = vld [vmem:[#allocation2 + $0x5c8] sm:$0xff]
    %v269 = vld [vmem:[#allocation2 + $0x5d0] sm:$0xff]
    %v270 = vld [vmem:[#allocation2 + $0x5d8] sm:$0xff]
    %v271 = vld [vmem:[#allocation2 + $0x5e0] sm:$0xff]
    %v272 = vld [vmem:[#allocation2 + $0x5e8] sm:$0xff]
    %v273 = vld [vmem:[#allocation2 + $0x5f0] sm:$0xff]
    %v274 = vld [vmem:[#allocation2 + $0x5f8] sm:$0xff]
    %v275 = vld [vmem:[#allocation2 + $0x600] sm:$0xff]
    %v276 = vld [vmem:[#allocation2 + $0x608] sm:$0xff]
    %v277 = vld [vmem:[#allocation2 + $0x610] sm:$0xff]
    %v278 = vld [vmem:[#allocation2 + $0x618] sm:$0xff]
    %v279 = vld [vmem:[#allocation2 + $0x620] sm:$0xff]
    %v280 = vld [vmem:[#allocation2 + $0x628] sm:$0xff]
    %v281 = vld [vmem:[#allocation2 + $0x630] sm:$0xff]
    %v282 = vld [vmem:[#allocation2 + $0x638] sm:$0xff]
    %v283 = vld [vmem:[#allocation2 + $0x640] sm:$0xff]
    %v284 = vld [vmem:[#allocation2 + $0x648] sm:$0xff]
    %v285 = vld [vmem:[#allocation2 + $0x650] sm:$0xff]
    %v286 = vld [vmem:[#allocation2 + $0x658] sm:$0xff]
    %v287 = vld [vmem:[#allocation2 + $0x660] sm:$0xff]
    %v288 = vld [vmem:[#allocation2 + $0x668] sm:$0xff]
    %v289 = vld [vmem:[#allocation2 + $0x670] sm:$0xff]
    %v290 = vld [vmem:[#allocation2 + $0x678] sm:$0xff]
    %v291 = vld [vmem:[#allocation2 + $0x680] sm:$0xff]
    %v292 = vld [vmem:[#allocation2 + $0x688] sm:$0xff]
    %v293 = vld [vmem:[#allocation2 + $0x690] sm:$0xff]
    %v294 = vld [vmem:[#allocation2 + $0x698] sm:$0xff]
    %v295 = vld [vmem:[#allocation2 + $0x6a0] sm:$0xff]
    %v296 = vld [vmem:[#allocation2 + $0x6a8] sm:$0xff]
    %v297 = vld [vmem:[#allocation2 + $0x6b0] sm:$0xff]
    %v298 = vld [vmem:[#allocation2 + $0x6b8] sm:$0xff]
    %v299 = vld [vmem:[#allocation2 + $0x6c0] sm:$0xff]
    %v300 = vld [vmem:[#allocation2 + $0x6c8] sm:$0xff]
    %v301 = vld [vmem:[#allocation2 + $0x6d0] sm:$0xff]
    %v302 = vld [vmem:[#allocation2 + $0x6d8] sm:$0xff]
    %v303 = vld [vmem:[#allocation2 + $0x6e0] sm:$0xff]
    %v304 = vld [vmem:[#allocation2 + $0x6e8] sm:$0xff]
    %v305 = vld [vmem:[#allocation2 + $0x6f0] sm:$0xff]
    %v306 = vld [vmem:[#allocation2 + $0x6f8] sm:$0xff]
    %v307 = vld [vmem:[#allocation2 + $0x700] sm:$0xff]
    %v308 = vld [vmem:[#allocation2 + $0x708] sm:$0xff]
    %v309 = vld [vmem:[#allocation2 + $0x710] sm:$0xff]
    %v310 = vld [vmem:[#allocation2 + $0x718] sm:$0xff]
    %v311 = vld [vmem:[#allocation2 + $0x720] sm:$0xff]
    %v312 = vld [vmem:[#allocation2 + $0x728] sm:$0xff]
    %v313 = vld [vmem:[#allocation2 + $0x730] sm:$0xff]
    %v314 = vld [vmem:[#allocation2 + $0x738] sm:$0xff]
    %v315 = vld [vmem:[#allocation2 + $0x740] sm:$0xff]
    %v316 = vld [vmem:[#allocation2 + $0x748] sm:$0xff]
    %v317 = vld [vmem:[#allocation2 + $0x750] sm:$0xff]
    %v318 = vld [vmem:[#allocation2 + $0x758] sm:$0xff]
    %v319 = vld [vmem:[#allocation2 + $0x760] sm:$0xff]
    %v320 = vld [vmem:[#allocation2 + $0x768] sm:$0xff]
    %v321 = vld [vmem:[#allocation2 + $0x770] sm:$0xff]
    %v322 = vld [vmem:[#allocation2 + $0x778] sm:$0xff]
    %v323 = vld [vmem:[#allocation2 + $0x780] sm:$0xff]
    %v324 = vld [vmem:[#allocation2 + $0x788] sm:$0xff]
    %v325 = vld [vmem:[#allocation2 + $0x790] sm:$0xff]
    %v326 = vld [vmem:[#allocation2 + $0x798] sm:$0xff]
    %v327 = vld [vmem:[#allocation2 + $0x7a0] sm:$0xff]
    %v328 = vld [vmem:[#allocation2 + $0x7a8] sm:$0xff]
    %v329 = vld [vmem:[#allocation2 + $0x7b0] sm:$0xff]
    %v330 = vld [vmem:[#allocation2 + $0x7b8] sm:$0xff]
    %v331 = vld [vmem:[#allocation2 + $0x7c0] sm:$0xff]
    %v332 = vld [vmem:[#allocation2 + $0x7c8] sm:$0xff]
    %v333 = vld [vmem:[#allocation2 + $0x7d0] sm:$0xff]
    %v334 = vld [vmem:[#allocation2 + $0x7d8] sm:$0xff]
    %v335 = vld [vmem:[#allocation2 + $0x7e0] sm:$0xff]
    %v336 = vld [vmem:[#allocation2 + $0x7e8] sm:$0xff]
    %v337 = vld [vmem:[#allocation2 + $0x7f0] sm:$0xff]
    %v338 = vld [vmem:[#allocation2 + $0x7f8] sm:$0xff]
    %v339 = vld [vmem:[#allocation2 + $0x800] sm:$0xff]
    %v340 = vld [vmem:[#allocation2 + $0x808] sm:$0xff]
    %v341 = vld [vmem:[#allocation2 + $0x810] sm:$0xff]
    %v342 = vld [vmem:[#allocation2 + $0x818] sm:$0xff]
    %v343 = vld [vmem:[#allocation2 + $0x820] sm:$0xff]
    %v344 = vld [vmem:[#allocation2 + $0x828] sm:$0xff]
    %v345 = vld [vmem:[#allocation2 + $0x830] sm:$0xff]
    %v346 = vld [vmem:[#allocation2 + $0x838] sm:$0xff]
    %v347 = vld [vmem:[#allocation2 + $0x840] sm:$0xff]
    %v348 = vld [vmem:[#allocation2 + $0x848] sm:$0xff]
    %v349 = vld [vmem:[#allocation2 + $0x850] sm:$0xff]
    %v350 = vld [vmem:[#allocation2 + $0x858] sm:$0xff]
    %v351 = vld [vmem:[#allocation2 + $0x860] sm:$0xff]
    %v352 = vld [vmem:[#allocation2 + $0x868] sm:$0xff]
    %v353 = vld [vmem:[#allocation2 + $0x870] sm:$0xff]
    %v354 = vld [vmem:[#allocation2 + $0x878] sm:$0xff]
    %v355 = vld [vmem:[#allocation2 + $0x880] sm:$0xff]
    %v356 = vld [vmem:[#allocation2 + $0x888] sm:$0xff]
    %v357 = vld [vmem:[#allocation2 + $0x890] sm:$0xff]
    %v358 = vld [vmem:[#allocation2 + $0x898] sm:$0xff]
    %v359 = vld [vmem:[#allocation2 + $0x8a0] sm:$0xff]
    %v360 = vld [vmem:[#allocation2 + $0x8a8] sm:$0xff]
    %v361 = vld [vmem:[#allocation2 + $0x8b0] sm:$0xff]
    %v362 = vld [vmem:[#allocation2 + $0x8b8] sm:$0xff]
    %v363 = vld [vmem:[#allocation2 + $0x8c0] sm:$0xff]
    %v364 = vld [vmem:[#allocation2 + $0x8c8] sm:$0xff]
    %v365 = vld [vmem:[#allocation2 + $0x8d0] sm:$0xff]
    %v366 = vld [vmem:[#allocation2 + $0x8d8] sm:$0xff]
    %v367 = vld [vmem:[#allocation2 + $0x8e0] sm:$0xff]
    %v368 = vld [vmem:[#allocation2 + $0x8e8] sm:$0xff]
    %v369 = vld [vmem:[#allocation2 + $0x8f0] sm:$0xff]
    %v370 = vld [vmem:[#allocation2 + $0x8f8] sm:$0xff]
    %v371 = vld [vmem:[#allocation2 + $0x900] sm:$0xff]
    %v372 = vld [vmem:[#allocation2 + $0x908] sm:$0xff]
    %v373 = vld [vmem:[#allocation2 + $0x910] sm:$0xff]
    %v374 = vld [vmem:[#allocation2 + $0x918] sm:$0xff]
    %v375 = vld [vmem:[#allocation2 + $0x920] sm:$0xff]
    %v376 = vld [vmem:[#allocation2 + $0x928] sm:$0xff]
    %v377 = vld [vmem:[#allocation2 + $0x930] sm:$0xff]
    %v378 = vld [vmem:[#allocation2 + $0x938] sm:$0xff]
    %v379 = vld [vmem:[#allocation2 + $0x940] sm:$0xff]
    %v380 = vld [vmem:[#allocation2 + $0x948] sm:$0xff]
    %v381 = vld [vmem:[#allocation2 + $0x950] sm:$0xff]
    %v382 = vld [vmem:[#allocation2 + $0x958] sm:$0xff]
    %v383 = vld [vmem:[#allocation2 + $0x960] sm:$0xff]
    %v384 = vld [vmem:[#allocation2 + $0x968] sm:$0xff]
    %v385 = vld [vmem:[#allocation2 + $0x970] sm:$0xff]
    %v386 = vld [vmem:[#allocation2 + $0x978] sm:$0xff]
    %v387 = vld [vmem:[#allocation2 + $0x980] sm:$0xff]
    %v388 = vld [vmem:[#allocation2 + $0x988] sm:$0xff]
    %v389 = vld [vmem:[#allocation2 + $0x990] sm:$0xff]
    %v390 = vld [vmem:[#allocation2 + $0x998] sm:$0xff]
    %v391 = vld [vmem:[#allocation2 + $0x9a0] sm:$0xff]
    %v392 = vld [vmem:[#allocation2 + $0x9a8] sm:$0xff]
    %v393 = vld [vmem:[#allocation2 + $0x9b0] sm:$0xff]
    %v394 = vld [vmem:[#allocation2 + $0x9b8] sm:$0xff]
    %v395 = vld [vmem:[#allocation2 + $0x9c0] sm:$0xff]
    %v396 = vld [vmem:[#allocation2 + $0x9c8] sm:$0xff]
    %v397 = vld [vmem:[#allocation2 + $0x9d0] sm:$0xff]
    %v398 = vld [vmem:[#allocation2 + $0x9d8] sm:$0xff]
    %v399 = vld [vmem:[#allocation2 + $0x9e0] sm:$0xff]
    %v400 = vld [vmem:[#allocation2 + $0x9e8] sm:$0xff]
    %v401 = vld [vmem:[#allocation2 + $0x9f0] sm:$0xff]
    %v402 = vld [vmem:[#allocation2 + $0x9f8] sm:$0xff]
    %v403 = vld [vmem:[#allocation2 + $0xa00] sm:$0xff]
    %v404 = vld [vmem:[#allocation2 + $0xa08] sm:$0xff]
    %v405 = vld [vmem:[#allocation2 + $0xa10] sm:$0xff]
    %v406 = vld [vmem:[#allocation2 + $0xa18] sm:$0xff]
    %v407 = vld [vmem:[#allocation2 + $0xa20] sm:$0xff]
    %v408 = vld [vmem:[#allocation2 + $0xa28] sm:$0xff]
    %v409 = vld [vmem:[#allocation2 + $0xa30] sm:$0xff]
    %v410 = vld [vmem:[#allocation2 + $0xa38] sm:$0xff]
    %v411 = vld [vmem:[#allocation2 + $0xa40] sm:$0xff]
    %v412 = vld [vmem:[#allocation2 + $0xa48] sm:$0xff]
    %v413 = vld [vmem:[#allocation2 + $0xa50] sm:$0xff]
    %v414 = vld [vmem:[#allocation2 + $0xa58] sm:$0xff]
    %v415 = vld [vmem:[#allocation2 + $0xa60] sm:$0xff]
    %v416 = vld [vmem:[#allocation2 + $0xa68] sm:$0xff]
    %v417 = vld [vmem:[#allocation2 + $0xa70] sm:$0xff]
    %v418 = vld [vmem:[#allocation2 + $0xa78] sm:$0xff]
    %v419 = vld [vmem:[#allocation2 + $0xa80] sm:$0xff]
    %v420 = vld [vmem:[#allocation2 + $0xa88] sm:$0xff]
    %v421 = vld [vmem:[#allocation2 + $0xa90] sm:$0xff]
    %v422 = vld [vmem:[#allocation2 + $0xa98] sm:$0xff]
    %v423 = vld [vmem:[#allocation2 + $0xaa0] sm:$0xff]
    %v424 = vld [vmem:[#allocation2 + $0xaa8] sm:$0xff]
    %v425 = vld [vmem:[#allocation2 + $0xab0] sm:$0xff]
    %v426 = vld [vmem:[#allocation2 + $0xab8] sm:$0xff]
    %v427 = vld [vmem:[#allocation2 + $0xac0] sm:$0xff]
    %v428 = vld [vmem:[#allocation2 + $0xac8] sm:$0xff]
    %v429 = vld [vmem:[#allocation2 + $0xad0] sm:$0xff]
    %v430 = vld [vmem:[#allocation2 + $0xad8] sm:$0xff]
    %v431 = vld [vmem:[#allocation2 + $0xae0] sm:$0xff]
    %v432 = vld [vmem:[#allocation2 + $0xae8] sm:$0xff]
    %v433 = vld [vmem:[#allocation2 + $0xaf0] sm:$0xff]
    %v434 = vld [vmem:[#allocation2 + $0xaf8] sm:$0xff]
    %v435 = vld [vmem:[#allocation2 + $0xb00] sm:$0xff]
    %v436 = vld [vmem:[#allocation2 + $0xb08] sm:$0xff]
    %v437 = vld [vmem:[#allocation2 + $0xb10] sm:$0xff]
    %v438 = vld [vmem:[#allocation2 + $0xb18] sm:$0xff]
    %v439 = vld [vmem:[#allocation2 + $0xb20] sm:$0xff]
    %v440 = vld [vmem:[#allocation2 + $0xb28] sm:$0xff]
    %v441 = vld [vmem:[#allocation2 + $0xb30] sm:$0xff]
    %v442 = vld [vmem:[#allocation2 + $0xb38] sm:$0xff]
    %v443 = vld [vmem:[#allocation2 + $0xb40] sm:$0xff]
    %v444 = vld [vmem:[#allocation2 + $0xb48] sm:$0xff]
    %v445 = vld [vmem:[#allocation2 + $0xb50] sm:$0xff]
    %v446 = vld [vmem:[#allocation2 + $0xb58] sm:$0xff]
    %v447 = vld [vmem:[#allocation2 + $0xb60] sm:$0xff]
    %v448 = vld [vmem:[#allocation2 + $0xb68] sm:$0xff]
    %v449 = vld [vmem:[#allocation2 + $0xb70] sm:$0xff]
    %v450 = vld [vmem:[#allocation2 + $0xb78] sm:$0xff]
    %v451 = vld [vmem:[#allocation2 + $0xb80] sm:$0xff]
    %v452 = vld [vmem:[#allocation2 + $0xb88] sm:$0xff]
    %v453 = vld [vmem:[#allocation2 + $0xb90] sm:$0xff]
    %v454 = vld [vmem:[#allocation2 + $0xb98] sm:$0xff]
    %v455 = vld [vmem:[#allocation2 + $0xba0] sm:$0xff]
    %v456 = vld [vmem:[#allocation2 + $0xba8] sm:$0xff]
    %v457 = vld [vmem:[#allocation2 + $0xbb0] sm:$0xff]
    %v458 = vld [vmem:[#allocation2 + $0xbb8] sm:$0xff]
    %v459 = vld [vmem:[#allocation2 + $0xbc0] sm:$0xff]
    %v460 = vld [vmem:[#allocation2 + $0xbc8] sm:$0xff]
    %v461 = vld [vmem:[#allocation2 + $0xbd0] sm:$0xff]
    %v462 = vld [vmem:[#allocation2 + $0xbd8] sm:$0xff]
    %v463 = vld [vmem:[#allocation2 + $0xbe0] sm:$0xff]
    %v464 = vld [vmem:[#allocation2 + $0xbe8] sm:$0xff]
    %v465 = vld [vmem:[#allocation2 + $0xbf0] sm:$0xff]
    %v466 = vld [vmem:[#allocation2 + $0xbf8] sm:$0xff]
    %v467 = vld [vmem:[#allocation2 + $0xc00] sm:$0xff]
    %v468 = vld [vmem:[#allocation2 + $0xc08] sm:$0xff]
    %v469 = vld [vmem:[#allocation2 + $0xc10] sm:$0xff]
    %v470 = vld [vmem:[#allocation2 + $0xc18] sm:$0xff]
    %v471 = vld [vmem:[#allocation2 + $0xc20] sm:$0xff]
    %v472 = vld [vmem:[#allocation2 + $0xc28] sm:$0xff]
    %v473 = vld [vmem:[#allocation2 + $0xc30] sm:$0xff]
    %v474 = vld [vmem:[#allocation2 + $0xc38] sm:$0xff]
    %v475 = vld [vmem:[#allocation2 + $0xc40] sm:$0xff]
    %v476 = vld [vmem:[#allocation2 + $0xc48] sm:$0xff]
    %v477 = vld [vmem:[#allocation2 + $0xc50] sm:$0xff]
    %v478 = vld [vmem:[#allocation2 + $0xc58] sm:$0xff]
    %v479 = vld [vmem:[#allocation2 + $0xc60] sm:$0xff]
    %v480 = vld [vmem:[#allocation2 + $0xc68] sm:$0xff]
    %v481 = vld [vmem:[#allocation2 + $0xc70] sm:$0xff]
    %v482 = vld [vmem:[#allocation2 + $0xc78] sm:$0xff]
    %v483 = vld [vmem:[#allocation2 + $0xc80] sm:$0xff]
    %v484 = vld [vmem:[#allocation2 + $0xc88] sm:$0xff]
    %v485 = vld [vmem:[#allocation2 + $0xc90] sm:$0xff]
    %v486 = vld [vmem:[#allocation2 + $0xc98] sm:$0xff]
    %v487 = vld [vmem:[#allocation2 + $0xca0] sm:$0xff]
    %v488 = vld [vmem:[#allocation2 + $0xca8] sm:$0xff]
    %v489 = vld [vmem:[#allocation2 + $0xcb0] sm:$0xff]
    %v490 = vld [vmem:[#allocation2 + $0xcb8] sm:$0xff]
    %v491 = vld [vmem:[#allocation2 + $0xcc0] sm:$0xff]
    %v492 = vld [vmem:[#allocation2 + $0xcc8] sm:$0xff]
    %v493 = vld [vmem:[#allocation2 + $0xcd0] sm:$0xff]
    %v494 = vld [vmem:[#allocation2 + $0xcd8] sm:$0xff]
    %v495 = vld [vmem:[#allocation2 + $0xce0] sm:$0xff]
    %v496 = vld [vmem:[#allocation2 + $0xce8] sm:$0xff]
    %v497 = vld [vmem:[#allocation2 + $0xcf0] sm:$0xff]
    %v498 = vld [vmem:[#allocation2 + $0xcf8] sm:$0xff]
    %v499 = vld [vmem:[#allocation2 + $0xd00] sm:$0xff]
    %v500 = vld [vmem:[#allocation2 + $0xd08] sm:$0xff]
    %v501 = vld [vmem:[#allocation2 + $0xd10] sm:$0xff]
    %v502 = vld [vmem:[#allocation2 + $0xd18] sm:$0xff]
    %v503 = vld [vmem:[#allocation2 + $0xd20] sm:$0xff]
    %v504 = vld [vmem:[#allocation2 + $0xd28] sm:$0xff]
    %v505 = vld [vmem:[#allocation2 + $0xd30] sm:$0xff]
    %v506 = vld [vmem:[#allocation2 + $0xd38] sm:$0xff]
    %v507 = vld [vmem:[#allocation2 + $0xd40] sm:$0xff]
    %v508 = vld [vmem:[#allocation2 + $0xd48] sm:$0xff]
    %v509 = vld [vmem:[#allocation2 + $0xd50] sm:$0xff]
    %v510 = vld [vmem:[#allocation2 + $0xd58] sm:$0xff]
    %v511 = vld [vmem:[#allocation2 + $0xd60] sm:$0xff]
    %v512 = vld [vmem:[#allocation2 + $0xd68] sm:$0xff]
    %v513 = vld [vmem:[#allocation2 + $0xd70] sm:$0xff]
    %v514 = vld [vmem:[#allocation2 + $0xd78] sm:$0xff]
    %v515 = vld [vmem:[#allocation2 + $0xd80] sm:$0xff]
    %v516 = vld [vmem:[#allocation2 + $0xd88] sm:$0xff]
    %v517 = vld [vmem:[#allocation2 + $0xd90] sm:$0xff]
    %v518 = vld [vmem:[#allocation2 + $0xd98] sm:$0xff]
    %v519 = vld [vmem:[#allocation2 + $0xda0] sm:$0xff]
    %v520 = vld [vmem:[#allocation2 + $0xda8] sm:$0xff]
    %v521 = vld [vmem:[#allocation2 + $0xdb0] sm:$0xff]
    %v522 = vld [vmem:[#allocation2 + $0xdb8] sm:$0xff]
    %v523 = vld [vmem:[#allocation2 + $0xdc0] sm:$0xff]
    %v524 = vld [vmem:[#allocation2 + $0xdc8] sm:$0xff]
    %v525 = vld [vmem:[#allocation2 + $0xdd0] sm:$0xff]
    %v526 = vld [vmem:[#allocation2 + $0xdd8] sm:$0xff]
    %v527 = vld [vmem:[#allocation2 + $0xde0] sm:$0xff]
    %v528 = vld [vmem:[#allocation2 + $0xde8] sm:$0xff]
    %v529 = vld [vmem:[#allocation2 + $0xdf0] sm:$0xff]
    %v530 = vld [vmem:[#allocation2 + $0xdf8] sm:$0xff]
    %v531 = vld [vmem:[#allocation2 + $0xe00] sm:$0xff]
    %v532 = vld [vmem:[#allocation2 + $0xe08] sm:$0xff]
    %v533 = vld [vmem:[#allocation2 + $0xe10] sm:$0xff]
    %v534 = vld [vmem:[#allocation2 + $0xe18] sm:$0xff]
    %v535 = vld [vmem:[#allocation2 + $0xe20] sm:$0xff]
    %v536 = vld [vmem:[#allocation2 + $0xe28] sm:$0xff]
    %v537 = vld [vmem:[#allocation2 + $0xe30] sm:$0xff]
    %v538 = vld [vmem:[#allocation2 + $0xe38] sm:$0xff]
    %v539 = vld [vmem:[#allocation2 + $0xe40] sm:$0xff]
    %v540 = vld [vmem:[#allocation2 + $0xe48] sm:$0xff]
    %v541 = vld [vmem:[#allocation2 + $0xe50] sm:$0xff]
    %v542 = vld [vmem:[#allocation2 + $0xe58] sm:$0xff]
    %v543 = vld [vmem:[#allocation2 + $0xe60] sm:$0xff]
    %v544 = vld [vmem:[#allocation2 + $0xe68] sm:$0xff]
    %v545 = vld [vmem:[#allocation2 + $0xe70] sm:$0xff]
    %v546 = vld [vmem:[#allocation2 + $0xe78] sm:$0xff]
    %v547 = vld [vmem:[#allocation2 + $0xe80] sm:$0xff]
    %v548 = vld [vmem:[#allocation2 + $0xe88] sm:$0xff]
    %v549 = vld [vmem:[#allocation2 + $0xe90] sm:$0xff]
    %v550 = vld [vmem:[#allocation2 + $0xe98] sm:$0xff]
    %v551 = vld [vmem:[#allocation2 + $0xea0] sm:$0xff]
    %v552 = vld [vmem:[#allocation2 + $0xea8] sm:$0xff]
    %v553 = vld [vmem:[#allocation2 + $0xeb0] sm:$0xff]
    %v554 = vld [vmem:[#allocation2 + $0xeb8] sm:$0xff]
    %v555 = vld [vmem:[#allocation2 + $0xec0] sm:$0xff]
    %v556 = vld [vmem:[#allocation2 + $0xec8] sm:$0xff]
    %v557 = vld [vmem:[#allocation2 + $0xed0] sm:$0xff]
    %v558 = vld [vmem:[#allocation2 + $0xed8] sm:$0xff]
    %v559 = vld [vmem:[#allocation2 + $0xee0] sm:$0xff]
    %v560 = vld [vmem:[#allocation2 + $0xee8] sm:$0xff]
    %v561 = vld [vmem:[#allocation2 + $0xef0] sm:$0xff]
    %v562 = vld [vmem:[#allocation2 + $0xef8] sm:$0xff]
    %v563 = vld [vmem:[#allocation2 + $0xf00] sm:$0xff]
    %v564 = vld [vmem:[#allocation2 + $0xf08] sm:$0xff]
    %v565 = vld [vmem:[#allocation2 + $0xf10] sm:$0xff]
    %v566 = vld [vmem:[#allocation2 + $0xf18] sm:$0xff]
    %v567 = vld [vmem:[#allocation2 + $0xf20] sm:$0xff]
    %v568 = vld [vmem:[#allocation2 + $0xf28] sm:$0xff]
    %v569 = vld [vmem:[#allocation2 + $0xf30] sm:$0xff]
    %v570 = vld [vmem:[#allocation2 + $0xf38] sm:$0xff]
    %v571 = vld [vmem:[#allocation2 + $0xf40] sm:$0xff]
    %v572 = vld [vmem:[#allocation2 + $0xf48] sm:$0xff]
    %v573 = vld [vmem:[#allocation2 + $0xf50] sm:$0xff]
    %v574 = vld [vmem:[#allocation2 + $0xf58] sm:$0xff]
    %v575 = vld [vmem:[#allocation2 + $0xf60] sm:$0xff]
    %v576 = vld [vmem:[#allocation2 + $0xf68] sm:$0xff]
    %v577 = vld [vmem:[#allocation2 + $0xf70] sm:$0xff]
    %v578 = vld [vmem:[#allocation2 + $0xf78] sm:$0xff]
    %v579 = vld [vmem:[#allocation2 + $0xf80] sm:$0xff]
    %v580 = vld [vmem:[#allocation2 + $0xf88] sm:$0xff]
    %v581 = vld [vmem:[#allocation2 + $0xf90] sm:$0xff]
    %v582 = vld [vmem:[#allocation2 + $0xf98] sm:$0xff]
    %v583 = vld [vmem:[#allocation2 + $0xfa0] sm:$0xff]
    %v584 = vld [vmem:[#allocation2 + $0xfa8] sm:$0xff]
    %v585 = vld [vmem:[#allocation2 + $0xfb0] sm:$0xff]
    %v586 = vld [vmem:[#allocation2 + $0xfb8] sm:$0xff]
    %v587 = vld [vmem:[#allocation2 + $0xfc0] sm:$0xff]
    %v588 = vld [vmem:[#allocation2 + $0xfc8] sm:$0xff]
    %v589 = vld [vmem:[#allocation2 + $0xfd0] sm:$0xff]
    %v590 = vld [vmem:[#allocation2 + $0xfd8] sm:$0xff]
    %v591 = vld [vmem:[#allocation2 + $0xfe0] sm:$0xff]
    %v592 = vld [vmem:[#allocation2 + $0xfe8] sm:$0xff]
    %v593 = vld [vmem:[#allocation2 + $0xff0] sm:$0xff]
    %v594 = vld [vmem:[#allocation2 + $0xff8] sm:$0xff]
    %v595 = vld [vmem:[#allocation4] sm:$0xff]
    %v597 = vperm.slane %v595, 0
    %v598 = vperm.slane %v595, 1
    %v599 = vperm.slane %v595, 2
    %v600 = vperm.slane %v595, 3
    %v601 = vperm.slane %v595, 4
    %v602 = vperm.slane %v595, 5
    %v603 = vperm.slane %v595, 6
    %v604 = vperm.slane %v595, 7
    %v617 = vunpack.c.l.b16 %v79
    %v618 = vunpack.c.h.b16 %v79
    %v619 = vunpack.c.l.b16 %v80
    %v620 = vunpack.c.h.b16 %v80
    %v621 = vunpack.c.l.b16 %v81
    %v622 = vunpack.c.h.b16 %v81
    %v623 = vunpack.c.l.b16 %v82
    %v624 = vunpack.c.h.b16 %v82
    %v625 = vpack.c.b16 %v617, %v617
    %v626 = vpack.c.b16 %v618, %v618
    %v627 = vpack.c.b16 %v619, %v619
    %v628 = vpack.c.b16 %v620, %v620
    %v629 = vpack.c.b16 %v621, %v621
    %v630 = vpack.c.b16 %v622, %v622
    %v631 = vpack.c.b16 %v623, %v623
    %v632 = vpack.c.b16 %v624, %v624
    %v1153 = vunpack.c.l.b16 %v83
    %v1154 = vunpack.c.h.b16 %v83
    %v1155 = vunpack.c.l.b16 %v84
    %v1156 = vunpack.c.h.b16 %v84
    %v1157 = vunpack.c.l.b16 %v85
    %v1158 = vunpack.c.h.b16 %v85
    %v1159 = vunpack.c.l.b16 %v86
    %v1160 = vunpack.c.h.b16 %v86
    %v1161 = vunpack.c.l.b16 %v87
    %v1162 = vunpack.c.h.b16 %v87
    %v1163 = vunpack.c.l.b16 %v88
    %v1164 = vunpack.c.h.b16 %v88
    %v1165 = vunpack.c.l.b16 %v89
    %v1166 = vunpack.c.h.b16 %v89
    %v1167 = vunpack.c.l.b16 %v90
    %v1168 = vunpack.c.h.b16 %v90
    %v1169 = vunpack.c.l.b16 %v91
    %v1170 = vunpack.c.h.b16 %v91
    %v1171 = vunpack.c.l.b16 %v92
    %v1172 = vunpack.c.h.b16 %v92
    %v1173 = vunpack.c.l.b16 %v93
    %v1174 = vunpack.c.h.b16 %v93
    %v1175 = vunpack.c.l.b16 %v94
    %v1176 = vunpack.c.h.b16 %v94
    %v1177 = vunpack.c.l.b16 %v95
    %v1178 = vunpack.c.h.b16 %v95
    %v1179 = vunpack.c.l.b16 %v96
    %v1180 = vunpack.c.h.b16 %v96
    %v1181 = vunpack.c.l.b16 %v97
    %v1182 = vunpack.c.h.b16 %v97
    %v1183 = vunpack.c.l.b16 %v98
    %v1184 = vunpack.c.h.b16 %v98
    %v1185 = vunpack.c.l.b16 %v99
    %v1186 = vunpack.c.h.b16 %v99
    %v1187 = vunpack.c.l.b16 %v100
    %v1188 = vunpack.c.h.b16 %v100
    %v1189 = vunpack.c.l.b16 %v101
    %v1190 = vunpack.c.h.b16 %v101
    %v1191 = vunpack.c.l.b16 %v102
    %v1192 = vunpack.c.h.b16 %v102
    %v1193 = vunpack.c.l.b16 %v103
    %v1194 = vunpack.c.h.b16 %v103
    %v1195 = vunpack.c.l.b16 %v104
    %v1196 = vunpack.c.h.b16 %v104
    %v1197 = vunpack.c.l.b16 %v105
    %v1198 = vunpack.c.h.b16 %v105
    %v1199 = vunpack.c.l.b16 %v106
    %v1200 = vunpack.c.h.b16 %v106
    %v1201 = vunpack.c.l.b16 %v107
    %v1202 = vunpack.c.h.b16 %v107
    %v1203 = vunpack.c.l.b16 %v108
    %v1204 = vunpack.c.h.b16 %v108
    %v1205 = vunpack.c.l.b16 %v109
    %v1206 = vunpack.c.h.b16 %v109
    %v1207 = vunpack.c.l.b16 %v110
    %v1208 = vunpack.c.h.b16 %v110
    %v1209 = vunpack.c.l.b16 %v111
    %v1210 = vunpack.c.h.b16 %v111
    %v1211 = vunpack.c.l.b16 %v112
    %v1212 = vunpack.c.h.b16 %v112
    %v1213 = vunpack.c.l.b16 %v113
    %v1214 = vunpack.c.h.b16 %v113
    %v1215 = vunpack.c.l.b16 %v114
    %v1216 = vunpack.c.h.b16 %v114
    %v1217 = vunpack.c.l.b16 %v115
    %v1218 = vunpack.c.h.b16 %v115
    %v1219 = vunpack.c.l.b16 %v116
    %v1220 = vunpack.c.h.b16 %v116
    %v1221 = vunpack.c.l.b16 %v117
    %v1222 = vunpack.c.h.b16 %v117
    %v1223 = vunpack.c.l.b16 %v118
    %v1224 = vunpack.c.h.b16 %v118
    %v1225 = vunpack.c.l.b16 %v119
    %v1226 = vunpack.c.h.b16 %v119
    %v1227 = vunpack.c.l.b16 %v120
    %v1228 = vunpack.c.h.b16 %v120
    %v1229 = vunpack.c.l.b16 %v121
    %v1230 = vunpack.c.h.b16 %v121
    %v1231 = vunpack.c.l.b16 %v122
    %v1232 = vunpack.c.h.b16 %v122
    %v1233 = vunpack.c.l.b16 %v123
    %v1234 = vunpack.c.h.b16 %v123
    %v1235 = vunpack.c.l.b16 %v124
    %v1236 = vunpack.c.h.b16 %v124
    %v1237 = vunpack.c.l.b16 %v125
    %v1238 = vunpack.c.h.b16 %v125
    %v1239 = vunpack.c.l.b16 %v126
    %v1240 = vunpack.c.h.b16 %v126
    %v1241 = vunpack.c.l.b16 %v127
    %v1242 = vunpack.c.h.b16 %v127
    %v1243 = vunpack.c.l.b16 %v128
    %v1244 = vunpack.c.h.b16 %v128
    %v1245 = vunpack.c.l.b16 %v129
    %v1246 = vunpack.c.h.b16 %v129
    %v1247 = vunpack.c.l.b16 %v130
    %v1248 = vunpack.c.h.b16 %v130
    %v1249 = vunpack.c.l.b16 %v131
    %v1250 = vunpack.c.h.b16 %v131
    %v1251 = vunpack.c.l.b16 %v132
    %v1252 = vunpack.c.h.b16 %v132
    %v1253 = vunpack.c.l.b16 %v133
    %v1254 = vunpack.c.h.b16 %v133
    %v1255 = vunpack.c.l.b16 %v134
    %v1256 = vunpack.c.h.b16 %v134
    %v1257 = vunpack.c.l.b16 %v135
    %v1258 = vunpack.c.h.b16 %v135
    %v1259 = vunpack.c.l.b16 %v136
    %v1260 = vunpack.c.h.b16 %v136
    %v1261 = vunpack.c.l.b16 %v137
    %v1262 = vunpack.c.h.b16 %v137
    %v1263 = vunpack.c.l.b16 %v138
    %v1264 = vunpack.c.h.b16 %v138
    %v1265 = vunpack.c.l.b16 %v139
    %v1266 = vunpack.c.h.b16 %v139
    %v1267 = vunpack.c.l.b16 %v140
    %v1268 = vunpack.c.h.b16 %v140
    %v1269 = vunpack.c.l.b16 %v141
    %v1270 = vunpack.c.h.b16 %v141
    %v1271 = vunpack.c.l.b16 %v142
    %v1272 = vunpack.c.h.b16 %v142
    %v1273 = vunpack.c.l.b16 %v143
    %v1274 = vunpack.c.h.b16 %v143
    %v1275 = vunpack.c.l.b16 %v144
    %v1276 = vunpack.c.h.b16 %v144
    %v1277 = vunpack.c.l.b16 %v145
    %v1278 = vunpack.c.h.b16 %v145
    %v1279 = vunpack.c.l.b16 %v146
    %v1280 = vunpack.c.h.b16 %v146
    %v1281 = vunpack.c.l.b16 %v147
    %v1282 = vunpack.c.h.b16 %v147
    %v1283 = vunpack.c.l.b16 %v148
    %v1284 = vunpack.c.h.b16 %v148
    %v1285 = vunpack.c.l.b16 %v149
    %v1286 = vunpack.c.h.b16 %v149
    %v1287 = vunpack.c.l.b16 %v150
    %v1288 = vunpack.c.h.b16 %v150
    %v1289 = vunpack.c.l.b16 %v151
    %v1290 = vunpack.c.h.b16 %v151
    %v1291 = vunpack.c.l.b16 %v152
    %v1292 = vunpack.c.h.b16 %v152
    %v1293 = vunpack.c.l.b16 %v153
    %v1294 = vunpack.c.h.b16 %v153
    %v1295 = vunpack.c.l.b16 %v154
    %v1296 = vunpack.c.h.b16 %v154
    %v1297 = vunpack.c.l.b16 %v155
    %v1298 = vunpack.c.h.b16 %v155
    %v1299 = vunpack.c.l.b16 %v156
    %v1300 = vunpack.c.h.b16 %v156
    %v1301 = vunpack.c.l.b16 %v157
    %v1302 = vunpack.c.h.b16 %v157
    %v1303 = vunpack.c.l.b16 %v158
    %v1304 = vunpack.c.h.b16 %v158
    %v1305 = vunpack.c.l.b16 %v159
    %v1306 = vunpack.c.h.b16 %v159
    %v1307 = vunpack.c.l.b16 %v160
    %v1308 = vunpack.c.h.b16 %v160
    %v1309 = vunpack.c.l.b16 %v161
    %v1310 = vunpack.c.h.b16 %v161
    %v1311 = vunpack.c.l.b16 %v162
    %v1312 = vunpack.c.h.b16 %v162
    %v1313 = vunpack.c.l.b16 %v163
    %v1314 = vunpack.c.h.b16 %v163
    %v1315 = vunpack.c.l.b16 %v164
    %v1316 = vunpack.c.h.b16 %v164
    %v1317 = vunpack.c.l.b16 %v165
    %v1318 = vunpack.c.h.b16 %v165
    %v1319 = vunpack.c.l.b16 %v166
    %v1320 = vunpack.c.h.b16 %v166
    %v1321 = vunpack.c.l.b16 %v167
    %v1322 = vunpack.c.h.b16 %v167
    %v1323 = vunpack.c.l.b16 %v168
    %v1324 = vunpack.c.h.b16 %v168
    %v1325 = vunpack.c.l.b16 %v169
    %v1326 = vunpack.c.h.b16 %v169
    %v1327 = vunpack.c.l.b16 %v170
    %v1328 = vunpack.c.h.b16 %v170
    %v1329 = vunpack.c.l.b16 %v171
    %v1330 = vunpack.c.h.b16 %v171
    %v1331 = vunpack.c.l.b16 %v172
    %v1332 = vunpack.c.h.b16 %v172
    %v1333 = vunpack.c.l.b16 %v173
    %v1334 = vunpack.c.h.b16 %v173
    %v1335 = vunpack.c.l.b16 %v174
    %v1336 = vunpack.c.h.b16 %v174
    %v1337 = vunpack.c.l.b16 %v175
    %v1338 = vunpack.c.h.b16 %v175
    %v1339 = vunpack.c.l.b16 %v176
    %v1340 = vunpack.c.h.b16 %v176
    %v1341 = vunpack.c.l.b16 %v177
    %v1342 = vunpack.c.h.b16 %v177
    %v1343 = vunpack.c.l.b16 %v178
    %v1344 = vunpack.c.h.b16 %v178
    %v1345 = vunpack.c.l.b16 %v179
    %v1346 = vunpack.c.h.b16 %v179
    %v1347 = vunpack.c.l.b16 %v180
    %v1348 = vunpack.c.h.b16 %v180
    %v1349 = vunpack.c.l.b16 %v181
    %v1350 = vunpack.c.h.b16 %v181
    %v1351 = vunpack.c.l.b16 %v182
    %v1352 = vunpack.c.h.b16 %v182
    %v1353 = vunpack.c.l.b16 %v183
    %v1354 = vunpack.c.h.b16 %v183
    %v1355 = vunpack.c.l.b16 %v184
    %v1356 = vunpack.c.h.b16 %v184
    %v1357 = vunpack.c.l.b16 %v185
    %v1358 = vunpack.c.h.b16 %v185
    %v1359 = vunpack.c.l.b16 %v186
    %v1360 = vunpack.c.h.b16 %v186
    %v1361 = vunpack.c.l.b16 %v187
    %v1362 = vunpack.c.h.b16 %v187
    %v1363 = vunpack.c.l.b16 %v188
    %v1364 = vunpack.c.h.b16 %v188
    %v1365 = vunpack.c.l.b16 %v189
    %v1366 = vunpack.c.h.b16 %v189
    %v1367 = vunpack.c.l.b16 %v190
    %v1368 = vunpack.c.h.b16 %v190
    %v1369 = vunpack.c.l.b16 %v191
    %v1370 = vunpack.c.h.b16 %v191
    %v1371 = vunpack.c.l.b16 %v192
    %v1372 = vunpack.c.h.b16 %v192
    %v1373 = vunpack.c.l.b16 %v193
    %v1374 = vunpack.c.h.b16 %v193
    %v1375 = vunpack.c.l.b16 %v194
    %v1376 = vunpack.c.h.b16 %v194
    %v1377 = vunpack.c.l.b16 %v195
    %v1378 = vunpack.c.h.b16 %v195
    %v1379 = vunpack.c.l.b16 %v196
    %v1380 = vunpack.c.h.b16 %v196
    %v1381 = vunpack.c.l.b16 %v197
    %v1382 = vunpack.c.h.b16 %v197
    %v1383 = vunpack.c.l.b16 %v198
    %v1384 = vunpack.c.h.b16 %v198
    %v1385 = vunpack.c.l.b16 %v199
    %v1386 = vunpack.c.h.b16 %v199
    %v1387 = vunpack.c.l.b16 %v200
    %v1388 = vunpack.c.h.b16 %v200
    %v1389 = vunpack.c.l.b16 %v201
    %v1390 = vunpack.c.h.b16 %v201
    %v1391 = vunpack.c.l.b16 %v202
    %v1392 = vunpack.c.h.b16 %v202
    %v1393 = vunpack.c.l.b16 %v203
    %v1394 = vunpack.c.h.b16 %v203
    %v1395 = vunpack.c.l.b16 %v204
    %v1396 = vunpack.c.h.b16 %v204
    %v1397 = vunpack.c.l.b16 %v205
    %v1398 = vunpack.c.h.b16 %v205
    %v1399 = vunpack.c.l.b16 %v206
    %v1400 = vunpack.c.h.b16 %v206
    %v1401 = vunpack.c.l.b16 %v207
    %v1402 = vunpack.c.h.b16 %v207
    %v1403 = vunpack.c.l.b16 %v208
    %v1404 = vunpack.c.h.b16 %v208
    %v1405 = vunpack.c.l.b16 %v209
    %v1406 = vunpack.c.h.b16 %v209
    %v1407 = vunpack.c.l.b16 %v210
    %v1408 = vunpack.c.h.b16 %v210
    %v1409 = vunpack.c.l.b16 %v211
    %v1410 = vunpack.c.h.b16 %v211
    %v1411 = vunpack.c.l.b16 %v212
    %v1412 = vunpack.c.h.b16 %v212
    %v1413 = vunpack.c.l.b16 %v213
    %v1414 = vunpack.c.h.b16 %v213
    %v1415 = vunpack.c.l.b16 %v214
    %v1416 = vunpack.c.h.b16 %v214
    %v1417 = vunpack.c.l.b16 %v215
    %v1418 = vunpack.c.h.b16 %v215
    %v1419 = vunpack.c.l.b16 %v216
    %v1420 = vunpack.c.h.b16 %v216
    %v1421 = vunpack.c.l.b16 %v217
    %v1422 = vunpack.c.h.b16 %v217
    %v1423 = vunpack.c.l.b16 %v218
    %v1424 = vunpack.c.h.b16 %v218
    %v1425 = vunpack.c.l.b16 %v219
    %v1426 = vunpack.c.h.b16 %v219
    %v1427 = vunpack.c.l.b16 %v220
    %v1428 = vunpack.c.h.b16 %v220
    %v1429 = vunpack.c.l.b16 %v221
    %v1430 = vunpack.c.h.b16 %v221
    %v1431 = vunpack.c.l.b16 %v222
    %v1432 = vunpack.c.h.b16 %v222
    %v1433 = vunpack.c.l.b16 %v223
    %v1434 = vunpack.c.h.b16 %v223
    %v1435 = vunpack.c.l.b16 %v224
    %v1436 = vunpack.c.h.b16 %v224
    %v1437 = vunpack.c.l.b16 %v225
    %v1438 = vunpack.c.h.b16 %v225
    %v1439 = vunpack.c.l.b16 %v226
    %v1440 = vunpack.c.h.b16 %v226
    %v1441 = vunpack.c.l.b16 %v227
    %v1442 = vunpack.c.h.b16 %v227
    %v1443 = vunpack.c.l.b16 %v228
    %v1444 = vunpack.c.h.b16 %v228
    %v1445 = vunpack.c.l.b16 %v229
    %v1446 = vunpack.c.h.b16 %v229
    %v1447 = vunpack.c.l.b16 %v230
    %v1448 = vunpack.c.h.b16 %v230
    %v1449 = vunpack.c.l.b16 %v231
    %v1450 = vunpack.c.h.b16 %v231
    %v1451 = vunpack.c.l.b16 %v232
    %v1452 = vunpack.c.h.b16 %v232
    %v1453 = vunpack.c.l.b16 %v233
    %v1454 = vunpack.c.h.b16 %v233
    %v1455 = vunpack.c.l.b16 %v234
    %v1456 = vunpack.c.h.b16 %v234
    %v1457 = vunpack.c.l.b16 %v235
    %v1458 = vunpack.c.h.b16 %v235
    %v1459 = vunpack.c.l.b16 %v236
    %v1460 = vunpack.c.h.b16 %v236
    %v1461 = vunpack.c.l.b16 %v237
    %v1462 = vunpack.c.h.b16 %v237
    %v1463 = vunpack.c.l.b16 %v238
    %v1464 = vunpack.c.h.b16 %v238
    %v1465 = vunpack.c.l.b16 %v239
    %v1466 = vunpack.c.h.b16 %v239
    %v1467 = vunpack.c.l.b16 %v240
    %v1468 = vunpack.c.h.b16 %v240
    %v1469 = vunpack.c.l.b16 %v241
    %v1470 = vunpack.c.h.b16 %v241
    %v1471 = vunpack.c.l.b16 %v242
    %v1472 = vunpack.c.h.b16 %v242
    %v1473 = vunpack.c.l.b16 %v243
    %v1474 = vunpack.c.h.b16 %v243
    %v1475 = vunpack.c.l.b16 %v244
    %v1476 = vunpack.c.h.b16 %v244
    %v1477 = vunpack.c.l.b16 %v245
    %v1478 = vunpack.c.h.b16 %v245
    %v1479 = vunpack.c.l.b16 %v246
    %v1480 = vunpack.c.h.b16 %v246
    %v1481 = vunpack.c.l.b16 %v247
    %v1482 = vunpack.c.h.b16 %v247
    %v1483 = vunpack.c.l.b16 %v248
    %v1484 = vunpack.c.h.b16 %v248
    %v1485 = vunpack.c.l.b16 %v249
    %v1486 = vunpack.c.h.b16 %v249
    %v1487 = vunpack.c.l.b16 %v250
    %v1488 = vunpack.c.h.b16 %v250
    %v1489 = vunpack.c.l.b16 %v251
    %v1490 = vunpack.c.h.b16 %v251
    %v1491 = vunpack.c.l.b16 %v252
    %v1492 = vunpack.c.h.b16 %v252
    %v1493 = vunpack.c.l.b16 %v253
    %v1494 = vunpack.c.h.b16 %v253
    %v1495 = vunpack.c.l.b16 %v254
    %v1496 = vunpack.c.h.b16 %v254
    %v1497 = vunpack.c.l.b16 %v255
    %v1498 = vunpack.c.h.b16 %v255
    %v1499 = vunpack.c.l.b16 %v256
    %v1500 = vunpack.c.h.b16 %v256
    %v1501 = vunpack.c.l.b16 %v257
    %v1502 = vunpack.c.h.b16 %v257
    %v1503 = vunpack.c.l.b16 %v258
    %v1504 = vunpack.c.h.b16 %v258
    %v1505 = vunpack.c.l.b16 %v259
    %v1506 = vunpack.c.h.b16 %v259
    %v1507 = vunpack.c.l.b16 %v260
    %v1508 = vunpack.c.h.b16 %v260
    %v1509 = vunpack.c.l.b16 %v261
    %v1510 = vunpack.c.h.b16 %v261
    %v1511 = vunpack.c.l.b16 %v262
    %v1512 = vunpack.c.h.b16 %v262
    %v1513 = vunpack.c.l.b16 %v263
    %v1514 = vunpack.c.h.b16 %v263
    %v1515 = vunpack.c.l.b16 %v264
    %v1516 = vunpack.c.h.b16 %v264
    %v1517 = vunpack.c.l.b16 %v265
    %v1518 = vunpack.c.h.b16 %v265
    %v1519 = vunpack.c.l.b16 %v266
    %v1520 = vunpack.c.h.b16 %v266
    %v1521 = vunpack.c.l.b16 %v267
    %v1522 = vunpack.c.h.b16 %v267
    %v1523 = vunpack.c.l.b16 %v268
    %v1524 = vunpack.c.h.b16 %v268
    %v1525 = vunpack.c.l.b16 %v269
    %v1526 = vunpack.c.h.b16 %v269
    %v1527 = vunpack.c.l.b16 %v270
    %v1528 = vunpack.c.h.b16 %v270
    %v1529 = vunpack.c.l.b16 %v271
    %v1530 = vunpack.c.h.b16 %v271
    %v1531 = vunpack.c.l.b16 %v272
    %v1532 = vunpack.c.h.b16 %v272
    %v1533 = vunpack.c.l.b16 %v273
    %v1534 = vunpack.c.h.b16 %v273
    %v1535 = vunpack.c.l.b16 %v274
    %v1536 = vunpack.c.h.b16 %v274
    %v1537 = vunpack.c.l.b16 %v275
    %v1538 = vunpack.c.h.b16 %v275
    %v1539 = vunpack.c.l.b16 %v276
    %v1540 = vunpack.c.h.b16 %v276
    %v1541 = vunpack.c.l.b16 %v277
    %v1542 = vunpack.c.h.b16 %v277
    %v1543 = vunpack.c.l.b16 %v278
    %v1544 = vunpack.c.h.b16 %v278
    %v1545 = vunpack.c.l.b16 %v279
    %v1546 = vunpack.c.h.b16 %v279
    %v1547 = vunpack.c.l.b16 %v280
    %v1548 = vunpack.c.h.b16 %v280
    %v1549 = vunpack.c.l.b16 %v281
    %v1550 = vunpack.c.h.b16 %v281
    %v1551 = vunpack.c.l.b16 %v282
    %v1552 = vunpack.c.h.b16 %v282
    %v1553 = vunpack.c.l.b16 %v283
    %v1554 = vunpack.c.h.b16 %v283
    %v1555 = vunpack.c.l.b16 %v284
    %v1556 = vunpack.c.h.b16 %v284
    %v1557 = vunpack.c.l.b16 %v285
    %v1558 = vunpack.c.h.b16 %v285
    %v1559 = vunpack.c.l.b16 %v286
    %v1560 = vunpack.c.h.b16 %v286
    %v1561 = vunpack.c.l.b16 %v287
    %v1562 = vunpack.c.h.b16 %v287
    %v1563 = vunpack.c.l.b16 %v288
    %v1564 = vunpack.c.h.b16 %v288
    %v1565 = vunpack.c.l.b16 %v289
    %v1566 = vunpack.c.h.b16 %v289
    %v1567 = vunpack.c.l.b16 %v290
    %v1568 = vunpack.c.h.b16 %v290
    %v1569 = vunpack.c.l.b16 %v291
    %v1570 = vunpack.c.h.b16 %v291
    %v1571 = vunpack.c.l.b16 %v292
    %v1572 = vunpack.c.h.b16 %v292
    %v1573 = vunpack.c.l.b16 %v293
    %v1574 = vunpack.c.h.b16 %v293
    %v1575 = vunpack.c.l.b16 %v294
    %v1576 = vunpack.c.h.b16 %v294
    %v1577 = vunpack.c.l.b16 %v295
    %v1578 = vunpack.c.h.b16 %v295
    %v1579 = vunpack.c.l.b16 %v296
    %v1580 = vunpack.c.h.b16 %v296
    %v1581 = vunpack.c.l.b16 %v297
    %v1582 = vunpack.c.h.b16 %v297
    %v1583 = vunpack.c.l.b16 %v298
    %v1584 = vunpack.c.h.b16 %v298
    %v1585 = vunpack.c.l.b16 %v299
    %v1586 = vunpack.c.h.b16 %v299
    %v1587 = vunpack.c.l.b16 %v300
    %v1588 = vunpack.c.h.b16 %v300
    %v1589 = vunpack.c.l.b16 %v301
    %v1590 = vunpack.c.h.b16 %v301
    %v1591 = vunpack.c.l.b16 %v302
    %v1592 = vunpack.c.h.b16 %v302
    %v1593 = vunpack.c.l.b16 %v303
    %v1594 = vunpack.c.h.b16 %v303
    %v1595 = vunpack.c.l.b16 %v304
    %v1596 = vunpack.c.h.b16 %v304
    %v1597 = vunpack.c.l.b16 %v305
    %v1598 = vunpack.c.h.b16 %v305
    %v1599 = vunpack.c.l.b16 %v306
    %v1600 = vunpack.c.h.b16 %v306
    %v1601 = vunpack.c.l.b16 %v307
    %v1602 = vunpack.c.h.b16 %v307
    %v1603 = vunpack.c.l.b16 %v308
    %v1604 = vunpack.c.h.b16 %v308
    %v1605 = vunpack.c.l.b16 %v309
    %v1606 = vunpack.c.h.b16 %v309
    %v1607 = vunpack.c.l.b16 %v310
    %v1608 = vunpack.c.h.b16 %v310
    %v1609 = vunpack.c.l.b16 %v311
    %v1610 = vunpack.c.h.b16 %v311
    %v1611 = vunpack.c.l.b16 %v312
    %v1612 = vunpack.c.h.b16 %v312
    %v1613 = vunpack.c.l.b16 %v313
    %v1614 = vunpack.c.h.b16 %v313
    %v1615 = vunpack.c.l.b16 %v314
    %v1616 = vunpack.c.h.b16 %v314
    %v1617 = vunpack.c.l.b16 %v315
    %v1618 = vunpack.c.h.b16 %v315
    %v1619 = vunpack.c.l.b16 %v316
    %v1620 = vunpack.c.h.b16 %v316
    %v1621 = vunpack.c.l.b16 %v317
    %v1622 = vunpack.c.h.b16 %v317
    %v1623 = vunpack.c.l.b16 %v318
    %v1624 = vunpack.c.h.b16 %v318
    %v1625 = vunpack.c.l.b16 %v319
    %v1626 = vunpack.c.h.b16 %v319
    %v1627 = vunpack.c.l.b16 %v320
    %v1628 = vunpack.c.h.b16 %v320
    %v1629 = vunpack.c.l.b16 %v321
    %v1630 = vunpack.c.h.b16 %v321
    %v1631 = vunpack.c.l.b16 %v322
    %v1632 = vunpack.c.h.b16 %v322
    %v1633 = vunpack.c.l.b16 %v323
    %v1634 = vunpack.c.h.b16 %v323
    %v1635 = vunpack.c.l.b16 %v324
    %v1636 = vunpack.c.h.b16 %v324
    %v1637 = vunpack.c.l.b16 %v325
    %v1638 = vunpack.c.h.b16 %v325
    %v1639 = vunpack.c.l.b16 %v326
    %v1640 = vunpack.c.h.b16 %v326
    %v1641 = vunpack.c.l.b16 %v327
    %v1642 = vunpack.c.h.b16 %v327
    %v1643 = vunpack.c.l.b16 %v328
    %v1644 = vunpack.c.h.b16 %v328
    %v1645 = vunpack.c.l.b16 %v329
    %v1646 = vunpack.c.h.b16 %v329
    %v1647 = vunpack.c.l.b16 %v330
    %v1648 = vunpack.c.h.b16 %v330
    %v1649 = vunpack.c.l.b16 %v331
    %v1650 = vunpack.c.h.b16 %v331
    %v1651 = vunpack.c.l.b16 %v332
    %v1652 = vunpack.c.h.b16 %v332
    %v1653 = vunpack.c.l.b16 %v333
    %v1654 = vunpack.c.h.b16 %v333
    %v1655 = vunpack.c.l.b16 %v334
    %v1656 = vunpack.c.h.b16 %v334
    %v1657 = vunpack.c.l.b16 %v335
    %v1658 = vunpack.c.h.b16 %v335
    %v1659 = vunpack.c.l.b16 %v336
    %v1660 = vunpack.c.h.b16 %v336
    %v1661 = vunpack.c.l.b16 %v337
    %v1662 = vunpack.c.h.b16 %v337
    %v1663 = vunpack.c.l.b16 %v338
    %v1664 = vunpack.c.h.b16 %v338
    %v1665 = vunpack.c.l.b16 %v339
    %v1666 = vunpack.c.h.b16 %v339
    %v1667 = vunpack.c.l.b16 %v340
    %v1668 = vunpack.c.h.b16 %v340
    %v1669 = vunpack.c.l.b16 %v341
    %v1670 = vunpack.c.h.b16 %v341
    %v1671 = vunpack.c.l.b16 %v342
    %v1672 = vunpack.c.h.b16 %v342
    %v1673 = vunpack.c.l.b16 %v343
    %v1674 = vunpack.c.h.b16 %v343
    %v1675 = vunpack.c.l.b16 %v344
    %v1676 = vunpack.c.h.b16 %v344
    %v1677 = vunpack.c.l.b16 %v345
    %v1678 = vunpack.c.h.b16 %v345
    %v1679 = vunpack.c.l.b16 %v346
    %v1680 = vunpack.c.h.b16 %v346
    %v1681 = vunpack.c.l.b16 %v347
    %v1682 = vunpack.c.h.b16 %v347
    %v1683 = vunpack.c.l.b16 %v348
    %v1684 = vunpack.c.h.b16 %v348
    %v1685 = vunpack.c.l.b16 %v349
    %v1686 = vunpack.c.h.b16 %v349
    %v1687 = vunpack.c.l.b16 %v350
    %v1688 = vunpack.c.h.b16 %v350
    %v1689 = vunpack.c.l.b16 %v351
    %v1690 = vunpack.c.h.b16 %v351
    %v1691 = vunpack.c.l.b16 %v352
    %v1692 = vunpack.c.h.b16 %v352
    %v1693 = vunpack.c.l.b16 %v353
    %v1694 = vunpack.c.h.b16 %v353
    %v1695 = vunpack.c.l.b16 %v354
    %v1696 = vunpack.c.h.b16 %v354
    %v1697 = vunpack.c.l.b16 %v355
    %v1698 = vunpack.c.h.b16 %v355
    %v1699 = vunpack.c.l.b16 %v356
    %v1700 = vunpack.c.h.b16 %v356
    %v1701 = vunpack.c.l.b16 %v357
    %v1702 = vunpack.c.h.b16 %v357
    %v1703 = vunpack.c.l.b16 %v358
    %v1704 = vunpack.c.h.b16 %v358
    %v1705 = vunpack.c.l.b16 %v359
    %v1706 = vunpack.c.h.b16 %v359
    %v1707 = vunpack.c.l.b16 %v360
    %v1708 = vunpack.c.h.b16 %v360
    %v1709 = vunpack.c.l.b16 %v361
    %v1710 = vunpack.c.h.b16 %v361
    %v1711 = vunpack.c.l.b16 %v362
    %v1712 = vunpack.c.h.b16 %v362
    %v1713 = vunpack.c.l.b16 %v363
    %v1714 = vunpack.c.h.b16 %v363
    %v1715 = vunpack.c.l.b16 %v364
    %v1716 = vunpack.c.h.b16 %v364
    %v1717 = vunpack.c.l.b16 %v365
    %v1718 = vunpack.c.h.b16 %v365
    %v1719 = vunpack.c.l.b16 %v366
    %v1720 = vunpack.c.h.b16 %v366
    %v1721 = vunpack.c.l.b16 %v367
    %v1722 = vunpack.c.h.b16 %v367
    %v1723 = vunpack.c.l.b16 %v368
    %v1724 = vunpack.c.h.b16 %v368
    %v1725 = vunpack.c.l.b16 %v369
    %v1726 = vunpack.c.h.b16 %v369
    %v1727 = vunpack.c.l.b16 %v370
    %v1728 = vunpack.c.h.b16 %v370
    %v1729 = vunpack.c.l.b16 %v371
    %v1730 = vunpack.c.h.b16 %v371
    %v1731 = vunpack.c.l.b16 %v372
    %v1732 = vunpack.c.h.b16 %v372
    %v1733 = vunpack.c.l.b16 %v373
    %v1734 = vunpack.c.h.b16 %v373
    %v1735 = vunpack.c.l.b16 %v374
    %v1736 = vunpack.c.h.b16 %v374
    %v1737 = vunpack.c.l.b16 %v375
    %v1738 = vunpack.c.h.b16 %v375
    %v1739 = vunpack.c.l.b16 %v376
    %v1740 = vunpack.c.h.b16 %v376
    %v1741 = vunpack.c.l.b16 %v377
    %v1742 = vunpack.c.h.b16 %v377
    %v1743 = vunpack.c.l.b16 %v378
    %v1744 = vunpack.c.h.b16 %v378
    %v1745 = vunpack.c.l.b16 %v379
    %v1746 = vunpack.c.h.b16 %v379
    %v1747 = vunpack.c.l.b16 %v380
    %v1748 = vunpack.c.h.b16 %v380
    %v1749 = vunpack.c.l.b16 %v381
    %v1750 = vunpack.c.h.b16 %v381
    %v1751 = vunpack.c.l.b16 %v382
    %v1752 = vunpack.c.h.b16 %v382
    %v1753 = vunpack.c.l.b16 %v383
    %v1754 = vunpack.c.h.b16 %v383
    %v1755 = vunpack.c.l.b16 %v384
    %v1756 = vunpack.c.h.b16 %v384
    %v1757 = vunpack.c.l.b16 %v385
    %v1758 = vunpack.c.h.b16 %v385
    %v1759 = vunpack.c.l.b16 %v386
    %v1760 = vunpack.c.h.b16 %v386
    %v1761 = vunpack.c.l.b16 %v387
    %v1762 = vunpack.c.h.b16 %v387
    %v1763 = vunpack.c.l.b16 %v388
    %v1764 = vunpack.c.h.b16 %v388
    %v1765 = vunpack.c.l.b16 %v389
    %v1766 = vunpack.c.h.b16 %v389
    %v1767 = vunpack.c.l.b16 %v390
    %v1768 = vunpack.c.h.b16 %v390
    %v1769 = vunpack.c.l.b16 %v391
    %v1770 = vunpack.c.h.b16 %v391
    %v1771 = vunpack.c.l.b16 %v392
    %v1772 = vunpack.c.h.b16 %v392
    %v1773 = vunpack.c.l.b16 %v393
    %v1774 = vunpack.c.h.b16 %v393
    %v1775 = vunpack.c.l.b16 %v394
    %v1776 = vunpack.c.h.b16 %v394
    %v1777 = vunpack.c.l.b16 %v395
    %v1778 = vunpack.c.h.b16 %v395
    %v1779 = vunpack.c.l.b16 %v396
    %v1780 = vunpack.c.h.b16 %v396
    %v1781 = vunpack.c.l.b16 %v397
    %v1782 = vunpack.c.h.b16 %v397
    %v1783 = vunpack.c.l.b16 %v398
    %v1784 = vunpack.c.h.b16 %v398
    %v1785 = vunpack.c.l.b16 %v399
    %v1786 = vunpack.c.h.b16 %v399
    %v1787 = vunpack.c.l.b16 %v400
    %v1788 = vunpack.c.h.b16 %v400
    %v1789 = vunpack.c.l.b16 %v401
    %v1790 = vunpack.c.h.b16 %v401
    %v1791 = vunpack.c.l.b16 %v402
    %v1792 = vunpack.c.h.b16 %v402
    %v1793 = vunpack.c.l.b16 %v403
    %v1794 = vunpack.c.h.b16 %v403
    %v1795 = vunpack.c.l.b16 %v404
    %v1796 = vunpack.c.h.b16 %v404
    %v1797 = vunpack.c.l.b16 %v405
    %v1798 = vunpack.c.h.b16 %v405
    %v1799 = vunpack.c.l.b16 %v406
    %v1800 = vunpack.c.h.b16 %v406
    %v1801 = vunpack.c.l.b16 %v407
    %v1802 = vunpack.c.h.b16 %v407
    %v1803 = vunpack.c.l.b16 %v408
    %v1804 = vunpack.c.h.b16 %v408
    %v1805 = vunpack.c.l.b16 %v409
    %v1806 = vunpack.c.h.b16 %v409
    %v1807 = vunpack.c.l.b16 %v410
    %v1808 = vunpack.c.h.b16 %v410
    %v1809 = vunpack.c.l.b16 %v411
    %v1810 = vunpack.c.h.b16 %v411
    %v1811 = vunpack.c.l.b16 %v412
    %v1812 = vunpack.c.h.b16 %v412
    %v1813 = vunpack.c.l.b16 %v413
    %v1814 = vunpack.c.h.b16 %v413
    %v1815 = vunpack.c.l.b16 %v414
    %v1816 = vunpack.c.h.b16 %v414
    %v1817 = vunpack.c.l.b16 %v415
    %v1818 = vunpack.c.h.b16 %v415
    %v1819 = vunpack.c.l.b16 %v416
    %v1820 = vunpack.c.h.b16 %v416
    %v1821 = vunpack.c.l.b16 %v417
    %v1822 = vunpack.c.h.b16 %v417
    %v1823 = vunpack.c.l.b16 %v418
    %v1824 = vunpack.c.h.b16 %v418
    %v1825 = vunpack.c.l.b16 %v419
    %v1826 = vunpack.c.h.b16 %v419
    %v1827 = vunpack.c.l.b16 %v420
    %v1828 = vunpack.c.h.b16 %v420
    %v1829 = vunpack.c.l.b16 %v421
    %v1830 = vunpack.c.h.b16 %v421
    %v1831 = vunpack.c.l.b16 %v422
    %v1832 = vunpack.c.h.b16 %v422
    %v1833 = vunpack.c.l.b16 %v423
    %v1834 = vunpack.c.h.b16 %v423
    %v1835 = vunpack.c.l.b16 %v424
    %v1836 = vunpack.c.h.b16 %v424
    %v1837 = vunpack.c.l.b16 %v425
    %v1838 = vunpack.c.h.b16 %v425
    %v1839 = vunpack.c.l.b16 %v426
    %v1840 = vunpack.c.h.b16 %v426
    %v1841 = vunpack.c.l.b16 %v427
    %v1842 = vunpack.c.h.b16 %v427
    %v1843 = vunpack.c.l.b16 %v428
    %v1844 = vunpack.c.h.b16 %v428
    %v1845 = vunpack.c.l.b16 %v429
    %v1846 = vunpack.c.h.b16 %v429
    %v1847 = vunpack.c.l.b16 %v430
    %v1848 = vunpack.c.h.b16 %v430
    %v1849 = vunpack.c.l.b16 %v431
    %v1850 = vunpack.c.h.b16 %v431
    %v1851 = vunpack.c.l.b16 %v432
    %v1852 = vunpack.c.h.b16 %v432
    %v1853 = vunpack.c.l.b16 %v433
    %v1854 = vunpack.c.h.b16 %v433
    %v1855 = vunpack.c.l.b16 %v434
    %v1856 = vunpack.c.h.b16 %v434
    %v1857 = vunpack.c.l.b16 %v435
    %v1858 = vunpack.c.h.b16 %v435
    %v1859 = vunpack.c.l.b16 %v436
    %v1860 = vunpack.c.h.b16 %v436
    %v1861 = vunpack.c.l.b16 %v437
    %v1862 = vunpack.c.h.b16 %v437
    %v1863 = vunpack.c.l.b16 %v438
    %v1864 = vunpack.c.h.b16 %v438
    %v1865 = vunpack.c.l.b16 %v439
    %v1866 = vunpack.c.h.b16 %v439
    %v1867 = vunpack.c.l.b16 %v440
    %v1868 = vunpack.c.h.b16 %v440
    %v1869 = vunpack.c.l.b16 %v441
    %v1870 = vunpack.c.h.b16 %v441
    %v1871 = vunpack.c.l.b16 %v442
    %v1872 = vunpack.c.h.b16 %v442
    %v1873 = vunpack.c.l.b16 %v443
    %v1874 = vunpack.c.h.b16 %v443
    %v1875 = vunpack.c.l.b16 %v444
    %v1876 = vunpack.c.h.b16 %v444
    %v1877 = vunpack.c.l.b16 %v445
    %v1878 = vunpack.c.h.b16 %v445
    %v1879 = vunpack.c.l.b16 %v446
    %v1880 = vunpack.c.h.b16 %v446
    %v1881 = vunpack.c.l.b16 %v447
    %v1882 = vunpack.c.h.b16 %v447
    %v1883 = vunpack.c.l.b16 %v448
    %v1884 = vunpack.c.h.b16 %v448
    %v1885 = vunpack.c.l.b16 %v449
    %v1886 = vunpack.c.h.b16 %v449
    %v1887 = vunpack.c.l.b16 %v450
    %v1888 = vunpack.c.h.b16 %v450
    %v1889 = vunpack.c.l.b16 %v451
    %v1890 = vunpack.c.h.b16 %v451
    %v1891 = vunpack.c.l.b16 %v452
    %v1892 = vunpack.c.h.b16 %v452
    %v1893 = vunpack.c.l.b16 %v453
    %v1894 = vunpack.c.h.b16 %v453
    %v1895 = vunpack.c.l.b16 %v454
    %v1896 = vunpack.c.h.b16 %v454
    %v1897 = vunpack.c.l.b16 %v455
    %v1898 = vunpack.c.h.b16 %v455
    %v1899 = vunpack.c.l.b16 %v456
    %v1900 = vunpack.c.h.b16 %v456
    %v1901 = vunpack.c.l.b16 %v457
    %v1902 = vunpack.c.h.b16 %v457
    %v1903 = vunpack.c.l.b16 %v458
    %v1904 = vunpack.c.h.b16 %v458
    %v1905 = vunpack.c.l.b16 %v459
    %v1906 = vunpack.c.h.b16 %v459
    %v1907 = vunpack.c.l.b16 %v460
    %v1908 = vunpack.c.h.b16 %v460
    %v1909 = vunpack.c.l.b16 %v461
    %v1910 = vunpack.c.h.b16 %v461
    %v1911 = vunpack.c.l.b16 %v462
    %v1912 = vunpack.c.h.b16 %v462
    %v1913 = vunpack.c.l.b16 %v463
    %v1914 = vunpack.c.h.b16 %v463
    %v1915 = vunpack.c.l.b16 %v464
    %v1916 = vunpack.c.h.b16 %v464
    %v1917 = vunpack.c.l.b16 %v465
    %v1918 = vunpack.c.h.b16 %v465
    %v1919 = vunpack.c.l.b16 %v466
    %v1920 = vunpack.c.h.b16 %v466
    %v1921 = vunpack.c.l.b16 %v467
    %v1922 = vunpack.c.h.b16 %v467
    %v1923 = vunpack.c.l.b16 %v468
    %v1924 = vunpack.c.h.b16 %v468
    %v1925 = vunpack.c.l.b16 %v469
    %v1926 = vunpack.c.h.b16 %v469
    %v1927 = vunpack.c.l.b16 %v470
    %v1928 = vunpack.c.h.b16 %v470
    %v1929 = vunpack.c.l.b16 %v471
    %v1930 = vunpack.c.h.b16 %v471
    %v1931 = vunpack.c.l.b16 %v472
    %v1932 = vunpack.c.h.b16 %v472
    %v1933 = vunpack.c.l.b16 %v473
    %v1934 = vunpack.c.h.b16 %v473
    %v1935 = vunpack.c.l.b16 %v474
    %v1936 = vunpack.c.h.b16 %v474
    %v1937 = vunpack.c.l.b16 %v475
    %v1938 = vunpack.c.h.b16 %v475
    %v1939 = vunpack.c.l.b16 %v476
    %v1940 = vunpack.c.h.b16 %v476
    %v1941 = vunpack.c.l.b16 %v477
    %v1942 = vunpack.c.h.b16 %v477
    %v1943 = vunpack.c.l.b16 %v478
    %v1944 = vunpack.c.h.b16 %v478
    %v1945 = vunpack.c.l.b16 %v479
    %v1946 = vunpack.c.h.b16 %v479
    %v1947 = vunpack.c.l.b16 %v480
    %v1948 = vunpack.c.h.b16 %v480
    %v1949 = vunpack.c.l.b16 %v481
    %v1950 = vunpack.c.h.b16 %v481
    %v1951 = vunpack.c.l.b16 %v482
    %v1952 = vunpack.c.h.b16 %v482
    %v1953 = vunpack.c.l.b16 %v483
    %v1954 = vunpack.c.h.b16 %v483
    %v1955 = vunpack.c.l.b16 %v484
    %v1956 = vunpack.c.h.b16 %v484
    %v1957 = vunpack.c.l.b16 %v485
    %v1958 = vunpack.c.h.b16 %v485
    %v1959 = vunpack.c.l.b16 %v486
    %v1960 = vunpack.c.h.b16 %v486
    %v1961 = vunpack.c.l.b16 %v487
    %v1962 = vunpack.c.h.b16 %v487
    %v1963 = vunpack.c.l.b16 %v488
    %v1964 = vunpack.c.h.b16 %v488
    %v1965 = vunpack.c.l.b16 %v489
    %v1966 = vunpack.c.h.b16 %v489
    %v1967 = vunpack.c.l.b16 %v490
    %v1968 = vunpack.c.h.b16 %v490
    %v1969 = vunpack.c.l.b16 %v491
    %v1970 = vunpack.c.h.b16 %v491
    %v1971 = vunpack.c.l.b16 %v492
    %v1972 = vunpack.c.h.b16 %v492
    %v1973 = vunpack.c.l.b16 %v493
    %v1974 = vunpack.c.h.b16 %v493
    %v1975 = vunpack.c.l.b16 %v494
    %v1976 = vunpack.c.h.b16 %v494
    %v1977 = vunpack.c.l.b16 %v495
    %v1978 = vunpack.c.h.b16 %v495
    %v1979 = vunpack.c.l.b16 %v496
    %v1980 = vunpack.c.h.b16 %v496
    %v1981 = vunpack.c.l.b16 %v497
    %v1982 = vunpack.c.h.b16 %v497
    %v1983 = vunpack.c.l.b16 %v498
    %v1984 = vunpack.c.h.b16 %v498
    %v1985 = vunpack.c.l.b16 %v499
    %v1986 = vunpack.c.h.b16 %v499
    %v1987 = vunpack.c.l.b16 %v500
    %v1988 = vunpack.c.h.b16 %v500
    %v1989 = vunpack.c.l.b16 %v501
    %v1990 = vunpack.c.h.b16 %v501
    %v1991 = vunpack.c.l.b16 %v502
    %v1992 = vunpack.c.h.b16 %v502
    %v1993 = vunpack.c.l.b16 %v503
    %v1994 = vunpack.c.h.b16 %v503
    %v1995 = vunpack.c.l.b16 %v504
    %v1996 = vunpack.c.h.b16 %v504
    %v1997 = vunpack.c.l.b16 %v505
    %v1998 = vunpack.c.h.b16 %v505
    %v1999 = vunpack.c.l.b16 %v506
    %v2000 = vunpack.c.h.b16 %v506
    %v2001 = vunpack.c.l.b16 %v507
    %v2002 = vunpack.c.h.b16 %v507
    %v2003 = vunpack.c.l.b16 %v508
    %v2004 = vunpack.c.h.b16 %v508
    %v2005 = vunpack.c.l.b16 %v509
    %v2006 = vunpack.c.h.b16 %v509
    %v2007 = vunpack.c.l.b16 %v510
    %v2008 = vunpack.c.h.b16 %v510
    %v2009 = vunpack.c.l.b16 %v511
    %v2010 = vunpack.c.h.b16 %v511
    %v2011 = vunpack.c.l.b16 %v512
    %v2012 = vunpack.c.h.b16 %v512
    %v2013 = vunpack.c.l.b16 %v513
    %v2014 = vunpack.c.h.b16 %v513
    %v2015 = vunpack.c.l.b16 %v514
    %v2016 = vunpack.c.h.b16 %v514
    %v2017 = vunpack.c.l.b16 %v515
    %v2018 = vunpack.c.h.b16 %v515
    %v2019 = vunpack.c.l.b16 %v516
    %v2020 = vunpack.c.h.b16 %v516
    %v2021 = vunpack.c.l.b16 %v517
    %v2022 = vunpack.c.h.b16 %v517
    %v2023 = vunpack.c.l.b16 %v518
    %v2024 = vunpack.c.h.b16 %v518
    %v2025 = vunpack.c.l.b16 %v519
    %v2026 = vunpack.c.h.b16 %v519
    %v2027 = vunpack.c.l.b16 %v520
    %v2028 = vunpack.c.h.b16 %v520
    %v2029 = vunpack.c.l.b16 %v521
    %v2030 = vunpack.c.h.b16 %v521
    %v2031 = vunpack.c.l.b16 %v522
    %v2032 = vunpack.c.h.b16 %v522
    %v2033 = vunpack.c.l.b16 %v523
    %v2034 = vunpack.c.h.b16 %v523
    %v2035 = vunpack.c.l.b16 %v524
    %v2036 = vunpack.c.h.b16 %v524
    %v2037 = vunpack.c.l.b16 %v525
    %v2038 = vunpack.c.h.b16 %v525
    %v2039 = vunpack.c.l.b16 %v526
    %v2040 = vunpack.c.h.b16 %v526
    %v2041 = vunpack.c.l.b16 %v527
    %v2042 = vunpack.c.h.b16 %v527
    %v2043 = vunpack.c.l.b16 %v528
    %v2044 = vunpack.c.h.b16 %v528
    %v2045 = vunpack.c.l.b16 %v529
    %v2046 = vunpack.c.h.b16 %v529
    %v2047 = vunpack.c.l.b16 %v530
    %v2048 = vunpack.c.h.b16 %v530
    %v2049 = vunpack.c.l.b16 %v531
    %v2050 = vunpack.c.h.b16 %v531
    %v2051 = vunpack.c.l.b16 %v532
    %v2052 = vunpack.c.h.b16 %v532
    %v2053 = vunpack.c.l.b16 %v533
    %v2054 = vunpack.c.h.b16 %v533
    %v2055 = vunpack.c.l.b16 %v534
    %v2056 = vunpack.c.h.b16 %v534
    %v2057 = vunpack.c.l.b16 %v535
    %v2058 = vunpack.c.h.b16 %v535
    %v2059 = vunpack.c.l.b16 %v536
    %v2060 = vunpack.c.h.b16 %v536
    %v2061 = vunpack.c.l.b16 %v537
    %v2062 = vunpack.c.h.b16 %v537
    %v2063 = vunpack.c.l.b16 %v538
    %v2064 = vunpack.c.h.b16 %v538
    %v2065 = vunpack.c.l.b16 %v539
    %v2066 = vunpack.c.h.b16 %v539
    %v2067 = vunpack.c.l.b16 %v540
    %v2068 = vunpack.c.h.b16 %v540
    %v2069 = vunpack.c.l.b16 %v541
    %v2070 = vunpack.c.h.b16 %v541
    %v2071 = vunpack.c.l.b16 %v542
    %v2072 = vunpack.c.h.b16 %v542
    %v2073 = vunpack.c.l.b16 %v543
    %v2074 = vunpack.c.h.b16 %v543
    %v2075 = vunpack.c.l.b16 %v544
    %v2076 = vunpack.c.h.b16 %v544
    %v2077 = vunpack.c.l.b16 %v545
    %v2078 = vunpack.c.h.b16 %v545
    %v2079 = vunpack.c.l.b16 %v546
    %v2080 = vunpack.c.h.b16 %v546
    %v2081 = vunpack.c.l.b16 %v547
    %v2082 = vunpack.c.h.b16 %v547
    %v2083 = vunpack.c.l.b16 %v548
    %v2084 = vunpack.c.h.b16 %v548
    %v2085 = vunpack.c.l.b16 %v549
    %v2086 = vunpack.c.h.b16 %v549
    %v2087 = vunpack.c.l.b16 %v550
    %v2088 = vunpack.c.h.b16 %v550
    %v2089 = vunpack.c.l.b16 %v551
    %v2090 = vunpack.c.h.b16 %v551
    %v2091 = vunpack.c.l.b16 %v552
    %v2092 = vunpack.c.h.b16 %v552
    %v2093 = vunpack.c.l.b16 %v553
    %v2094 = vunpack.c.h.b16 %v553
    %v2095 = vunpack.c.l.b16 %v554
    %v2096 = vunpack.c.h.b16 %v554
    %v2097 = vunpack.c.l.b16 %v555
    %v2098 = vunpack.c.h.b16 %v555
    %v2099 = vunpack.c.l.b16 %v556
    %v2100 = vunpack.c.h.b16 %v556
    %v2101 = vunpack.c.l.b16 %v557
    %v2102 = vunpack.c.h.b16 %v557
    %v2103 = vunpack.c.l.b16 %v558
    %v2104 = vunpack.c.h.b16 %v558
    %v2105 = vunpack.c.l.b16 %v559
    %v2106 = vunpack.c.h.b16 %v559
    %v2107 = vunpack.c.l.b16 %v560
    %v2108 = vunpack.c.h.b16 %v560
    %v2109 = vunpack.c.l.b16 %v561
    %v2110 = vunpack.c.h.b16 %v561
    %v2111 = vunpack.c.l.b16 %v562
    %v2112 = vunpack.c.h.b16 %v562
    %v2113 = vunpack.c.l.b16 %v563
    %v2114 = vunpack.c.h.b16 %v563
    %v2115 = vunpack.c.l.b16 %v564
    %v2116 = vunpack.c.h.b16 %v564
    %v2117 = vunpack.c.l.b16 %v565
    %v2118 = vunpack.c.h.b16 %v565
    %v2119 = vunpack.c.l.b16 %v566
    %v2120 = vunpack.c.h.b16 %v566
    %v2121 = vunpack.c.l.b16 %v567
    %v2122 = vunpack.c.h.b16 %v567
    %v2123 = vunpack.c.l.b16 %v568
    %v2124 = vunpack.c.h.b16 %v568
    %v2125 = vunpack.c.l.b16 %v569
    %v2126 = vunpack.c.h.b16 %v569
    %v2127 = vunpack.c.l.b16 %v570
    %v2128 = vunpack.c.h.b16 %v570
    %v2129 = vunpack.c.l.b16 %v571
    %v2130 = vunpack.c.h.b16 %v571
    %v2131 = vunpack.c.l.b16 %v572
    %v2132 = vunpack.c.h.b16 %v572
    %v2133 = vunpack.c.l.b16 %v573
    %v2134 = vunpack.c.h.b16 %v573
    %v2135 = vunpack.c.l.b16 %v574
    %v2136 = vunpack.c.h.b16 %v574
    %v2137 = vunpack.c.l.b16 %v575
    %v2138 = vunpack.c.h.b16 %v575
    %v2139 = vunpack.c.l.b16 %v576
    %v2140 = vunpack.c.h.b16 %v576
    %v2141 = vunpack.c.l.b16 %v577
    %v2142 = vunpack.c.h.b16 %v577
    %v2143 = vunpack.c.l.b16 %v578
    %v2144 = vunpack.c.h.b16 %v578
    %v2145 = vunpack.c.l.b16 %v579
    %v2146 = vunpack.c.h.b16 %v579
    %v2147 = vunpack.c.l.b16 %v580
    %v2148 = vunpack.c.h.b16 %v580
    %v2149 = vunpack.c.l.b16 %v581
    %v2150 = vunpack.c.h.b16 %v581
    %v2151 = vunpack.c.l.b16 %v582
    %v2152 = vunpack.c.h.b16 %v582
    %v2153 = vunpack.c.l.b16 %v583
    %v2154 = vunpack.c.h.b16 %v583
    %v2155 = vunpack.c.l.b16 %v584
    %v2156 = vunpack.c.h.b16 %v584
    %v2157 = vunpack.c.l.b16 %v585
    %v2158 = vunpack.c.h.b16 %v585
    %v2159 = vunpack.c.l.b16 %v586
    %v2160 = vunpack.c.h.b16 %v586
    %v2161 = vunpack.c.l.b16 %v587
    %v2162 = vunpack.c.h.b16 %v587
    %v2163 = vunpack.c.l.b16 %v588
    %v2164 = vunpack.c.h.b16 %v588
    %v2165 = vunpack.c.l.b16 %v589
    %v2166 = vunpack.c.h.b16 %v589
    %v2167 = vunpack.c.l.b16 %v590
    %v2168 = vunpack.c.h.b16 %v590
    %v2169 = vunpack.c.l.b16 %v591
    %v2170 = vunpack.c.h.b16 %v591
    %v2171 = vunpack.c.l.b16 %v592
    %v2172 = vunpack.c.h.b16 %v592
    %v2173 = vunpack.c.l.b16 %v593
    %v2174 = vunpack.c.h.b16 %v593
    %v2175 = vunpack.c.l.b16 %v594
    %v2176 = vunpack.c.h.b16 %v594
    %v2177 = vpack.c.b16 %v1161, %v1153
    %v2178 = vpack.c.b16 %v1162, %v1154
    %v2179 = vpack.c.b16 %v1163, %v1155
    %v2180 = vpack.c.b16 %v1164, %v1156
    %v2181 = vpack.c.b16 %v1165, %v1157
    %v2182 = vpack.c.b16 %v1166, %v1158
    %v2183 = vpack.c.b16 %v1167, %v1159
    %v2184 = vpack.c.b16 %v1168, %v1160
    %v2185 = vpack.c.b16 %v1177, %v1169
    %v2186 = vpack.c.b16 %v1178, %v1170
    %v2187 = vpack.c.b16 %v1179, %v1171
    %v2188 = vpack.c.b16 %v1180, %v1172
    %v2189 = vpack.c.b16 %v1181, %v1173
    %v2190 = vpack.c.b16 %v1182, %v1174
    %v2191 = vpack.c.b16 %v1183, %v1175
    %v2192 = vpack.c.b16 %v1184, %v1176
    %v2193 = vpack.c.b16 %v1193, %v1185
    %v2194 = vpack.c.b16 %v1194, %v1186
    %v2195 = vpack.c.b16 %v1195, %v1187
    %v2196 = vpack.c.b16 %v1196, %v1188
    %v2197 = vpack.c.b16 %v1197, %v1189
    %v2198 = vpack.c.b16 %v1198, %v1190
    %v2199 = vpack.c.b16 %v1199, %v1191
    %v2200 = vpack.c.b16 %v1200, %v1192
    %v2201 = vpack.c.b16 %v1209, %v1201
    %v2202 = vpack.c.b16 %v1210, %v1202
    %v2203 = vpack.c.b16 %v1211, %v1203
    %v2204 = vpack.c.b16 %v1212, %v1204
    %v2205 = vpack.c.b16 %v1213, %v1205
    %v2206 = vpack.c.b16 %v1214, %v1206
    %v2207 = vpack.c.b16 %v1215, %v1207
    %v2208 = vpack.c.b16 %v1216, %v1208
    %v2209 = vpack.c.b16 %v1225, %v1217
    %v2210 = vpack.c.b16 %v1226, %v1218
    %v2211 = vpack.c.b16 %v1227, %v1219
    %v2212 = vpack.c.b16 %v1228, %v1220
    %v2213 = vpack.c.b16 %v1229, %v1221
    %v2214 = vpack.c.b16 %v1230, %v1222
    %v2215 = vpack.c.b16 %v1231, %v1223
    %v2216 = vpack.c.b16 %v1232, %v1224
    %v2217 = vpack.c.b16 %v1241, %v1233
    %v2218 = vpack.c.b16 %v1242, %v1234
    %v2219 = vpack.c.b16 %v1243, %v1235
    %v2220 = vpack.c.b16 %v1244, %v1236
    %v2221 = vpack.c.b16 %v1245, %v1237
    %v2222 = vpack.c.b16 %v1246, %v1238
    %v2223 = vpack.c.b16 %v1247, %v1239
    %v2224 = vpack.c.b16 %v1248, %v1240
    %v2225 = vpack.c.b16 %v1257, %v1249
    %v2226 = vpack.c.b16 %v1258, %v1250
    %v2227 = vpack.c.b16 %v1259, %v1251
    %v2228 = vpack.c.b16 %v1260, %v1252
    %v2229 = vpack.c.b16 %v1261, %v1253
    %v2230 = vpack.c.b16 %v1262, %v1254
    %v2231 = vpack.c.b16 %v1263, %v1255
    %v2232 = vpack.c.b16 %v1264, %v1256
    %v2233 = vpack.c.b16 %v1273, %v1265
    %v2234 = vpack.c.b16 %v1274, %v1266
    %v2235 = vpack.c.b16 %v1275, %v1267
    %v2236 = vpack.c.b16 %v1276, %v1268
    %v2237 = vpack.c.b16 %v1277, %v1269
    %v2238 = vpack.c.b16 %v1278, %v1270
    %v2239 = vpack.c.b16 %v1279, %v1271
    %v2240 = vpack.c.b16 %v1280, %v1272
    %v2241 = vpack.c.b16 %v1289, %v1281
    %v2242 = vpack.c.b16 %v1290, %v1282
    %v2243 = vpack.c.b16 %v1291, %v1283
    %v2244 = vpack.c.b16 %v1292, %v1284
    %v2245 = vpack.c.b16 %v1293, %v1285
    %v2246 = vpack.c.b16 %v1294, %v1286
    %v2247 = vpack.c.b16 %v1295, %v1287
    %v2248 = vpack.c.b16 %v1296, %v1288
    %v2249 = vpack.c.b16 %v1305, %v1297
    %v2250 = vpack.c.b16 %v1306, %v1298
    %v2251 = vpack.c.b16 %v1307, %v1299
    %v2252 = vpack.c.b16 %v1308, %v1300
    %v2253 = vpack.c.b16 %v1309, %v1301
    %v2254 = vpack.c.b16 %v1310, %v1302
    %v2255 = vpack.c.b16 %v1311, %v1303
    %v2256 = vpack.c.b16 %v1312, %v1304
    %v2257 = vpack.c.b16 %v1321, %v1313
    %v2258 = vpack.c.b16 %v1322, %v1314
    %v2259 = vpack.c.b16 %v1323, %v1315
    %v2260 = vpack.c.b16 %v1324, %v1316
    %v2261 = vpack.c.b16 %v1325, %v1317
    %v2262 = vpack.c.b16 %v1326, %v1318
    %v2263 = vpack.c.b16 %v1327, %v1319
    %v2264 = vpack.c.b16 %v1328, %v1320
    %v2265 = vpack.c.b16 %v1337, %v1329
    %v2266 = vpack.c.b16 %v1338, %v1330
    %v2267 = vpack.c.b16 %v1339, %v1331
    %v2268 = vpack.c.b16 %v1340, %v1332
    %v2269 = vpack.c.b16 %v1341, %v1333
    %v2270 = vpack.c.b16 %v1342, %v1334
    %v2271 = vpack.c.b16 %v1343, %v1335
    %v2272 = vpack.c.b16 %v1344, %v1336
    %v2273 = vpack.c.b16 %v1353, %v1345
    %v2274 = vpack.c.b16 %v1354, %v1346
    %v2275 = vpack.c.b16 %v1355, %v1347
    %v2276 = vpack.c.b16 %v1356, %v1348
    %v2277 = vpack.c.b16 %v1357, %v1349
    %v2278 = vpack.c.b16 %v1358, %v1350
    %v2279 = vpack.c.b16 %v1359, %v1351
    %v2280 = vpack.c.b16 %v1360, %v1352
    %v2281 = vpack.c.b16 %v1369, %v1361
    %v2282 = vpack.c.b16 %v1370, %v1362
    %v2283 = vpack.c.b16 %v1371, %v1363
    %v2284 = vpack.c.b16 %v1372, %v1364
    %v2285 = vpack.c.b16 %v1373, %v1365
    %v2286 = vpack.c.b16 %v1374, %v1366
    %v2287 = vpack.c.b16 %v1375, %v1367
    %v2288 = vpack.c.b16 %v1376, %v1368
    %v2289 = vpack.c.b16 %v1385, %v1377
    %v2290 = vpack.c.b16 %v1386, %v1378
    %v2291 = vpack.c.b16 %v1387, %v1379
    %v2292 = vpack.c.b16 %v1388, %v1380
    %v2293 = vpack.c.b16 %v1389, %v1381
    %v2294 = vpack.c.b16 %v1390, %v1382
    %v2295 = vpack.c.b16 %v1391, %v1383
    %v2296 = vpack.c.b16 %v1392, %v1384
    %v2297 = vpack.c.b16 %v1401, %v1393
    %v2298 = vpack.c.b16 %v1402, %v1394
    %v2299 = vpack.c.b16 %v1403, %v1395
    %v2300 = vpack.c.b16 %v1404, %v1396
    %v2301 = vpack.c.b16 %v1405, %v1397
    %v2302 = vpack.c.b16 %v1406, %v1398
    %v2303 = vpack.c.b16 %v1407, %v1399
    %v2304 = vpack.c.b16 %v1408, %v1400
    %v2305 = vpack.c.b16 %v1417, %v1409
    %v2306 = vpack.c.b16 %v1418, %v1410
    %v2307 = vpack.c.b16 %v1419, %v1411
    %v2308 = vpack.c.b16 %v1420, %v1412
    %v2309 = vpack.c.b16 %v1421, %v1413
    %v2310 = vpack.c.b16 %v1422, %v1414
    %v2311 = vpack.c.b16 %v1423, %v1415
    %v2312 = vpack.c.b16 %v1424, %v1416
    %v2313 = vpack.c.b16 %v1433, %v1425
    %v2314 = vpack.c.b16 %v1434, %v1426
    %v2315 = vpack.c.b16 %v1435, %v1427
    %v2316 = vpack.c.b16 %v1436, %v1428
    %v2317 = vpack.c.b16 %v1437, %v1429
    %v2318 = vpack.c.b16 %v1438, %v1430
    %v2319 = vpack.c.b16 %v1439, %v1431
    %v2320 = vpack.c.b16 %v1440, %v1432
    %v2321 = vpack.c.b16 %v1449, %v1441
    %v2322 = vpack.c.b16 %v1450, %v1442
    %v2323 = vpack.c.b16 %v1451, %v1443
    %v2324 = vpack.c.b16 %v1452, %v1444
    %v2325 = vpack.c.b16 %v1453, %v1445
    %v2326 = vpack.c.b16 %v1454, %v1446
    %v2327 = vpack.c.b16 %v1455, %v1447
    %v2328 = vpack.c.b16 %v1456, %v1448
    %v2329 = vpack.c.b16 %v1465, %v1457
    %v2330 = vpack.c.b16 %v1466, %v1458
    %v2331 = vpack.c.b16 %v1467, %v1459
    %v2332 = vpack.c.b16 %v1468, %v1460
    %v2333 = vpack.c.b16 %v1469, %v1461
    %v2334 = vpack.c.b16 %v1470, %v1462
    %v2335 = vpack.c.b16 %v1471, %v1463
    %v2336 = vpack.c.b16 %v1472, %v1464
    %v2337 = vpack.c.b16 %v1481, %v1473
    %v2338 = vpack.c.b16 %v1482, %v1474
    %v2339 = vpack.c.b16 %v1483, %v1475
    %v2340 = vpack.c.b16 %v1484, %v1476
    %v2341 = vpack.c.b16 %v1485, %v1477
    %v2342 = vpack.c.b16 %v1486, %v1478
    %v2343 = vpack.c.b16 %v1487, %v1479
    %v2344 = vpack.c.b16 %v1488, %v1480
    %v2345 = vpack.c.b16 %v1497, %v1489
    %v2346 = vpack.c.b16 %v1498, %v1490
    %v2347 = vpack.c.b16 %v1499, %v1491
    %v2348 = vpack.c.b16 %v1500, %v1492
    %v2349 = vpack.c.b16 %v1501, %v1493
    %v2350 = vpack.c.b16 %v1502, %v1494
    %v2351 = vpack.c.b16 %v1503, %v1495
    %v2352 = vpack.c.b16 %v1504, %v1496
    %v2353 = vpack.c.b16 %v1513, %v1505
    %v2354 = vpack.c.b16 %v1514, %v1506
    %v2355 = vpack.c.b16 %v1515, %v1507
    %v2356 = vpack.c.b16 %v1516, %v1508
    %v2357 = vpack.c.b16 %v1517, %v1509
    %v2358 = vpack.c.b16 %v1518, %v1510
    %v2359 = vpack.c.b16 %v1519, %v1511
    %v2360 = vpack.c.b16 %v1520, %v1512
    %v2361 = vpack.c.b16 %v1529, %v1521
    %v2362 = vpack.c.b16 %v1530, %v1522
    %v2363 = vpack.c.b16 %v1531, %v1523
    %v2364 = vpack.c.b16 %v1532, %v1524
    %v2365 = vpack.c.b16 %v1533, %v1525
    %v2366 = vpack.c.b16 %v1534, %v1526
    %v2367 = vpack.c.b16 %v1535, %v1527
    %v2368 = vpack.c.b16 %v1536, %v1528
    %v2369 = vpack.c.b16 %v1545, %v1537
    %v2370 = vpack.c.b16 %v1546, %v1538
    %v2371 = vpack.c.b16 %v1547, %v1539
    %v2372 = vpack.c.b16 %v1548, %v1540
    %v2373 = vpack.c.b16 %v1549, %v1541
    %v2374 = vpack.c.b16 %v1550, %v1542
    %v2375 = vpack.c.b16 %v1551, %v1543
    %v2376 = vpack.c.b16 %v1552, %v1544
    %v2377 = vpack.c.b16 %v1561, %v1553
    %v2378 = vpack.c.b16 %v1562, %v1554
    %v2379 = vpack.c.b16 %v1563, %v1555
    %v2380 = vpack.c.b16 %v1564, %v1556
    %v2381 = vpack.c.b16 %v1565, %v1557
    %v2382 = vpack.c.b16 %v1566, %v1558
    %v2383 = vpack.c.b16 %v1567, %v1559
    %v2384 = vpack.c.b16 %v1568, %v1560
    %v2385 = vpack.c.b16 %v1577, %v1569
    %v2386 = vpack.c.b16 %v1578, %v1570
    %v2387 = vpack.c.b16 %v1579, %v1571
    %v2388 = vpack.c.b16 %v1580, %v1572
    %v2389 = vpack.c.b16 %v1581, %v1573
    %v2390 = vpack.c.b16 %v1582, %v1574
    %v2391 = vpack.c.b16 %v1583, %v1575
    %v2392 = vpack.c.b16 %v1584, %v1576
    %v2393 = vpack.c.b16 %v1593, %v1585
    %v2394 = vpack.c.b16 %v1594, %v1586
    %v2395 = vpack.c.b16 %v1595, %v1587
    %v2396 = vpack.c.b16 %v1596, %v1588
    %v2397 = vpack.c.b16 %v1597, %v1589
    %v2398 = vpack.c.b16 %v1598, %v1590
    %v2399 = vpack.c.b16 %v1599, %v1591
    %v2400 = vpack.c.b16 %v1600, %v1592
    %v2401 = vpack.c.b16 %v1609, %v1601
    %v2402 = vpack.c.b16 %v1610, %v1602
    %v2403 = vpack.c.b16 %v1611, %v1603
    %v2404 = vpack.c.b16 %v1612, %v1604
    %v2405 = vpack.c.b16 %v1613, %v1605
    %v2406 = vpack.c.b16 %v1614, %v1606
    %v2407 = vpack.c.b16 %v1615, %v1607
    %v2408 = vpack.c.b16 %v1616, %v1608
    %v2409 = vpack.c.b16 %v1625, %v1617
    %v2410 = vpack.c.b16 %v1626, %v1618
    %v2411 = vpack.c.b16 %v1627, %v1619
    %v2412 = vpack.c.b16 %v1628, %v1620
    %v2413 = vpack.c.b16 %v1629, %v1621
    %v2414 = vpack.c.b16 %v1630, %v1622
    %v2415 = vpack.c.b16 %v1631, %v1623
    %v2416 = vpack.c.b16 %v1632, %v1624
    %v2417 = vpack.c.b16 %v1641, %v1633
    %v2418 = vpack.c.b16 %v1642, %v1634
    %v2419 = vpack.c.b16 %v1643, %v1635
    %v2420 = vpack.c.b16 %v1644, %v1636
    %v2421 = vpack.c.b16 %v1645, %v1637
    %v2422 = vpack.c.b16 %v1646, %v1638
    %v2423 = vpack.c.b16 %v1647, %v1639
    %v2424 = vpack.c.b16 %v1648, %v1640
    %v2425 = vpack.c.b16 %v1657, %v1649
    %v2426 = vpack.c.b16 %v1658, %v1650
    %v2427 = vpack.c.b16 %v1659, %v1651
    %v2428 = vpack.c.b16 %v1660, %v1652
    %v2429 = vpack.c.b16 %v1661, %v1653
    %v2430 = vpack.c.b16 %v1662, %v1654
    %v2431 = vpack.c.b16 %v1663, %v1655
    %v2432 = vpack.c.b16 %v1664, %v1656
    %v2433 = vpack.c.b16 %v1673, %v1665
    %v2434 = vpack.c.b16 %v1674, %v1666
    %v2435 = vpack.c.b16 %v1675, %v1667
    %v2436 = vpack.c.b16 %v1676, %v1668
    %v2437 = vpack.c.b16 %v1677, %v1669
    %v2438 = vpack.c.b16 %v1678, %v1670
    %v2439 = vpack.c.b16 %v1679, %v1671
    %v2440 = vpack.c.b16 %v1680, %v1672
    %v2441 = vpack.c.b16 %v1689, %v1681
    %v2442 = vpack.c.b16 %v1690, %v1682
    %v2443 = vpack.c.b16 %v1691, %v1683
    %v2444 = vpack.c.b16 %v1692, %v1684
    %v2445 = vpack.c.b16 %v1693, %v1685
    %v2446 = vpack.c.b16 %v1694, %v1686
    %v2447 = vpack.c.b16 %v1695, %v1687
    %v2448 = vpack.c.b16 %v1696, %v1688
    %v2449 = vpack.c.b16 %v1705, %v1697
    %v2450 = vpack.c.b16 %v1706, %v1698
    %v2451 = vpack.c.b16 %v1707, %v1699
    %v2452 = vpack.c.b16 %v1708, %v1700
    %v2453 = vpack.c.b16 %v1709, %v1701
    %v2454 = vpack.c.b16 %v1710, %v1702
    %v2455 = vpack.c.b16 %v1711, %v1703
    %v2456 = vpack.c.b16 %v1712, %v1704
    %v2457 = vpack.c.b16 %v1721, %v1713
    %v2458 = vpack.c.b16 %v1722, %v1714
    %v2459 = vpack.c.b16 %v1723, %v1715
    %v2460 = vpack.c.b16 %v1724, %v1716
    %v2461 = vpack.c.b16 %v1725, %v1717
    %v2462 = vpack.c.b16 %v1726, %v1718
    %v2463 = vpack.c.b16 %v1727, %v1719
    %v2464 = vpack.c.b16 %v1728, %v1720
    %v2465 = vpack.c.b16 %v1737, %v1729
    %v2466 = vpack.c.b16 %v1738, %v1730
    %v2467 = vpack.c.b16 %v1739, %v1731
    %v2468 = vpack.c.b16 %v1740, %v1732
    %v2469 = vpack.c.b16 %v1741, %v1733
    %v2470 = vpack.c.b16 %v1742, %v1734
    %v2471 = vpack.c.b16 %v1743, %v1735
    %v2472 = vpack.c.b16 %v1744, %v1736
    %v2473 = vpack.c.b16 %v1753, %v1745
    %v2474 = vpack.c.b16 %v1754, %v1746
    %v2475 = vpack.c.b16 %v1755, %v1747
    %v2476 = vpack.c.b16 %v1756, %v1748
    %v2477 = vpack.c.b16 %v1757, %v1749
    %v2478 = vpack.c.b16 %v1758, %v1750
    %v2479 = vpack.c.b16 %v1759, %v1751
    %v2480 = vpack.c.b16 %v1760, %v1752
    %v2481 = vpack.c.b16 %v1769, %v1761
    %v2482 = vpack.c.b16 %v1770, %v1762
    %v2483 = vpack.c.b16 %v1771, %v1763
    %v2484 = vpack.c.b16 %v1772, %v1764
    %v2485 = vpack.c.b16 %v1773, %v1765
    %v2486 = vpack.c.b16 %v1774, %v1766
    %v2487 = vpack.c.b16 %v1775, %v1767
    %v2488 = vpack.c.b16 %v1776, %v1768
    %v2489 = vpack.c.b16 %v1785, %v1777
    %v2490 = vpack.c.b16 %v1786, %v1778
    %v2491 = vpack.c.b16 %v1787, %v1779
    %v2492 = vpack.c.b16 %v1788, %v1780
    %v2493 = vpack.c.b16 %v1789, %v1781
    %v2494 = vpack.c.b16 %v1790, %v1782
    %v2495 = vpack.c.b16 %v1791, %v1783
    %v2496 = vpack.c.b16 %v1792, %v1784
    %v2497 = vpack.c.b16 %v1801, %v1793
    %v2498 = vpack.c.b16 %v1802, %v1794
    %v2499 = vpack.c.b16 %v1803, %v1795
    %v2500 = vpack.c.b16 %v1804, %v1796
    %v2501 = vpack.c.b16 %v1805, %v1797
    %v2502 = vpack.c.b16 %v1806, %v1798
    %v2503 = vpack.c.b16 %v1807, %v1799
    %v2504 = vpack.c.b16 %v1808, %v1800
    %v2505 = vpack.c.b16 %v1817, %v1809
    %v2506 = vpack.c.b16 %v1818, %v1810
    %v2507 = vpack.c.b16 %v1819, %v1811
    %v2508 = vpack.c.b16 %v1820, %v1812
    %v2509 = vpack.c.b16 %v1821, %v1813
    %v2510 = vpack.c.b16 %v1822, %v1814
    %v2511 = vpack.c.b16 %v1823, %v1815
    %v2512 = vpack.c.b16 %v1824, %v1816
    %v2513 = vpack.c.b16 %v1833, %v1825
    %v2514 = vpack.c.b16 %v1834, %v1826
    %v2515 = vpack.c.b16 %v1835, %v1827
    %v2516 = vpack.c.b16 %v1836, %v1828
    %v2517 = vpack.c.b16 %v1837, %v1829
    %v2518 = vpack.c.b16 %v1838, %v1830
    %v2519 = vpack.c.b16 %v1839, %v1831
    %v2520 = vpack.c.b16 %v1840, %v1832
    %v2521 = vpack.c.b16 %v1849, %v1841
    %v2522 = vpack.c.b16 %v1850, %v1842
    %v2523 = vpack.c.b16 %v1851, %v1843
    %v2524 = vpack.c.b16 %v1852, %v1844
    %v2525 = vpack.c.b16 %v1853, %v1845
    %v2526 = vpack.c.b16 %v1854, %v1846
    %v2527 = vpack.c.b16 %v1855, %v1847
    %v2528 = vpack.c.b16 %v1856, %v1848
    %v2529 = vpack.c.b16 %v1865, %v1857
    %v2530 = vpack.c.b16 %v1866, %v1858
    %v2531 = vpack.c.b16 %v1867, %v1859
    %v2532 = vpack.c.b16 %v1868, %v1860
    %v2533 = vpack.c.b16 %v1869, %v1861
    %v2534 = vpack.c.b16 %v1870, %v1862
    %v2535 = vpack.c.b16 %v1871, %v1863
    %v2536 = vpack.c.b16 %v1872, %v1864
    %v2537 = vpack.c.b16 %v1881, %v1873
    %v2538 = vpack.c.b16 %v1882, %v1874
    %v2539 = vpack.c.b16 %v1883, %v1875
    %v2540 = vpack.c.b16 %v1884, %v1876
    %v2541 = vpack.c.b16 %v1885, %v1877
    %v2542 = vpack.c.b16 %v1886, %v1878
    %v2543 = vpack.c.b16 %v1887, %v1879
    %v2544 = vpack.c.b16 %v1888, %v1880
    %v2545 = vpack.c.b16 %v1897, %v1889
    %v2546 = vpack.c.b16 %v1898, %v1890
    %v2547 = vpack.c.b16 %v1899, %v1891
    %v2548 = vpack.c.b16 %v1900, %v1892
    %v2549 = vpack.c.b16 %v1901, %v1893
    %v2550 = vpack.c.b16 %v1902, %v1894
    %v2551 = vpack.c.b16 %v1903, %v1895
    %v2552 = vpack.c.b16 %v1904, %v1896
    %v2553 = vpack.c.b16 %v1913, %v1905
    %v2554 = vpack.c.b16 %v1914, %v1906
    %v2555 = vpack.c.b16 %v1915, %v1907
    %v2556 = vpack.c.b16 %v1916, %v1908
    %v2557 = vpack.c.b16 %v1917, %v1909
    %v2558 = vpack.c.b16 %v1918, %v1910
    %v2559 = vpack.c.b16 %v1919, %v1911
    %v2560 = vpack.c.b16 %v1920, %v1912
    %v2561 = vpack.c.b16 %v1929, %v1921
    %v2562 = vpack.c.b16 %v1930, %v1922
    %v2563 = vpack.c.b16 %v1931, %v1923
    %v2564 = vpack.c.b16 %v1932, %v1924
    %v2565 = vpack.c.b16 %v1933, %v1925
    %v2566 = vpack.c.b16 %v1934, %v1926
    %v2567 = vpack.c.b16 %v1935, %v1927
    %v2568 = vpack.c.b16 %v1936, %v1928
    %v2569 = vpack.c.b16 %v1945, %v1937
    %v2570 = vpack.c.b16 %v1946, %v1938
    %v2571 = vpack.c.b16 %v1947, %v1939
    %v2572 = vpack.c.b16 %v1948, %v1940
    %v2573 = vpack.c.b16 %v1949, %v1941
    %v2574 = vpack.c.b16 %v1950, %v1942
    %v2575 = vpack.c.b16 %v1951, %v1943
    %v2576 = vpack.c.b16 %v1952, %v1944
    %v2577 = vpack.c.b16 %v1961, %v1953
    %v2578 = vpack.c.b16 %v1962, %v1954
    %v2579 = vpack.c.b16 %v1963, %v1955
    %v2580 = vpack.c.b16 %v1964, %v1956
    %v2581 = vpack.c.b16 %v1965, %v1957
    %v2582 = vpack.c.b16 %v1966, %v1958
    %v2583 = vpack.c.b16 %v1967, %v1959
    %v2584 = vpack.c.b16 %v1968, %v1960
    %v2585 = vpack.c.b16 %v1977, %v1969
    %v2586 = vpack.c.b16 %v1978, %v1970
    %v2587 = vpack.c.b16 %v1979, %v1971
    %v2588 = vpack.c.b16 %v1980, %v1972
    %v2589 = vpack.c.b16 %v1981, %v1973
    %v2590 = vpack.c.b16 %v1982, %v1974
    %v2591 = vpack.c.b16 %v1983, %v1975
    %v2592 = vpack.c.b16 %v1984, %v1976
    %v2593 = vpack.c.b16 %v1993, %v1985
    %v2594 = vpack.c.b16 %v1994, %v1986
    %v2595 = vpack.c.b16 %v1995, %v1987
    %v2596 = vpack.c.b16 %v1996, %v1988
    %v2597 = vpack.c.b16 %v1997, %v1989
    %v2598 = vpack.c.b16 %v1998, %v1990
    %v2599 = vpack.c.b16 %v1999, %v1991
    %v2600 = vpack.c.b16 %v2000, %v1992
    %v2601 = vpack.c.b16 %v2009, %v2001
    %v2602 = vpack.c.b16 %v2010, %v2002
    %v2603 = vpack.c.b16 %v2011, %v2003
    %v2604 = vpack.c.b16 %v2012, %v2004
    %v2605 = vpack.c.b16 %v2013, %v2005
    %v2606 = vpack.c.b16 %v2014, %v2006
    %v2607 = vpack.c.b16 %v2015, %v2007
    %v2608 = vpack.c.b16 %v2016, %v2008
    %v2609 = vpack.c.b16 %v2025, %v2017
    %v2610 = vpack.c.b16 %v2026, %v2018
    %v2611 = vpack.c.b16 %v2027, %v2019
    %v2612 = vpack.c.b16 %v2028, %v2020
    %v2613 = vpack.c.b16 %v2029, %v2021
    %v2614 = vpack.c.b16 %v2030, %v2022
    %v2615 = vpack.c.b16 %v2031, %v2023
    %v2616 = vpack.c.b16 %v2032, %v2024
    %v2617 = vpack.c.b16 %v2041, %v2033
    %v2618 = vpack.c.b16 %v2042, %v2034
    %v2619 = vpack.c.b16 %v2043, %v2035
    %v2620 = vpack.c.b16 %v2044, %v2036
    %v2621 = vpack.c.b16 %v2045, %v2037
    %v2622 = vpack.c.b16 %v2046, %v2038
    %v2623 = vpack.c.b16 %v2047, %v2039
    %v2624 = vpack.c.b16 %v2048, %v2040
    %v2625 = vpack.c.b16 %v2057, %v2049
    %v2626 = vpack.c.b16 %v2058, %v2050
    %v2627 = vpack.c.b16 %v2059, %v2051
    %v2628 = vpack.c.b16 %v2060, %v2052
    %v2629 = vpack.c.b16 %v2061, %v2053
    %v2630 = vpack.c.b16 %v2062, %v2054
    %v2631 = vpack.c.b16 %v2063, %v2055
    %v2632 = vpack.c.b16 %v2064, %v2056
    %v2633 = vpack.c.b16 %v2073, %v2065
    %v2634 = vpack.c.b16 %v2074, %v2066
    %v2635 = vpack.c.b16 %v2075, %v2067
    %v2636 = vpack.c.b16 %v2076, %v2068
    %v2637 = vpack.c.b16 %v2077, %v2069
    %v2638 = vpack.c.b16 %v2078, %v2070
    %v2639 = vpack.c.b16 %v2079, %v2071
    %v2640 = vpack.c.b16 %v2080, %v2072
    %v2641 = vpack.c.b16 %v2089, %v2081
    %v2642 = vpack.c.b16 %v2090, %v2082
    %v2643 = vpack.c.b16 %v2091, %v2083
    %v2644 = vpack.c.b16 %v2092, %v2084
    %v2645 = vpack.c.b16 %v2093, %v2085
    %v2646 = vpack.c.b16 %v2094, %v2086
    %v2647 = vpack.c.b16 %v2095, %v2087
    %v2648 = vpack.c.b16 %v2096, %v2088
    %v2649 = vpack.c.b16 %v2105, %v2097
    %v2650 = vpack.c.b16 %v2106, %v2098
    %v2651 = vpack.c.b16 %v2107, %v2099
    %v2652 = vpack.c.b16 %v2108, %v2100
    %v2653 = vpack.c.b16 %v2109, %v2101
    %v2654 = vpack.c.b16 %v2110, %v2102
    %v2655 = vpack.c.b16 %v2111, %v2103
    %v2656 = vpack.c.b16 %v2112, %v2104
    %v2657 = vpack.c.b16 %v2121, %v2113
    %v2658 = vpack.c.b16 %v2122, %v2114
    %v2659 = vpack.c.b16 %v2123, %v2115
    %v2660 = vpack.c.b16 %v2124, %v2116
    %v2661 = vpack.c.b16 %v2125, %v2117
    %v2662 = vpack.c.b16 %v2126, %v2118
    %v2663 = vpack.c.b16 %v2127, %v2119
    %v2664 = vpack.c.b16 %v2128, %v2120
    %v2665 = vpack.c.b16 %v2137, %v2129
    %v2666 = vpack.c.b16 %v2138, %v2130
    %v2667 = vpack.c.b16 %v2139, %v2131
    %v2668 = vpack.c.b16 %v2140, %v2132
    %v2669 = vpack.c.b16 %v2141, %v2133
    %v2670 = vpack.c.b16 %v2142, %v2134
    %v2671 = vpack.c.b16 %v2143, %v2135
    %v2672 = vpack.c.b16 %v2144, %v2136
    %v2673 = vpack.c.b16 %v2153, %v2145
    %v2674 = vpack.c.b16 %v2154, %v2146
    %v2675 = vpack.c.b16 %v2155, %v2147
    %v2676 = vpack.c.b16 %v2156, %v2148
    %v2677 = vpack.c.b16 %v2157, %v2149
    %v2678 = vpack.c.b16 %v2158, %v2150
    %v2679 = vpack.c.b16 %v2159, %v2151
    %v2680 = vpack.c.b16 %v2160, %v2152
    %v2681 = vpack.c.b16 %v2169, %v2161
    %v2682 = vpack.c.b16 %v2170, %v2162
    %v2683 = vpack.c.b16 %v2171, %v2163
    %v2684 = vpack.c.b16 %v2172, %v2164
    %v2685 = vpack.c.b16 %v2173, %v2165
    %v2686 = vpack.c.b16 %v2174, %v2166
    %v2687 = vpack.c.b16 %v2175, %v2167
    %v2688 = vpack.c.b16 %v2176, %v2168
    %3201 = vmatpush.bf16.msra.mxu0 %v2233
    %3202 = vmatpush.bf16.msra.mxu0 %v2225
    %3203 = vmatpush.bf16.msra.mxu0 %v2217
    %3204 = vmatpush.bf16.msra.mxu0 %v2209
    %3205 = vmatpush.bf16.msra.mxu0 %v2201
    %3206 = vmatpush.bf16.msra.mxu0 %v2193
    %3207 = vmatpush.bf16.msra.mxu0 %v2185
    %3208 = vmatpush.bf16.msra.mxu0 %v2177
    %3209 = vmatmul.bf16.gmra.mxu0 %v625
    %v3210 = vpop.f32.mrf.mxu0
    %v3211 = vadd.f32 %v597, %v3210
    %v3212 = vpop.f32.mrf.mxu0
    %3213 = vdwg.mxu0
    %3214 = vmatpush.bf16.msra.mxu0 %v2297
    %3215 = vmatpush.bf16.msra.mxu0 %v2289
    %3216 = vmatpush.bf16.msra.mxu0 %v2281
    %3217 = vmatpush.bf16.msra.mxu0 %v2273
    %3218 = vmatpush.bf16.msra.mxu0 %v2265
    %3219 = vmatpush.bf16.msra.mxu0 %v2257
    %3220 = vmatpush.bf16.msra.mxu0 %v2249
    %3221 = vmatpush.bf16.msra.mxu0 %v2241
    %3222 = vmatmul.bf16.gmra.mxu0 %v626
    %v3223 = vpop.f32.mrf.mxu0
    %v3224 = vadd.f32 %v3211, %v3223
    %v3225 = vpop.f32.mrf.mxu0
    %3226 = vdwg.mxu0
    %3227 = vmatpush.bf16.msra.mxu0 %v2361
    %3228 = vmatpush.bf16.msra.mxu0 %v2353
    %3229 = vmatpush.bf16.msra.mxu0 %v2345
    %3230 = vmatpush.bf16.msra.mxu0 %v2337
    %3231 = vmatpush.bf16.msra.mxu0 %v2329
    %3232 = vmatpush.bf16.msra.mxu0 %v2321
    %3233 = vmatpush.bf16.msra.mxu0 %v2313
    %3234 = vmatpush.bf16.msra.mxu0 %v2305
    %3235 = vmatmul.bf16.gmra.mxu0 %v627
    %v3236 = vpop.f32.mrf.mxu0
    %v3237 = vadd.f32 %v3224, %v3236
    %v3238 = vpop.f32.mrf.mxu0
    %3239 = vdwg.mxu0
    %3240 = vmatpush.bf16.msra.mxu0 %v2425
    %3241 = vmatpush.bf16.msra.mxu0 %v2417
    %3242 = vmatpush.bf16.msra.mxu0 %v2409
    %3243 = vmatpush.bf16.msra.mxu0 %v2401
    %3244 = vmatpush.bf16.msra.mxu0 %v2393
    %3245 = vmatpush.bf16.msra.mxu0 %v2385
    %3246 = vmatpush.bf16.msra.mxu0 %v2377
    %3247 = vmatpush.bf16.msra.mxu0 %v2369
    %3248 = vmatmul.bf16.gmra.mxu0 %v628
    %v3249 = vpop.f32.mrf.mxu0
    %v3250 = vadd.f32 %v3237, %v3249
    %v3251 = vpop.f32.mrf.mxu0
    %3252 = vdwg.mxu0
    %3253 = vmatpush.bf16.msra.mxu0 %v2489
    %3254 = vmatpush.bf16.msra.mxu0 %v2481
    %3255 = vmatpush.bf16.msra.mxu0 %v2473
    %3256 = vmatpush.bf16.msra.mxu0 %v2465
    %3257 = vmatpush.bf16.msra.mxu0 %v2457
    %3258 = vmatpush.bf16.msra.mxu0 %v2449
    %3259 = vmatpush.bf16.msra.mxu0 %v2441
    %3260 = vmatpush.bf16.msra.mxu0 %v2433
    %3261 = vmatmul.bf16.gmra.mxu0 %v629
    %v3262 = vpop.f32.mrf.mxu0
    %v3263 = vadd.f32 %v3250, %v3262
    %v3264 = vpop.f32.mrf.mxu0
    %3265 = vdwg.mxu0
    %3266 = vmatpush.bf16.msra.mxu0 %v2553
    %3267 = vmatpush.bf16.msra.mxu0 %v2545
    %3268 = vmatpush.bf16.msra.mxu0 %v2537
    %3269 = vmatpush.bf16.msra.mxu0 %v2529
    %3270 = vmatpush.bf16.msra.mxu0 %v2521
    %3271 = vmatpush.bf16.msra.mxu0 %v2513
    %3272 = vmatpush.bf16.msra.mxu0 %v2505
    %3273 = vmatpush.bf16.msra.mxu0 %v2497
    %3274 = vmatmul.bf16.gmra.mxu0 %v630
    %v3275 = vpop.f32.mrf.mxu0
    %v3276 = vadd.f32 %v3263, %v3275
    %v3277 = vpop.f32.mrf.mxu0
    %3278 = vdwg.mxu0
    %3279 = vmatpush.bf16.msra.mxu0 %v2617
    %3280 = vmatpush.bf16.msra.mxu0 %v2609
    %3281 = vmatpush.bf16.msra.mxu0 %v2601
    %3282 = vmatpush.bf16.msra.mxu0 %v2593
    %3283 = vmatpush.bf16.msra.mxu0 %v2585
    %3284 = vmatpush.bf16.msra.mxu0 %v2577
    %3285 = vmatpush.bf16.msra.mxu0 %v2569
    %3286 = vmatpush.bf16.msra.mxu0 %v2561
    %3287 = vmatmul.bf16.gmra.mxu0 %v631
    %v3288 = vpop.f32.mrf.mxu0
    %v3289 = vadd.f32 %v3276, %v3288
    %v3290 = vpop.f32.mrf.mxu0
    %3291 = vdwg.mxu0
    %3292 = vmatpush.bf16.msra.mxu0 %v2681
    %3293 = vmatpush.bf16.msra.mxu0 %v2673
    %3294 = vmatpush.bf16.msra.mxu0 %v2665
    %3295 = vmatpush.bf16.msra.mxu0 %v2657
    %3296 = vmatpush.bf16.msra.mxu0 %v2649
    %3297 = vmatpush.bf16.msra.mxu0 %v2641
    %3298 = vmatpush.bf16.msra.mxu0 %v2633
    %3299 = vmatpush.bf16.msra.mxu0 %v2625
    %3300 = vmatmul.bf16.gmra.mxu0 %v632
    %v3301 = vpop.f32.mrf.mxu0
    %v3302 = vadd.f32 %v3289, %v3301
    %v3303 = vpop.f32.mrf.mxu0
    %3304 = vdwg.mxu0
    %3305 = vmatpush.bf16.msra.mxu0 %v2234
    %3306 = vmatpush.bf16.msra.mxu0 %v2226
    %3307 = vmatpush.bf16.msra.mxu0 %v2218
    %3308 = vmatpush.bf16.msra.mxu0 %v2210
    %3309 = vmatpush.bf16.msra.mxu0 %v2202
    %3310 = vmatpush.bf16.msra.mxu0 %v2194
    %3311 = vmatpush.bf16.msra.mxu0 %v2186
    %3312 = vmatpush.bf16.msra.mxu0 %v2178
    %3313 = vmatmul.bf16.gmra.mxu0 %v625
    %v3314 = vpop.f32.mrf.mxu0
    %v3315 = vadd.f32 %v598, %v3314
    %v3316 = vpop.f32.mrf.mxu0
    %3317 = vdwg.mxu0
    %3318 = vmatpush.bf16.msra.mxu0 %v2298
    %3319 = vmatpush.bf16.msra.mxu0 %v2290
    %3320 = vmatpush.bf16.msra.mxu0 %v2282
    %3321 = vmatpush.bf16.msra.mxu0 %v2274
    %3322 = vmatpush.bf16.msra.mxu0 %v2266
    %3323 = vmatpush.bf16.msra.mxu0 %v2258
    %3324 = vmatpush.bf16.msra.mxu0 %v2250
    %3325 = vmatpush.bf16.msra.mxu0 %v2242
    %3326 = vmatmul.bf16.gmra.mxu0 %v626
    %v3327 = vpop.f32.mrf.mxu0
    %v3328 = vadd.f32 %v3315, %v3327
    %v3329 = vpop.f32.mrf.mxu0
    %3330 = vdwg.mxu0
    %3331 = vmatpush.bf16.msra.mxu0 %v2362
    %3332 = vmatpush.bf16.msra.mxu0 %v2354
    %3333 = vmatpush.bf16.msra.mxu0 %v2346
    %3334 = vmatpush.bf16.msra.mxu0 %v2338
    %3335 = vmatpush.bf16.msra.mxu0 %v2330
    %3336 = vmatpush.bf16.msra.mxu0 %v2322
    %3337 = vmatpush.bf16.msra.mxu0 %v2314
    %3338 = vmatpush.bf16.msra.mxu0 %v2306
    %3339 = vmatmul.bf16.gmra.mxu0 %v627
    %v3340 = vpop.f32.mrf.mxu0
    %v3341 = vadd.f32 %v3328, %v3340
    %v3342 = vpop.f32.mrf.mxu0
    %3343 = vdwg.mxu0
    %3344 = vmatpush.bf16.msra.mxu0 %v2426
    %3345 = vmatpush.bf16.msra.mxu0 %v2418
    %3346 = vmatpush.bf16.msra.mxu0 %v2410
    %3347 = vmatpush.bf16.msra.mxu0 %v2402
    %3348 = vmatpush.bf16.msra.mxu0 %v2394
    %3349 = vmatpush.bf16.msra.mxu0 %v2386
    %3350 = vmatpush.bf16.msra.mxu0 %v2378
    %3351 = vmatpush.bf16.msra.mxu0 %v2370
    %3352 = vmatmul.bf16.gmra.mxu0 %v628
    %v3353 = vpop.f32.mrf.mxu0
    %v3354 = vadd.f32 %v3341, %v3353
    %v3355 = vpop.f32.mrf.mxu0
    %3356 = vdwg.mxu0
    %3357 = vmatpush.bf16.msra.mxu0 %v2490
    %3358 = vmatpush.bf16.msra.mxu0 %v2482
    %3359 = vmatpush.bf16.msra.mxu0 %v2474
    %3360 = vmatpush.bf16.msra.mxu0 %v2466
    %3361 = vmatpush.bf16.msra.mxu0 %v2458
    %3362 = vmatpush.bf16.msra.mxu0 %v2450
    %3363 = vmatpush.bf16.msra.mxu0 %v2442
    %3364 = vmatpush.bf16.msra.mxu0 %v2434
    %3365 = vmatmul.bf16.gmra.mxu0 %v629
    %v3366 = vpop.f32.mrf.mxu0
    %v3367 = vadd.f32 %v3354, %v3366
    %v3368 = vpop.f32.mrf.mxu0
    %3369 = vdwg.mxu0
    %3370 = vmatpush.bf16.msra.mxu0 %v2554
    %3371 = vmatpush.bf16.msra.mxu0 %v2546
    %3372 = vmatpush.bf16.msra.mxu0 %v2538
    %3373 = vmatpush.bf16.msra.mxu0 %v2530
    %3374 = vmatpush.bf16.msra.mxu0 %v2522
    %3375 = vmatpush.bf16.msra.mxu0 %v2514
    %3376 = vmatpush.bf16.msra.mxu0 %v2506
    %3377 = vmatpush.bf16.msra.mxu0 %v2498
    %3378 = vmatmul.bf16.gmra.mxu0 %v630
    %v3379 = vpop.f32.mrf.mxu0
    %v3380 = vadd.f32 %v3367, %v3379
    %v3381 = vpop.f32.mrf.mxu0
    %3382 = vdwg.mxu0
    %3383 = vmatpush.bf16.msra.mxu0 %v2618
    %3384 = vmatpush.bf16.msra.mxu0 %v2610
    %3385 = vmatpush.bf16.msra.mxu0 %v2602
    %3386 = vmatpush.bf16.msra.mxu0 %v2594
    %3387 = vmatpush.bf16.msra.mxu0 %v2586
    %3388 = vmatpush.bf16.msra.mxu0 %v2578
    %3389 = vmatpush.bf16.msra.mxu0 %v2570
    %3390 = vmatpush.bf16.msra.mxu0 %v2562
    %3391 = vmatmul.bf16.gmra.mxu0 %v631
    %v3392 = vpop.f32.mrf.mxu0
    %v3393 = vadd.f32 %v3380, %v3392
    %v3394 = vpop.f32.mrf.mxu0
    %3395 = vdwg.mxu0
    %3396 = vmatpush.bf16.msra.mxu0 %v2682
    %3397 = vmatpush.bf16.msra.mxu0 %v2674
    %3398 = vmatpush.bf16.msra.mxu0 %v2666
    %3399 = vmatpush.bf16.msra.mxu0 %v2658
    %3400 = vmatpush.bf16.msra.mxu0 %v2650
    %3401 = vmatpush.bf16.msra.mxu0 %v2642
    %3402 = vmatpush.bf16.msra.mxu0 %v2634
    %3403 = vmatpush.bf16.msra.mxu0 %v2626
    %3404 = vmatmul.bf16.gmra.mxu0 %v632
    %v3405 = vpop.f32.mrf.mxu0
    %v3406 = vadd.f32 %v3393, %v3405
    %v3407 = vpop.f32.mrf.mxu0
    %3408 = vdwg.mxu0
    %3409 = vmatpush.bf16.msra.mxu0 %v2235
    %3410 = vmatpush.bf16.msra.mxu0 %v2227
    %3411 = vmatpush.bf16.msra.mxu0 %v2219
    %3412 = vmatpush.bf16.msra.mxu0 %v2211
    %3413 = vmatpush.bf16.msra.mxu0 %v2203
    %3414 = vmatpush.bf16.msra.mxu0 %v2195
    %3415 = vmatpush.bf16.msra.mxu0 %v2187
    %3416 = vmatpush.bf16.msra.mxu0 %v2179
    %3417 = vmatmul.bf16.gmra.mxu0 %v625
    %v3418 = vpop.f32.mrf.mxu0
    %v3419 = vadd.f32 %v599, %v3418
    %v3420 = vpop.f32.mrf.mxu0
    %3421 = vdwg.mxu0
    %3422 = vmatpush.bf16.msra.mxu0 %v2299
    %3423 = vmatpush.bf16.msra.mxu0 %v2291
    %3424 = vmatpush.bf16.msra.mxu0 %v2283
    %3425 = vmatpush.bf16.msra.mxu0 %v2275
    %3426 = vmatpush.bf16.msra.mxu0 %v2267
    %3427 = vmatpush.bf16.msra.mxu0 %v2259
    %3428 = vmatpush.bf16.msra.mxu0 %v2251
    %3429 = vmatpush.bf16.msra.mxu0 %v2243
    %3430 = vmatmul.bf16.gmra.mxu0 %v626
    %v3431 = vpop.f32.mrf.mxu0
    %v3432 = vadd.f32 %v3419, %v3431
    %v3433 = vpop.f32.mrf.mxu0
    %3434 = vdwg.mxu0
    %3435 = vmatpush.bf16.msra.mxu0 %v2363
    %3436 = vmatpush.bf16.msra.mxu0 %v2355
    %3437 = vmatpush.bf16.msra.mxu0 %v2347
    %3438 = vmatpush.bf16.msra.mxu0 %v2339
    %3439 = vmatpush.bf16.msra.mxu0 %v2331
    %3440 = vmatpush.bf16.msra.mxu0 %v2323
    %3441 = vmatpush.bf16.msra.mxu0 %v2315
    %3442 = vmatpush.bf16.msra.mxu0 %v2307
    %3443 = vmatmul.bf16.gmra.mxu0 %v627
    %v3444 = vpop.f32.mrf.mxu0
    %v3445 = vadd.f32 %v3432, %v3444
    %v3446 = vpop.f32.mrf.mxu0
    %3447 = vdwg.mxu0
    %3448 = vmatpush.bf16.msra.mxu0 %v2427
    %3449 = vmatpush.bf16.msra.mxu0 %v2419
    %3450 = vmatpush.bf16.msra.mxu0 %v2411
    %3451 = vmatpush.bf16.msra.mxu0 %v2403
    %3452 = vmatpush.bf16.msra.mxu0 %v2395
    %3453 = vmatpush.bf16.msra.mxu0 %v2387
    %3454 = vmatpush.bf16.msra.mxu0 %v2379
    %3455 = vmatpush.bf16.msra.mxu0 %v2371
    %3456 = vmatmul.bf16.gmra.mxu0 %v628
    %v3457 = vpop.f32.mrf.mxu0
    %v3458 = vadd.f32 %v3445, %v3457
    %v3459 = vpop.f32.mrf.mxu0
    %3460 = vdwg.mxu0
    %3461 = vmatpush.bf16.msra.mxu0 %v2491
    %3462 = vmatpush.bf16.msra.mxu0 %v2483
    %3463 = vmatpush.bf16.msra.mxu0 %v2475
    %3464 = vmatpush.bf16.msra.mxu0 %v2467
    %3465 = vmatpush.bf16.msra.mxu0 %v2459
    %3466 = vmatpush.bf16.msra.mxu0 %v2451
    %3467 = vmatpush.bf16.msra.mxu0 %v2443
    %3468 = vmatpush.bf16.msra.mxu0 %v2435
    %3469 = vmatmul.bf16.gmra.mxu0 %v629
    %v3470 = vpop.f32.mrf.mxu0
    %v3471 = vadd.f32 %v3458, %v3470
    %v3472 = vpop.f32.mrf.mxu0
    %3473 = vdwg.mxu0
    %3474 = vmatpush.bf16.msra.mxu0 %v2555
    %3475 = vmatpush.bf16.msra.mxu0 %v2547
    %3476 = vmatpush.bf16.msra.mxu0 %v2539
    %3477 = vmatpush.bf16.msra.mxu0 %v2531
    %3478 = vmatpush.bf16.msra.mxu0 %v2523
    %3479 = vmatpush.bf16.msra.mxu0 %v2515
    %3480 = vmatpush.bf16.msra.mxu0 %v2507
    %3481 = vmatpush.bf16.msra.mxu0 %v2499
    %3482 = vmatmul.bf16.gmra.mxu0 %v630
    %v3483 = vpop.f32.mrf.mxu0
    %v3484 = vadd.f32 %v3471, %v3483
    %v3485 = vpop.f32.mrf.mxu0
    %3486 = vdwg.mxu0
    %3487 = vmatpush.bf16.msra.mxu0 %v2619
    %3488 = vmatpush.bf16.msra.mxu0 %v2611
    %3489 = vmatpush.bf16.msra.mxu0 %v2603
    %3490 = vmatpush.bf16.msra.mxu0 %v2595
    %3491 = vmatpush.bf16.msra.mxu0 %v2587
    %3492 = vmatpush.bf16.msra.mxu0 %v2579
    %3493 = vmatpush.bf16.msra.mxu0 %v2571
    %3494 = vmatpush.bf16.msra.mxu0 %v2563
    %3495 = vmatmul.bf16.gmra.mxu0 %v631
    %v3496 = vpop.f32.mrf.mxu0
    %v3497 = vadd.f32 %v3484, %v3496
    %v3498 = vpop.f32.mrf.mxu0
    %3499 = vdwg.mxu0
    %3500 = vmatpush.bf16.msra.mxu0 %v2683
    %3501 = vmatpush.bf16.msra.mxu0 %v2675
    %3502 = vmatpush.bf16.msra.mxu0 %v2667
    %3503 = vmatpush.bf16.msra.mxu0 %v2659
    %3504 = vmatpush.bf16.msra.mxu0 %v2651
    %3505 = vmatpush.bf16.msra.mxu0 %v2643
    %3506 = vmatpush.bf16.msra.mxu0 %v2635
    %3507 = vmatpush.bf16.msra.mxu0 %v2627
    %3508 = vmatmul.bf16.gmra.mxu0 %v632
    %v3509 = vpop.f32.mrf.mxu0
    %v3510 = vadd.f32 %v3497, %v3509
    %v3511 = vpop.f32.mrf.mxu0
    %3512 = vdwg.mxu0
    %3513 = vmatpush.bf16.msra.mxu0 %v2236
    %3514 = vmatpush.bf16.msra.mxu0 %v2228
    %3515 = vmatpush.bf16.msra.mxu0 %v2220
    %3516 = vmatpush.bf16.msra.mxu0 %v2212
    %3517 = vmatpush.bf16.msra.mxu0 %v2204
    %3518 = vmatpush.bf16.msra.mxu0 %v2196
    %3519 = vmatpush.bf16.msra.mxu0 %v2188
    %3520 = vmatpush.bf16.msra.mxu0 %v2180
    %3521 = vmatmul.bf16.gmra.mxu0 %v625
    %v3522 = vpop.f32.mrf.mxu0
    %v3523 = vadd.f32 %v600, %v3522
    %v3524 = vpop.f32.mrf.mxu0
    %3525 = vdwg.mxu0
    %3526 = vmatpush.bf16.msra.mxu0 %v2300
    %3527 = vmatpush.bf16.msra.mxu0 %v2292
    %3528 = vmatpush.bf16.msra.mxu0 %v2284
    %3529 = vmatpush.bf16.msra.mxu0 %v2276
    %3530 = vmatpush.bf16.msra.mxu0 %v2268
    %3531 = vmatpush.bf16.msra.mxu0 %v2260
    %3532 = vmatpush.bf16.msra.mxu0 %v2252
    %3533 = vmatpush.bf16.msra.mxu0 %v2244
    %3534 = vmatmul.bf16.gmra.mxu0 %v626
    %v3535 = vpop.f32.mrf.mxu0
    %v3536 = vadd.f32 %v3523, %v3535
    %v3537 = vpop.f32.mrf.mxu0
    %3538 = vdwg.mxu0
    %3539 = vmatpush.bf16.msra.mxu0 %v2364
    %3540 = vmatpush.bf16.msra.mxu0 %v2356
    %3541 = vmatpush.bf16.msra.mxu0 %v2348
    %3542 = vmatpush.bf16.msra.mxu0 %v2340
    %3543 = vmatpush.bf16.msra.mxu0 %v2332
    %3544 = vmatpush.bf16.msra.mxu0 %v2324
    %3545 = vmatpush.bf16.msra.mxu0 %v2316
    %3546 = vmatpush.bf16.msra.mxu0 %v2308
    %3547 = vmatmul.bf16.gmra.mxu0 %v627
    %v3548 = vpop.f32.mrf.mxu0
    %v3549 = vadd.f32 %v3536, %v3548
    %v3550 = vpop.f32.mrf.mxu0
    %3551 = vdwg.mxu0
    %3552 = vmatpush.bf16.msra.mxu0 %v2428
    %3553 = vmatpush.bf16.msra.mxu0 %v2420
    %3554 = vmatpush.bf16.msra.mxu0 %v2412
    %3555 = vmatpush.bf16.msra.mxu0 %v2404
    %3556 = vmatpush.bf16.msra.mxu0 %v2396
    %3557 = vmatpush.bf16.msra.mxu0 %v2388
    %3558 = vmatpush.bf16.msra.mxu0 %v2380
    %3559 = vmatpush.bf16.msra.mxu0 %v2372
    %3560 = vmatmul.bf16.gmra.mxu0 %v628
    %v3561 = vpop.f32.mrf.mxu0
    %v3562 = vadd.f32 %v3549, %v3561
    %v3563 = vpop.f32.mrf.mxu0
    %3564 = vdwg.mxu0
    %3565 = vmatpush.bf16.msra.mxu0 %v2492
    %3566 = vmatpush.bf16.msra.mxu0 %v2484
    %3567 = vmatpush.bf16.msra.mxu0 %v2476
    %3568 = vmatpush.bf16.msra.mxu0 %v2468
    %3569 = vmatpush.bf16.msra.mxu0 %v2460
    %3570 = vmatpush.bf16.msra.mxu0 %v2452
    %3571 = vmatpush.bf16.msra.mxu0 %v2444
    %3572 = vmatpush.bf16.msra.mxu0 %v2436
    %3573 = vmatmul.bf16.gmra.mxu0 %v629
    %v3574 = vpop.f32.mrf.mxu0
    %v3575 = vadd.f32 %v3562, %v3574
    %v3576 = vpop.f32.mrf.mxu0
    %3577 = vdwg.mxu0
    %3578 = vmatpush.bf16.msra.mxu0 %v2556
    %3579 = vmatpush.bf16.msra.mxu0 %v2548
    %3580 = vmatpush.bf16.msra.mxu0 %v2540
    %3581 = vmatpush.bf16.msra.mxu0 %v2532
    %3582 = vmatpush.bf16.msra.mxu0 %v2524
    %3583 = vmatpush.bf16.msra.mxu0 %v2516
    %3584 = vmatpush.bf16.msra.mxu0 %v2508
    %3585 = vmatpush.bf16.msra.mxu0 %v2500
    %3586 = vmatmul.bf16.gmra.mxu0 %v630
    %v3587 = vpop.f32.mrf.mxu0
    %v3588 = vadd.f32 %v3575, %v3587
    %v3589 = vpop.f32.mrf.mxu0
    %3590 = vdwg.mxu0
    %3591 = vmatpush.bf16.msra.mxu0 %v2620
    %3592 = vmatpush.bf16.msra.mxu0 %v2612
    %3593 = vmatpush.bf16.msra.mxu0 %v2604
    %3594 = vmatpush.bf16.msra.mxu0 %v2596
    %3595 = vmatpush.bf16.msra.mxu0 %v2588
    %3596 = vmatpush.bf16.msra.mxu0 %v2580
    %3597 = vmatpush.bf16.msra.mxu0 %v2572
    %3598 = vmatpush.bf16.msra.mxu0 %v2564
    %3599 = vmatmul.bf16.gmra.mxu0 %v631
    %v3600 = vpop.f32.mrf.mxu0
    %v3601 = vadd.f32 %v3588, %v3600
    %v3602 = vpop.f32.mrf.mxu0
    %3603 = vdwg.mxu0
    %3604 = vmatpush.bf16.msra.mxu0 %v2684
    %3605 = vmatpush.bf16.msra.mxu0 %v2676
    %3606 = vmatpush.bf16.msra.mxu0 %v2668
    %3607 = vmatpush.bf16.msra.mxu0 %v2660
    %3608 = vmatpush.bf16.msra.mxu0 %v2652
    %3609 = vmatpush.bf16.msra.mxu0 %v2644
    %3610 = vmatpush.bf16.msra.mxu0 %v2636
    %3611 = vmatpush.bf16.msra.mxu0 %v2628
    %3612 = vmatmul.bf16.gmra.mxu0 %v632
    %v3613 = vpop.f32.mrf.mxu0
    %v3614 = vadd.f32 %v3601, %v3613
    %v3615 = vpop.f32.mrf.mxu0
    %3616 = vdwg.mxu0
    %3617 = vmatpush.bf16.msra.mxu0 %v2237
    %3618 = vmatpush.bf16.msra.mxu0 %v2229
    %3619 = vmatpush.bf16.msra.mxu0 %v2221
    %3620 = vmatpush.bf16.msra.mxu0 %v2213
    %3621 = vmatpush.bf16.msra.mxu0 %v2205
    %3622 = vmatpush.bf16.msra.mxu0 %v2197
    %3623 = vmatpush.bf16.msra.mxu0 %v2189
    %3624 = vmatpush.bf16.msra.mxu0 %v2181
    %3625 = vmatmul.bf16.gmra.mxu0 %v625
    %v3626 = vpop.f32.mrf.mxu0
    %v3627 = vadd.f32 %v601, %v3626
    %v3628 = vpop.f32.mrf.mxu0
    %3629 = vdwg.mxu0
    %3630 = vmatpush.bf16.msra.mxu0 %v2301
    %3631 = vmatpush.bf16.msra.mxu0 %v2293
    %3632 = vmatpush.bf16.msra.mxu0 %v2285
    %3633 = vmatpush.bf16.msra.mxu0 %v2277
    %3634 = vmatpush.bf16.msra.mxu0 %v2269
    %3635 = vmatpush.bf16.msra.mxu0 %v2261
    %3636 = vmatpush.bf16.msra.mxu0 %v2253
    %3637 = vmatpush.bf16.msra.mxu0 %v2245
    %3638 = vmatmul.bf16.gmra.mxu0 %v626
    %v3639 = vpop.f32.mrf.mxu0
    %v3640 = vadd.f32 %v3627, %v3639
    %v3641 = vpop.f32.mrf.mxu0
    %3642 = vdwg.mxu0
    %3643 = vmatpush.bf16.msra.mxu0 %v2365
    %3644 = vmatpush.bf16.msra.mxu0 %v2357
    %3645 = vmatpush.bf16.msra.mxu0 %v2349
    %3646 = vmatpush.bf16.msra.mxu0 %v2341
    %3647 = vmatpush.bf16.msra.mxu0 %v2333
    %3648 = vmatpush.bf16.msra.mxu0 %v2325
    %3649 = vmatpush.bf16.msra.mxu0 %v2317
    %3650 = vmatpush.bf16.msra.mxu0 %v2309
    %3651 = vmatmul.bf16.gmra.mxu0 %v627
    %v3652 = vpop.f32.mrf.mxu0
    %v3653 = vadd.f32 %v3640, %v3652
    %v3654 = vpop.f32.mrf.mxu0
    %3655 = vdwg.mxu0
    %3656 = vmatpush.bf16.msra.mxu0 %v2429
    %3657 = vmatpush.bf16.msra.mxu0 %v2421
    %3658 = vmatpush.bf16.msra.mxu0 %v2413
    %3659 = vmatpush.bf16.msra.mxu0 %v2405
    %3660 = vmatpush.bf16.msra.mxu0 %v2397
    %3661 = vmatpush.bf16.msra.mxu0 %v2389
    %3662 = vmatpush.bf16.msra.mxu0 %v2381
    %3663 = vmatpush.bf16.msra.mxu0 %v2373
    %3664 = vmatmul.bf16.gmra.mxu0 %v628
    %v3665 = vpop.f32.mrf.mxu0
    %v3666 = vadd.f32 %v3653, %v3665
    %v3667 = vpop.f32.mrf.mxu0
    %3668 = vdwg.mxu0
    %3669 = vmatpush.bf16.msra.mxu0 %v2493
    %3670 = vmatpush.bf16.msra.mxu0 %v2485
    %3671 = vmatpush.bf16.msra.mxu0 %v2477
    %3672 = vmatpush.bf16.msra.mxu0 %v2469
    %3673 = vmatpush.bf16.msra.mxu0 %v2461
    %3674 = vmatpush.bf16.msra.mxu0 %v2453
    %3675 = vmatpush.bf16.msra.mxu0 %v2445
    %3676 = vmatpush.bf16.msra.mxu0 %v2437
    %3677 = vmatmul.bf16.gmra.mxu0 %v629
    %v3678 = vpop.f32.mrf.mxu0
    %v3679 = vadd.f32 %v3666, %v3678
    %v3680 = vpop.f32.mrf.mxu0
    %3681 = vdwg.mxu0
    %3682 = vmatpush.bf16.msra.mxu0 %v2557
    %3683 = vmatpush.bf16.msra.mxu0 %v2549
    %3684 = vmatpush.bf16.msra.mxu0 %v2541
    %3685 = vmatpush.bf16.msra.mxu0 %v2533
    %3686 = vmatpush.bf16.msra.mxu0 %v2525
    %3687 = vmatpush.bf16.msra.mxu0 %v2517
    %3688 = vmatpush.bf16.msra.mxu0 %v2509
    %3689 = vmatpush.bf16.msra.mxu0 %v2501
    %3690 = vmatmul.bf16.gmra.mxu0 %v630
    %v3691 = vpop.f32.mrf.mxu0
    %v3692 = vadd.f32 %v3679, %v3691
    %v3693 = vpop.f32.mrf.mxu0
    %3694 = vdwg.mxu0
    %3695 = vmatpush.bf16.msra.mxu0 %v2621
    %3696 = vmatpush.bf16.msra.mxu0 %v2613
    %3697 = vmatpush.bf16.msra.mxu0 %v2605
    %3698 = vmatpush.bf16.msra.mxu0 %v2597
    %3699 = vmatpush.bf16.msra.mxu0 %v2589
    %3700 = vmatpush.bf16.msra.mxu0 %v2581
    %3701 = vmatpush.bf16.msra.mxu0 %v2573
    %3702 = vmatpush.bf16.msra.mxu0 %v2565
    %3703 = vmatmul.bf16.gmra.mxu0 %v631
    %v3704 = vpop.f32.mrf.mxu0
    %v3705 = vadd.f32 %v3692, %v3704
    %v3706 = vpop.f32.mrf.mxu0
    %3707 = vdwg.mxu0
    %3708 = vmatpush.bf16.msra.mxu0 %v2685
    %3709 = vmatpush.bf16.msra.mxu0 %v2677
    %3710 = vmatpush.bf16.msra.mxu0 %v2669
    %3711 = vmatpush.bf16.msra.mxu0 %v2661
    %3712 = vmatpush.bf16.msra.mxu0 %v2653
    %3713 = vmatpush.bf16.msra.mxu0 %v2645
    %3714 = vmatpush.bf16.msra.mxu0 %v2637
    %3715 = vmatpush.bf16.msra.mxu0 %v2629
    %3716 = vmatmul.bf16.gmra.mxu0 %v632
    %v3717 = vpop.f32.mrf.mxu0
    %v3718 = vadd.f32 %v3705, %v3717
    %v3719 = vpop.f32.mrf.mxu0
    %3720 = vdwg.mxu0
    %3721 = vmatpush.bf16.msra.mxu0 %v2238
    %3722 = vmatpush.bf16.msra.mxu0 %v2230
    %3723 = vmatpush.bf16.msra.mxu0 %v2222
    %3724 = vmatpush.bf16.msra.mxu0 %v2214
    %3725 = vmatpush.bf16.msra.mxu0 %v2206
    %3726 = vmatpush.bf16.msra.mxu0 %v2198
    %3727 = vmatpush.bf16.msra.mxu0 %v2190
    %3728 = vmatpush.bf16.msra.mxu0 %v2182
    %3729 = vmatmul.bf16.gmra.mxu0 %v625
    %v3730 = vpop.f32.mrf.mxu0
    %v3731 = vadd.f32 %v602, %v3730
    %v3732 = vpop.f32.mrf.mxu0
    %3733 = vdwg.mxu0
    %3734 = vmatpush.bf16.msra.mxu0 %v2302
    %3735 = vmatpush.bf16.msra.mxu0 %v2294
    %3736 = vmatpush.bf16.msra.mxu0 %v2286
    %3737 = vmatpush.bf16.msra.mxu0 %v2278
    %3738 = vmatpush.bf16.msra.mxu0 %v2270
    %3739 = vmatpush.bf16.msra.mxu0 %v2262
    %3740 = vmatpush.bf16.msra.mxu0 %v2254
    %3741 = vmatpush.bf16.msra.mxu0 %v2246
    %3742 = vmatmul.bf16.gmra.mxu0 %v626
    %v3743 = vpop.f32.mrf.mxu0
    %v3744 = vadd.f32 %v3731, %v3743
    %v3745 = vpop.f32.mrf.mxu0
    %3746 = vdwg.mxu0
    %3747 = vmatpush.bf16.msra.mxu0 %v2366
    %3748 = vmatpush.bf16.msra.mxu0 %v2358
    %3749 = vmatpush.bf16.msra.mxu0 %v2350
    %3750 = vmatpush.bf16.msra.mxu0 %v2342
    %3751 = vmatpush.bf16.msra.mxu0 %v2334
    %3752 = vmatpush.bf16.msra.mxu0 %v2326
    %3753 = vmatpush.bf16.msra.mxu0 %v2318
    %3754 = vmatpush.bf16.msra.mxu0 %v2310
    %3755 = vmatmul.bf16.gmra.mxu0 %v627
    %v3756 = vpop.f32.mrf.mxu0
    %v3757 = vadd.f32 %v3744, %v3756
    %v3758 = vpop.f32.mrf.mxu0
    %3759 = vdwg.mxu0
    %3760 = vmatpush.bf16.msra.mxu0 %v2430
    %3761 = vmatpush.bf16.msra.mxu0 %v2422
    %3762 = vmatpush.bf16.msra.mxu0 %v2414
    %3763 = vmatpush.bf16.msra.mxu0 %v2406
    %3764 = vmatpush.bf16.msra.mxu0 %v2398
    %3765 = vmatpush.bf16.msra.mxu0 %v2390
    %3766 = vmatpush.bf16.msra.mxu0 %v2382
    %3767 = vmatpush.bf16.msra.mxu0 %v2374
    %3768 = vmatmul.bf16.gmra.mxu0 %v628
    %v3769 = vpop.f32.mrf.mxu0
    %v3770 = vadd.f32 %v3757, %v3769
    %v3771 = vpop.f32.mrf.mxu0
    %3772 = vdwg.mxu0
    %3773 = vmatpush.bf16.msra.mxu0 %v2494
    %3774 = vmatpush.bf16.msra.mxu0 %v2486
    %3775 = vmatpush.bf16.msra.mxu0 %v2478
    %3776 = vmatpush.bf16.msra.mxu0 %v2470
    %3777 = vmatpush.bf16.msra.mxu0 %v2462
    %3778 = vmatpush.bf16.msra.mxu0 %v2454
    %3779 = vmatpush.bf16.msra.mxu0 %v2446
    %3780 = vmatpush.bf16.msra.mxu0 %v2438
    %3781 = vmatmul.bf16.gmra.mxu0 %v629
    %v3782 = vpop.f32.mrf.mxu0
    %v3783 = vadd.f32 %v3770, %v3782
    %v3784 = vpop.f32.mrf.mxu0
    %3785 = vdwg.mxu0
    %3786 = vmatpush.bf16.msra.mxu0 %v2558
    %3787 = vmatpush.bf16.msra.mxu0 %v2550
    %3788 = vmatpush.bf16.msra.mxu0 %v2542
    %3789 = vmatpush.bf16.msra.mxu0 %v2534
    %3790 = vmatpush.bf16.msra.mxu0 %v2526
    %3791 = vmatpush.bf16.msra.mxu0 %v2518
    %3792 = vmatpush.bf16.msra.mxu0 %v2510
    %3793 = vmatpush.bf16.msra.mxu0 %v2502
    %3794 = vmatmul.bf16.gmra.mxu0 %v630
    %v3795 = vpop.f32.mrf.mxu0
    %v3796 = vadd.f32 %v3783, %v3795
    %v3797 = vpop.f32.mrf.mxu0
    %3798 = vdwg.mxu0
    %3799 = vmatpush.bf16.msra.mxu0 %v2622
    %3800 = vmatpush.bf16.msra.mxu0 %v2614
    %3801 = vmatpush.bf16.msra.mxu0 %v2606
    %3802 = vmatpush.bf16.msra.mxu0 %v2598
    %3803 = vmatpush.bf16.msra.mxu0 %v2590
    %3804 = vmatpush.bf16.msra.mxu0 %v2582
    %3805 = vmatpush.bf16.msra.mxu0 %v2574
    %3806 = vmatpush.bf16.msra.mxu0 %v2566
    %3807 = vmatmul.bf16.gmra.mxu0 %v631
    %v3808 = vpop.f32.mrf.mxu0
    %v3809 = vadd.f32 %v3796, %v3808
    %v3810 = vpop.f32.mrf.mxu0
    %3811 = vdwg.mxu0
    %3812 = vmatpush.bf16.msra.mxu0 %v2686
    %3813 = vmatpush.bf16.msra.mxu0 %v2678
    %3814 = vmatpush.bf16.msra.mxu0 %v2670
    %3815 = vmatpush.bf16.msra.mxu0 %v2662
    %3816 = vmatpush.bf16.msra.mxu0 %v2654
    %3817 = vmatpush.bf16.msra.mxu0 %v2646
    %3818 = vmatpush.bf16.msra.mxu0 %v2638
    %3819 = vmatpush.bf16.msra.mxu0 %v2630
    %3820 = vmatmul.bf16.gmra.mxu0 %v632
    %v3821 = vpop.f32.mrf.mxu0
    %v3822 = vadd.f32 %v3809, %v3821
    %v3823 = vpop.f32.mrf.mxu0
    %3824 = vdwg.mxu0
    %3825 = vmatpush.bf16.msra.mxu0 %v2239
    %3826 = vmatpush.bf16.msra.mxu0 %v2231
    %3827 = vmatpush.bf16.msra.mxu0 %v2223
    %3828 = vmatpush.bf16.msra.mxu0 %v2215
    %3829 = vmatpush.bf16.msra.mxu0 %v2207
    %3830 = vmatpush.bf16.msra.mxu0 %v2199
    %3831 = vmatpush.bf16.msra.mxu0 %v2191
    %3832 = vmatpush.bf16.msra.mxu0 %v2183
    %3833 = vmatmul.bf16.gmra.mxu0 %v625
    %v3834 = vpop.f32.mrf.mxu0
    %v3835 = vadd.f32 %v603, %v3834
    %v3836 = vpop.f32.mrf.mxu0
    %3837 = vdwg.mxu0
    %3838 = vmatpush.bf16.msra.mxu0 %v2303
    %3839 = vmatpush.bf16.msra.mxu0 %v2295
    %3840 = vmatpush.bf16.msra.mxu0 %v2287
    %3841 = vmatpush.bf16.msra.mxu0 %v2279
    %3842 = vmatpush.bf16.msra.mxu0 %v2271
    %3843 = vmatpush.bf16.msra.mxu0 %v2263
    %3844 = vmatpush.bf16.msra.mxu0 %v2255
    %3845 = vmatpush.bf16.msra.mxu0 %v2247
    %3846 = vmatmul.bf16.gmra.mxu0 %v626
    %v3847 = vpop.f32.mrf.mxu0
    %v3848 = vadd.f32 %v3835, %v3847
    %v3849 = vpop.f32.mrf.mxu0
    %3850 = vdwg.mxu0
    %3851 = vmatpush.bf16.msra.mxu0 %v2367
    %3852 = vmatpush.bf16.msra.mxu0 %v2359
    %3853 = vmatpush.bf16.msra.mxu0 %v2351
    %3854 = vmatpush.bf16.msra.mxu0 %v2343
    %3855 = vmatpush.bf16.msra.mxu0 %v2335
    %3856 = vmatpush.bf16.msra.mxu0 %v2327
    %3857 = vmatpush.bf16.msra.mxu0 %v2319
    %3858 = vmatpush.bf16.msra.mxu0 %v2311
    %3859 = vmatmul.bf16.gmra.mxu0 %v627
    %v3860 = vpop.f32.mrf.mxu0
    %v3861 = vadd.f32 %v3848, %v3860
    %v3862 = vpop.f32.mrf.mxu0
    %3863 = vdwg.mxu0
    %3864 = vmatpush.bf16.msra.mxu0 %v2431
    %3865 = vmatpush.bf16.msra.mxu0 %v2423
    %3866 = vmatpush.bf16.msra.mxu0 %v2415
    %3867 = vmatpush.bf16.msra.mxu0 %v2407
    %3868 = vmatpush.bf16.msra.mxu0 %v2399
    %3869 = vmatpush.bf16.msra.mxu0 %v2391
    %3870 = vmatpush.bf16.msra.mxu0 %v2383
    %3871 = vmatpush.bf16.msra.mxu0 %v2375
    %3872 = vmatmul.bf16.gmra.mxu0 %v628
    %v3873 = vpop.f32.mrf.mxu0
    %v3874 = vadd.f32 %v3861, %v3873
    %v3875 = vpop.f32.mrf.mxu0
    %3876 = vdwg.mxu0
    %3877 = vmatpush.bf16.msra.mxu0 %v2495
    %3878 = vmatpush.bf16.msra.mxu0 %v2487
    %3879 = vmatpush.bf16.msra.mxu0 %v2479
    %3880 = vmatpush.bf16.msra.mxu0 %v2471
    %3881 = vmatpush.bf16.msra.mxu0 %v2463
    %3882 = vmatpush.bf16.msra.mxu0 %v2455
    %3883 = vmatpush.bf16.msra.mxu0 %v2447
    %3884 = vmatpush.bf16.msra.mxu0 %v2439
    %3885 = vmatmul.bf16.gmra.mxu0 %v629
    %v3886 = vpop.f32.mrf.mxu0
    %v3887 = vadd.f32 %v3874, %v3886
    %v3888 = vpop.f32.mrf.mxu0
    %3889 = vdwg.mxu0
    %3890 = vmatpush.bf16.msra.mxu0 %v2559
    %3891 = vmatpush.bf16.msra.mxu0 %v2551
    %3892 = vmatpush.bf16.msra.mxu0 %v2543
    %3893 = vmatpush.bf16.msra.mxu0 %v2535
    %3894 = vmatpush.bf16.msra.mxu0 %v2527
    %3895 = vmatpush.bf16.msra.mxu0 %v2519
    %3896 = vmatpush.bf16.msra.mxu0 %v2511
    %3897 = vmatpush.bf16.msra.mxu0 %v2503
    %3898 = vmatmul.bf16.gmra.mxu0 %v630
    %v3899 = vpop.f32.mrf.mxu0
    %v3900 = vadd.f32 %v3887, %v3899
    %v3901 = vpop.f32.mrf.mxu0
    %3902 = vdwg.mxu0
    %3903 = vmatpush.bf16.msra.mxu0 %v2623
    %3904 = vmatpush.bf16.msra.mxu0 %v2615
    %3905 = vmatpush.bf16.msra.mxu0 %v2607
    %3906 = vmatpush.bf16.msra.mxu0 %v2599
    %3907 = vmatpush.bf16.msra.mxu0 %v2591
    %3908 = vmatpush.bf16.msra.mxu0 %v2583
    %3909 = vmatpush.bf16.msra.mxu0 %v2575
    %3910 = vmatpush.bf16.msra.mxu0 %v2567
    %3911 = vmatmul.bf16.gmra.mxu0 %v631
    %v3912 = vpop.f32.mrf.mxu0
    %v3913 = vadd.f32 %v3900, %v3912
    %v3914 = vpop.f32.mrf.mxu0
    %3915 = vdwg.mxu0
    %3916 = vmatpush.bf16.msra.mxu0 %v2687
    %3917 = vmatpush.bf16.msra.mxu0 %v2679
    %3918 = vmatpush.bf16.msra.mxu0 %v2671
    %3919 = vmatpush.bf16.msra.mxu0 %v2663
    %3920 = vmatpush.bf16.msra.mxu0 %v2655
    %3921 = vmatpush.bf16.msra.mxu0 %v2647
    %3922 = vmatpush.bf16.msra.mxu0 %v2639
    %3923 = vmatpush.bf16.msra.mxu0 %v2631
    %3924 = vmatmul.bf16.gmra.mxu0 %v632
    %v3925 = vpop.f32.mrf.mxu0
    %v3926 = vadd.f32 %v3913, %v3925
    %v3927 = vpop.f32.mrf.mxu0
    %3928 = vdwg.mxu0
    %3929 = vmatpush.bf16.msra.mxu0 %v2240
    %3930 = vmatpush.bf16.msra.mxu0 %v2232
    %3931 = vmatpush.bf16.msra.mxu0 %v2224
    %3932 = vmatpush.bf16.msra.mxu0 %v2216
    %3933 = vmatpush.bf16.msra.mxu0 %v2208
    %3934 = vmatpush.bf16.msra.mxu0 %v2200
    %3935 = vmatpush.bf16.msra.mxu0 %v2192
    %3936 = vmatpush.bf16.msra.mxu0 %v2184
    %3937 = vmatmul.bf16.gmra.mxu0 %v625
    %v3938 = vpop.f32.mrf.mxu0
    %v3939 = vadd.f32 %v604, %v3938
    %v3940 = vpop.f32.mrf.mxu0
    %3941 = vdwg.mxu0
    %3942 = vmatpush.bf16.msra.mxu0 %v2304
    %3943 = vmatpush.bf16.msra.mxu0 %v2296
    %3944 = vmatpush.bf16.msra.mxu0 %v2288
    %3945 = vmatpush.bf16.msra.mxu0 %v2280
    %3946 = vmatpush.bf16.msra.mxu0 %v2272
    %3947 = vmatpush.bf16.msra.mxu0 %v2264
    %3948 = vmatpush.bf16.msra.mxu0 %v2256
    %3949 = vmatpush.bf16.msra.mxu0 %v2248
    %3950 = vmatmul.bf16.gmra.mxu0 %v626
    %v3951 = vpop.f32.mrf.mxu0
    %v3952 = vadd.f32 %v3939, %v3951
    %v3953 = vpop.f32.mrf.mxu0
    %3954 = vdwg.mxu0
    %3955 = vmatpush.bf16.msra.mxu0 %v2368
    %3956 = vmatpush.bf16.msra.mxu0 %v2360
    %3957 = vmatpush.bf16.msra.mxu0 %v2352
    %3958 = vmatpush.bf16.msra.mxu0 %v2344
    %3959 = vmatpush.bf16.msra.mxu0 %v2336
    %3960 = vmatpush.bf16.msra.mxu0 %v2328
    %3961 = vmatpush.bf16.msra.mxu0 %v2320
    %3962 = vmatpush.bf16.msra.mxu0 %v2312
    %3963 = vmatmul.bf16.gmra.mxu0 %v627
    %v3964 = vpop.f32.mrf.mxu0
    %v3965 = vadd.f32 %v3952, %v3964
    %v3966 = vpop.f32.mrf.mxu0
    %3967 = vdwg.mxu0
    %3968 = vmatpush.bf16.msra.mxu0 %v2432
    %3969 = vmatpush.bf16.msra.mxu0 %v2424
    %3970 = vmatpush.bf16.msra.mxu0 %v2416
    %3971 = vmatpush.bf16.msra.mxu0 %v2408
    %3972 = vmatpush.bf16.msra.mxu0 %v2400
    %3973 = vmatpush.bf16.msra.mxu0 %v2392
    %3974 = vmatpush.bf16.msra.mxu0 %v2384
    %3975 = vmatpush.bf16.msra.mxu0 %v2376
    %3976 = vmatmul.bf16.gmra.mxu0 %v628
    %v3977 = vpop.f32.mrf.mxu0
    %v3978 = vadd.f32 %v3965, %v3977
    %v3979 = vpop.f32.mrf.mxu0
    %3980 = vdwg.mxu0
    %3981 = vmatpush.bf16.msra.mxu0 %v2496
    %3982 = vmatpush.bf16.msra.mxu0 %v2488
    %3983 = vmatpush.bf16.msra.mxu0 %v2480
    %3984 = vmatpush.bf16.msra.mxu0 %v2472
    %3985 = vmatpush.bf16.msra.mxu0 %v2464
    %3986 = vmatpush.bf16.msra.mxu0 %v2456
    %3987 = vmatpush.bf16.msra.mxu0 %v2448
    %3988 = vmatpush.bf16.msra.mxu0 %v2440
    %3989 = vmatmul.bf16.gmra.mxu0 %v629
    %v3990 = vpop.f32.mrf.mxu0
    %v3991 = vadd.f32 %v3978, %v3990
    %v3992 = vpop.f32.mrf.mxu0
    %3993 = vdwg.mxu0
    %3994 = vmatpush.bf16.msra.mxu0 %v2560
    %3995 = vmatpush.bf16.msra.mxu0 %v2552
    %3996 = vmatpush.bf16.msra.mxu0 %v2544
    %3997 = vmatpush.bf16.msra.mxu0 %v2536
    %3998 = vmatpush.bf16.msra.mxu0 %v2528
    %3999 = vmatpush.bf16.msra.mxu0 %v2520
    %4000 = vmatpush.bf16.msra.mxu0 %v2512
    %4001 = vmatpush.bf16.msra.mxu0 %v2504
    %4002 = vmatmul.bf16.gmra.mxu0 %v630
    %v4003 = vpop.f32.mrf.mxu0
    %v4004 = vadd.f32 %v3991, %v4003
    %v4005 = vpop.f32.mrf.mxu0
    %4006 = vdwg.mxu0
    %4007 = vmatpush.bf16.msra.mxu0 %v2624
    %4008 = vmatpush.bf16.msra.mxu0 %v2616
    %4009 = vmatpush.bf16.msra.mxu0 %v2608
    %4010 = vmatpush.bf16.msra.mxu0 %v2600
    %4011 = vmatpush.bf16.msra.mxu0 %v2592
    %4012 = vmatpush.bf16.msra.mxu0 %v2584
    %4013 = vmatpush.bf16.msra.mxu0 %v2576
    %4014 = vmatpush.bf16.msra.mxu0 %v2568
    %4015 = vmatmul.bf16.gmra.mxu0 %v631
    %v4016 = vpop.f32.mrf.mxu0
    %v4017 = vadd.f32 %v4004, %v4016
    %v4018 = vpop.f32.mrf.mxu0
    %4019 = vdwg.mxu0
    %4020 = vmatpush.bf16.msra.mxu0 %v2688
    %4021 = vmatpush.bf16.msra.mxu0 %v2680
    %4022 = vmatpush.bf16.msra.mxu0 %v2672
    %4023 = vmatpush.bf16.msra.mxu0 %v2664
    %4024 = vmatpush.bf16.msra.mxu0 %v2656
    %4025 = vmatpush.bf16.msra.mxu0 %v2648
    %4026 = vmatpush.bf16.msra.mxu0 %v2640
    %4027 = vmatpush.bf16.msra.mxu0 %v2632
    %4028 = vmatmul.bf16.gmra.mxu0 %v632
    %v4029 = vpop.f32.mrf.mxu0
    %v4030 = vadd.f32 %v4017, %v4029
    %v4031 = vpop.f32.mrf.mxu0
    %4032 = vdwg.mxu0
    %vm4033 = vcmp.ge.f32.partialorder %v3302, 0.0
    %vm4034 = vcmp.ge.f32.partialorder %v3406, 0.0
    %vm4035 = vcmp.ge.f32.partialorder %v3510, 0.0
    %vm4036 = vcmp.ge.f32.partialorder %v3614, 0.0
    %vm4037 = vcmp.ge.f32.partialorder %v3718, 0.0
    %vm4038 = vcmp.ge.f32.partialorder %v3822, 0.0
    %vm4039 = vcmp.ge.f32.partialorder %v3926, 0.0
    %vm4040 = vcmp.ge.f32.partialorder %v4030, 0.0
    %v4041 = vmul.f32 %v3302, 0.01
    %v4042 = vmul.f32 %v3406, 0.01
    %v4043 = vmul.f32 %v3510, 0.01
    %v4044 = vmul.f32 %v3614, 0.01
    %v4045 = vmul.f32 %v3718, 0.01
    %v4046 = vmul.f32 %v3822, 0.01
    %v4047 = vmul.f32 %v3926, 0.01
    %v4048 = vmul.f32 %v4030, 0.01
    %v4049 = vsel %vm4033, %v3302, %v4041
    %v4050 = vsel %vm4034, %v3406, %v4042
    %v4051 = vsel %vm4035, %v3510, %v4043
    %v4052 = vsel %vm4036, %v3614, %v4044
    %v4053 = vsel %vm4037, %v3718, %v4045
    %v4054 = vsel %vm4038, %v3822, %v4046
    %v4055 = vsel %vm4039, %v3926, %v4047
    %v4056 = vsel %vm4040, %v4030, %v4048
    %v4057 = vpack.c.bf16 %v4049, %v4049
    %v4058 = vpack.c.bf16 %v4050, %v4050
    %v4059 = vpack.c.bf16 %v4051, %v4051
    %v4060 = vpack.c.bf16 %v4052, %v4052
    %v4061 = vpack.c.bf16 %v4053, %v4053
    %v4062 = vpack.c.bf16 %v4054, %v4054
    %v4063 = vpack.c.bf16 %v4055, %v4055
    %v4064 = vpack.c.bf16 %v4056, %v4056
    %v4065 = vld [vmem:[#allocation6] sm:$0xf]
    %v4066 = vld [vmem:[#allocation6 + $0x4] sm:$0xf]
    %v4067 = vld [vmem:[#allocation6 + $0x8] sm:$0xf]
    %v4068 = vld [vmem:[#allocation6 + $0xc] sm:$0xf]
    %v4069 = vld [vmem:[#allocation6 + $0x10] sm:$0xf]
    %v4070 = vld [vmem:[#allocation6 + $0x14] sm:$0xf]
    %v4071 = vld [vmem:[#allocation6 + $0x18] sm:$0xf]
    %v4072 = vld [vmem:[#allocation6 + $0x1c] sm:$0xf]
    %v4073 = vld [vmem:[#allocation6 + $0x20] sm:$0xf]
    %v4074 = vld [vmem:[#allocation6 + $0x24] sm:$0xf]
    %v4075 = vld [vmem:[#allocation6 + $0x28] sm:$0xf]
    %v4076 = vld [vmem:[#allocation6 + $0x2c] sm:$0xf]
    %v4077 = vld [vmem:[#allocation6 + $0x30] sm:$0xf]
    %v4078 = vld [vmem:[#allocation6 + $0x34] sm:$0xf]
    %v4079 = vld [vmem:[#allocation6 + $0x38] sm:$0xf]
    %v4080 = vld [vmem:[#allocation6 + $0x3c] sm:$0xf]
    %v4081 = vld [vmem:[#allocation6 + $0x40] sm:$0xf]
    %v4082 = vld [vmem:[#allocation6 + $0x44] sm:$0xf]
    %v4083 = vld [vmem:[#allocation6 + $0x48] sm:$0xf]
    %v4084 = vld [vmem:[#allocation6 + $0x4c] sm:$0xf]
    %v4085 = vld [vmem:[#allocation6 + $0x50] sm:$0xf]
    %v4086 = vld [vmem:[#allocation6 + $0x54] sm:$0xf]
    %v4087 = vld [vmem:[#allocation6 + $0x58] sm:$0xf]
    %v4088 = vld [vmem:[#allocation6 + $0x5c] sm:$0xf]
    %v4089 = vld [vmem:[#allocation6 + $0x60] sm:$0xf]
    %v4090 = vld [vmem:[#allocation6 + $0x64] sm:$0xf]
    %v4091 = vld [vmem:[#allocation6 + $0x68] sm:$0xf]
    %v4092 = vld [vmem:[#allocation6 + $0x6c] sm:$0xf]
    %v4093 = vld [vmem:[#allocation6 + $0x70] sm:$0xf]
    %v4094 = vld [vmem:[#allocation6 + $0x74] sm:$0xf]
    %v4095 = vld [vmem:[#allocation6 + $0x78] sm:$0xf]
    %v4096 = vld [vmem:[#allocation6 + $0x7c] sm:$0xf]
    %v4097 = vld [vmem:[#allocation6 + $0x80] sm:$0xf]
    %v4098 = vld [vmem:[#allocation6 + $0x84] sm:$0xf]
    %v4099 = vld [vmem:[#allocation6 + $0x88] sm:$0xf]
    %v4100 = vld [vmem:[#allocation6 + $0x8c] sm:$0xf]
    %v4101 = vld [vmem:[#allocation6 + $0x90] sm:$0xf]
    %v4102 = vld [vmem:[#allocation6 + $0x94] sm:$0xf]
    %v4103 = vld [vmem:[#allocation6 + $0x98] sm:$0xf]
    %v4104 = vld [vmem:[#allocation6 + $0x9c] sm:$0xf]
    %v4105 = vld [vmem:[#allocation6 + $0xa0] sm:$0xf]
    %v4106 = vld [vmem:[#allocation6 + $0xa4] sm:$0xf]
    %v4107 = vld [vmem:[#allocation6 + $0xa8] sm:$0xf]
    %v4108 = vld [vmem:[#allocation6 + $0xac] sm:$0xf]
    %v4109 = vld [vmem:[#allocation6 + $0xb0] sm:$0xf]
    %v4110 = vld [vmem:[#allocation6 + $0xb4] sm:$0xf]
    %v4111 = vld [vmem:[#allocation6 + $0xb8] sm:$0xf]
    %v4112 = vld [vmem:[#allocation6 + $0xbc] sm:$0xf]
    %v4113 = vld [vmem:[#allocation6 + $0xc0] sm:$0xf]
    %v4114 = vld [vmem:[#allocation6 + $0xc4] sm:$0xf]
    %v4115 = vld [vmem:[#allocation6 + $0xc8] sm:$0xf]
    %v4116 = vld [vmem:[#allocation6 + $0xcc] sm:$0xf]
    %v4117 = vld [vmem:[#allocation6 + $0xd0] sm:$0xf]
    %v4118 = vld [vmem:[#allocation6 + $0xd4] sm:$0xf]
    %v4119 = vld [vmem:[#allocation6 + $0xd8] sm:$0xf]
    %v4120 = vld [vmem:[#allocation6 + $0xdc] sm:$0xf]
    %v4121 = vld [vmem:[#allocation6 + $0xe0] sm:$0xf]
    %v4122 = vld [vmem:[#allocation6 + $0xe4] sm:$0xf]
    %v4123 = vld [vmem:[#allocation6 + $0xe8] sm:$0xf]
    %v4124 = vld [vmem:[#allocation6 + $0xec] sm:$0xf]
    %v4125 = vld [vmem:[#allocation6 + $0xf0] sm:$0xf]
    %v4126 = vld [vmem:[#allocation6 + $0xf4] sm:$0xf]
    %v4127 = vld [vmem:[#allocation6 + $0xf8] sm:$0xf]
    %v4128 = vld [vmem:[#allocation6 + $0xfc] sm:$0xf]
    %v4129 = vld [vmem:[#allocation6 + $0x100] sm:$0xf]
    %v4130 = vld [vmem:[#allocation6 + $0x104] sm:$0xf]
    %v4131 = vld [vmem:[#allocation6 + $0x108] sm:$0xf]
    %v4132 = vld [vmem:[#allocation6 + $0x10c] sm:$0xf]
    %v4133 = vld [vmem:[#allocation6 + $0x110] sm:$0xf]
    %v4134 = vld [vmem:[#allocation6 + $0x114] sm:$0xf]
    %v4135 = vld [vmem:[#allocation6 + $0x118] sm:$0xf]
    %v4136 = vld [vmem:[#allocation6 + $0x11c] sm:$0xf]
    %v4137 = vld [vmem:[#allocation6 + $0x120] sm:$0xf]
    %v4138 = vld [vmem:[#allocation6 + $0x124] sm:$0xf]
    %v4139 = vld [vmem:[#allocation6 + $0x128] sm:$0xf]
    %v4140 = vld [vmem:[#allocation6 + $0x12c] sm:$0xf]
    %v4141 = vld [vmem:[#allocation6 + $0x130] sm:$0xf]
    %v4142 = vld [vmem:[#allocation6 + $0x134] sm:$0xf]
    %v4143 = vld [vmem:[#allocation6 + $0x138] sm:$0xf]
    %v4144 = vld [vmem:[#allocation6 + $0x13c] sm:$0xf]
    %v4145 = vld [vmem:[#allocation6 + $0x140] sm:$0xf]
    %v4146 = vld [vmem:[#allocation6 + $0x144] sm:$0xf]
    %v4147 = vld [vmem:[#allocation6 + $0x148] sm:$0xf]
    %v4148 = vld [vmem:[#allocation6 + $0x14c] sm:$0xf]
    %v4149 = vld [vmem:[#allocation6 + $0x150] sm:$0xf]
    %v4150 = vld [vmem:[#allocation6 + $0x154] sm:$0xf]
    %v4151 = vld [vmem:[#allocation6 + $0x158] sm:$0xf]
    %v4152 = vld [vmem:[#allocation6 + $0x15c] sm:$0xf]
    %v4153 = vld [vmem:[#allocation6 + $0x160] sm:$0xf]
    %v4154 = vld [vmem:[#allocation6 + $0x164] sm:$0xf]
    %v4155 = vld [vmem:[#allocation6 + $0x168] sm:$0xf]
    %v4156 = vld [vmem:[#allocation6 + $0x16c] sm:$0xf]
    %v4157 = vld [vmem:[#allocation6 + $0x170] sm:$0xf]
    %v4158 = vld [vmem:[#allocation6 + $0x174] sm:$0xf]
    %v4159 = vld [vmem:[#allocation6 + $0x178] sm:$0xf]
    %v4160 = vld [vmem:[#allocation6 + $0x17c] sm:$0xf]
    %v4161 = vld [vmem:[#allocation6 + $0x180] sm:$0xf]
    %v4162 = vld [vmem:[#allocation6 + $0x184] sm:$0xf]
    %v4163 = vld [vmem:[#allocation6 + $0x188] sm:$0xf]
    %v4164 = vld [vmem:[#allocation6 + $0x18c] sm:$0xf]
    %v4165 = vld [vmem:[#allocation6 + $0x190] sm:$0xf]
    %v4166 = vld [vmem:[#allocation6 + $0x194] sm:$0xf]
    %v4167 = vld [vmem:[#allocation6 + $0x198] sm:$0xf]
    %v4168 = vld [vmem:[#allocation6 + $0x19c] sm:$0xf]
    %v4169 = vld [vmem:[#allocation6 + $0x1a0] sm:$0xf]
    %v4170 = vld [vmem:[#allocation6 + $0x1a4] sm:$0xf]
    %v4171 = vld [vmem:[#allocation6 + $0x1a8] sm:$0xf]
    %v4172 = vld [vmem:[#allocation6 + $0x1ac] sm:$0xf]
    %v4173 = vld [vmem:[#allocation6 + $0x1b0] sm:$0xf]
    %v4174 = vld [vmem:[#allocation6 + $0x1b4] sm:$0xf]
    %v4175 = vld [vmem:[#allocation6 + $0x1b8] sm:$0xf]
    %v4176 = vld [vmem:[#allocation6 + $0x1bc] sm:$0xf]
    %v4177 = vld [vmem:[#allocation6 + $0x1c0] sm:$0xf]
    %v4178 = vld [vmem:[#allocation6 + $0x1c4] sm:$0xf]
    %v4179 = vld [vmem:[#allocation6 + $0x1c8] sm:$0xf]
    %v4180 = vld [vmem:[#allocation6 + $0x1cc] sm:$0xf]
    %v4181 = vld [vmem:[#allocation6 + $0x1d0] sm:$0xf]
    %v4182 = vld [vmem:[#allocation6 + $0x1d4] sm:$0xf]
    %v4183 = vld [vmem:[#allocation6 + $0x1d8] sm:$0xf]
    %v4184 = vld [vmem:[#allocation6 + $0x1dc] sm:$0xf]
    %v4185 = vld [vmem:[#allocation6 + $0x1e0] sm:$0xf]
    %v4186 = vld [vmem:[#allocation6 + $0x1e4] sm:$0xf]
    %v4187 = vld [vmem:[#allocation6 + $0x1e8] sm:$0xf]
    %v4188 = vld [vmem:[#allocation6 + $0x1ec] sm:$0xf]
    %v4189 = vld [vmem:[#allocation6 + $0x1f0] sm:$0xf]
    %v4190 = vld [vmem:[#allocation6 + $0x1f4] sm:$0xf]
    %v4191 = vld [vmem:[#allocation6 + $0x1f8] sm:$0xf]
    %v4192 = vld [vmem:[#allocation6 + $0x1fc] sm:$0xf]
    %v4193 = vld [vmem:[#allocation7] sm:$0x1]
    %v4195 = vperm.slane %v4193, 0
    %v4325 = vunpack.c.l.b16 %v4065
    %v4326 = vunpack.c.l.b16 %v4066
    %v4327 = vunpack.c.l.b16 %v4067
    %v4328 = vunpack.c.l.b16 %v4068
    %v4329 = vunpack.c.l.b16 %v4069
    %v4330 = vunpack.c.l.b16 %v4070
    %v4331 = vunpack.c.l.b16 %v4071
    %v4332 = vunpack.c.l.b16 %v4072
    %v4333 = vunpack.c.l.b16 %v4073
    %v4334 = vunpack.c.l.b16 %v4074
    %v4335 = vunpack.c.l.b16 %v4075
    %v4336 = vunpack.c.l.b16 %v4076
    %v4337 = vunpack.c.l.b16 %v4077
    %v4338 = vunpack.c.l.b16 %v4078
    %v4339 = vunpack.c.l.b16 %v4079
    %v4340 = vunpack.c.l.b16 %v4080
    %v4341 = vunpack.c.l.b16 %v4081
    %v4342 = vunpack.c.l.b16 %v4082
    %v4343 = vunpack.c.l.b16 %v4083
    %v4344 = vunpack.c.l.b16 %v4084
    %v4345 = vunpack.c.l.b16 %v4085
    %v4346 = vunpack.c.l.b16 %v4086
    %v4347 = vunpack.c.l.b16 %v4087
    %v4348 = vunpack.c.l.b16 %v4088
    %v4349 = vunpack.c.l.b16 %v4089
    %v4350 = vunpack.c.l.b16 %v4090
    %v4351 = vunpack.c.l.b16 %v4091
    %v4352 = vunpack.c.l.b16 %v4092
    %v4353 = vunpack.c.l.b16 %v4093
    %v4354 = vunpack.c.l.b16 %v4094
    %v4355 = vunpack.c.l.b16 %v4095
    %v4356 = vunpack.c.l.b16 %v4096
    %v4357 = vunpack.c.l.b16 %v4097
    %v4358 = vunpack.c.l.b16 %v4098
    %v4359 = vunpack.c.l.b16 %v4099
    %v4360 = vunpack.c.l.b16 %v4100
    %v4361 = vunpack.c.l.b16 %v4101
    %v4362 = vunpack.c.l.b16 %v4102
    %v4363 = vunpack.c.l.b16 %v4103
    %v4364 = vunpack.c.l.b16 %v4104
    %v4365 = vunpack.c.l.b16 %v4105
    %v4366 = vunpack.c.l.b16 %v4106
    %v4367 = vunpack.c.l.b16 %v4107
    %v4368 = vunpack.c.l.b16 %v4108
    %v4369 = vunpack.c.l.b16 %v4109
    %v4370 = vunpack.c.l.b16 %v4110
    %v4371 = vunpack.c.l.b16 %v4111
    %v4372 = vunpack.c.l.b16 %v4112
    %v4373 = vunpack.c.l.b16 %v4113
    %v4374 = vunpack.c.l.b16 %v4114
    %v4375 = vunpack.c.l.b16 %v4115
    %v4376 = vunpack.c.l.b16 %v4116
    %v4377 = vunpack.c.l.b16 %v4117
    %v4378 = vunpack.c.l.b16 %v4118
    %v4379 = vunpack.c.l.b16 %v4119
    %v4380 = vunpack.c.l.b16 %v4120
    %v4381 = vunpack.c.l.b16 %v4121
    %v4382 = vunpack.c.l.b16 %v4122
    %v4383 = vunpack.c.l.b16 %v4123
    %v4384 = vunpack.c.l.b16 %v4124
    %v4385 = vunpack.c.l.b16 %v4125
    %v4386 = vunpack.c.l.b16 %v4126
    %v4387 = vunpack.c.l.b16 %v4127
    %v4388 = vunpack.c.l.b16 %v4128
    %v4389 = vunpack.c.l.b16 %v4129
    %v4390 = vunpack.c.l.b16 %v4130
    %v4391 = vunpack.c.l.b16 %v4131
    %v4392 = vunpack.c.l.b16 %v4132
    %v4393 = vunpack.c.l.b16 %v4133
    %v4394 = vunpack.c.l.b16 %v4134
    %v4395 = vunpack.c.l.b16 %v4135
    %v4396 = vunpack.c.l.b16 %v4136
    %v4397 = vunpack.c.l.b16 %v4137
    %v4398 = vunpack.c.l.b16 %v4138
    %v4399 = vunpack.c.l.b16 %v4139
    %v4400 = vunpack.c.l.b16 %v4140
    %v4401 = vunpack.c.l.b16 %v4141
    %v4402 = vunpack.c.l.b16 %v4142
    %v4403 = vunpack.c.l.b16 %v4143
    %v4404 = vunpack.c.l.b16 %v4144
    %v4405 = vunpack.c.l.b16 %v4145
    %v4406 = vunpack.c.l.b16 %v4146
    %v4407 = vunpack.c.l.b16 %v4147
    %v4408 = vunpack.c.l.b16 %v4148
    %v4409 = vunpack.c.l.b16 %v4149
    %v4410 = vunpack.c.l.b16 %v4150
    %v4411 = vunpack.c.l.b16 %v4151
    %v4412 = vunpack.c.l.b16 %v4152
    %v4413 = vunpack.c.l.b16 %v4153
    %v4414 = vunpack.c.l.b16 %v4154
    %v4415 = vunpack.c.l.b16 %v4155
    %v4416 = vunpack.c.l.b16 %v4156
    %v4417 = vunpack.c.l.b16 %v4157
    %v4418 = vunpack.c.l.b16 %v4158
    %v4419 = vunpack.c.l.b16 %v4159
    %v4420 = vunpack.c.l.b16 %v4160
    %v4421 = vunpack.c.l.b16 %v4161
    %v4422 = vunpack.c.l.b16 %v4162
    %v4423 = vunpack.c.l.b16 %v4163
    %v4424 = vunpack.c.l.b16 %v4164
    %v4425 = vunpack.c.l.b16 %v4165
    %v4426 = vunpack.c.l.b16 %v4166
    %v4427 = vunpack.c.l.b16 %v4167
    %v4428 = vunpack.c.l.b16 %v4168
    %v4429 = vunpack.c.l.b16 %v4169
    %v4430 = vunpack.c.l.b16 %v4170
    %v4431 = vunpack.c.l.b16 %v4171
    %v4432 = vunpack.c.l.b16 %v4172
    %v4433 = vunpack.c.l.b16 %v4173
    %v4434 = vunpack.c.l.b16 %v4174
    %v4435 = vunpack.c.l.b16 %v4175
    %v4436 = vunpack.c.l.b16 %v4176
    %v4437 = vunpack.c.l.b16 %v4177
    %v4438 = vunpack.c.l.b16 %v4178
    %v4439 = vunpack.c.l.b16 %v4179
    %v4440 = vunpack.c.l.b16 %v4180
    %v4441 = vunpack.c.l.b16 %v4181
    %v4442 = vunpack.c.l.b16 %v4182
    %v4443 = vunpack.c.l.b16 %v4183
    %v4444 = vunpack.c.l.b16 %v4184
    %v4445 = vunpack.c.l.b16 %v4185
    %v4446 = vunpack.c.l.b16 %v4186
    %v4447 = vunpack.c.l.b16 %v4187
    %v4448 = vunpack.c.l.b16 %v4188
    %v4449 = vunpack.c.l.b16 %v4189
    %v4450 = vunpack.c.l.b16 %v4190
    %v4451 = vunpack.c.l.b16 %v4191
    %v4452 = vunpack.c.l.b16 %v4192
    %v4453 = vpack.c.b16 %v4326, %v4325
    %v4454 = vpack.c.b16 %v4328, %v4327
    %v4455 = vpack.c.b16 %v4330, %v4329
    %v4456 = vpack.c.b16 %v4332, %v4331
    %v4457 = vpack.c.b16 %v4334, %v4333
    %v4458 = vpack.c.b16 %v4336, %v4335
    %v4459 = vpack.c.b16 %v4338, %v4337
    %v4460 = vpack.c.b16 %v4340, %v4339
    %v4461 = vpack.c.b16 %v4342, %v4341
    %v4462 = vpack.c.b16 %v4344, %v4343
    %v4463 = vpack.c.b16 %v4346, %v4345
    %v4464 = vpack.c.b16 %v4348, %v4347
    %v4465 = vpack.c.b16 %v4350, %v4349
    %v4466 = vpack.c.b16 %v4352, %v4351
    %v4467 = vpack.c.b16 %v4354, %v4353
    %v4468 = vpack.c.b16 %v4356, %v4355
    %v4469 = vpack.c.b16 %v4358, %v4357
    %v4470 = vpack.c.b16 %v4360, %v4359
    %v4471 = vpack.c.b16 %v4362, %v4361
    %v4472 = vpack.c.b16 %v4364, %v4363
    %v4473 = vpack.c.b16 %v4366, %v4365
    %v4474 = vpack.c.b16 %v4368, %v4367
    %v4475 = vpack.c.b16 %v4370, %v4369
    %v4476 = vpack.c.b16 %v4372, %v4371
    %v4477 = vpack.c.b16 %v4374, %v4373
    %v4478 = vpack.c.b16 %v4376, %v4375
    %v4479 = vpack.c.b16 %v4378, %v4377
    %v4480 = vpack.c.b16 %v4380, %v4379
    %v4481 = vpack.c.b16 %v4382, %v4381
    %v4482 = vpack.c.b16 %v4384, %v4383
    %v4483 = vpack.c.b16 %v4386, %v4385
    %v4484 = vpack.c.b16 %v4388, %v4387
    %v4485 = vpack.c.b16 %v4390, %v4389
    %v4486 = vpack.c.b16 %v4392, %v4391
    %v4487 = vpack.c.b16 %v4394, %v4393
    %v4488 = vpack.c.b16 %v4396, %v4395
    %v4489 = vpack.c.b16 %v4398, %v4397
    %v4490 = vpack.c.b16 %v4400, %v4399
    %v4491 = vpack.c.b16 %v4402, %v4401
    %v4492 = vpack.c.b16 %v4404, %v4403
    %v4493 = vpack.c.b16 %v4406, %v4405
    %v4494 = vpack.c.b16 %v4408, %v4407
    %v4495 = vpack.c.b16 %v4410, %v4409
    %v4496 = vpack.c.b16 %v4412, %v4411
    %v4497 = vpack.c.b16 %v4414, %v4413
    %v4498 = vpack.c.b16 %v4416, %v4415
    %v4499 = vpack.c.b16 %v4418, %v4417
    %v4500 = vpack.c.b16 %v4420, %v4419
    %v4501 = vpack.c.b16 %v4422, %v4421
    %v4502 = vpack.c.b16 %v4424, %v4423
    %v4503 = vpack.c.b16 %v4426, %v4425
    %v4504 = vpack.c.b16 %v4428, %v4427
    %v4505 = vpack.c.b16 %v4430, %v4429
    %v4506 = vpack.c.b16 %v4432, %v4431
    %v4507 = vpack.c.b16 %v4434, %v4433
    %v4508 = vpack.c.b16 %v4436, %v4435
    %v4509 = vpack.c.b16 %v4438, %v4437
    %v4510 = vpack.c.b16 %v4440, %v4439
    %v4511 = vpack.c.b16 %v4442, %v4441
    %v4512 = vpack.c.b16 %v4444, %v4443
    %v4513 = vpack.c.b16 %v4446, %v4445
    %v4514 = vpack.c.b16 %v4448, %v4447
    %v4515 = vpack.c.b16 %v4450, %v4449
    %v4516 = vpack.c.b16 %v4452, %v4451
    %4581 = vmatpush.bf16.msra.mxu0 %v4460
    %4582 = vmatpush.bf16.msra.mxu0 %v4459
    %4583 = vmatpush.bf16.msra.mxu0 %v4458
    %4584 = vmatpush.bf16.msra.mxu0 %v4457
    %4585 = vmatpush.bf16.msra.mxu0 %v4456
    %4586 = vmatpush.bf16.msra.mxu0 %v4455
    %4587 = vmatpush.bf16.msra.mxu0 %v4454
    %4588 = vmatpush.bf16.msra.mxu0 %v4453
    %4589 = vmatmul.bf16.gmra.mxu0 %v4057
    %v4590 = vpop.f32.mrf.mxu0
    %v4591 = vadd.f32 %v4195, %v4590
    %v4592 = vpop.f32.mrf.mxu0
    %4593 = vdwg.mxu0
    %4594 = vmatpush.bf16.msra.mxu0 %v4468
    %4595 = vmatpush.bf16.msra.mxu0 %v4467
    %4596 = vmatpush.bf16.msra.mxu0 %v4466
    %4597 = vmatpush.bf16.msra.mxu0 %v4465
    %4598 = vmatpush.bf16.msra.mxu0 %v4464
    %4599 = vmatpush.bf16.msra.mxu0 %v4463
    %4600 = vmatpush.bf16.msra.mxu0 %v4462
    %4601 = vmatpush.bf16.msra.mxu0 %v4461
    %4602 = vmatmul.bf16.gmra.mxu0 %v4058
    %v4603 = vpop.f32.mrf.mxu0
    %v4604 = vadd.f32 %v4591, %v4603
    %v4605 = vpop.f32.mrf.mxu0
    %4606 = vdwg.mxu0
    %4607 = vmatpush.bf16.msra.mxu0 %v4476
    %4608 = vmatpush.bf16.msra.mxu0 %v4475
    %4609 = vmatpush.bf16.msra.mxu0 %v4474
    %4610 = vmatpush.bf16.msra.mxu0 %v4473
    %4611 = vmatpush.bf16.msra.mxu0 %v4472
    %4612 = vmatpush.bf16.msra.mxu0 %v4471
    %4613 = vmatpush.bf16.msra.mxu0 %v4470
    %4614 = vmatpush.bf16.msra.mxu0 %v4469
    %4615 = vmatmul.bf16.gmra.mxu0 %v4059
    %v4616 = vpop.f32.mrf.mxu0
    %v4617 = vadd.f32 %v4604, %v4616
    %v4618 = vpop.f32.mrf.mxu0
    %4619 = vdwg.mxu0
    %4620 = vmatpush.bf16.msra.mxu0 %v4484
    %4621 = vmatpush.bf16.msra.mxu0 %v4483
    %4622 = vmatpush.bf16.msra.mxu0 %v4482
    %4623 = vmatpush.bf16.msra.mxu0 %v4481
    %4624 = vmatpush.bf16.msra.mxu0 %v4480
    %4625 = vmatpush.bf16.msra.mxu0 %v4479
    %4626 = vmatpush.bf16.msra.mxu0 %v4478
    %4627 = vmatpush.bf16.msra.mxu0 %v4477
    %4628 = vmatmul.bf16.gmra.mxu0 %v4060
    %v4629 = vpop.f32.mrf.mxu0
    %v4630 = vadd.f32 %v4617, %v4629
    %v4631 = vpop.f32.mrf.mxu0
    %4632 = vdwg.mxu0
    %4633 = vmatpush.bf16.msra.mxu0 %v4492
    %4634 = vmatpush.bf16.msra.mxu0 %v4491
    %4635 = vmatpush.bf16.msra.mxu0 %v4490
    %4636 = vmatpush.bf16.msra.mxu0 %v4489
    %4637 = vmatpush.bf16.msra.mxu0 %v4488
    %4638 = vmatpush.bf16.msra.mxu0 %v4487
    %4639 = vmatpush.bf16.msra.mxu0 %v4486
    %4640 = vmatpush.bf16.msra.mxu0 %v4485
    %4641 = vmatmul.bf16.gmra.mxu0 %v4061
    %v4642 = vpop.f32.mrf.mxu0
    %v4643 = vadd.f32 %v4630, %v4642
    %v4644 = vpop.f32.mrf.mxu0
    %4645 = vdwg.mxu0
    %4646 = vmatpush.bf16.msra.mxu0 %v4500
    %4647 = vmatpush.bf16.msra.mxu0 %v4499
    %4648 = vmatpush.bf16.msra.mxu0 %v4498
    %4649 = vmatpush.bf16.msra.mxu0 %v4497
    %4650 = vmatpush.bf16.msra.mxu0 %v4496
    %4651 = vmatpush.bf16.msra.mxu0 %v4495
    %4652 = vmatpush.bf16.msra.mxu0 %v4494
    %4653 = vmatpush.bf16.msra.mxu0 %v4493
    %4654 = vmatmul.bf16.gmra.mxu0 %v4062
    %v4655 = vpop.f32.mrf.mxu0
    %v4656 = vadd.f32 %v4643, %v4655
    %v4657 = vpop.f32.mrf.mxu0
    %4658 = vdwg.mxu0
    %4659 = vmatpush.bf16.msra.mxu0 %v4508
    %4660 = vmatpush.bf16.msra.mxu0 %v4507
    %4661 = vmatpush.bf16.msra.mxu0 %v4506
    %4662 = vmatpush.bf16.msra.mxu0 %v4505
    %4663 = vmatpush.bf16.msra.mxu0 %v4504
    %4664 = vmatpush.bf16.msra.mxu0 %v4503
    %4665 = vmatpush.bf16.msra.mxu0 %v4502
    %4666 = vmatpush.bf16.msra.mxu0 %v4501
    %4667 = vmatmul.bf16.gmra.mxu0 %v4063
    %v4668 = vpop.f32.mrf.mxu0
    %v4669 = vadd.f32 %v4656, %v4668
    %v4670 = vpop.f32.mrf.mxu0
    %4671 = vdwg.mxu0
    %4672 = vmatpush.bf16.msra.mxu0 %v4516
    %4673 = vmatpush.bf16.msra.mxu0 %v4515
    %4674 = vmatpush.bf16.msra.mxu0 %v4514
    %4675 = vmatpush.bf16.msra.mxu0 %v4513
    %4676 = vmatpush.bf16.msra.mxu0 %v4512
    %4677 = vmatpush.bf16.msra.mxu0 %v4511
    %4678 = vmatpush.bf16.msra.mxu0 %v4510
    %4679 = vmatpush.bf16.msra.mxu0 %v4509
    %4680 = vmatmul.bf16.gmra.mxu0 %v4064
    %v4681 = vpop.f32.mrf.mxu0
    %v4682 = vadd.f32 %v4669, %v4681
    %v4683 = vpop.f32.mrf.mxu0
    %4684 = vdwg.mxu0
    %4685 = vst [vmem:[%s5] sm:$0xff] %v4682
    // Predicated region
    $region38: #{_forward.5} parent=1 // pred_check
      _
    $region39: #{_forward.5} parent=1 // pred_check_branch
      %4687 = sbr.rel (0) target = $region41
    $region40: #{_forward.5} parent=1 // pred_region
      _
    $region41: #{_forward.5} parent=1 // pred_fallthru
      _
    // Predicated region
    $region42: #{_forward.5} parent=1 // pred_check
      _
    $region43: #{_forward.5} parent=1 // pred_check_branch
      %4689 = sbr.rel (0) target = $region45
    $region44: #{_forward.5} parent=1 // pred_region
      _
    $region45: #{_forward.5} parent=1 // pred_fallthru
      _
    %4690 = vsyncpa [#allocation3], 1
    %4691 = vsyncpa [#allocation5], 1
    %4692 = vsyncpa [#allocation8], 1

</llo_original>
